<compile_context>
chip_gen: v7x
topology: tpu7x:2x2x1
jax: 0.10.0
libtpu: 0.0.40
codegen_flags: <defaults>
</compile_context>

<pallas_src>
import functools

import jax
import jax.numpy as jnp
from jax.experimental import pallas as pl
from jax.experimental.pallas import tpu as pltpu

OBS_DIM = 6525
ENCODING = 300
LATENT = 30
ACTIONS = 3

OUT_W = 128                 # packed output width = one vreg of lanes (unmasked vst)
VALUE_LANE = LATENT         # lane 30 carries tanh(value)
PROBS_LO = 32               # probs live in lanes [32, 35)
PROBS_HI = PROBS_LO + ACTIONS


# ----------------------------------------------------------------------------
# optional single-buffering of resident weights (probed once at import)
# ----------------------------------------------------------------------------
def _probe_copy_kernel(x_ref, o_ref):
    o_ref[...] = x_ref[...]


def _detect_single_buffer_mode():
    """pl.Buffered(1) on constant-index weight blocks saves one VMEM buffer per
    resident weight (~3.9 MiB for W1).  Probe once; fall back to the default
    double-buffering if this jax/libtpu build rejects buffer_count=1."""
    try:
        mode = pl.Buffered(1)
        pl.pallas_call(
            _probe_copy_kernel,
            out_shape=jax.ShapeDtypeStruct((16, 128), jnp.float32),
            grid=(2,),
            in_specs=[pl.BlockSpec((8, 128), lambda i: (0, 0), pipeline_mode=mode)],
            out_specs=pl.BlockSpec((8, 128), lambda i: (i, 0)),
        )(jnp.zeros((8, 128), jnp.float32))
        return mode
    except Exception:
        return None


_RESIDENT_MODE = _detect_single_buffer_mode()


def _resident_spec(shape):
    if _RESIDENT_MODE is None:
        return pl.BlockSpec(shape, lambda i: (0, 0))
    return pl.BlockSpec(shape, lambda i: (0, 0), pipeline_mode=_RESIDENT_MODE)


# ----------------------------------------------------------------------------
# generation-aware tiling
# ----------------------------------------------------------------------------
@functools.lru_cache(maxsize=1)
def _chip_config():
    """(tb_max, vmem_limit_bytes) chosen from the chip's VMEM capacity."""
    vmem = None
    try:
        vmem = getattr(pltpu.get_tpu_info(), "vmem_capacity_bytes", None)
    except Exception:
        vmem = None
    if vmem is None:
        vmem = 64 << 20                       # assume the smallest (v7x per-TC)
    if vmem >= (96 << 20):                    # v5e / v6e: 128 MiB VMEM
        return 768, 96 << 20
    return 384, 48 << 20                      # v7x: 64 MiB VMEM


def _round_up(x, m):
    return ((x + m - 1) // m) * m


def _batch_tiling(batch):
    """Pick (tile_rows, padded_batch).  >=2 grid steps whenever possible so
    both v7x TensorCores get work; tiles rounded to 16 rows (bf16 sublane
    packing); tile size capped per-generation by VMEM."""
    tb_max, _ = _chip_config()
    b8 = _round_up(max(batch, 8), 8)
    if b8 < 16:
        return b8, b8
    n_tiles = max(2, pl.cdiv(b8, tb_max))
    tb = _round_up(pl.cdiv(b8, n_tiles), 16)
    b_pad = _round_up(b8, tb)
    return tb, b_pad


def _pad_rows(x, b_pad):
    b = x.shape[0]
    return x if b_pad == b else jnp.pad(x, ((0, b_pad - b), (0, 0)))


# ----------------------------------------------------------------------------
# kernels
# ----------------------------------------------------------------------------
def _fused_kernel(obs_ref, w1_ref, b1_ref, wh_ref, bh_ref, wp_ref, bp_ref, out_ref):
    # down_sampler: cast raw f32 obs tile to bf16 in VMEM (no HBM round-trip),
    # bf16 x bf16 MXU matmul with f32 accumulation, add b1, ReLU.
    obs = obs_ref[...].astype(jnp.bfloat16)
    enc = jnp.dot(obs, w1_ref[...], preferred_element_type=jnp.float32)
    enc = jnp.maximum(enc + b1_ref[...], 0.0)

    # packed policy|value head: lanes [0,30) ReLU policy, lane 30 tanh value.
    pv = jnp.dot(enc, wh_ref[...], preferred_element_type=jnp.float32) + bh_ref[...]
    lane = jax.lax.broadcasted_iota(jnp.int32, pv.shape, 1)
    act = jnp.where(lane < LATENT, jnp.maximum(pv, 0.0),
                    jnp.where(lane == VALUE_LANE, jnp.tanh(pv), 0.0))

    # to_probs: wp rows >= 30 are zero so the value/pad lanes cannot leak;
    # logits land in lanes [32,35); masked softmax over those 3 lanes.
    raw = jnp.dot(act, wp_ref[...], preferred_element_type=jnp.float32) + bp_ref[...]
    logits = jnp.maximum(raw, 0.0)
    pmask = (lane >= PROBS_LO) & (lane < PROBS_HI)
    m = jnp.max(jnp.where(pmask, logits, -jnp.inf), axis=-1, keepdims=True)
    e = jnp.where(pmask, jnp.exp(logits - m), 0.0)
    probs = e / jnp.sum(e, axis=-1, keepdims=True)

    # single lane-dense store: policy|value in lanes 0..30, probs in 32..34.
    out_ref[...] = act + probs


def _communicate_kernel(pd_ref, nb_ref, wrt_ref, wrb_ref, hn_ref):
    # general recurr path: hn = ReLU([pd, nb] @ Wr^T) with Wr pre-split.
    hn = (jnp.dot(pd_ref[...], wrt_ref[...], preferred_element_type=jnp.float32)
          + jnp.dot(nb_ref[...], wrb_ref[...], preferred_element_type=jnp.float32))
    hn_ref[...] = jnp.maximum(hn, 0.0)


def _probs_kernel(x_ref, wp_ref, bp_ref, out_ref):
    logits = jnp.maximum(
        jnp.dot(x_ref[...], wp_ref[...], preferred_element_type=jnp.float32)
        + bp_ref[...], 0.0)
    z = logits - jnp.max(logits, axis=-1, keepdims=True)
    e = jnp.exp(z)
    out_ref[...] = e / jnp.sum(e, axis=-1, keepdims=True)


# ----------------------------------------------------------------------------
# fused runner (steps 0 + 1 + 2 in one pallas_call)
# ----------------------------------------------------------------------------
def _run_fused(observation, params):
    b = observation.shape[0]
    tb, b_pad = _batch_tiling(b)
    _, vmem_limit = _chip_config()
    obs = _pad_rows(observation.astype(jnp.float32), b_pad)   # no-op when aligned

    flops = 2 * b_pad * (OBS_DIM * ENCODING + ENCODING * OUT_W + OUT_W * OUT_W)
    bytes_accessed = (b_pad * OBS_DIM * 4                      # obs (f32, read once)
                      + OBS_DIM * ENCODING * 2                 # W1 (bf16, resident)
                      + (ENCODING * OUT_W + OUT_W * OUT_W
                         + ENCODING + 3 * OUT_W) * 4           # small weights/biases
                      + b_pad * OUT_W * 4)                     # packed output
    cost = pl.CostEstimate(flops=flops,
                           transcendentals=b_pad * (OUT_W + 2),
                           bytes_accessed=bytes_accessed)

    out = pl.pallas_call(
        _fused_kernel,
        out_shape=jax.ShapeDtypeStruct((b_pad, OUT_W), jnp.float32),
        grid=(b_pad // tb,),
        in_specs=[pl.BlockSpec((tb, OBS_DIM), lambda i: (i, 0)),   # raw f32 obs tile
                  _resident_spec((OBS_DIM, ENCODING)),             # W1 (bf16)
                  _resident_spec((1, ENCODING)),                   # b1
                  _resident_spec((ENCODING, OUT_W)),               # packed policy|value head
                  _resident_spec((1, OUT_W)),                      # packed b2|b3
                  _resident_spec((OUT_W, OUT_W)),                  # padded to_probs weight
                  _resident_spec((1, OUT_W))],                     # padded bp
        out_specs=pl.BlockSpec((tb, OUT_W), lambda i: (i, 0)),
        compiler_params=pltpu.CompilerParams(
            dimension_semantics=("parallel",),
            vmem_limit_bytes=vmem_limit),
        cost_estimate=cost,
    )(obs, params["w1"], params["b1"], params["w_head"], params["b_head"],
      params["wp128"], params["bp128"])
    return out, b


# ----------------------------------------------------------------------------
# public API
# ----------------------------------------------------------------------------
@jax.jit
def forward_pipeline(observation, neighbors, params):
    """Steps 0+1+2 fused. recurr_policy is frozen to [I | 0] (init_recurr_policy),
    so hn == ReLU(policy) == policy and neighbors contribute exactly zero."""
    del neighbors
    out, b = _run_fused(observation, params)
    policy = out[:b, :LATENT]
    value = out[:b, VALUE_LANE:VALUE_LANE + 1]
    probs = out[:b, PROBS_LO:PROBS_HI]
    return policy, value, policy, probs


@jax.jit
def forward_initial(observation, params):
    # Reuses the fused kernel; the extra probs head is a negligible (tb,128)
    # matmul and keeps a single compiled kernel / lane-dense output.
    out, b = _run_fused(observation, params)
    return out[:b, :LATENT], out[:b, VALUE_LANE:VALUE_LANE + 1]


@jax.jit
def forward_communicate(policy_dist, neighbors, params):
    # NOTE: whole-array VMEM specs — fine for the (B,30) tensors this step sees;
    # add batch tiling here if B ever reaches the hundreds of thousands.
    nb = jnp.squeeze(neighbors, axis=1).astype(jnp.float32)
    vspec = pl.BlockSpec(memory_space=pltpu.MemorySpace.VMEM)
    return pl.pallas_call(
        _communicate_kernel,
        out_shape=jax.ShapeDtypeStruct((policy_dist.shape[0], LATENT), jnp.float32),
        in_specs=[vspec] * 4,
        out_specs=vspec,
        compiler_params=pltpu.CompilerParams(vmem_limit_bytes=16 << 20),
    )(policy_dist.astype(jnp.float32), nb, params["wr_top"], params["wr_bot"])


@jax.jit
def forward_probs(latent_vector, params):
    vspec = pl.BlockSpec(memory_space=pltpu.MemorySpace.VMEM)
    return pl.pallas_call(
        _probs_kernel,
        out_shape=jax.ShapeDtypeStruct((latent_vector.shape[0], ACTIONS), jnp.float32),
        in_specs=[vspec] * 3,
        out_specs=vspec,
        compiler_params=pltpu.CompilerParams(vmem_limit_bytes=16 << 20),
    )(latent_vector.astype(jnp.float32), params["wp_t"], params["bp3"])


def forward(observation, step, neighbors=None, *, params):
    if step == 0:
        return forward_initial(observation, params)
    elif step == 1:
        return forward_communicate(observation, neighbors, params)
    elif step == 2:
        return forward_probs(observation, params)
    raise Exception("Incorrect step number for forward prop, should be: 0,1,2")


# ----------------------------------------------------------------------------
# parameter construction (mirrors torch init_params / init_recurr_policy)
# ----------------------------------------------------------------------------
def _row_normalized(key, out_features, in_features):
    # torch: weight ~ N(0,1), each row scaled to unit L2 norm; bias = 0
    w = jax.random.normal(key, (out_features, in_features), dtype=jnp.float32)
    return w / jnp.sqrt(jnp.sum(w * w, axis=1, keepdims=True))


def make_params(seed=0):
    k1, k2, k3, k4 = jax.random.split(jax.random.PRNGKey(seed), 4)
    w1 = _row_normalized(k1, ENCODING, OBS_DIM)      # down_sampler
    w2 = _row_normalized(k2, LATENT, ENCODING)       # policy
    w3 = _row_normalized(k3, 1, ENCODING)            # v_net
    wp = _row_normalized(k4, ACTIONS, LATENT)        # to_probs
    b1 = jnp.zeros((1, ENCODING), jnp.float32)
    bp = jnp.zeros((ACTIONS,), jnp.float32)

    # policy + value heads packed into one lane-dense (300, 128) weight
    w_head = jnp.zeros((ENCODING, OUT_W), jnp.float32)
    w_head = w_head.at[:, :LATENT].set(w2.T).at[:, VALUE_LANE].set(w3[0])
    b_head = jnp.zeros((1, OUT_W), jnp.float32)       # b2 = b3 = 0 (init_params)

    # to_probs weight padded to (128, 128): rows >= 30 zero so value/pad lanes
    # cannot leak into the logits; logits land in lanes [32, 35)
    wp128 = jnp.zeros((OUT_W, OUT_W), jnp.float32)
    wp128 = wp128.at[:LATENT, PROBS_LO:PROBS_HI].set(wp.T)
    bp128 = jnp.zeros((1, OUT_W), jnp.float32)
    bp128 = bp128.at[0, PROBS_LO:PROBS_HI].set(bp)

    # recurr_policy weight [I | 0] pre-split (transposed) for forward_communicate
    wr_top = jnp.eye(LATENT, dtype=jnp.float32)
    wr_bot = jnp.zeros((LATENT, LATENT), jnp.float32)

    return {
        # W1 transposed, stored bf16: halves the only large resident HBM stream
        "w1": w1.T.astype(jnp.bfloat16),
        "b1": b1,
        "w_head": w_head, "b_head": b_head,
        "wp128": wp128, "bp128": bp128,
        "wr_top": wr_top, "wr_bot": wr_bot,
        "wp_t": wp.T, "bp3": bp.reshape(1, ACTIONS),
    }


# ----------------------------------------------------------------------------
# pure-JAX reference (same bf16 quantization of obs/W1 so tolerances stay tight)
# ----------------------------------------------------------------------------
def _ref_pipeline(observation, neighbors, p):
    obs = observation.astype(jnp.bfloat16).astype(jnp.float32)
    w1 = p["w1"].astype(jnp.float32)
    enc = jnp.maximum(obs @ w1 + p["b1"], 0.0)
    pol = jnp.maximum(enc @ p["w_head"][:, :LATENT] + p["b_head"][:, :LATENT], 0.0)
    val = jnp.tanh(enc @ p["w_head"][:, VALUE_LANE:VALUE_LANE + 1]
                   + p["b_head"][:, VALUE_LANE:VALUE_LANE + 1])
    nb = jnp.squeeze(neighbors, axis=1)
    hn = jnp.maximum(pol @ p["wr_top"] + nb @ p["wr_bot"], 0.0)
    logits = jnp.maximum(hn @ p["wp_t"] + p["bp3"], 0.0)
    probs = jax.nn.softmax(logits, axis=-1)
    return pol, val, hn, probs


if __name__ == "__main__":
    key = jax.random.PRNGKey(0)
    k_obs, k_nb = jax.random.split(key)

    batch = 8
    observation = jax.random.normal(k_obs, (batch, OBS_DIM), dtype=jnp.float32)
    neighbors = jax.random.normal(k_nb, (batch, 1, LATENT), dtype=jnp.float32)
    params = make_params(seed=0)

    # fused path (steps 0+1+2 in a single kernel)
    pol, val, hn, probs = forward_pipeline(observation, neighbors, params)

    # per-step path (torch-style step dispatch)
    pol_s, val_s = forward(observation, 0, params=params)
    hn_s = forward(pol_s, 1, neighbors, params=params)
    probs_s = forward(hn_s, 2, params=params)

    jax.block_until_ready((pol, val, hn, probs, pol_s, val_s, hn_s, probs_s))

    # correctness vs. pure-JAX reference
    pol_r, val_r, hn_r, probs_r = _ref_pipeline(observation, neighbors, params)
    for a, r in ((pol, pol_r), (val, val_r), (hn, hn_r), (probs, probs_r),
                 (pol_s, pol_r), (val_s, val_r), (hn_s, hn_r), (probs_s, probs_r)):
        assert jnp.allclose(a, r, rtol=2e-4, atol=2e-4), float(jnp.max(jnp.abs(a - r)))

    print("KERNEL_OK")
</pallas_src>

<mosaic_0001>
module attributes {stable_mosaic.version = 11 : i64} {
  func.func @_probe_copy_kernel(%arg0: i32, %arg1: memref<8x128xf32, #tpu.memory_space<vmem>>, %arg2: memref<8x128xf32, #tpu.memory_space<vmem>>) attributes {dimension_semantics = [#tpu.dimension_semantics<arbitrary>], iteration_bounds = array<i64: 2>, scalar_prefetch = 0 : i64, scratch_operands = 0 : i64, tpu.core_type = #tpu.core_type<tc>, window_params = [{pipeline_mode = #tpu.pipeline_mode<synchronous>, transform_indices = @transform_0, window_bounds = array<i64: 8, 128>}, {transform_indices = @transform_1, window_bounds = array<i64: 8, 128>}]} {
    %c0 = arith.constant 0 : index
    %c0_0 = arith.constant 0 : index
    %0 = vector.load %arg1[%c0, %c0_0] : memref<8x128xf32, #tpu.memory_space<vmem>>, vector<8x128xf32>
    %c0_1 = arith.constant 0 : index
    %c0_2 = arith.constant 0 : index
    %1 = vector.load %arg2[%c0_1, %c0_2] : memref<8x128xf32, #tpu.memory_space<vmem>>, vector<8x128xf32>
    tpu.vector_store %arg2[%c0_1, %c0_2], %0 {strides = array<i32>} : memref<8x128xf32, #tpu.memory_space<vmem>>, vector<8x128xf32>,
    return
  }
  func.func @transform_0(%arg0: i32) -> (i32, i32) {
    %c0_i32 = arith.constant 0 : i32
    %c0_i32_0 = arith.constant 0 : i32
    %c0_i32_1 = arith.constant 0 : i32
    return %c0_i32, %c0_i32_0 : i32, i32
  }
  func.func @transform_1(%arg0: i32) -> (i32, i32) {
    %c0_i32 = arith.constant 0 : i32
    %c0_i32_0 = arith.constant 0 : i32
    return %arg0, %c0_i32 : i32, i32
  }
}

module attributes {stable_mosaic.version = 11 : i64} {
  func.func @_fused_kernel(%arg0: i32, %arg1: memref<8x6525xf32, #tpu.memory_space<vmem>>, %arg2: memref<6525x300xbf16, #tpu.memory_space<vmem>>, %arg3: memref<1x300xf32, #tpu.memory_space<vmem>>, %arg4: memref<300x128xf32, #tpu.memory_space<vmem>>, %arg5: memref<1x128xf32, #tpu.memory_space<vmem>>, %arg6: memref<128x128xf32, #tpu.memory_space<vmem>>, %arg7: memref<1x128xf32, #tpu.memory_space<vmem>>, %arg8: memref<8x128xf32, #tpu.memory_space<vmem>>) attributes {dimension_semantics = [#tpu.dimension_semantics<parallel>], iteration_bounds = array<i64: 1>, scalar_prefetch = 0 : i64, scratch_operands = 0 : i64, tpu.core_type = #tpu.core_type<tc>, window_params = [{transform_indices = @transform_0, window_bounds = array<i64: 8, 6525>}, {pipeline_mode = #tpu.pipeline_mode<synchronous>, transform_indices = @transform_1, window_bounds = array<i64: 6525, 300>}, {pipeline_mode = #tpu.pipeline_mode<synchronous>, transform_indices = @transform_2, window_bounds = array<i64: 1, 300>}, {pipeline_mode = #tpu.pipeline_mode<synchronous>, transform_indices = @transform_3, window_bounds = array<i64: 300, 128>}, {pipeline_mode = #tpu.pipeline_mode<synchronous>, transform_indices = @transform_4, window_bounds = array<i64: 1, 128>}, {pipeline_mode = #tpu.pipeline_mode<synchronous>, transform_indices = @transform_5, window_bounds = array<i64: 128, 128>}, {pipeline_mode = #tpu.pipeline_mode<synchronous>, transform_indices = @transform_6, window_bounds = array<i64: 1, 128>}, {transform_indices = @transform_7, window_bounds = array<i64: 8, 128>}]} {
    %c0 = arith.constant 0 : index
    %c0_0 = arith.constant 0 : index
    %0 = vector.load %arg1[%c0, %c0_0] : memref<8x6525xf32, #tpu.memory_space<vmem>>, vector<8x6525xf32>
    %1 = arith.truncf %0 : vector<8x6525xf32> to vector<8x6525xbf16>
    %c0_1 = arith.constant 0 : index
    %c0_2 = arith.constant 0 : index
    %2 = vector.load %arg2[%c0_1, %c0_2] : memref<6525x300xbf16, #tpu.memory_space<vmem>>, vector<6525x300xbf16>
    %cst = arith.constant dense<0.000000e+00> : vector<8x300xf32>
    %3 = tpu.matmul %1, %2, %cst {dimension_numbers = #tpu.dot_dimension_numbers<[1], [0], [0], [1], [0, 0, 1, 1], [], []>} : vector<8x6525xbf16>, vector<6525x300xbf16>, vector<8x300xf32> -> vector<8x300xf32>
    %c0_3 = arith.constant 0 : index
    %c0_4 = arith.constant 0 : index
    %4 = vector.load %arg3[%c0_3, %c0_4] : memref<1x300xf32, #tpu.memory_space<vmem>>, vector<1x300xf32>
    %5 = vector.broadcast %4 : vector<1x300xf32> to vector<8x300xf32>
    %6 = arith.addf %3, %5 : vector<8x300xf32>
    %cst_5 = arith.constant 0.000000e+00 : f32
    %7 = vector.broadcast %cst_5 : f32 to vector<8x300xf32>
    %8 = arith.maximumf %6, %7 : vector<8x300xf32>
    %c0_6 = arith.constant 0 : index
    %c0_7 = arith.constant 0 : index
    %9 = vector.load %arg4[%c0_6, %c0_7] : memref<300x128xf32, #tpu.memory_space<vmem>>, vector<300x128xf32>
    %cst_8 = arith.constant dense<0.000000e+00> : vector<8x128xf32>
    %10 = tpu.matmul %8, %9, %cst_8 {dimension_numbers = #tpu.dot_dimension_numbers<[1], [0], [0], [1], [0, 0, 1, 1], [], []>} : vector<8x300xf32>, vector<300x128xf32>, vector<8x128xf32> -> vector<8x128xf32>
    %c0_9 = arith.constant 0 : index
    %c0_10 = arith.constant 0 : index
    %11 = vector.load %arg5[%c0_9, %c0_10] : memref<1x128xf32, #tpu.memory_space<vmem>>, vector<1x128xf32>
    %12 = vector.broadcast %11 : vector<1x128xf32> to vector<8x128xf32>
    %13 = arith.addf %10, %12 : vector<8x128xf32>
    %14 = tpu.iota {dimensions = array<i32: 1>} : vector<8x128xi32>
    %c30_i32 = arith.constant 30 : i32
    %15 = vector.broadcast %c30_i32 : i32 to vector<8x128xi32>
    %16 = arith.cmpi slt, %14, %15 : vector<8x128xi32>
    %cst_11 = arith.constant 0.000000e+00 : f32
    %17 = vector.broadcast %cst_11 : f32 to vector<8x128xf32>
    %18 = arith.maximumf %13, %17 : vector<8x128xf32>
    %c30_i32_12 = arith.constant 30 : i32
    %19 = vector.broadcast %c30_i32_12 : i32 to vector<8x128xi32>
    %20 = arith.cmpi eq, %14, %19 : vector<8x128xi32>
    %21 = math.tanh %13 : vector<8x128xf32>
    %cst_13 = arith.constant 0.000000e+00 : f32
    %22 = vector.broadcast %cst_13 : f32 to vector<8x128xf32>
    %23 = arith.select %20, %21, %22 : vector<8x128xi1>, vector<8x128xf32>
    %24 = arith.select %16, %18, %23 : vector<8x128xi1>, vector<8x128xf32>
    %c0_14 = arith.constant 0 : index
    %c0_15 = arith.constant 0 : index
    %25 = vector.load %arg6[%c0_14, %c0_15] : memref<128x128xf32, #tpu.memory_space<vmem>>, vector<128x128xf32>
    %cst_16 = arith.constant dense<0.000000e+00> : vector<8x128xf32>
    %26 = tpu.matmul %24, %25, %cst_16 {dimension_numbers = #tpu.dot_dimension_numbers<[1], [0], [0], [1], [0, 0, 1, 1], [], []>} : vector<8x128xf32>, vector<128x128xf32>, vector<8x128xf32> -> vector<8x128xf32>
    %c0_17 = arith.constant 0 : index
    %c0_18 = arith.constant 0 : index
    %27 = vector.load %arg7[%c0_17, %c0_18] : memref<1x128xf32, #tpu.memory_space<vmem>>, vector<1x128xf32>
    %28 = vector.broadcast %27 : vector<1x128xf32> to vector<8x128xf32>
    %29 = arith.addf %26, %28 : vector<8x128xf32>
    %cst_19 = arith.constant 0.000000e+00 : f32
    %30 = vector.broadcast %cst_19 : f32 to vector<8x128xf32>
    %31 = arith.maximumf %29, %30 : vector<8x128xf32>
    %c32_i32 = arith.constant 32 : i32
    %32 = vector.broadcast %c32_i32 : i32 to vector<8x128xi32>
    %33 = arith.cmpi sge, %14, %32 : vector<8x128xi32>
    %c35_i32 = arith.constant 35 : i32
    %34 = vector.broadcast %c35_i32 : i32 to vector<8x128xi32>
    %35 = arith.cmpi slt, %14, %34 : vector<8x128xi32>
    %36 = arith.andi %33, %35 : vector<8x128xi1>
    %cst_20 = arith.constant 0xFF800000 : f32
    %37 = vector.broadcast %cst_20 : f32 to vector<8x128xf32>
    %38 = arith.select %36, %31, %37 : vector<8x128xi1>, vector<8x128xf32>
    %cst_21 = arith.constant dense<0xFF800000> : vector<8xf32>
    %39 = vector.multi_reduction <maximumf>, %38, %cst_21 [1] : vector<8x128xf32> to vector<8xf32>
    %40 = vector.shape_cast %39 : vector<8xf32> to vector<8x1xf32>
    %41 = vector.broadcast %40 : vector<8x1xf32> to vector<8x128xf32>
    %42 = arith.subf %31, %41 : vector<8x128xf32>
    %43 = math.exp %42 : vector<8x128xf32>
    %cst_22 = arith.constant 0.000000e+00 : f32
    %44 = vector.broadcast %cst_22 : f32 to vector<8x128xf32>
    %45 = arith.select %36, %43, %44 : vector<8x128xi1>, vector<8x128xf32>
    %cst_23 = arith.constant dense<0.000000e+00> : vector<8xf32>
    %46 = vector.multi_reduction <add>, %45, %cst_23 [1] : vector<8x128xf32> to vector<8xf32>
    %47 = vector.shape_cast %46 : vector<8xf32> to vector<8x1xf32>
    %48 = vector.broadcast %47 : vector<8x1xf32> to vector<8x128xf32>
    %49 = arith.divf %45, %48 : vector<8x128xf32>
    %50 = arith.addf %24, %49 : vector<8x128xf32>
    %c0_24 = arith.constant 0 : index
    %c0_25 = arith.constant 0 : index
    %51 = vector.load %arg8[%c0_24, %c0_25] : memref<8x128xf32, #tpu.memory_space<vmem>>, vector<8x128xf32>
    tpu.vector_store %arg8[%c0_24, %c0_25], %50 {strides = array<i32>} : memref<8x128xf32, #tpu.memory_space<vmem>>, vector<8x128xf32>,
    return
  }
  func.func @transform_0(%arg0: i32) -> (i32, i32) {
    %c0_i32 = arith.constant 0 : i32
    %c0_i32_0 = arith.constant 0 : i32
    return %arg0, %c0_i32 : i32, i32
  }
  func.func @transform_1(%arg0: i32) -> (i32, i32) {
    %c0_i32 = arith.constant 0 : i32
    %c0_i32_0 = arith.constant 0 : i32
    %c0_i32_1 = arith.constant 0 : i32
    return %c0_i32, %c0_i32_0 : i32, i32
  }
  func.func @transform_2(%arg0: i32) -> (i32, i32) {
    %c0_i32 = arith.constant 0 : i32
    %c0_i32_0 = arith.constant 0 : i32
    %c0_i32_1 = arith.constant 0 : i32
    return %c0_i32, %c0_i32_0 : i32, i32
  }
  func.func @transform_3(%arg0: i32) -> (i32, i32) {
    %c0_i32 = arith.constant 0 : i32
    %c0_i32_0 = arith.constant 0 : i32
    %c0_i32_1 = arith.constant 0 : i32
    return %c0_i32, %c0_i32_0 : i32, i32
  }
  func.func @transform_4(%arg0: i32) -> (i32, i32) {
    %c0_i32 = arith.constant 0 : i32
    %c0_i32_0 = arith.constant 0 : i32
    %c0_i32_1 = arith.constant 0 : i32
    return %c0_i32, %c0_i32_0 : i32, i32
  }
  func.func @transform_5(%arg0: i32) -> (i32, i32) {
    %c0_i32 = arith.constant 0 : i32
    %c0_i32_0 = arith.constant 0 : i32
    %c0_i32_1 = arith.constant 0 : i32
    return %c0_i32, %c0_i32_0 : i32, i32
  }
  func.func @transform_6(%arg0: i32) -> (i32, i32) {
    %c0_i32 = arith.constant 0 : i32
    %c0_i32_0 = arith.constant 0 : i32
    %c0_i32_1 = arith.constant 0 : i32
    return %c0_i32, %c0_i32_0 : i32, i32
  }
  func.func @transform_7(%arg0: i32) -> (i32, i32) {
    %c0_i32 = arith.constant 0 : i32
    %c0_i32_0 = arith.constant 0 : i32
    return %arg0, %c0_i32 : i32, i32
  }
}

</mosaic_0001>

<llo_original>
// kernel: tpu_custom_call.1
$region0: #{tpu_custom_call.1}
  #allocation0 [shape = 'u32[]', space=smem, size = 0x4, offset = 0x4, fixed_abs, tag = 'smem constant byte address 0x4 - core index']
  #allocation1 [shape = 'u32[144,128]{1,0:T(1,128)}', space=vmem, size = 0x12000, scoped, tag = 'internal scratch']
  %s0 = inlined_call_operand.hbm [shape: f32[8,128], index: 0, kind: input, shape index: {}]
  %s1 = inlined_call_operand.hbm [shape: f32[16,128], index: 1, kind: output, shape index: {}]
  %s2 = sld [smem:[#allocation0]]
  $region41: #{tpu_custom_call.1} parent=0
    _
  %s4 = ssub.s32 1, %s2
  %s5 = scalar_select 0, %s4, %s2
  $region1: #{tpu_custom_call.1} parent=0
    #allocation2 [shape = 'u8[4096]{0}', space=vmem, size = 0x1000, scoped, tag = 'input window, operand 0, single buffered']
    #allocation3 [shape = 's32[2]{0}', space=sflag, size = 0x8, scoped, tag = 'scoped memory for tpu_custom_call.1']
    #allocation4 [shape = 's32[2]{0}', space=sflag, size = 0x8, scoped, tag = 'scoped memory for tpu_custom_call.1']
    #allocation5 [shape = 'u8[8192]{0}', space=vmem, size = 0x2000, scoped, tag = 'output window, operand 0']
    %6 = vsyncpa [#allocation3], 0
    %7 = vsyncpa [#allocation4], 0
    %s8 = scalar_lea.sflag [#allocation4], 1
    %9 = vsyncpa %s8, 0
    loop: start=0, step=1, limit=4
    $region2: #{tpu_custom_call.1} parent=1 // loop_pre_header
      _
    $region3: #{tpu_custom_call.1} parent=1 // loop_header
      %s11 = sphi 0, %s15
      %p12 = scmp.ge.s32.totalorder %s11, 4
      %s19 = sphi 0, %s19
      %s21 = sphi 0, %s19
      %s22 = sphi 0, %s21
      %s36 = sphi 0, %s22
      %s42 = sphi 0, %s44
      %s45 = sphi 0, %s42
      %s46 = sphi 0, %s45
      %s62 = sphi 0, %s46
    $region4: #{tpu_custom_call.1} parent=1 // loop_header_branch
      %14 = sbr.rel (%p12) target = $region8
    $region5: #{tpu_custom_call.1} parent=1 // loop_body
      %s16 = ssub.s32 %s11, 1
      %s17 = ssub.s32 %s11, 2
      %s18 = sadd.s32 %s11, 1
      %s20 = sadd.s32 %s19, 1
      %p23 = scmp.eq.s32.totalorder %s11, 1
      %p24 = scmp.ne.s32.totalorder %s19, %s21
      %p25 = scmp.eq.s32.totalorder %s11, 0
      %p26 = por %p24, %p25
      %p27 = scmp.ne.s32.totalorder %s19, %s21
      %p28 = scmp.eq.s32.totalorder %s16, 1
      %p29 = por %p27, %p28
      %p30 = scmp.ne.s32.totalorder %s21, %s22
      %p31 = scmp.eq.s32.totalorder %s16, 0
      %p32 = por %p30, %p31
      %p33 = scmp.ne.s32.totalorder %s21, %s22
      %p34 = scmp.eq.s32.totalorder %s17, 1
      %p35 = por %p33, %p34
      %p37 = scmp.ne.s32.totalorder %s22, %s36
      %p38 = scmp.eq.s32.totalorder %s17, 0
      %p39 = por %p37, %p38
      %s40 = ssub.s32 %s11, %s18
      %p41 = scmp.eq.s32.totalorder %s40, 0
      %s43 = sadd.s32 %s42, 1
      %s44 = scalar_select %p41, %s42, %s43
      %p47 = pneg %p41
      %p48 = scmp.eq.s32.totalorder %s11, 1
      %p49 = por %p47, %p48
      %p50 = scmp.ne.s32.totalorder %s42, %s45
      %p51 = scmp.eq.s32.totalorder %s11, 0
      %p52 = por %p50, %p51
      %p53 = scmp.ne.s32.totalorder %s42, %s45
      %p54 = scmp.eq.s32.totalorder %s16, 1
      %p55 = por %p53, %p54
      %p56 = scmp.ne.s32.totalorder %s45, %s46
      %p57 = scmp.eq.s32.totalorder %s16, 0
      %p58 = por %p56, %p57
      %p59 = scmp.ne.s32.totalorder %s45, %s46
      %p60 = scmp.eq.s32.totalorder %s17, 1
      %p61 = por %p59, %p60
      %p63 = scmp.ne.s32.totalorder %s46, %s62
      %p64 = scmp.eq.s32.totalorder %s17, 0
      %p65 = por %p63, %p64
      %p66 = scmp.le.s32.totalorder 1, %s11
      %p67 = scmp.lt.s32.totalorder %s11, 3
      %p68 = pnand %p66, %p67
      %p69 = pneg %p68
      // Predicated region
      $region9: #{tpu_custom_call.1} parent=5 // pred_check
        _
      $region10: #{tpu_custom_call.1} parent=5 // pred_check_branch
        %71 = sbr.rel (%p68) target = $region12
      $region11: #{tpu_custom_call.1} parent=5 // pred_region
        %s72 = ssub.s32 %s11, 1
        // Predicated region
        $region13: #{tpu_custom_call.1} parent=11 // pred_check
          %p73 = pneg %p32
        $region14: #{tpu_custom_call.1} parent=11 // pred_check_branch
          %75 = sbr.rel (%p73) target = $region16
        $region15: #{tpu_custom_call.1} parent=11 // pred_region
          %s77 = ssub.s32 128, 128
          %78 = vsyncadd [#allocation3], %s77
          %s80 = sshll.u32 [#allocation2], 4
          %s81 = int_to_ptr.vmem [resolvable:$true] %s80
          %83 = dma.hbm_to_vmem [thread:$0]  %s0, 128, %s81, [#allocation3]
        $region16: #{tpu_custom_call.1} parent=11 // pred_fallthru
          _
      $region12: #{tpu_custom_call.1} parent=5 // pred_fallthru
        _
      %p84 = scmp.lt.s32.totalorder %s11, 2
      // Predicated region
      $region17: #{tpu_custom_call.1} parent=5 // pred_check
        %p85 = pneg %p84
      $region18: #{tpu_custom_call.1} parent=5 // pred_check_branch
        %87 = sbr.rel (%p85) target = $region20
      $region19: #{tpu_custom_call.1} parent=5 // pred_region
        _
      $region20: #{tpu_custom_call.1} parent=5 // pred_fallthru
        _
      %p88 = scmp.le.s32.totalorder 1, %s11
      %p89 = scmp.lt.s32.totalorder %s11, 3
      %p90 = pnand %p88, %p89
      %p91 = pneg %p90
      // Predicated region
      $region21: #{tpu_custom_call.1} parent=5 // pred_check
        _
      $region22: #{tpu_custom_call.1} parent=5 // pred_check_branch
        %93 = sbr.rel (%p90) target = $region24
      $region23: #{tpu_custom_call.1} parent=5 // pred_region
        %s94 = ssub.s32 %s11, 1
        // Predicated region
        $region25: #{tpu_custom_call.1} parent=23 // pred_check
          %p95 = pneg %p32
        $region26: #{tpu_custom_call.1} parent=23 // pred_check_branch
          %97 = sbr.rel (%p95) target = $region28
        $region27: #{tpu_custom_call.1} parent=23 // pred_region
          %98 = dma.done [#allocation3], 128
        $region28: #{tpu_custom_call.1} parent=23 // pred_fallthru
          _
        %p99 = pneg %p32
        %p100 = pneg %p29
        %p101 = pneg %p58
        %p102 = pneg %p55
        %s103 = sand.u32 %s45, 1
        %s104 = scalar_lea.sflag [#allocation4], %s103
        %s105 = sand.u32 %s45, 1
        %s106 = smul.addr %s105, 8
        %s107 = scalar_lea.vmem [#allocation5], %s106
        %v108 = vld [vmem:[#allocation2] sm:$0xff]
        %109 = vst [vmem:[%s107] sm:$0xff] %v108
        %s110 = sand.u32 %s45, 1
        %s111 = scalar_lea.sflag [#allocation4], %s110
        %s112 = sand.u32 %s45, 1
        %s113 = smul.addr %s112, 8
        %s114 = scalar_lea.vmem [#allocation5], %s113
        // Predicated region
        $region29: #{tpu_custom_call.1} parent=23 // pred_check
          %p115 = pneg %p55
        $region30: #{tpu_custom_call.1} parent=23 // pred_check_branch
          %117 = sbr.rel (%p115) target = $region32
        $region31: #{tpu_custom_call.1} parent=23 // pred_region
          %s119 = ssub.s32 128, 128
          %120 = vsyncadd %s111, %s119
          %s121 = smul.addr %s16, 128
          %s122 = scalar_lea.hbm %s1, %s121
          %s124 = sshll.u32 %s114, 4
          %s125 = int_to_ptr.vmem [resolvable:$true] %s124
          %127 = dma.vmem_to_hbm [thread:$0]  %s125, 128, %s122, %s111
        $region32: #{tpu_custom_call.1} parent=23 // pred_fallthru
          _
      $region24: #{tpu_custom_call.1} parent=5 // pred_fallthru
        _
      %p128 = scmp.le.s32.totalorder 2, %s11
      // Predicated region
      $region33: #{tpu_custom_call.1} parent=5 // pred_check
        %p129 = pneg %p128
      $region34: #{tpu_custom_call.1} parent=5 // pred_check_branch
        %131 = sbr.rel (%p129) target = $region36
      $region35: #{tpu_custom_call.1} parent=5 // pred_region
        %s132 = ssub.s32 %s11, 2
        // Predicated region
        $region37: #{tpu_custom_call.1} parent=35 // pred_check
          %p133 = pneg %p61
        $region38: #{tpu_custom_call.1} parent=35 // pred_check_branch
          %135 = sbr.rel (%p133) target = $region40
        $region39: #{tpu_custom_call.1} parent=35 // pred_region
          %s136 = sand.u32 %s46, 1
          %s137 = scalar_lea.sflag [#allocation4], %s136
          %s138 = sand.u32 %s46, 1
          %s139 = smul.addr %s138, 8
          %s140 = scalar_lea.vmem [#allocation5], %s139
          %141 = dma.done %s137, 128
        $region40: #{tpu_custom_call.1} parent=35 // pred_fallthru
          _
      $region36: #{tpu_custom_call.1} parent=5 // pred_fallthru
        _
    $region6: #{tpu_custom_call.1} parent=1 // loop_footer
      %s15 = sadd.s32 1, %s11
    $region7: #{tpu_custom_call.1} parent=1 // loop_footer_branch
      %10 = sbr.rel target = $region3
    $region8: #{tpu_custom_call.1} parent=1 // loop_exit
      _
    %142 = vsyncpa [#allocation3], 1
    %s143 = scalar_lea.sflag [#allocation3], 1
    %144 = vsyncpa %s143, 1
    %145 = vsyncpa [#allocation4], 1
    %s146 = scalar_lea.sflag [#allocation4], 1
    %147 = vsyncpa %s146, 1

// kernel: forward_pipeline.1
$region0: #{forward_pipeline.1}
  #allocation0 [shape = 'u32[]', space=smem, size = 0x4, offset = 0x4, fixed_abs, tag = 'smem constant byte address 0x4 - core index']
  #allocation1 [shape = 'u32[144,128]{1,0:T(1,128)}', space=vmem, size = 0x12000, scoped, tag = 'internal scratch']
  %s0 = inlined_call_operand.vmem [shape: f32[8,6525], index: 0, kind: input, shape index: {}]
  %s1 = inlined_call_operand.vmem [shape: bf16[6525,300], index: 1, kind: input, shape index: {}]
  %s2 = inlined_call_operand.vmem [shape: f32[1,300], index: 2, kind: input, shape index: {}]
  %s3 = inlined_call_operand.vmem [shape: f32[300,128], index: 3, kind: input, shape index: {}]
  %s4 = inlined_call_operand.vmem [shape: f32[1,128], index: 4, kind: input, shape index: {}]
  %s5 = inlined_call_operand.vmem [shape: f32[128,128], index: 5, kind: input, shape index: {}]
  %s6 = inlined_call_operand.vmem [shape: f32[1,128], index: 6, kind: input, shape index: {}]
  %s7 = inlined_call_operand.vmem [shape: f32[8,128], index: 7, kind: output, shape index: {}]
  %s8 = sld [smem:[#allocation0]]
  $region38: #{forward_pipeline.1} parent=0
    _
  %s10 = ssub.s32 1, %s8
  %s11 = scalar_select 0, %s10, %s8
  // Predicated region
  $region2: #{forward_pipeline.1} parent=0 // pred_check
    _
  $region3: #{forward_pipeline.1} parent=0 // pred_check_branch
    %13 = sbr.rel (0) target = $region5
  $region4: #{forward_pipeline.1} parent=0 // pred_region
    _
  $region5: #{forward_pipeline.1} parent=0 // pred_fallthru
    _
  // Predicated region
  $region6: #{forward_pipeline.1} parent=0 // pred_check
    _
  $region7: #{forward_pipeline.1} parent=0 // pred_check_branch
    %15 = sbr.rel (0) target = $region9
  $region8: #{forward_pipeline.1} parent=0 // pred_region
    _
  $region9: #{forward_pipeline.1} parent=0 // pred_fallthru
    _
  // Predicated region
  $region10: #{forward_pipeline.1} parent=0 // pred_check
    _
  $region11: #{forward_pipeline.1} parent=0 // pred_check_branch
    %17 = sbr.rel (0) target = $region13
  $region12: #{forward_pipeline.1} parent=0 // pred_region
    _
  $region13: #{forward_pipeline.1} parent=0 // pred_fallthru
    _
  // Predicated region
  $region14: #{forward_pipeline.1} parent=0 // pred_check
    _
  $region15: #{forward_pipeline.1} parent=0 // pred_check_branch
    %19 = sbr.rel (0) target = $region17
  $region16: #{forward_pipeline.1} parent=0 // pred_region
    _
  $region17: #{forward_pipeline.1} parent=0 // pred_fallthru
    _
  // Predicated region
  $region18: #{forward_pipeline.1} parent=0 // pred_check
    _
  $region19: #{forward_pipeline.1} parent=0 // pred_check_branch
    %21 = sbr.rel (0) target = $region21
  $region20: #{forward_pipeline.1} parent=0 // pred_region
    _
  $region21: #{forward_pipeline.1} parent=0 // pred_fallthru
    _
  // Predicated region
  $region22: #{forward_pipeline.1} parent=0 // pred_check
    _
  $region23: #{forward_pipeline.1} parent=0 // pred_check_branch
    %23 = sbr.rel (0) target = $region25
  $region24: #{forward_pipeline.1} parent=0 // pred_region
    _
  $region25: #{forward_pipeline.1} parent=0 // pred_fallthru
    _
  // Predicated region
  $region26: #{forward_pipeline.1} parent=0 // pred_check
    _
  $region27: #{forward_pipeline.1} parent=0 // pred_check_branch
    %25 = sbr.rel (0) target = $region29
  $region28: #{forward_pipeline.1} parent=0 // pred_region
    _
  $region29: #{forward_pipeline.1} parent=0 // pred_fallthru
    _
  %v27 = vld [vmem:[%s0] sm:$0xff]
  %v28 = vld [vmem:[%s0 + $0x8] sm:$0xff]
  %v29 = vld [vmem:[%s0 + $0x10] sm:$0xff]
  %v30 = vld [vmem:[%s0 + $0x18] sm:$0xff]
  %v31 = vld [vmem:[%s0 + $0x20] sm:$0xff]
  %v32 = vld [vmem:[%s0 + $0x28] sm:$0xff]
  %v33 = vld [vmem:[%s0 + $0x30] sm:$0xff]
  %v34 = vld [vmem:[%s0 + $0x38] sm:$0xff]
  %v35 = vld [vmem:[%s0 + $0x40] sm:$0xff]
  %v36 = vld [vmem:[%s0 + $0x48] sm:$0xff]
  %v37 = vld [vmem:[%s0 + $0x50] sm:$0xff]
  %v38 = vld [vmem:[%s0 + $0x58] sm:$0xff]
  %v39 = vld [vmem:[%s0 + $0x60] sm:$0xff]
  %v40 = vld [vmem:[%s0 + $0x68] sm:$0xff]
  %v41 = vld [vmem:[%s0 + $0x70] sm:$0xff]
  %v42 = vld [vmem:[%s0 + $0x78] sm:$0xff]
  %v43 = vld [vmem:[%s0 + $0x80] sm:$0xff]
  %v44 = vld [vmem:[%s0 + $0x88] sm:$0xff]
  %v45 = vld [vmem:[%s0 + $0x90] sm:$0xff]
  %v46 = vld [vmem:[%s0 + $0x98] sm:$0xff]
  %v47 = vld [vmem:[%s0 + $0xa0] sm:$0xff]
  %v48 = vld [vmem:[%s0 + $0xa8] sm:$0xff]
  %v49 = vld [vmem:[%s0 + $0xb0] sm:$0xff]
  %v50 = vld [vmem:[%s0 + $0xb8] sm:$0xff]
  %v51 = vld [vmem:[%s0 + $0xc0] sm:$0xff]
  %v52 = vld [vmem:[%s0 + $0xc8] sm:$0xff]
  %v53 = vld [vmem:[%s0 + $0xd0] sm:$0xff]
  %v54 = vld [vmem:[%s0 + $0xd8] sm:$0xff]
  %v55 = vld [vmem:[%s0 + $0xe0] sm:$0xff]
  %v56 = vld [vmem:[%s0 + $0xe8] sm:$0xff]
  %v57 = vld [vmem:[%s0 + $0xf0] sm:$0xff]
  %v58 = vld [vmem:[%s0 + $0xf8] sm:$0xff]
  %v59 = vld [vmem:[%s0 + $0x100] sm:$0xff]
  %v60 = vld [vmem:[%s0 + $0x108] sm:$0xff]
  %v61 = vld [vmem:[%s0 + $0x110] sm:$0xff]
  %v62 = vld [vmem:[%s0 + $0x118] sm:$0xff]
  %v63 = vld [vmem:[%s0 + $0x120] sm:$0xff]
  %v64 = vld [vmem:[%s0 + $0x128] sm:$0xff]
  %v65 = vld [vmem:[%s0 + $0x130] sm:$0xff]
  %v66 = vld [vmem:[%s0 + $0x138] sm:$0xff]
  %v67 = vld [vmem:[%s0 + $0x140] sm:$0xff]
  %v68 = vld [vmem:[%s0 + $0x148] sm:$0xff]
  %v69 = vld [vmem:[%s0 + $0x150] sm:$0xff]
  %v70 = vld [vmem:[%s0 + $0x158] sm:$0xff]
  %v71 = vld [vmem:[%s0 + $0x160] sm:$0xff]
  %v72 = vld [vmem:[%s0 + $0x168] sm:$0xff]
  %v73 = vld [vmem:[%s0 + $0x170] sm:$0xff]
  %v74 = vld [vmem:[%s0 + $0x178] sm:$0xff]
  %v75 = vld [vmem:[%s0 + $0x180] sm:$0xff]
  %v76 = vld [vmem:[%s0 + $0x188] sm:$0xff]
  %v77 = vld [vmem:[%s0 + $0x190] sm:$0xff]
  %v78 = vpack.c.bf16 %v27, %v27
  %v79 = vpack.c.bf16 %v28, %v28
  %v80 = vpack.c.bf16 %v29, %v29
  %v81 = vpack.c.bf16 %v30, %v30
  %v82 = vpack.c.bf16 %v31, %v31
  %v83 = vpack.c.bf16 %v32, %v32
  %v84 = vpack.c.bf16 %v33, %v33
  %v85 = vpack.c.bf16 %v34, %v34
  %v86 = vpack.c.bf16 %v35, %v35
  %v87 = vpack.c.bf16 %v36, %v36
  %v88 = vpack.c.bf16 %v37, %v37
  %v89 = vpack.c.bf16 %v38, %v38
  %v90 = vpack.c.bf16 %v39, %v39
  %v91 = vpack.c.bf16 %v40, %v40
  %v92 = vpack.c.bf16 %v41, %v41
  %v93 = vpack.c.bf16 %v42, %v42
  %v94 = vpack.c.bf16 %v43, %v43
  %v95 = vpack.c.bf16 %v44, %v44
  %v96 = vpack.c.bf16 %v45, %v45
  %v97 = vpack.c.bf16 %v46, %v46
  %v98 = vpack.c.bf16 %v47, %v47
  %v99 = vpack.c.bf16 %v48, %v48
  %v100 = vpack.c.bf16 %v49, %v49
  %v101 = vpack.c.bf16 %v50, %v50
  %v102 = vpack.c.bf16 %v51, %v51
  %v103 = vpack.c.bf16 %v52, %v52
  %v104 = vpack.c.bf16 %v53, %v53
  %v105 = vpack.c.bf16 %v54, %v54
  %v106 = vpack.c.bf16 %v55, %v55
  %v107 = vpack.c.bf16 %v56, %v56
  %v108 = vpack.c.bf16 %v57, %v57
  %v109 = vpack.c.bf16 %v58, %v58
  %v110 = vpack.c.bf16 %v59, %v59
  %v111 = vpack.c.bf16 %v60, %v60
  %v112 = vpack.c.bf16 %v61, %v61
  %v113 = vpack.c.bf16 %v62, %v62
  %v114 = vpack.c.bf16 %v63, %v63
  %v115 = vpack.c.bf16 %v64, %v64
  %v116 = vpack.c.bf16 %v65, %v65
  %v117 = vpack.c.bf16 %v66, %v66
  %v118 = vpack.c.bf16 %v67, %v67
  %v119 = vpack.c.bf16 %v68, %v68
  %v120 = vpack.c.bf16 %v69, %v69
  %v121 = vpack.c.bf16 %v70, %v70
  %v122 = vpack.c.bf16 %v71, %v71
  %v123 = vpack.c.bf16 %v72, %v72
  %v124 = vpack.c.bf16 %v73, %v73
  %v125 = vpack.c.bf16 %v74, %v74
  %v126 = vpack.c.bf16 %v75, %v75
  %v127 = vpack.c.bf16 %v76, %v76
  %v128 = vpack.c.bf16 %v77, %v77
  %v129 = vld [vmem:[%s1] sm:$0xff]
  %v130 = vld [vmem:[%s1 + $0x8] sm:$0xf]
  %v131 = vld [vmem:[%s1 + $0xc] sm:$0xff]
  %v132 = vld [vmem:[%s1 + $0x14] sm:$0xf]
  %v133 = vld [vmem:[%s1 + $0x18] sm:$0xff]
  %v134 = vld [vmem:[%s1 + $0x20] sm:$0xf]
  %v135 = vld [vmem:[%s1 + $0x24] sm:$0xff]
  %v136 = vld [vmem:[%s1 + $0x2c] sm:$0xf]
  %v137 = vld [vmem:[%s1 + $0x30] sm:$0xff]
  %v138 = vld [vmem:[%s1 + $0x38] sm:$0xf]
  %v139 = vld [vmem:[%s1 + $0x3c] sm:$0xff]
  %v140 = vld [vmem:[%s1 + $0x44] sm:$0xf]
  %v141 = vld [vmem:[%s1 + $0x48] sm:$0xff]
  %v142 = vld [vmem:[%s1 + $0x50] sm:$0xf]
  %v143 = vld [vmem:[%s1 + $0x54] sm:$0xff]
  %v144 = vld [vmem:[%s1 + $0x5c] sm:$0xf]
  %v145 = vld [vmem:[%s1 + $0x60] sm:$0xff]
  %v146 = vld [vmem:[%s1 + $0x68] sm:$0xf]
  %v147 = vld [vmem:[%s1 + $0x6c] sm:$0xff]
  %v148 = vld [vmem:[%s1 + $0x74] sm:$0xf]
  %v149 = vld [vmem:[%s1 + $0x78] sm:$0xff]
  %v150 = vld [vmem:[%s1 + $0x80] sm:$0xf]
  %v151 = vld [vmem:[%s1 + $0x84] sm:$0xff]
  %v152 = vld [vmem:[%s1 + $0x8c] sm:$0xf]
  %v153 = vld [vmem:[%s1 + $0x90] sm:$0xff]
  %v154 = vld [vmem:[%s1 + $0x98] sm:$0xf]
  %v155 = vld [vmem:[%s1 + $0x9c] sm:$0xff]
  %v156 = vld [vmem:[%s1 + $0xa4] sm:$0xf]
  %v157 = vld [vmem:[%s1 + $0xa8] sm:$0xff]
  %v158 = vld [vmem:[%s1 + $0xb0] sm:$0xf]
  %v159 = vld [vmem:[%s1 + $0xb4] sm:$0xff]
  %v160 = vld [vmem:[%s1 + $0xbc] sm:$0xf]
  %v161 = vld [vmem:[%s1 + $0xc0] sm:$0xff]
  %v162 = vld [vmem:[%s1 + $0xc8] sm:$0xf]
  %v163 = vld [vmem:[%s1 + $0xcc] sm:$0xff]
  %v164 = vld [vmem:[%s1 + $0xd4] sm:$0xf]
  %v165 = vld [vmem:[%s1 + $0xd8] sm:$0xff]
  %v166 = vld [vmem:[%s1 + $0xe0] sm:$0xf]
  %v167 = vld [vmem:[%s1 + $0xe4] sm:$0xff]
  %v168 = vld [vmem:[%s1 + $0xec] sm:$0xf]
  %v169 = vld [vmem:[%s1 + $0xf0] sm:$0xff]
  %v170 = vld [vmem:[%s1 + $0xf8] sm:$0xf]
  %v171 = vld [vmem:[%s1 + $0xfc] sm:$0xff]
  %v172 = vld [vmem:[%s1 + $0x104] sm:$0xf]
  %v173 = vld [vmem:[%s1 + $0x108] sm:$0xff]
  %v174 = vld [vmem:[%s1 + $0x110] sm:$0xf]
  %v175 = vld [vmem:[%s1 + $0x114] sm:$0xff]
  %v176 = vld [vmem:[%s1 + $0x11c] sm:$0xf]
  %v177 = vld [vmem:[%s1 + $0x120] sm:$0xff]
  %v178 = vld [vmem:[%s1 + $0x128] sm:$0xf]
  %v179 = vld [vmem:[%s1 + $0x12c] sm:$0xff]
  %v180 = vld [vmem:[%s1 + $0x134] sm:$0xf]
  %v181 = vld [vmem:[%s1 + $0x138] sm:$0xff]
  %v182 = vld [vmem:[%s1 + $0x140] sm:$0xf]
  %v183 = vld [vmem:[%s1 + $0x144] sm:$0xff]
  %v184 = vld [vmem:[%s1 + $0x14c] sm:$0xf]
  %v185 = vld [vmem:[%s1 + $0x150] sm:$0xff]
  %v186 = vld [vmem:[%s1 + $0x158] sm:$0xf]
  %v187 = vld [vmem:[%s1 + $0x15c] sm:$0xff]
  %v188 = vld [vmem:[%s1 + $0x164] sm:$0xf]
  %v189 = vld [vmem:[%s1 + $0x168] sm:$0xff]
  %v190 = vld [vmem:[%s1 + $0x170] sm:$0xf]
  %v191 = vld [vmem:[%s1 + $0x174] sm:$0xff]
  %v192 = vld [vmem:[%s1 + $0x17c] sm:$0xf]
  %v193 = vld [vmem:[%s1 + $0x180] sm:$0xff]
  %v194 = vld [vmem:[%s1 + $0x188] sm:$0xf]
  %v195 = vld [vmem:[%s1 + $0x18c] sm:$0xff]
  %v196 = vld [vmem:[%s1 + $0x194] sm:$0xf]
  %v197 = vld [vmem:[%s1 + $0x198] sm:$0xff]
  %v198 = vld [vmem:[%s1 + $0x1a0] sm:$0xf]
  %v199 = vld [vmem:[%s1 + $0x1a4] sm:$0xff]
  %v200 = vld [vmem:[%s1 + $0x1ac] sm:$0xf]
  %v201 = vld [vmem:[%s1 + $0x1b0] sm:$0xff]
  %v202 = vld [vmem:[%s1 + $0x1b8] sm:$0xf]
  %v203 = vld [vmem:[%s1 + $0x1bc] sm:$0xff]
  %v204 = vld [vmem:[%s1 + $0x1c4] sm:$0xf]
  %v205 = vld [vmem:[%s1 + $0x1c8] sm:$0xff]
  %v206 = vld [vmem:[%s1 + $0x1d0] sm:$0xf]
  %v207 = vld [vmem:[%s1 + $0x1d4] sm:$0xff]
  %v208 = vld [vmem:[%s1 + $0x1dc] sm:$0xf]
  %v209 = vld [vmem:[%s1 + $0x1e0] sm:$0xff]
  %v210 = vld [vmem:[%s1 + $0x1e8] sm:$0xf]
  %v211 = vld [vmem:[%s1 + $0x1ec] sm:$0xff]
  %v212 = vld [vmem:[%s1 + $0x1f4] sm:$0xf]
  %v213 = vld [vmem:[%s1 + $0x1f8] sm:$0xff]
  %v214 = vld [vmem:[%s1 + $0x200] sm:$0xf]
  %v215 = vld [vmem:[%s1 + $0x204] sm:$0xff]
  %v216 = vld [vmem:[%s1 + $0x20c] sm:$0xf]
  %v217 = vld [vmem:[%s1 + $0x210] sm:$0xff]
  %v218 = vld [vmem:[%s1 + $0x218] sm:$0xf]
  %v219 = vld [vmem:[%s1 + $0x21c] sm:$0xff]
  %v220 = vld [vmem:[%s1 + $0x224] sm:$0xf]
  %v221 = vld [vmem:[%s1 + $0x228] sm:$0xff]
  %v222 = vld [vmem:[%s1 + $0x230] sm:$0xf]
  %v223 = vld [vmem:[%s1 + $0x234] sm:$0xff]
  %v224 = vld [vmem:[%s1 + $0x23c] sm:$0xf]
  %v225 = vld [vmem:[%s1 + $0x240] sm:$0xff]
  %v226 = vld [vmem:[%s1 + $0x248] sm:$0xf]
  %v227 = vld [vmem:[%s1 + $0x24c] sm:$0xff]
  %v228 = vld [vmem:[%s1 + $0x254] sm:$0xf]
  %v229 = vld [vmem:[%s1 + $0x258] sm:$0xff]
  %v230 = vld [vmem:[%s1 + $0x260] sm:$0xf]
  %v231 = vld [vmem:[%s1 + $0x264] sm:$0xff]
  %v232 = vld [vmem:[%s1 + $0x26c] sm:$0xf]
  %v233 = vld [vmem:[%s1 + $0x270] sm:$0xff]
  %v234 = vld [vmem:[%s1 + $0x278] sm:$0xf]
  %v235 = vld [vmem:[%s1 + $0x27c] sm:$0xff]
  %v236 = vld [vmem:[%s1 + $0x284] sm:$0xf]
  %v237 = vld [vmem:[%s1 + $0x288] sm:$0xff]
  %v238 = vld [vmem:[%s1 + $0x290] sm:$0xf]
  %v239 = vld [vmem:[%s1 + $0x294] sm:$0xff]
  %v240 = vld [vmem:[%s1 + $0x29c] sm:$0xf]
  %v241 = vld [vmem:[%s1 + $0x2a0] sm:$0xff]
  %v242 = vld [vmem:[%s1 + $0x2a8] sm:$0xf]
  %v243 = vld [vmem:[%s1 + $0x2ac] sm:$0xff]
  %v244 = vld [vmem:[%s1 + $0x2b4] sm:$0xf]
  %v245 = vld [vmem:[%s1 + $0x2b8] sm:$0xff]
  %v246 = vld [vmem:[%s1 + $0x2c0] sm:$0xf]
  %v247 = vld [vmem:[%s1 + $0x2c4] sm:$0xff]
  %v248 = vld [vmem:[%s1 + $0x2cc] sm:$0xf]
  %v249 = vld [vmem:[%s1 + $0x2d0] sm:$0xff]
  %v250 = vld [vmem:[%s1 + $0x2d8] sm:$0xf]
  %v251 = vld [vmem:[%s1 + $0x2dc] sm:$0xff]
  %v252 = vld [vmem:[%s1 + $0x2e4] sm:$0xf]
  %v253 = vld [vmem:[%s1 + $0x2e8] sm:$0xff]
  %v254 = vld [vmem:[%s1 + $0x2f0] sm:$0xf]
  %v255 = vld [vmem:[%s1 + $0x2f4] sm:$0xff]
  %v256 = vld [vmem:[%s1 + $0x2fc] sm:$0xf]
  %v257 = vld [vmem:[%s1 + $0x300] sm:$0xff]
  %v258 = vld [vmem:[%s1 + $0x308] sm:$0xf]
  %v259 = vld [vmem:[%s1 + $0x30c] sm:$0xff]
  %v260 = vld [vmem:[%s1 + $0x314] sm:$0xf]
  %v261 = vld [vmem:[%s1 + $0x318] sm:$0xff]
  %v262 = vld [vmem:[%s1 + $0x320] sm:$0xf]
  %v263 = vld [vmem:[%s1 + $0x324] sm:$0xff]
  %v264 = vld [vmem:[%s1 + $0x32c] sm:$0xf]
  %v265 = vld [vmem:[%s1 + $0x330] sm:$0xff]
  %v266 = vld [vmem:[%s1 + $0x338] sm:$0xf]
  %v267 = vld [vmem:[%s1 + $0x33c] sm:$0xff]
  %v268 = vld [vmem:[%s1 + $0x344] sm:$0xf]
  %v269 = vld [vmem:[%s1 + $0x348] sm:$0xff]
  %v270 = vld [vmem:[%s1 + $0x350] sm:$0xf]
  %v271 = vld [vmem:[%s1 + $0x354] sm:$0xff]
  %v272 = vld [vmem:[%s1 + $0x35c] sm:$0xf]
  %v273 = vld [vmem:[%s1 + $0x360] sm:$0xff]
  %v274 = vld [vmem:[%s1 + $0x368] sm:$0xf]
  %v275 = vld [vmem:[%s1 + $0x36c] sm:$0xff]
  %v276 = vld [vmem:[%s1 + $0x374] sm:$0xf]
  %v277 = vld [vmem:[%s1 + $0x378] sm:$0xff]
  %v278 = vld [vmem:[%s1 + $0x380] sm:$0xf]
  %v279 = vld [vmem:[%s1 + $0x384] sm:$0xff]
  %v280 = vld [vmem:[%s1 + $0x38c] sm:$0xf]
  %v281 = vld [vmem:[%s1 + $0x390] sm:$0xff]
  %v282 = vld [vmem:[%s1 + $0x398] sm:$0xf]
  %v283 = vld [vmem:[%s1 + $0x39c] sm:$0xff]
  %v284 = vld [vmem:[%s1 + $0x3a4] sm:$0xf]
  %v285 = vld [vmem:[%s1 + $0x3a8] sm:$0xff]
  %v286 = vld [vmem:[%s1 + $0x3b0] sm:$0xf]
  %v287 = vld [vmem:[%s1 + $0x3b4] sm:$0xff]
  %v288 = vld [vmem:[%s1 + $0x3bc] sm:$0xf]
  %v289 = vld [vmem:[%s1 + $0x3c0] sm:$0xff]
  %v290 = vld [vmem:[%s1 + $0x3c8] sm:$0xf]
  %v291 = vld [vmem:[%s1 + $0x3cc] sm:$0xff]
  %v292 = vld [vmem:[%s1 + $0x3d4] sm:$0xf]
  %v293 = vld [vmem:[%s1 + $0x3d8] sm:$0xff]
  %v294 = vld [vmem:[%s1 + $0x3e0] sm:$0xf]
  %v295 = vld [vmem:[%s1 + $0x3e4] sm:$0xff]
  %v296 = vld [vmem:[%s1 + $0x3ec] sm:$0xf]
  %v297 = vld [vmem:[%s1 + $0x3f0] sm:$0xff]
  %v298 = vld [vmem:[%s1 + $0x3f8] sm:$0xf]
  %v299 = vld [vmem:[%s1 + $0x3fc] sm:$0xff]
  %v300 = vld [vmem:[%s1 + $0x404] sm:$0xf]
  %v301 = vld [vmem:[%s1 + $0x408] sm:$0xff]
  %v302 = vld [vmem:[%s1 + $0x410] sm:$0xf]
  %v303 = vld [vmem:[%s1 + $0x414] sm:$0xff]
  %v304 = vld [vmem:[%s1 + $0x41c] sm:$0xf]
  %v305 = vld [vmem:[%s1 + $0x420] sm:$0xff]
  %v306 = vld [vmem:[%s1 + $0x428] sm:$0xf]
  %v307 = vld [vmem:[%s1 + $0x42c] sm:$0xff]
  %v308 = vld [vmem:[%s1 + $0x434] sm:$0xf]
  %v309 = vld [vmem:[%s1 + $0x438] sm:$0xff]
  %v310 = vld [vmem:[%s1 + $0x440] sm:$0xf]
  %v311 = vld [vmem:[%s1 + $0x444] sm:$0xff]
  %v312 = vld [vmem:[%s1 + $0x44c] sm:$0xf]
  %v313 = vld [vmem:[%s1 + $0x450] sm:$0xff]
  %v314 = vld [vmem:[%s1 + $0x458] sm:$0xf]
  %v315 = vld [vmem:[%s1 + $0x45c] sm:$0xff]
  %v316 = vld [vmem:[%s1 + $0x464] sm:$0xf]
  %v317 = vld [vmem:[%s1 + $0x468] sm:$0xff]
  %v318 = vld [vmem:[%s1 + $0x470] sm:$0xf]
  %v319 = vld [vmem:[%s1 + $0x474] sm:$0xff]
  %v320 = vld [vmem:[%s1 + $0x47c] sm:$0xf]
  %v321 = vld [vmem:[%s1 + $0x480] sm:$0xff]
  %v322 = vld [vmem:[%s1 + $0x488] sm:$0xf]
  %v323 = vld [vmem:[%s1 + $0x48c] sm:$0xff]
  %v324 = vld [vmem:[%s1 + $0x494] sm:$0xf]
  %v325 = vld [vmem:[%s1 + $0x498] sm:$0xff]
  %v326 = vld [vmem:[%s1 + $0x4a0] sm:$0xf]
  %v327 = vld [vmem:[%s1 + $0x4a4] sm:$0xff]
  %v328 = vld [vmem:[%s1 + $0x4ac] sm:$0xf]
  %v329 = vld [vmem:[%s1 + $0x4b0] sm:$0xff]
  %v330 = vld [vmem:[%s1 + $0x4b8] sm:$0xf]
  %v331 = vld [vmem:[%s1 + $0x4bc] sm:$0xff]
  %v332 = vld [vmem:[%s1 + $0x4c4] sm:$0xf]
  %v333 = vld [vmem:[%s1 + $0x4c8] sm:$0xff]
  %v334 = vld [vmem:[%s1 + $0x4d0] sm:$0xf]
  %v335 = vld [vmem:[%s1 + $0x4d4] sm:$0xff]
  %v336 = vld [vmem:[%s1 + $0x4dc] sm:$0xf]
  %v337 = vld [vmem:[%s1 + $0x4e0] sm:$0xff]
  %v338 = vld [vmem:[%s1 + $0x4e8] sm:$0xf]
  %v339 = vld [vmem:[%s1 + $0x4ec] sm:$0xff]
  %v340 = vld [vmem:[%s1 + $0x4f4] sm:$0xf]
  %v341 = vld [vmem:[%s1 + $0x4f8] sm:$0xff]
  %v342 = vld [vmem:[%s1 + $0x500] sm:$0xf]
  %v343 = vld [vmem:[%s1 + $0x504] sm:$0xff]
  %v344 = vld [vmem:[%s1 + $0x50c] sm:$0xf]
  %v345 = vld [vmem:[%s1 + $0x510] sm:$0xff]
  %v346 = vld [vmem:[%s1 + $0x518] sm:$0xf]
  %v347 = vld [vmem:[%s1 + $0x51c] sm:$0xff]
  %v348 = vld [vmem:[%s1 + $0x524] sm:$0xf]
  %v349 = vld [vmem:[%s1 + $0x528] sm:$0xff]
  %v350 = vld [vmem:[%s1 + $0x530] sm:$0xf]
  %v351 = vld [vmem:[%s1 + $0x534] sm:$0xff]
  %v352 = vld [vmem:[%s1 + $0x53c] sm:$0xf]
  %v353 = vld [vmem:[%s1 + $0x540] sm:$0xff]
  %v354 = vld [vmem:[%s1 + $0x548] sm:$0xf]
  %v355 = vld [vmem:[%s1 + $0x54c] sm:$0xff]
  %v356 = vld [vmem:[%s1 + $0x554] sm:$0xf]
  %v357 = vld [vmem:[%s1 + $0x558] sm:$0xff]
  %v358 = vld [vmem:[%s1 + $0x560] sm:$0xf]
  %v359 = vld [vmem:[%s1 + $0x564] sm:$0xff]
  %v360 = vld [vmem:[%s1 + $0x56c] sm:$0xf]
  %v361 = vld [vmem:[%s1 + $0x570] sm:$0xff]
  %v362 = vld [vmem:[%s1 + $0x578] sm:$0xf]
  %v363 = vld [vmem:[%s1 + $0x57c] sm:$0xff]
  %v364 = vld [vmem:[%s1 + $0x584] sm:$0xf]
  %v365 = vld [vmem:[%s1 + $0x588] sm:$0xff]
  %v366 = vld [vmem:[%s1 + $0x590] sm:$0xf]
  %v367 = vld [vmem:[%s1 + $0x594] sm:$0xff]
  %v368 = vld [vmem:[%s1 + $0x59c] sm:$0xf]
  %v369 = vld [vmem:[%s1 + $0x5a0] sm:$0xff]
  %v370 = vld [vmem:[%s1 + $0x5a8] sm:$0xf]
  %v371 = vld [vmem:[%s1 + $0x5ac] sm:$0xff]
  %v372 = vld [vmem:[%s1 + $0x5b4] sm:$0xf]
  %v373 = vld [vmem:[%s1 + $0x5b8] sm:$0xff]
  %v374 = vld [vmem:[%s1 + $0x5c0] sm:$0xf]
  %v375 = vld [vmem:[%s1 + $0x5c4] sm:$0xff]
  %v376 = vld [vmem:[%s1 + $0x5cc] sm:$0xf]
  %v377 = vld [vmem:[%s1 + $0x5d0] sm:$0xff]
  %v378 = vld [vmem:[%s1 + $0x5d8] sm:$0xf]
  %v379 = vld [vmem:[%s1 + $0x5dc] sm:$0xff]
  %v380 = vld [vmem:[%s1 + $0x5e4] sm:$0xf]
  %v381 = vld [vmem:[%s1 + $0x5e8] sm:$0xff]
  %v382 = vld [vmem:[%s1 + $0x5f0] sm:$0xf]
  %v383 = vld [vmem:[%s1 + $0x5f4] sm:$0xff]
  %v384 = vld [vmem:[%s1 + $0x5fc] sm:$0xf]
  %v385 = vld [vmem:[%s1 + $0x600] sm:$0xff]
  %v386 = vld [vmem:[%s1 + $0x608] sm:$0xf]
  %v387 = vld [vmem:[%s1 + $0x60c] sm:$0xff]
  %v388 = vld [vmem:[%s1 + $0x614] sm:$0xf]
  %v389 = vld [vmem:[%s1 + $0x618] sm:$0xff]
  %v390 = vld [vmem:[%s1 + $0x620] sm:$0xf]
  %v391 = vld [vmem:[%s1 + $0x624] sm:$0xff]
  %v392 = vld [vmem:[%s1 + $0x62c] sm:$0xf]
  %v393 = vld [vmem:[%s1 + $0x630] sm:$0xff]
  %v394 = vld [vmem:[%s1 + $0x638] sm:$0xf]
  %v395 = vld [vmem:[%s1 + $0x63c] sm:$0xff]
  %v396 = vld [vmem:[%s1 + $0x644] sm:$0xf]
  %v397 = vld [vmem:[%s1 + $0x648] sm:$0xff]
  %v398 = vld [vmem:[%s1 + $0x650] sm:$0xf]
  %v399 = vld [vmem:[%s1 + $0x654] sm:$0xff]
  %v400 = vld [vmem:[%s1 + $0x65c] sm:$0xf]
  %v401 = vld [vmem:[%s1 + $0x660] sm:$0xff]
  %v402 = vld [vmem:[%s1 + $0x668] sm:$0xf]
  %v403 = vld [vmem:[%s1 + $0x66c] sm:$0xff]
  %v404 = vld [vmem:[%s1 + $0x674] sm:$0xf]
  %v405 = vld [vmem:[%s1 + $0x678] sm:$0xff]
  %v406 = vld [vmem:[%s1 + $0x680] sm:$0xf]
  %v407 = vld [vmem:[%s1 + $0x684] sm:$0xff]
  %v408 = vld [vmem:[%s1 + $0x68c] sm:$0xf]
  %v409 = vld [vmem:[%s1 + $0x690] sm:$0xff]
  %v410 = vld [vmem:[%s1 + $0x698] sm:$0xf]
  %v411 = vld [vmem:[%s1 + $0x69c] sm:$0xff]
  %v412 = vld [vmem:[%s1 + $0x6a4] sm:$0xf]
  %v413 = vld [vmem:[%s1 + $0x6a8] sm:$0xff]
  %v414 = vld [vmem:[%s1 + $0x6b0] sm:$0xf]
  %v415 = vld [vmem:[%s1 + $0x6b4] sm:$0xff]
  %v416 = vld [vmem:[%s1 + $0x6bc] sm:$0xf]
  %v417 = vld [vmem:[%s1 + $0x6c0] sm:$0xff]
  %v418 = vld [vmem:[%s1 + $0x6c8] sm:$0xf]
  %v419 = vld [vmem:[%s1 + $0x6cc] sm:$0xff]
  %v420 = vld [vmem:[%s1 + $0x6d4] sm:$0xf]
  %v421 = vld [vmem:[%s1 + $0x6d8] sm:$0xff]
  %v422 = vld [vmem:[%s1 + $0x6e0] sm:$0xf]
  %v423 = vld [vmem:[%s1 + $0x6e4] sm:$0xff]
  %v424 = vld [vmem:[%s1 + $0x6ec] sm:$0xf]
  %v425 = vld [vmem:[%s1 + $0x6f0] sm:$0xff]
  %v426 = vld [vmem:[%s1 + $0x6f8] sm:$0xf]
  %v427 = vld [vmem:[%s1 + $0x6fc] sm:$0xff]
  %v428 = vld [vmem:[%s1 + $0x704] sm:$0xf]
  %v429 = vld [vmem:[%s1 + $0x708] sm:$0xff]
  %v430 = vld [vmem:[%s1 + $0x710] sm:$0xf]
  %v431 = vld [vmem:[%s1 + $0x714] sm:$0xff]
  %v432 = vld [vmem:[%s1 + $0x71c] sm:$0xf]
  %v433 = vld [vmem:[%s1 + $0x720] sm:$0xff]
  %v434 = vld [vmem:[%s1 + $0x728] sm:$0xf]
  %v435 = vld [vmem:[%s1 + $0x72c] sm:$0xff]
  %v436 = vld [vmem:[%s1 + $0x734] sm:$0xf]
  %v437 = vld [vmem:[%s1 + $0x738] sm:$0xff]
  %v438 = vld [vmem:[%s1 + $0x740] sm:$0xf]
  %v439 = vld [vmem:[%s1 + $0x744] sm:$0xff]
  %v440 = vld [vmem:[%s1 + $0x74c] sm:$0xf]
  %v441 = vld [vmem:[%s1 + $0x750] sm:$0xff]
  %v442 = vld [vmem:[%s1 + $0x758] sm:$0xf]
  %v443 = vld [vmem:[%s1 + $0x75c] sm:$0xff]
  %v444 = vld [vmem:[%s1 + $0x764] sm:$0xf]
  %v445 = vld [vmem:[%s1 + $0x768] sm:$0xff]
  %v446 = vld [vmem:[%s1 + $0x770] sm:$0xf]
  %v447 = vld [vmem:[%s1 + $0x774] sm:$0xff]
  %v448 = vld [vmem:[%s1 + $0x77c] sm:$0xf]
  %v449 = vld [vmem:[%s1 + $0x780] sm:$0xff]
  %v450 = vld [vmem:[%s1 + $0x788] sm:$0xf]
  %v451 = vld [vmem:[%s1 + $0x78c] sm:$0xff]
  %v452 = vld [vmem:[%s1 + $0x794] sm:$0xf]
  %v453 = vld [vmem:[%s1 + $0x798] sm:$0xff]
  %v454 = vld [vmem:[%s1 + $0x7a0] sm:$0xf]
  %v455 = vld [vmem:[%s1 + $0x7a4] sm:$0xff]
  %v456 = vld [vmem:[%s1 + $0x7ac] sm:$0xf]
  %v457 = vld [vmem:[%s1 + $0x7b0] sm:$0xff]
  %v458 = vld [vmem:[%s1 + $0x7b8] sm:$0xf]
  %v459 = vld [vmem:[%s1 + $0x7bc] sm:$0xff]
  %v460 = vld [vmem:[%s1 + $0x7c4] sm:$0xf]
  %v461 = vld [vmem:[%s1 + $0x7c8] sm:$0xff]
  %v462 = vld [vmem:[%s1 + $0x7d0] sm:$0xf]
  %v463 = vld [vmem:[%s1 + $0x7d4] sm:$0xff]
  %v464 = vld [vmem:[%s1 + $0x7dc] sm:$0xf]
  %v465 = vld [vmem:[%s1 + $0x7e0] sm:$0xff]
  %v466 = vld [vmem:[%s1 + $0x7e8] sm:$0xf]
  %v467 = vld [vmem:[%s1 + $0x7ec] sm:$0xff]
  %v468 = vld [vmem:[%s1 + $0x7f4] sm:$0xf]
  %v469 = vld [vmem:[%s1 + $0x7f8] sm:$0xff]
  %v470 = vld [vmem:[%s1 + $0x800] sm:$0xf]
  %v471 = vld [vmem:[%s1 + $0x804] sm:$0xff]
  %v472 = vld [vmem:[%s1 + $0x80c] sm:$0xf]
  %v473 = vld [vmem:[%s1 + $0x810] sm:$0xff]
  %v474 = vld [vmem:[%s1 + $0x818] sm:$0xf]
  %v475 = vld [vmem:[%s1 + $0x81c] sm:$0xff]
  %v476 = vld [vmem:[%s1 + $0x824] sm:$0xf]
  %v477 = vld [vmem:[%s1 + $0x828] sm:$0xff]
  %v478 = vld [vmem:[%s1 + $0x830] sm:$0xf]
  %v479 = vld [vmem:[%s1 + $0x834] sm:$0xff]
  %v480 = vld [vmem:[%s1 + $0x83c] sm:$0xf]
  %v481 = vld [vmem:[%s1 + $0x840] sm:$0xff]
  %v482 = vld [vmem:[%s1 + $0x848] sm:$0xf]
  %v483 = vld [vmem:[%s1 + $0x84c] sm:$0xff]
  %v484 = vld [vmem:[%s1 + $0x854] sm:$0xf]
  %v485 = vld [vmem:[%s1 + $0x858] sm:$0xff]
  %v486 = vld [vmem:[%s1 + $0x860] sm:$0xf]
  %v487 = vld [vmem:[%s1 + $0x864] sm:$0xff]
  %v488 = vld [vmem:[%s1 + $0x86c] sm:$0xf]
  %v489 = vld [vmem:[%s1 + $0x870] sm:$0xff]
  %v490 = vld [vmem:[%s1 + $0x878] sm:$0xf]
  %v491 = vld [vmem:[%s1 + $0x87c] sm:$0xff]
  %v492 = vld [vmem:[%s1 + $0x884] sm:$0xf]
  %v493 = vld [vmem:[%s1 + $0x888] sm:$0xff]
  %v494 = vld [vmem:[%s1 + $0x890] sm:$0xf]
  %v495 = vld [vmem:[%s1 + $0x894] sm:$0xff]
  %v496 = vld [vmem:[%s1 + $0x89c] sm:$0xf]
  %v497 = vld [vmem:[%s1 + $0x8a0] sm:$0xff]
  %v498 = vld [vmem:[%s1 + $0x8a8] sm:$0xf]
  %v499 = vld [vmem:[%s1 + $0x8ac] sm:$0xff]
  %v500 = vld [vmem:[%s1 + $0x8b4] sm:$0xf]
  %v501 = vld [vmem:[%s1 + $0x8b8] sm:$0xff]
  %v502 = vld [vmem:[%s1 + $0x8c0] sm:$0xf]
  %v503 = vld [vmem:[%s1 + $0x8c4] sm:$0xff]
  %v504 = vld [vmem:[%s1 + $0x8cc] sm:$0xf]
  %v505 = vld [vmem:[%s1 + $0x8d0] sm:$0xff]
  %v506 = vld [vmem:[%s1 + $0x8d8] sm:$0xf]
  %v507 = vld [vmem:[%s1 + $0x8dc] sm:$0xff]
  %v508 = vld [vmem:[%s1 + $0x8e4] sm:$0xf]
  %v509 = vld [vmem:[%s1 + $0x8e8] sm:$0xff]
  %v510 = vld [vmem:[%s1 + $0x8f0] sm:$0xf]
  %v511 = vld [vmem:[%s1 + $0x8f4] sm:$0xff]
  %v512 = vld [vmem:[%s1 + $0x8fc] sm:$0xf]
  %v513 = vld [vmem:[%s1 + $0x900] sm:$0xff]
  %v514 = vld [vmem:[%s1 + $0x908] sm:$0xf]
  %v515 = vld [vmem:[%s1 + $0x90c] sm:$0xff]
  %v516 = vld [vmem:[%s1 + $0x914] sm:$0xf]
  %v517 = vld [vmem:[%s1 + $0x918] sm:$0xff]
  %v518 = vld [vmem:[%s1 + $0x920] sm:$0xf]
  %v519 = vld [vmem:[%s1 + $0x924] sm:$0xff]
  %v520 = vld [vmem:[%s1 + $0x92c] sm:$0xf]
  %v521 = vld [vmem:[%s1 + $0x930] sm:$0xff]
  %v522 = vld [vmem:[%s1 + $0x938] sm:$0xf]
  %v523 = vld [vmem:[%s1 + $0x93c] sm:$0xff]
  %v524 = vld [vmem:[%s1 + $0x944] sm:$0xf]
  %v525 = vld [vmem:[%s1 + $0x948] sm:$0xff]
  %v526 = vld [vmem:[%s1 + $0x950] sm:$0xf]
  %v527 = vld [vmem:[%s1 + $0x954] sm:$0xff]
  %v528 = vld [vmem:[%s1 + $0x95c] sm:$0xf]
  %v529 = vld [vmem:[%s1 + $0x960] sm:$0xff]
  %v530 = vld [vmem:[%s1 + $0x968] sm:$0xf]
  %v531 = vld [vmem:[%s1 + $0x96c] sm:$0xff]
  %v532 = vld [vmem:[%s1 + $0x974] sm:$0xf]
  %v533 = vld [vmem:[%s1 + $0x978] sm:$0xff]
  %v534 = vld [vmem:[%s1 + $0x980] sm:$0xf]
  %v535 = vld [vmem:[%s1 + $0x984] sm:$0xff]
  %v536 = vld [vmem:[%s1 + $0x98c] sm:$0xf]
  %v537 = vld [vmem:[%s1 + $0x990] sm:$0xff]
  %v538 = vld [vmem:[%s1 + $0x998] sm:$0xf]
  %v539 = vld [vmem:[%s1 + $0x99c] sm:$0xff]
  %v540 = vld [vmem:[%s1 + $0x9a4] sm:$0xf]
  %v541 = vld [vmem:[%s1 + $0x9a8] sm:$0xff]
  %v542 = vld [vmem:[%s1 + $0x9b0] sm:$0xf]
  %v543 = vld [vmem:[%s1 + $0x9b4] sm:$0xff]
  %v544 = vld [vmem:[%s1 + $0x9bc] sm:$0xf]
  %v545 = vld [vmem:[%s1 + $0x9c0] sm:$0xff]
  %v546 = vld [vmem:[%s1 + $0x9c8] sm:$0xf]
  %v547 = vld [vmem:[%s1 + $0x9cc] sm:$0xff]
  %v548 = vld [vmem:[%s1 + $0x9d4] sm:$0xf]
  %v549 = vld [vmem:[%s1 + $0x9d8] sm:$0xff]
  %v550 = vld [vmem:[%s1 + $0x9e0] sm:$0xf]
  %v551 = vld [vmem:[%s1 + $0x9e4] sm:$0xff]
  %v552 = vld [vmem:[%s1 + $0x9ec] sm:$0xf]
  %v553 = vld [vmem:[%s1 + $0x9f0] sm:$0xff]
  %v554 = vld [vmem:[%s1 + $0x9f8] sm:$0xf]
  %v555 = vld [vmem:[%s1 + $0x9fc] sm:$0xff]
  %v556 = vld [vmem:[%s1 + $0xa04] sm:$0xf]
  %v557 = vld [vmem:[%s1 + $0xa08] sm:$0xff]
  %v558 = vld [vmem:[%s1 + $0xa10] sm:$0xf]
  %v559 = vld [vmem:[%s1 + $0xa14] sm:$0xff]
  %v560 = vld [vmem:[%s1 + $0xa1c] sm:$0xf]
  %v561 = vld [vmem:[%s1 + $0xa20] sm:$0xff]
  %v562 = vld [vmem:[%s1 + $0xa28] sm:$0xf]
  %v563 = vld [vmem:[%s1 + $0xa2c] sm:$0xff]
  %v564 = vld [vmem:[%s1 + $0xa34] sm:$0xf]
  %v565 = vld [vmem:[%s1 + $0xa38] sm:$0xff]
  %v566 = vld [vmem:[%s1 + $0xa40] sm:$0xf]
  %v567 = vld [vmem:[%s1 + $0xa44] sm:$0xff]
  %v568 = vld [vmem:[%s1 + $0xa4c] sm:$0xf]
  %v569 = vld [vmem:[%s1 + $0xa50] sm:$0xff]
  %v570 = vld [vmem:[%s1 + $0xa58] sm:$0xf]
  %v571 = vld [vmem:[%s1 + $0xa5c] sm:$0xff]
  %v572 = vld [vmem:[%s1 + $0xa64] sm:$0xf]
  %v573 = vld [vmem:[%s1 + $0xa68] sm:$0xff]
  %v574 = vld [vmem:[%s1 + $0xa70] sm:$0xf]
  %v575 = vld [vmem:[%s1 + $0xa74] sm:$0xff]
  %v576 = vld [vmem:[%s1 + $0xa7c] sm:$0xf]
  %v577 = vld [vmem:[%s1 + $0xa80] sm:$0xff]
  %v578 = vld [vmem:[%s1 + $0xa88] sm:$0xf]
  %v579 = vld [vmem:[%s1 + $0xa8c] sm:$0xff]
  %v580 = vld [vmem:[%s1 + $0xa94] sm:$0xf]
  %v581 = vld [vmem:[%s1 + $0xa98] sm:$0xff]
  %v582 = vld [vmem:[%s1 + $0xaa0] sm:$0xf]
  %v583 = vld [vmem:[%s1 + $0xaa4] sm:$0xff]
  %v584 = vld [vmem:[%s1 + $0xaac] sm:$0xf]
  %v585 = vld [vmem:[%s1 + $0xab0] sm:$0xff]
  %v586 = vld [vmem:[%s1 + $0xab8] sm:$0xf]
  %v587 = vld [vmem:[%s1 + $0xabc] sm:$0xff]
  %v588 = vld [vmem:[%s1 + $0xac4] sm:$0xf]
  %v589 = vld [vmem:[%s1 + $0xac8] sm:$0xff]
  %v590 = vld [vmem:[%s1 + $0xad0] sm:$0xf]
  %v591 = vld [vmem:[%s1 + $0xad4] sm:$0xff]
  %v592 = vld [vmem:[%s1 + $0xadc] sm:$0xf]
  %v593 = vld [vmem:[%s1 + $0xae0] sm:$0xff]
  %v594 = vld [vmem:[%s1 + $0xae8] sm:$0xf]
  %v595 = vld [vmem:[%s1 + $0xaec] sm:$0xff]
  %v596 = vld [vmem:[%s1 + $0xaf4] sm:$0xf]
  %v597 = vld [vmem:[%s1 + $0xaf8] sm:$0xff]
  %v598 = vld [vmem:[%s1 + $0xb00] sm:$0xf]
  %v599 = vld [vmem:[%s1 + $0xb04] sm:$0xff]
  %v600 = vld [vmem:[%s1 + $0xb0c] sm:$0xf]
  %v601 = vld [vmem:[%s1 + $0xb10] sm:$0xff]
  %v602 = vld [vmem:[%s1 + $0xb18] sm:$0xf]
  %v603 = vld [vmem:[%s1 + $0xb1c] sm:$0xff]
  %v604 = vld [vmem:[%s1 + $0xb24] sm:$0xf]
  %v605 = vld [vmem:[%s1 + $0xb28] sm:$0xff]
  %v606 = vld [vmem:[%s1 + $0xb30] sm:$0xf]
  %v607 = vld [vmem:[%s1 + $0xb34] sm:$0xff]
  %v608 = vld [vmem:[%s1 + $0xb3c] sm:$0xf]
  %v609 = vld [vmem:[%s1 + $0xb40] sm:$0xff]
  %v610 = vld [vmem:[%s1 + $0xb48] sm:$0xf]
  %v611 = vld [vmem:[%s1 + $0xb4c] sm:$0xff]
  %v612 = vld [vmem:[%s1 + $0xb54] sm:$0xf]
  %v613 = vld [vmem:[%s1 + $0xb58] sm:$0xff]
  %v614 = vld [vmem:[%s1 + $0xb60] sm:$0xf]
  %v615 = vld [vmem:[%s1 + $0xb64] sm:$0xff]
  %v616 = vld [vmem:[%s1 + $0xb6c] sm:$0xf]
  %v617 = vld [vmem:[%s1 + $0xb70] sm:$0xff]
  %v618 = vld [vmem:[%s1 + $0xb78] sm:$0xf]
  %v619 = vld [vmem:[%s1 + $0xb7c] sm:$0xff]
  %v620 = vld [vmem:[%s1 + $0xb84] sm:$0xf]
  %v621 = vld [vmem:[%s1 + $0xb88] sm:$0xff]
  %v622 = vld [vmem:[%s1 + $0xb90] sm:$0xf]
  %v623 = vld [vmem:[%s1 + $0xb94] sm:$0xff]
  %v624 = vld [vmem:[%s1 + $0xb9c] sm:$0xf]
  %v625 = vld [vmem:[%s1 + $0xba0] sm:$0xff]
  %v626 = vld [vmem:[%s1 + $0xba8] sm:$0xf]
  %v627 = vld [vmem:[%s1 + $0xbac] sm:$0xff]
  %v628 = vld [vmem:[%s1 + $0xbb4] sm:$0xf]
  %v629 = vld [vmem:[%s1 + $0xbb8] sm:$0xff]
  %v630 = vld [vmem:[%s1 + $0xbc0] sm:$0xf]
  %v631 = vld [vmem:[%s1 + $0xbc4] sm:$0xff]
  %v632 = vld [vmem:[%s1 + $0xbcc] sm:$0xf]
  %v633 = vld [vmem:[%s1 + $0xbd0] sm:$0xff]
  %v634 = vld [vmem:[%s1 + $0xbd8] sm:$0xf]
  %v635 = vld [vmem:[%s1 + $0xbdc] sm:$0xff]
  %v636 = vld [vmem:[%s1 + $0xbe4] sm:$0xf]
  %v637 = vld [vmem:[%s1 + $0xbe8] sm:$0xff]
  %v638 = vld [vmem:[%s1 + $0xbf0] sm:$0xf]
  %v639 = vld [vmem:[%s1 + $0xbf4] sm:$0xff]
  %v640 = vld [vmem:[%s1 + $0xbfc] sm:$0xf]
  %v641 = vld [vmem:[%s1 + $0xc00] sm:$0xff]
  %v642 = vld [vmem:[%s1 + $0xc08] sm:$0xf]
  %v643 = vld [vmem:[%s1 + $0xc0c] sm:$0xff]
  %v644 = vld [vmem:[%s1 + $0xc14] sm:$0xf]
  %v645 = vld [vmem:[%s1 + $0xc18] sm:$0xff]
  %v646 = vld [vmem:[%s1 + $0xc20] sm:$0xf]
  %v647 = vld [vmem:[%s1 + $0xc24] sm:$0xff]
  %v648 = vld [vmem:[%s1 + $0xc2c] sm:$0xf]
  %v649 = vld [vmem:[%s1 + $0xc30] sm:$0xff]
  %v650 = vld [vmem:[%s1 + $0xc38] sm:$0xf]
  %v651 = vld [vmem:[%s1 + $0xc3c] sm:$0xff]
  %v652 = vld [vmem:[%s1 + $0xc44] sm:$0xf]
  %v653 = vld [vmem:[%s1 + $0xc48] sm:$0xff]
  %v654 = vld [vmem:[%s1 + $0xc50] sm:$0xf]
  %v655 = vld [vmem:[%s1 + $0xc54] sm:$0xff]
  %v656 = vld [vmem:[%s1 + $0xc5c] sm:$0xf]
  %v657 = vld [vmem:[%s1 + $0xc60] sm:$0xff]
  %v658 = vld [vmem:[%s1 + $0xc68] sm:$0xf]
  %v659 = vld [vmem:[%s1 + $0xc6c] sm:$0xff]
  %v660 = vld [vmem:[%s1 + $0xc74] sm:$0xf]
  %v661 = vld [vmem:[%s1 + $0xc78] sm:$0xff]
  %v662 = vld [vmem:[%s1 + $0xc80] sm:$0xf]
  %v663 = vld [vmem:[%s1 + $0xc84] sm:$0xff]
  %v664 = vld [vmem:[%s1 + $0xc8c] sm:$0xf]
  %v665 = vld [vmem:[%s1 + $0xc90] sm:$0xff]
  %v666 = vld [vmem:[%s1 + $0xc98] sm:$0xf]
  %v667 = vld [vmem:[%s1 + $0xc9c] sm:$0xff]
  %v668 = vld [vmem:[%s1 + $0xca4] sm:$0xf]
  %v669 = vld [vmem:[%s1 + $0xca8] sm:$0xff]
  %v670 = vld [vmem:[%s1 + $0xcb0] sm:$0xf]
  %v671 = vld [vmem:[%s1 + $0xcb4] sm:$0xff]
  %v672 = vld [vmem:[%s1 + $0xcbc] sm:$0xf]
  %v673 = vld [vmem:[%s1 + $0xcc0] sm:$0xff]
  %v674 = vld [vmem:[%s1 + $0xcc8] sm:$0xf]
  %v675 = vld [vmem:[%s1 + $0xccc] sm:$0xff]
  %v676 = vld [vmem:[%s1 + $0xcd4] sm:$0xf]
  %v677 = vld [vmem:[%s1 + $0xcd8] sm:$0xff]
  %v678 = vld [vmem:[%s1 + $0xce0] sm:$0xf]
  %v679 = vld [vmem:[%s1 + $0xce4] sm:$0xff]
  %v680 = vld [vmem:[%s1 + $0xcec] sm:$0xf]
  %v681 = vld [vmem:[%s1 + $0xcf0] sm:$0xff]
  %v682 = vld [vmem:[%s1 + $0xcf8] sm:$0xf]
  %v683 = vld [vmem:[%s1 + $0xcfc] sm:$0xff]
  %v684 = vld [vmem:[%s1 + $0xd04] sm:$0xf]
  %v685 = vld [vmem:[%s1 + $0xd08] sm:$0xff]
  %v686 = vld [vmem:[%s1 + $0xd10] sm:$0xf]
  %v687 = vld [vmem:[%s1 + $0xd14] sm:$0xff]
  %v688 = vld [vmem:[%s1 + $0xd1c] sm:$0xf]
  %v689 = vld [vmem:[%s1 + $0xd20] sm:$0xff]
  %v690 = vld [vmem:[%s1 + $0xd28] sm:$0xf]
  %v691 = vld [vmem:[%s1 + $0xd2c] sm:$0xff]
  %v692 = vld [vmem:[%s1 + $0xd34] sm:$0xf]
  %v693 = vld [vmem:[%s1 + $0xd38] sm:$0xff]
  %v694 = vld [vmem:[%s1 + $0xd40] sm:$0xf]
  %v695 = vld [vmem:[%s1 + $0xd44] sm:$0xff]
  %v696 = vld [vmem:[%s1 + $0xd4c] sm:$0xf]
  %v697 = vld [vmem:[%s1 + $0xd50] sm:$0xff]
  %v698 = vld [vmem:[%s1 + $0xd58] sm:$0xf]
  %v699 = vld [vmem:[%s1 + $0xd5c] sm:$0xff]
  %v700 = vld [vmem:[%s1 + $0xd64] sm:$0xf]
  %v701 = vld [vmem:[%s1 + $0xd68] sm:$0xff]
  %v702 = vld [vmem:[%s1 + $0xd70] sm:$0xf]
  %v703 = vld [vmem:[%s1 + $0xd74] sm:$0xff]
  %v704 = vld [vmem:[%s1 + $0xd7c] sm:$0xf]
  %v705 = vld [vmem:[%s1 + $0xd80] sm:$0xff]
  %v706 = vld [vmem:[%s1 + $0xd88] sm:$0xf]
  %v707 = vld [vmem:[%s1 + $0xd8c] sm:$0xff]
  %v708 = vld [vmem:[%s1 + $0xd94] sm:$0xf]
  %v709 = vld [vmem:[%s1 + $0xd98] sm:$0xff]
  %v710 = vld [vmem:[%s1 + $0xda0] sm:$0xf]
  %v711 = vld [vmem:[%s1 + $0xda4] sm:$0xff]
  %v712 = vld [vmem:[%s1 + $0xdac] sm:$0xf]
  %v713 = vld [vmem:[%s1 + $0xdb0] sm:$0xff]
  %v714 = vld [vmem:[%s1 + $0xdb8] sm:$0xf]
  %v715 = vld [vmem:[%s1 + $0xdbc] sm:$0xff]
  %v716 = vld [vmem:[%s1 + $0xdc4] sm:$0xf]
  %v717 = vld [vmem:[%s1 + $0xdc8] sm:$0xff]
  %v718 = vld [vmem:[%s1 + $0xdd0] sm:$0xf]
  %v719 = vld [vmem:[%s1 + $0xdd4] sm:$0xff]
  %v720 = vld [vmem:[%s1 + $0xddc] sm:$0xf]
  %v721 = vld [vmem:[%s1 + $0xde0] sm:$0xff]
  %v722 = vld [vmem:[%s1 + $0xde8] sm:$0xf]
  %v723 = vld [vmem:[%s1 + $0xdec] sm:$0xff]
  %v724 = vld [vmem:[%s1 + $0xdf4] sm:$0xf]
  %v725 = vld [vmem:[%s1 + $0xdf8] sm:$0xff]
  %v726 = vld [vmem:[%s1 + $0xe00] sm:$0xf]
  %v727 = vld [vmem:[%s1 + $0xe04] sm:$0xff]
  %v728 = vld [vmem:[%s1 + $0xe0c] sm:$0xf]
  %v729 = vld [vmem:[%s1 + $0xe10] sm:$0xff]
  %v730 = vld [vmem:[%s1 + $0xe18] sm:$0xf]
  %v731 = vld [vmem:[%s1 + $0xe1c] sm:$0xff]
  %v732 = vld [vmem:[%s1 + $0xe24] sm:$0xf]
  %v733 = vld [vmem:[%s1 + $0xe28] sm:$0xff]
  %v734 = vld [vmem:[%s1 + $0xe30] sm:$0xf]
  %v735 = vld [vmem:[%s1 + $0xe34] sm:$0xff]
  %v736 = vld [vmem:[%s1 + $0xe3c] sm:$0xf]
  %v737 = vld [vmem:[%s1 + $0xe40] sm:$0xff]
  %v738 = vld [vmem:[%s1 + $0xe48] sm:$0xf]
  %v739 = vld [vmem:[%s1 + $0xe4c] sm:$0xff]
  %v740 = vld [vmem:[%s1 + $0xe54] sm:$0xf]
  %v741 = vld [vmem:[%s1 + $0xe58] sm:$0xff]
  %v742 = vld [vmem:[%s1 + $0xe60] sm:$0xf]
  %v743 = vld [vmem:[%s1 + $0xe64] sm:$0xff]
  %v744 = vld [vmem:[%s1 + $0xe6c] sm:$0xf]
  %v745 = vld [vmem:[%s1 + $0xe70] sm:$0xff]
  %v746 = vld [vmem:[%s1 + $0xe78] sm:$0xf]
  %v747 = vld [vmem:[%s1 + $0xe7c] sm:$0xff]
  %v748 = vld [vmem:[%s1 + $0xe84] sm:$0xf]
  %v749 = vld [vmem:[%s1 + $0xe88] sm:$0xff]
  %v750 = vld [vmem:[%s1 + $0xe90] sm:$0xf]
  %v751 = vld [vmem:[%s1 + $0xe94] sm:$0xff]
  %v752 = vld [vmem:[%s1 + $0xe9c] sm:$0xf]
  %v753 = vld [vmem:[%s1 + $0xea0] sm:$0xff]
  %v754 = vld [vmem:[%s1 + $0xea8] sm:$0xf]
  %v755 = vld [vmem:[%s1 + $0xeac] sm:$0xff]
  %v756 = vld [vmem:[%s1 + $0xeb4] sm:$0xf]
  %v757 = vld [vmem:[%s1 + $0xeb8] sm:$0xff]
  %v758 = vld [vmem:[%s1 + $0xec0] sm:$0xf]
  %v759 = vld [vmem:[%s1 + $0xec4] sm:$0xff]
  %v760 = vld [vmem:[%s1 + $0xecc] sm:$0xf]
  %v761 = vld [vmem:[%s1 + $0xed0] sm:$0xff]
  %v762 = vld [vmem:[%s1 + $0xed8] sm:$0xf]
  %v763 = vld [vmem:[%s1 + $0xedc] sm:$0xff]
  %v764 = vld [vmem:[%s1 + $0xee4] sm:$0xf]
  %v765 = vld [vmem:[%s1 + $0xee8] sm:$0xff]
  %v766 = vld [vmem:[%s1 + $0xef0] sm:$0xf]
  %v767 = vld [vmem:[%s1 + $0xef4] sm:$0xff]
  %v768 = vld [vmem:[%s1 + $0xefc] sm:$0xf]
  %v769 = vld [vmem:[%s1 + $0xf00] sm:$0xff]
  %v770 = vld [vmem:[%s1 + $0xf08] sm:$0xf]
  %v771 = vld [vmem:[%s1 + $0xf0c] sm:$0xff]
  %v772 = vld [vmem:[%s1 + $0xf14] sm:$0xf]
  %v773 = vld [vmem:[%s1 + $0xf18] sm:$0xff]
  %v774 = vld [vmem:[%s1 + $0xf20] sm:$0xf]
  %v775 = vld [vmem:[%s1 + $0xf24] sm:$0xff]
  %v776 = vld [vmem:[%s1 + $0xf2c] sm:$0xf]
  %v777 = vld [vmem:[%s1 + $0xf30] sm:$0xff]
  %v778 = vld [vmem:[%s1 + $0xf38] sm:$0xf]
  %v779 = vld [vmem:[%s1 + $0xf3c] sm:$0xff]
  %v780 = vld [vmem:[%s1 + $0xf44] sm:$0xf]
  %v781 = vld [vmem:[%s1 + $0xf48] sm:$0xff]
  %v782 = vld [vmem:[%s1 + $0xf50] sm:$0xf]
  %v783 = vld [vmem:[%s1 + $0xf54] sm:$0xff]
  %v784 = vld [vmem:[%s1 + $0xf5c] sm:$0xf]
  %v785 = vld [vmem:[%s1 + $0xf60] sm:$0xff]
  %v786 = vld [vmem:[%s1 + $0xf68] sm:$0xf]
  %v787 = vld [vmem:[%s1 + $0xf6c] sm:$0xff]
  %v788 = vld [vmem:[%s1 + $0xf74] sm:$0xf]
  %v789 = vld [vmem:[%s1 + $0xf78] sm:$0xff]
  %v790 = vld [vmem:[%s1 + $0xf80] sm:$0xf]
  %v791 = vld [vmem:[%s1 + $0xf84] sm:$0xff]
  %v792 = vld [vmem:[%s1 + $0xf8c] sm:$0xf]
  %v793 = vld [vmem:[%s1 + $0xf90] sm:$0xff]
  %v794 = vld [vmem:[%s1 + $0xf98] sm:$0xf]
  %v795 = vld [vmem:[%s1 + $0xf9c] sm:$0xff]
  %v796 = vld [vmem:[%s1 + $0xfa4] sm:$0xf]
  %v797 = vld [vmem:[%s1 + $0xfa8] sm:$0xff]
  %v798 = vld [vmem:[%s1 + $0xfb0] sm:$0xf]
  %v799 = vld [vmem:[%s1 + $0xfb4] sm:$0xff]
  %v800 = vld [vmem:[%s1 + $0xfbc] sm:$0xf]
  %v801 = vld [vmem:[%s1 + $0xfc0] sm:$0xff]
  %v802 = vld [vmem:[%s1 + $0xfc8] sm:$0xf]
  %v803 = vld [vmem:[%s1 + $0xfcc] sm:$0xff]
  %v804 = vld [vmem:[%s1 + $0xfd4] sm:$0xf]
  %v805 = vld [vmem:[%s1 + $0xfd8] sm:$0xff]
  %v806 = vld [vmem:[%s1 + $0xfe0] sm:$0xf]
  %v807 = vld [vmem:[%s1 + $0xfe4] sm:$0xff]
  %v808 = vld [vmem:[%s1 + $0xfec] sm:$0xf]
  %v809 = vld [vmem:[%s1 + $0xff0] sm:$0xff]
  %v810 = vld [vmem:[%s1 + $0xff8] sm:$0xf]
  %v811 = vld [vmem:[%s1 + $0xffc] sm:$0xff]
  %v812 = vld [vmem:[%s1 + $0x1004] sm:$0xf]
  %v813 = vld [vmem:[%s1 + $0x1008] sm:$0xff]
  %v814 = vld [vmem:[%s1 + $0x1010] sm:$0xf]
  %v815 = vld [vmem:[%s1 + $0x1014] sm:$0xff]
  %v816 = vld [vmem:[%s1 + $0x101c] sm:$0xf]
  %v817 = vld [vmem:[%s1 + $0x1020] sm:$0xff]
  %v818 = vld [vmem:[%s1 + $0x1028] sm:$0xf]
  %v819 = vld [vmem:[%s1 + $0x102c] sm:$0xff]
  %v820 = vld [vmem:[%s1 + $0x1034] sm:$0xf]
  %v821 = vld [vmem:[%s1 + $0x1038] sm:$0xff]
  %v822 = vld [vmem:[%s1 + $0x1040] sm:$0xf]
  %v823 = vld [vmem:[%s1 + $0x1044] sm:$0xff]
  %v824 = vld [vmem:[%s1 + $0x104c] sm:$0xf]
  %v825 = vld [vmem:[%s1 + $0x1050] sm:$0xff]
  %v826 = vld [vmem:[%s1 + $0x1058] sm:$0xf]
  %v827 = vld [vmem:[%s1 + $0x105c] sm:$0xff]
  %v828 = vld [vmem:[%s1 + $0x1064] sm:$0xf]
  %v829 = vld [vmem:[%s1 + $0x1068] sm:$0xff]
  %v830 = vld [vmem:[%s1 + $0x1070] sm:$0xf]
  %v831 = vld [vmem:[%s1 + $0x1074] sm:$0xff]
  %v832 = vld [vmem:[%s1 + $0x107c] sm:$0xf]
  %v833 = vld [vmem:[%s1 + $0x1080] sm:$0xff]
  %v834 = vld [vmem:[%s1 + $0x1088] sm:$0xf]
  %v835 = vld [vmem:[%s1 + $0x108c] sm:$0xff]
  %v836 = vld [vmem:[%s1 + $0x1094] sm:$0xf]
  %v837 = vld [vmem:[%s1 + $0x1098] sm:$0xff]
  %v838 = vld [vmem:[%s1 + $0x10a0] sm:$0xf]
  %v839 = vld [vmem:[%s1 + $0x10a4] sm:$0xff]
  %v840 = vld [vmem:[%s1 + $0x10ac] sm:$0xf]
  %v841 = vld [vmem:[%s1 + $0x10b0] sm:$0xff]
  %v842 = vld [vmem:[%s1 + $0x10b8] sm:$0xf]
  %v843 = vld [vmem:[%s1 + $0x10bc] sm:$0xff]
  %v844 = vld [vmem:[%s1 + $0x10c4] sm:$0xf]
  %v845 = vld [vmem:[%s1 + $0x10c8] sm:$0xff]
  %v846 = vld [vmem:[%s1 + $0x10d0] sm:$0xf]
  %v847 = vld [vmem:[%s1 + $0x10d4] sm:$0xff]
  %v848 = vld [vmem:[%s1 + $0x10dc] sm:$0xf]
  %v849 = vld [vmem:[%s1 + $0x10e0] sm:$0xff]
  %v850 = vld [vmem:[%s1 + $0x10e8] sm:$0xf]
  %v851 = vld [vmem:[%s1 + $0x10ec] sm:$0xff]
  %v852 = vld [vmem:[%s1 + $0x10f4] sm:$0xf]
  %v853 = vld [vmem:[%s1 + $0x10f8] sm:$0xff]
  %v854 = vld [vmem:[%s1 + $0x1100] sm:$0xf]
  %v855 = vld [vmem:[%s1 + $0x1104] sm:$0xff]
  %v856 = vld [vmem:[%s1 + $0x110c] sm:$0xf]
  %v857 = vld [vmem:[%s1 + $0x1110] sm:$0xff]
  %v858 = vld [vmem:[%s1 + $0x1118] sm:$0xf]
  %v859 = vld [vmem:[%s1 + $0x111c] sm:$0xff]
  %v860 = vld [vmem:[%s1 + $0x1124] sm:$0xf]
  %v861 = vld [vmem:[%s1 + $0x1128] sm:$0xff]
  %v862 = vld [vmem:[%s1 + $0x1130] sm:$0xf]
  %v863 = vld [vmem:[%s1 + $0x1134] sm:$0xff]
  %v864 = vld [vmem:[%s1 + $0x113c] sm:$0xf]
  %v865 = vld [vmem:[%s1 + $0x1140] sm:$0xff]
  %v866 = vld [vmem:[%s1 + $0x1148] sm:$0xf]
  %v867 = vld [vmem:[%s1 + $0x114c] sm:$0xff]
  %v868 = vld [vmem:[%s1 + $0x1154] sm:$0xf]
  %v869 = vld [vmem:[%s1 + $0x1158] sm:$0xff]
  %v870 = vld [vmem:[%s1 + $0x1160] sm:$0xf]
  %v871 = vld [vmem:[%s1 + $0x1164] sm:$0xff]
  %v872 = vld [vmem:[%s1 + $0x116c] sm:$0xf]
  %v873 = vld [vmem:[%s1 + $0x1170] sm:$0xff]
  %v874 = vld [vmem:[%s1 + $0x1178] sm:$0xf]
  %v875 = vld [vmem:[%s1 + $0x117c] sm:$0xff]
  %v876 = vld [vmem:[%s1 + $0x1184] sm:$0xf]
  %v877 = vld [vmem:[%s1 + $0x1188] sm:$0xff]
  %v878 = vld [vmem:[%s1 + $0x1190] sm:$0xf]
  %v879 = vld [vmem:[%s1 + $0x1194] sm:$0xff]
  %v880 = vld [vmem:[%s1 + $0x119c] sm:$0xf]
  %v881 = vld [vmem:[%s1 + $0x11a0] sm:$0xff]
  %v882 = vld [vmem:[%s1 + $0x11a8] sm:$0xf]
  %v883 = vld [vmem:[%s1 + $0x11ac] sm:$0xff]
  %v884 = vld [vmem:[%s1 + $0x11b4] sm:$0xf]
  %v885 = vld [vmem:[%s1 + $0x11b8] sm:$0xff]
  %v886 = vld [vmem:[%s1 + $0x11c0] sm:$0xf]
  %v887 = vld [vmem:[%s1 + $0x11c4] sm:$0xff]
  %v888 = vld [vmem:[%s1 + $0x11cc] sm:$0xf]
  %v889 = vld [vmem:[%s1 + $0x11d0] sm:$0xff]
  %v890 = vld [vmem:[%s1 + $0x11d8] sm:$0xf]
  %v891 = vld [vmem:[%s1 + $0x11dc] sm:$0xff]
  %v892 = vld [vmem:[%s1 + $0x11e4] sm:$0xf]
  %v893 = vld [vmem:[%s1 + $0x11e8] sm:$0xff]
  %v894 = vld [vmem:[%s1 + $0x11f0] sm:$0xf]
  %v895 = vld [vmem:[%s1 + $0x11f4] sm:$0xff]
  %v896 = vld [vmem:[%s1 + $0x11fc] sm:$0xf]
  %v897 = vld [vmem:[%s1 + $0x1200] sm:$0xff]
  %v898 = vld [vmem:[%s1 + $0x1208] sm:$0xf]
  %v899 = vld [vmem:[%s1 + $0x120c] sm:$0xff]
  %v900 = vld [vmem:[%s1 + $0x1214] sm:$0xf]
  %v901 = vld [vmem:[%s1 + $0x1218] sm:$0xff]
  %v902 = vld [vmem:[%s1 + $0x1220] sm:$0xf]
  %v903 = vld [vmem:[%s1 + $0x1224] sm:$0xff]
  %v904 = vld [vmem:[%s1 + $0x122c] sm:$0xf]
  %v905 = vld [vmem:[%s1 + $0x1230] sm:$0xff]
  %v906 = vld [vmem:[%s1 + $0x1238] sm:$0xf]
  %v907 = vld [vmem:[%s1 + $0x123c] sm:$0xff]
  %v908 = vld [vmem:[%s1 + $0x1244] sm:$0xf]
  %v909 = vld [vmem:[%s1 + $0x1248] sm:$0xff]
  %v910 = vld [vmem:[%s1 + $0x1250] sm:$0xf]
  %v911 = vld [vmem:[%s1 + $0x1254] sm:$0xff]
  %v912 = vld [vmem:[%s1 + $0x125c] sm:$0xf]
  %v913 = vld [vmem:[%s1 + $0x1260] sm:$0xff]
  %v914 = vld [vmem:[%s1 + $0x1268] sm:$0xf]
  %v915 = vld [vmem:[%s1 + $0x126c] sm:$0xff]
  %v916 = vld [vmem:[%s1 + $0x1274] sm:$0xf]
  %v917 = vld [vmem:[%s1 + $0x1278] sm:$0xff]
  %v918 = vld [vmem:[%s1 + $0x1280] sm:$0xf]
  %v919 = vld [vmem:[%s1 + $0x1284] sm:$0xff]
  %v920 = vld [vmem:[%s1 + $0x128c] sm:$0xf]
  %v921 = vld [vmem:[%s1 + $0x1290] sm:$0xff]
  %v922 = vld [vmem:[%s1 + $0x1298] sm:$0xf]
  %v923 = vld [vmem:[%s1 + $0x129c] sm:$0xff]
  %v924 = vld [vmem:[%s1 + $0x12a4] sm:$0xf]
  %v925 = vld [vmem:[%s1 + $0x12a8] sm:$0xff]
  %v926 = vld [vmem:[%s1 + $0x12b0] sm:$0xf]
  %v927 = vld [vmem:[%s1 + $0x12b4] sm:$0xff]
  %v928 = vld [vmem:[%s1 + $0x12bc] sm:$0xf]
  %v929 = vld [vmem:[%s1 + $0x12c0] sm:$0xff]
  %v930 = vld [vmem:[%s1 + $0x12c8] sm:$0xf]
  %v931 = vld [vmem:[%s1 + $0x12cc] sm:$0xff]
  %v932 = vld [vmem:[%s1 + $0x12d4] sm:$0xf]
  %v933 = vld [vmem:[%s1 + $0x12d8] sm:$0xff]
  %v934 = vld [vmem:[%s1 + $0x12e0] sm:$0xf]
  %v935 = vld [vmem:[%s1 + $0x12e4] sm:$0xff]
  %v936 = vld [vmem:[%s1 + $0x12ec] sm:$0xf]
  %v937 = vld [vmem:[%s1 + $0x12f0] sm:$0xff]
  %v938 = vld [vmem:[%s1 + $0x12f8] sm:$0xf]
  %v939 = vld [vmem:[%s1 + $0x12fc] sm:$0xff]
  %v940 = vld [vmem:[%s1 + $0x1304] sm:$0xf]
  %v941 = vld [vmem:[%s1 + $0x1308] sm:$0xff]
  %v942 = vld [vmem:[%s1 + $0x1310] sm:$0xf]
  %v943 = vld [vmem:[%s1 + $0x1314] sm:$0xff]
  %v944 = vld [vmem:[%s1 + $0x131c] sm:$0xf]
  %v945 = vld [vmem:[%s1 + $0x1320] sm:$0xff]
  %v946 = vld [vmem:[%s1 + $0x1328] sm:$0xf]
  %v947 = vld [vmem:[%s1 + $0x132c] sm:$0xff]
  %v948 = vld [vmem:[%s1 + $0x1334] sm:$0xf]
  %v949 = vld [vmem:[%s1 + $0x1338] sm:$0xff]
  %v950 = vld [vmem:[%s1 + $0x1340] sm:$0xf]
  %v951 = vld [vmem:[%s1 + $0x1344] sm:$0xff]
  %v952 = vld [vmem:[%s1 + $0x134c] sm:$0xf]
  %v953 = vld [vmem:[%s1 + $0x1350] sm:$0xff]
  %v954 = vld [vmem:[%s1 + $0x1358] sm:$0xf]
  %v955 = vld [vmem:[%s1 + $0x135c] sm:$0xff]
  %v956 = vld [vmem:[%s1 + $0x1364] sm:$0xf]
  %v957 = vld [vmem:[%s1 + $0x1368] sm:$0xff]
  %v958 = vld [vmem:[%s1 + $0x1370] sm:$0xf]
  %v959 = vld [vmem:[%s1 + $0x1374] sm:$0xff]
  %v960 = vld [vmem:[%s1 + $0x137c] sm:$0xf]
  %v961 = vld [vmem:[%s1 + $0x1380] sm:$0xff]
  %v962 = vld [vmem:[%s1 + $0x1388] sm:$0xf]
  %v963 = vld [vmem:[%s1 + $0x138c] sm:$0xff]
  %v964 = vld [vmem:[%s1 + $0x1394] sm:$0xf]
  %v965 = vld [vmem:[%s1 + $0x1398] sm:$0xff]
  %v966 = vld [vmem:[%s1 + $0x13a0] sm:$0xf]
  %v967 = vld [vmem:[%s1 + $0x13a4] sm:$0xff]
  %v968 = vld [vmem:[%s1 + $0x13ac] sm:$0xf]
  %v969 = vld [vmem:[%s1 + $0x13b0] sm:$0xff]
  %v970 = vld [vmem:[%s1 + $0x13b8] sm:$0xf]
  %v971 = vld [vmem:[%s1 + $0x13bc] sm:$0xff]
  %v972 = vld [vmem:[%s1 + $0x13c4] sm:$0xf]
  %v973 = vld [vmem:[%s1 + $0x13c8] sm:$0xff]
  %v974 = vld [vmem:[%s1 + $0x13d0] sm:$0xf]
  %v975 = vld [vmem:[%s1 + $0x13d4] sm:$0xff]
  %v976 = vld [vmem:[%s1 + $0x13dc] sm:$0xf]
  %v977 = vld [vmem:[%s1 + $0x13e0] sm:$0xff]
  %v978 = vld [vmem:[%s1 + $0x13e8] sm:$0xf]
  %v979 = vld [vmem:[%s1 + $0x13ec] sm:$0xff]
  %v980 = vld [vmem:[%s1 + $0x13f4] sm:$0xf]
  %v981 = vld [vmem:[%s1 + $0x13f8] sm:$0xff]
  %v982 = vld [vmem:[%s1 + $0x1400] sm:$0xf]
  %v983 = vld [vmem:[%s1 + $0x1404] sm:$0xff]
  %v984 = vld [vmem:[%s1 + $0x140c] sm:$0xf]
  %v985 = vld [vmem:[%s1 + $0x1410] sm:$0xff]
  %v986 = vld [vmem:[%s1 + $0x1418] sm:$0xf]
  %v987 = vld [vmem:[%s1 + $0x141c] sm:$0xff]
  %v988 = vld [vmem:[%s1 + $0x1424] sm:$0xf]
  %v989 = vld [vmem:[%s1 + $0x1428] sm:$0xff]
  %v990 = vld [vmem:[%s1 + $0x1430] sm:$0xf]
  %v991 = vld [vmem:[%s1 + $0x1434] sm:$0xff]
  %v992 = vld [vmem:[%s1 + $0x143c] sm:$0xf]
  %v993 = vld [vmem:[%s1 + $0x1440] sm:$0xff]
  %v994 = vld [vmem:[%s1 + $0x1448] sm:$0xf]
  %v995 = vld [vmem:[%s1 + $0x144c] sm:$0xff]
  %v996 = vld [vmem:[%s1 + $0x1454] sm:$0xf]
  %v997 = vld [vmem:[%s1 + $0x1458] sm:$0xff]
  %v998 = vld [vmem:[%s1 + $0x1460] sm:$0xf]
  %v999 = vld [vmem:[%s1 + $0x1464] sm:$0xff]
  %v1000 = vld [vmem:[%s1 + $0x146c] sm:$0xf]
  %v1001 = vld [vmem:[%s1 + $0x1470] sm:$0xff]
  %v1002 = vld [vmem:[%s1 + $0x1478] sm:$0xf]
  %v1003 = vld [vmem:[%s1 + $0x147c] sm:$0xff]
  %v1004 = vld [vmem:[%s1 + $0x1484] sm:$0xf]
  %v1005 = vld [vmem:[%s1 + $0x1488] sm:$0xff]
  %v1006 = vld [vmem:[%s1 + $0x1490] sm:$0xf]
  %v1007 = vld [vmem:[%s1 + $0x1494] sm:$0xff]
  %v1008 = vld [vmem:[%s1 + $0x149c] sm:$0xf]
  %v1009 = vld [vmem:[%s1 + $0x14a0] sm:$0xff]
  %v1010 = vld [vmem:[%s1 + $0x14a8] sm:$0xf]
  %v1011 = vld [vmem:[%s1 + $0x14ac] sm:$0xff]
  %v1012 = vld [vmem:[%s1 + $0x14b4] sm:$0xf]
  %v1013 = vld [vmem:[%s1 + $0x14b8] sm:$0xff]
  %v1014 = vld [vmem:[%s1 + $0x14c0] sm:$0xf]
  %v1015 = vld [vmem:[%s1 + $0x14c4] sm:$0xff]
  %v1016 = vld [vmem:[%s1 + $0x14cc] sm:$0xf]
  %v1017 = vld [vmem:[%s1 + $0x14d0] sm:$0xff]
  %v1018 = vld [vmem:[%s1 + $0x14d8] sm:$0xf]
  %v1019 = vld [vmem:[%s1 + $0x14dc] sm:$0xff]
  %v1020 = vld [vmem:[%s1 + $0x14e4] sm:$0xf]
  %v1021 = vld [vmem:[%s1 + $0x14e8] sm:$0xff]
  %v1022 = vld [vmem:[%s1 + $0x14f0] sm:$0xf]
  %v1023 = vld [vmem:[%s1 + $0x14f4] sm:$0xff]
  %v1024 = vld [vmem:[%s1 + $0x14fc] sm:$0xf]
  %v1025 = vld [vmem:[%s1 + $0x1500] sm:$0xff]
  %v1026 = vld [vmem:[%s1 + $0x1508] sm:$0xf]
  %v1027 = vld [vmem:[%s1 + $0x150c] sm:$0xff]
  %v1028 = vld [vmem:[%s1 + $0x1514] sm:$0xf]
  %v1029 = vld [vmem:[%s1 + $0x1518] sm:$0xff]
  %v1030 = vld [vmem:[%s1 + $0x1520] sm:$0xf]
  %v1031 = vld [vmem:[%s1 + $0x1524] sm:$0xff]
  %v1032 = vld [vmem:[%s1 + $0x152c] sm:$0xf]
  %v1033 = vld [vmem:[%s1 + $0x1530] sm:$0xff]
  %v1034 = vld [vmem:[%s1 + $0x1538] sm:$0xf]
  %v1035 = vld [vmem:[%s1 + $0x153c] sm:$0xff]
  %v1036 = vld [vmem:[%s1 + $0x1544] sm:$0xf]
  %v1037 = vld [vmem:[%s1 + $0x1548] sm:$0xff]
  %v1038 = vld [vmem:[%s1 + $0x1550] sm:$0xf]
  %v1039 = vld [vmem:[%s1 + $0x1554] sm:$0xff]
  %v1040 = vld [vmem:[%s1 + $0x155c] sm:$0xf]
  %v1041 = vld [vmem:[%s1 + $0x1560] sm:$0xff]
  %v1042 = vld [vmem:[%s1 + $0x1568] sm:$0xf]
  %v1043 = vld [vmem:[%s1 + $0x156c] sm:$0xff]
  %v1044 = vld [vmem:[%s1 + $0x1574] sm:$0xf]
  %v1045 = vld [vmem:[%s1 + $0x1578] sm:$0xff]
  %v1046 = vld [vmem:[%s1 + $0x1580] sm:$0xf]
  %v1047 = vld [vmem:[%s1 + $0x1584] sm:$0xff]
  %v1048 = vld [vmem:[%s1 + $0x158c] sm:$0xf]
  %v1049 = vld [vmem:[%s1 + $0x1590] sm:$0xff]
  %v1050 = vld [vmem:[%s1 + $0x1598] sm:$0xf]
  %v1051 = vld [vmem:[%s1 + $0x159c] sm:$0xff]
  %v1052 = vld [vmem:[%s1 + $0x15a4] sm:$0xf]
  %v1053 = vld [vmem:[%s1 + $0x15a8] sm:$0xff]
  %v1054 = vld [vmem:[%s1 + $0x15b0] sm:$0xf]
  %v1055 = vld [vmem:[%s1 + $0x15b4] sm:$0xff]
  %v1056 = vld [vmem:[%s1 + $0x15bc] sm:$0xf]
  %v1057 = vld [vmem:[%s1 + $0x15c0] sm:$0xff]
  %v1058 = vld [vmem:[%s1 + $0x15c8] sm:$0xf]
  %v1059 = vld [vmem:[%s1 + $0x15cc] sm:$0xff]
  %v1060 = vld [vmem:[%s1 + $0x15d4] sm:$0xf]
  %v1061 = vld [vmem:[%s1 + $0x15d8] sm:$0xff]
  %v1062 = vld [vmem:[%s1 + $0x15e0] sm:$0xf]
  %v1063 = vld [vmem:[%s1 + $0x15e4] sm:$0xff]
  %v1064 = vld [vmem:[%s1 + $0x15ec] sm:$0xf]
  %v1065 = vld [vmem:[%s1 + $0x15f0] sm:$0xff]
  %v1066 = vld [vmem:[%s1 + $0x15f8] sm:$0xf]
  %v1067 = vld [vmem:[%s1 + $0x15fc] sm:$0xff]
  %v1068 = vld [vmem:[%s1 + $0x1604] sm:$0xf]
  %v1069 = vld [vmem:[%s1 + $0x1608] sm:$0xff]
  %v1070 = vld [vmem:[%s1 + $0x1610] sm:$0xf]
  %v1071 = vld [vmem:[%s1 + $0x1614] sm:$0xff]
  %v1072 = vld [vmem:[%s1 + $0x161c] sm:$0xf]
  %v1073 = vld [vmem:[%s1 + $0x1620] sm:$0xff]
  %v1074 = vld [vmem:[%s1 + $0x1628] sm:$0xf]
  %v1075 = vld [vmem:[%s1 + $0x162c] sm:$0xff]
  %v1076 = vld [vmem:[%s1 + $0x1634] sm:$0xf]
  %v1077 = vld [vmem:[%s1 + $0x1638] sm:$0xff]
  %v1078 = vld [vmem:[%s1 + $0x1640] sm:$0xf]
  %v1079 = vld [vmem:[%s1 + $0x1644] sm:$0xff]
  %v1080 = vld [vmem:[%s1 + $0x164c] sm:$0xf]
  %v1081 = vld [vmem:[%s1 + $0x1650] sm:$0xff]
  %v1082 = vld [vmem:[%s1 + $0x1658] sm:$0xf]
  %v1083 = vld [vmem:[%s1 + $0x165c] sm:$0xff]
  %v1084 = vld [vmem:[%s1 + $0x1664] sm:$0xf]
  %v1085 = vld [vmem:[%s1 + $0x1668] sm:$0xff]
  %v1086 = vld [vmem:[%s1 + $0x1670] sm:$0xf]
  %v1087 = vld [vmem:[%s1 + $0x1674] sm:$0xff]
  %v1088 = vld [vmem:[%s1 + $0x167c] sm:$0xf]
  %v1089 = vld [vmem:[%s1 + $0x1680] sm:$0xff]
  %v1090 = vld [vmem:[%s1 + $0x1688] sm:$0xf]
  %v1091 = vld [vmem:[%s1 + $0x168c] sm:$0xff]
  %v1092 = vld [vmem:[%s1 + $0x1694] sm:$0xf]
  %v1093 = vld [vmem:[%s1 + $0x1698] sm:$0xff]
  %v1094 = vld [vmem:[%s1 + $0x16a0] sm:$0xf]
  %v1095 = vld [vmem:[%s1 + $0x16a4] sm:$0xff]
  %v1096 = vld [vmem:[%s1 + $0x16ac] sm:$0xf]
  %v1097 = vld [vmem:[%s1 + $0x16b0] sm:$0xff]
  %v1098 = vld [vmem:[%s1 + $0x16b8] sm:$0xf]
  %v1099 = vld [vmem:[%s1 + $0x16bc] sm:$0xff]
  %v1100 = vld [vmem:[%s1 + $0x16c4] sm:$0xf]
  %v1101 = vld [vmem:[%s1 + $0x16c8] sm:$0xff]
  %v1102 = vld [vmem:[%s1 + $0x16d0] sm:$0xf]
  %v1103 = vld [vmem:[%s1 + $0x16d4] sm:$0xff]
  %v1104 = vld [vmem:[%s1 + $0x16dc] sm:$0xf]
  %v1105 = vld [vmem:[%s1 + $0x16e0] sm:$0xff]
  %v1106 = vld [vmem:[%s1 + $0x16e8] sm:$0xf]
  %v1107 = vld [vmem:[%s1 + $0x16ec] sm:$0xff]
  %v1108 = vld [vmem:[%s1 + $0x16f4] sm:$0xf]
  %v1109 = vld [vmem:[%s1 + $0x16f8] sm:$0xff]
  %v1110 = vld [vmem:[%s1 + $0x1700] sm:$0xf]
  %v1111 = vld [vmem:[%s1 + $0x1704] sm:$0xff]
  %v1112 = vld [vmem:[%s1 + $0x170c] sm:$0xf]
  %v1113 = vld [vmem:[%s1 + $0x1710] sm:$0xff]
  %v1114 = vld [vmem:[%s1 + $0x1718] sm:$0xf]
  %v1115 = vld [vmem:[%s1 + $0x171c] sm:$0xff]
  %v1116 = vld [vmem:[%s1 + $0x1724] sm:$0xf]
  %v1117 = vld [vmem:[%s1 + $0x1728] sm:$0xff]
  %v1118 = vld [vmem:[%s1 + $0x1730] sm:$0xf]
  %v1119 = vld [vmem:[%s1 + $0x1734] sm:$0xff]
  %v1120 = vld [vmem:[%s1 + $0x173c] sm:$0xf]
  %v1121 = vld [vmem:[%s1 + $0x1740] sm:$0xff]
  %v1122 = vld [vmem:[%s1 + $0x1748] sm:$0xf]
  %v1123 = vld [vmem:[%s1 + $0x174c] sm:$0xff]
  %v1124 = vld [vmem:[%s1 + $0x1754] sm:$0xf]
  %v1125 = vld [vmem:[%s1 + $0x1758] sm:$0xff]
  %v1126 = vld [vmem:[%s1 + $0x1760] sm:$0xf]
  %v1127 = vld [vmem:[%s1 + $0x1764] sm:$0xff]
  %v1128 = vld [vmem:[%s1 + $0x176c] sm:$0xf]
  %v1129 = vld [vmem:[%s1 + $0x1770] sm:$0xff]
  %v1130 = vld [vmem:[%s1 + $0x1778] sm:$0xf]
  %v1131 = vld [vmem:[%s1 + $0x177c] sm:$0xff]
  %v1132 = vld [vmem:[%s1 + $0x1784] sm:$0xf]
  %v1133 = vld [vmem:[%s1 + $0x1788] sm:$0xff]
  %v1134 = vld [vmem:[%s1 + $0x1790] sm:$0xf]
  %v1135 = vld [vmem:[%s1 + $0x1794] sm:$0xff]
  %v1136 = vld [vmem:[%s1 + $0x179c] sm:$0xf]
  %v1137 = vld [vmem:[%s1 + $0x17a0] sm:$0xff]
  %v1138 = vld [vmem:[%s1 + $0x17a8] sm:$0xf]
  %v1139 = vld [vmem:[%s1 + $0x17ac] sm:$0xff]
  %v1140 = vld [vmem:[%s1 + $0x17b4] sm:$0xf]
  %v1141 = vld [vmem:[%s1 + $0x17b8] sm:$0xff]
  %v1142 = vld [vmem:[%s1 + $0x17c0] sm:$0xf]
  %v1143 = vld [vmem:[%s1 + $0x17c4] sm:$0xff]
  %v1144 = vld [vmem:[%s1 + $0x17cc] sm:$0xf]
  %v1145 = vld [vmem:[%s1 + $0x17d0] sm:$0xff]
  %v1146 = vld [vmem:[%s1 + $0x17d8] sm:$0xf]
  %v1147 = vld [vmem:[%s1 + $0x17dc] sm:$0xff]
  %v1148 = vld [vmem:[%s1 + $0x17e4] sm:$0xf]
  %v1149 = vld [vmem:[%s1 + $0x17e8] sm:$0xff]
  %v1150 = vld [vmem:[%s1 + $0x17f0] sm:$0xf]
  %v1151 = vld [vmem:[%s1 + $0x17f4] sm:$0xff]
  %v1152 = vld [vmem:[%s1 + $0x17fc] sm:$0xf]
  %v1153 = vld [vmem:[%s1 + $0x1800] sm:$0xff]
  %v1154 = vld [vmem:[%s1 + $0x1808] sm:$0xf]
  %v1155 = vld [vmem:[%s1 + $0x180c] sm:$0xff]
  %v1156 = vld [vmem:[%s1 + $0x1814] sm:$0xf]
  %v1157 = vld [vmem:[%s1 + $0x1818] sm:$0xff]
  %v1158 = vld [vmem:[%s1 + $0x1820] sm:$0xf]
  %v1159 = vld [vmem:[%s1 + $0x1824] sm:$0xff]
  %v1160 = vld [vmem:[%s1 + $0x182c] sm:$0xf]
  %v1161 = vld [vmem:[%s1 + $0x1830] sm:$0xff]
  %v1162 = vld [vmem:[%s1 + $0x1838] sm:$0xf]
  %v1163 = vld [vmem:[%s1 + $0x183c] sm:$0xff]
  %v1164 = vld [vmem:[%s1 + $0x1844] sm:$0xf]
  %v1165 = vld [vmem:[%s1 + $0x1848] sm:$0xff]
  %v1166 = vld [vmem:[%s1 + $0x1850] sm:$0xf]
  %v1167 = vld [vmem:[%s1 + $0x1854] sm:$0xff]
  %v1168 = vld [vmem:[%s1 + $0x185c] sm:$0xf]
  %v1169 = vld [vmem:[%s1 + $0x1860] sm:$0xff]
  %v1170 = vld [vmem:[%s1 + $0x1868] sm:$0xf]
  %v1171 = vld [vmem:[%s1 + $0x186c] sm:$0xff]
  %v1172 = vld [vmem:[%s1 + $0x1874] sm:$0xf]
  %v1173 = vld [vmem:[%s1 + $0x1878] sm:$0xff]
  %v1174 = vld [vmem:[%s1 + $0x1880] sm:$0xf]
  %v1175 = vld [vmem:[%s1 + $0x1884] sm:$0xff]
  %v1176 = vld [vmem:[%s1 + $0x188c] sm:$0xf]
  %v1177 = vld [vmem:[%s1 + $0x1890] sm:$0xff]
  %v1178 = vld [vmem:[%s1 + $0x1898] sm:$0xf]
  %v1179 = vld [vmem:[%s1 + $0x189c] sm:$0xff]
  %v1180 = vld [vmem:[%s1 + $0x18a4] sm:$0xf]
  %v1181 = vld [vmem:[%s1 + $0x18a8] sm:$0xff]
  %v1182 = vld [vmem:[%s1 + $0x18b0] sm:$0xf]
  %v1183 = vld [vmem:[%s1 + $0x18b4] sm:$0xff]
  %v1184 = vld [vmem:[%s1 + $0x18bc] sm:$0xf]
  %v1185 = vld [vmem:[%s1 + $0x18c0] sm:$0xff]
  %v1186 = vld [vmem:[%s1 + $0x18c8] sm:$0xf]
  %v1187 = vld [vmem:[%s1 + $0x18cc] sm:$0xff]
  %v1188 = vld [vmem:[%s1 + $0x18d4] sm:$0xf]
  %v1189 = vld [vmem:[%s1 + $0x18d8] sm:$0xff]
  %v1190 = vld [vmem:[%s1 + $0x18e0] sm:$0xf]
  %v1191 = vld [vmem:[%s1 + $0x18e4] sm:$0xff]
  %v1192 = vld [vmem:[%s1 + $0x18ec] sm:$0xf]
  %v1193 = vld [vmem:[%s1 + $0x18f0] sm:$0xff]
  %v1194 = vld [vmem:[%s1 + $0x18f8] sm:$0xf]
  %v1195 = vld [vmem:[%s1 + $0x18fc] sm:$0xff]
  %v1196 = vld [vmem:[%s1 + $0x1904] sm:$0xf]
  %v1197 = vld [vmem:[%s1 + $0x1908] sm:$0xff]
  %v1198 = vld [vmem:[%s1 + $0x1910] sm:$0xf]
  %v1199 = vld [vmem:[%s1 + $0x1914] sm:$0xff]
  %v1200 = vld [vmem:[%s1 + $0x191c] sm:$0xf]
  %v1201 = vld [vmem:[%s1 + $0x1920] sm:$0xff]
  %v1202 = vld [vmem:[%s1 + $0x1928] sm:$0xf]
  %v1203 = vld [vmem:[%s1 + $0x192c] sm:$0xff]
  %v1204 = vld [vmem:[%s1 + $0x1934] sm:$0xf]
  %v1205 = vld [vmem:[%s1 + $0x1938] sm:$0xff]
  %v1206 = vld [vmem:[%s1 + $0x1940] sm:$0xf]
  %v1207 = vld [vmem:[%s1 + $0x1944] sm:$0xff]
  %v1208 = vld [vmem:[%s1 + $0x194c] sm:$0xf]
  %v1209 = vld [vmem:[%s1 + $0x1950] sm:$0xff]
  %v1210 = vld [vmem:[%s1 + $0x1958] sm:$0xf]
  %v1211 = vld [vmem:[%s1 + $0x195c] sm:$0xff]
  %v1212 = vld [vmem:[%s1 + $0x1964] sm:$0xf]
  %v1213 = vld [vmem:[%s1 + $0x1968] sm:$0xff]
  %v1214 = vld [vmem:[%s1 + $0x1970] sm:$0xf]
  %v1215 = vld [vmem:[%s1 + $0x1974] sm:$0xff]
  %v1216 = vld [vmem:[%s1 + $0x197c] sm:$0xf]
  %v1217 = vld [vmem:[%s1 + $0x1980] sm:$0xff]
  %v1218 = vld [vmem:[%s1 + $0x1988] sm:$0xf]
  %v1219 = vld [vmem:[%s1 + $0x198c] sm:$0xff]
  %v1220 = vld [vmem:[%s1 + $0x1994] sm:$0xf]
  %v1221 = vld [vmem:[%s1 + $0x1998] sm:$0xff]
  %v1222 = vld [vmem:[%s1 + $0x19a0] sm:$0xf]
  %v1223 = vld [vmem:[%s1 + $0x19a4] sm:$0xff]
  %v1224 = vld [vmem:[%s1 + $0x19ac] sm:$0xf]
  %v1225 = vld [vmem:[%s1 + $0x19b0] sm:$0xff]
  %v1226 = vld [vmem:[%s1 + $0x19b8] sm:$0xf]
  %v1227 = vld [vmem:[%s1 + $0x19bc] sm:$0xff]
  %v1228 = vld [vmem:[%s1 + $0x19c4] sm:$0xf]
  %v1229 = vld [vmem:[%s1 + $0x19c8] sm:$0xff]
  %v1230 = vld [vmem:[%s1 + $0x19d0] sm:$0xf]
  %v1231 = vld [vmem:[%s1 + $0x19d4] sm:$0xff]
  %v1232 = vld [vmem:[%s1 + $0x19dc] sm:$0xf]
  %v1233 = vld [vmem:[%s1 + $0x19e0] sm:$0xff]
  %v1234 = vld [vmem:[%s1 + $0x19e8] sm:$0xf]
  %v1235 = vld [vmem:[%s1 + $0x19ec] sm:$0xff]
  %v1236 = vld [vmem:[%s1 + $0x19f4] sm:$0xf]
  %v1237 = vld [vmem:[%s1 + $0x19f8] sm:$0xff]
  %v1238 = vld [vmem:[%s1 + $0x1a00] sm:$0xf]
  %v1239 = vld [vmem:[%s1 + $0x1a04] sm:$0xff]
  %v1240 = vld [vmem:[%s1 + $0x1a0c] sm:$0xf]
  %v1241 = vld [vmem:[%s1 + $0x1a10] sm:$0xff]
  %v1242 = vld [vmem:[%s1 + $0x1a18] sm:$0xf]
  %v1243 = vld [vmem:[%s1 + $0x1a1c] sm:$0xff]
  %v1244 = vld [vmem:[%s1 + $0x1a24] sm:$0xf]
  %v1245 = vld [vmem:[%s1 + $0x1a28] sm:$0xff]
  %v1246 = vld [vmem:[%s1 + $0x1a30] sm:$0xf]
  %v1247 = vld [vmem:[%s1 + $0x1a34] sm:$0xff]
  %v1248 = vld [vmem:[%s1 + $0x1a3c] sm:$0xf]
  %v1249 = vld [vmem:[%s1 + $0x1a40] sm:$0xff]
  %v1250 = vld [vmem:[%s1 + $0x1a48] sm:$0xf]
  %v1251 = vld [vmem:[%s1 + $0x1a4c] sm:$0xff]
  %v1252 = vld [vmem:[%s1 + $0x1a54] sm:$0xf]
  %v1253 = vld [vmem:[%s1 + $0x1a58] sm:$0xff]
  %v1254 = vld [vmem:[%s1 + $0x1a60] sm:$0xf]
  %v1255 = vld [vmem:[%s1 + $0x1a64] sm:$0xff]
  %v1256 = vld [vmem:[%s1 + $0x1a6c] sm:$0xf]
  %v1257 = vld [vmem:[%s1 + $0x1a70] sm:$0xff]
  %v1258 = vld [vmem:[%s1 + $0x1a78] sm:$0xf]
  %v1259 = vld [vmem:[%s1 + $0x1a7c] sm:$0xff]
  %v1260 = vld [vmem:[%s1 + $0x1a84] sm:$0xf]
  %v1261 = vld [vmem:[%s1 + $0x1a88] sm:$0xff]
  %v1262 = vld [vmem:[%s1 + $0x1a90] sm:$0xf]
  %v1263 = vld [vmem:[%s1 + $0x1a94] sm:$0xff]
  %v1264 = vld [vmem:[%s1 + $0x1a9c] sm:$0xf]
  %v1265 = vld [vmem:[%s1 + $0x1aa0] sm:$0xff]
  %v1266 = vld [vmem:[%s1 + $0x1aa8] sm:$0xf]
  %v1267 = vld [vmem:[%s1 + $0x1aac] sm:$0xff]
  %v1268 = vld [vmem:[%s1 + $0x1ab4] sm:$0xf]
  %v1269 = vld [vmem:[%s1 + $0x1ab8] sm:$0xff]
  %v1270 = vld [vmem:[%s1 + $0x1ac0] sm:$0xf]
  %v1271 = vld [vmem:[%s1 + $0x1ac4] sm:$0xff]
  %v1272 = vld [vmem:[%s1 + $0x1acc] sm:$0xf]
  %v1273 = vld [vmem:[%s1 + $0x1ad0] sm:$0xff]
  %v1274 = vld [vmem:[%s1 + $0x1ad8] sm:$0xf]
  %v1275 = vld [vmem:[%s1 + $0x1adc] sm:$0xff]
  %v1276 = vld [vmem:[%s1 + $0x1ae4] sm:$0xf]
  %v1277 = vld [vmem:[%s1 + $0x1ae8] sm:$0xff]
  %v1278 = vld [vmem:[%s1 + $0x1af0] sm:$0xf]
  %v1279 = vld [vmem:[%s1 + $0x1af4] sm:$0xff]
  %v1280 = vld [vmem:[%s1 + $0x1afc] sm:$0xf]
  %v1281 = vld [vmem:[%s1 + $0x1b00] sm:$0xff]
  %v1282 = vld [vmem:[%s1 + $0x1b08] sm:$0xf]
  %v1283 = vld [vmem:[%s1 + $0x1b0c] sm:$0xff]
  %v1284 = vld [vmem:[%s1 + $0x1b14] sm:$0xf]
  %v1285 = vld [vmem:[%s1 + $0x1b18] sm:$0xff]
  %v1286 = vld [vmem:[%s1 + $0x1b20] sm:$0xf]
  %v1287 = vld [vmem:[%s1 + $0x1b24] sm:$0xff]
  %v1288 = vld [vmem:[%s1 + $0x1b2c] sm:$0xf]
  %v1289 = vld [vmem:[%s1 + $0x1b30] sm:$0xff]
  %v1290 = vld [vmem:[%s1 + $0x1b38] sm:$0xf]
  %v1291 = vld [vmem:[%s1 + $0x1b3c] sm:$0xff]
  %v1292 = vld [vmem:[%s1 + $0x1b44] sm:$0xf]
  %v1293 = vld [vmem:[%s1 + $0x1b48] sm:$0xff]
  %v1294 = vld [vmem:[%s1 + $0x1b50] sm:$0xf]
  %v1295 = vld [vmem:[%s1 + $0x1b54] sm:$0xff]
  %v1296 = vld [vmem:[%s1 + $0x1b5c] sm:$0xf]
  %v1297 = vld [vmem:[%s1 + $0x1b60] sm:$0xff]
  %v1298 = vld [vmem:[%s1 + $0x1b68] sm:$0xf]
  %v1299 = vld [vmem:[%s1 + $0x1b6c] sm:$0xff]
  %v1300 = vld [vmem:[%s1 + $0x1b74] sm:$0xf]
  %v1301 = vld [vmem:[%s1 + $0x1b78] sm:$0xff]
  %v1302 = vld [vmem:[%s1 + $0x1b80] sm:$0xf]
  %v1303 = vld [vmem:[%s1 + $0x1b84] sm:$0xff]
  %v1304 = vld [vmem:[%s1 + $0x1b8c] sm:$0xf]
  %v1305 = vld [vmem:[%s1 + $0x1b90] sm:$0xff]
  %v1306 = vld [vmem:[%s1 + $0x1b98] sm:$0xf]
  %v1307 = vld [vmem:[%s1 + $0x1b9c] sm:$0xff]
  %v1308 = vld [vmem:[%s1 + $0x1ba4] sm:$0xf]
  %v1309 = vld [vmem:[%s1 + $0x1ba8] sm:$0xff]
  %v1310 = vld [vmem:[%s1 + $0x1bb0] sm:$0xf]
  %v1311 = vld [vmem:[%s1 + $0x1bb4] sm:$0xff]
  %v1312 = vld [vmem:[%s1 + $0x1bbc] sm:$0xf]
  %v1313 = vld [vmem:[%s1 + $0x1bc0] sm:$0xff]
  %v1314 = vld [vmem:[%s1 + $0x1bc8] sm:$0xf]
  %v1315 = vld [vmem:[%s1 + $0x1bcc] sm:$0xff]
  %v1316 = vld [vmem:[%s1 + $0x1bd4] sm:$0xf]
  %v1317 = vld [vmem:[%s1 + $0x1bd8] sm:$0xff]
  %v1318 = vld [vmem:[%s1 + $0x1be0] sm:$0xf]
  %v1319 = vld [vmem:[%s1 + $0x1be4] sm:$0xff]
  %v1320 = vld [vmem:[%s1 + $0x1bec] sm:$0xf]
  %v1321 = vld [vmem:[%s1 + $0x1bf0] sm:$0xff]
  %v1322 = vld [vmem:[%s1 + $0x1bf8] sm:$0xf]
  %v1323 = vld [vmem:[%s1 + $0x1bfc] sm:$0xff]
  %v1324 = vld [vmem:[%s1 + $0x1c04] sm:$0xf]
  %v1325 = vld [vmem:[%s1 + $0x1c08] sm:$0xff]
  %v1326 = vld [vmem:[%s1 + $0x1c10] sm:$0xf]
  %v1327 = vld [vmem:[%s1 + $0x1c14] sm:$0xff]
  %v1328 = vld [vmem:[%s1 + $0x1c1c] sm:$0xf]
  %v1329 = vld [vmem:[%s1 + $0x1c20] sm:$0xff]
  %v1330 = vld [vmem:[%s1 + $0x1c28] sm:$0xf]
  %v1331 = vld [vmem:[%s1 + $0x1c2c] sm:$0xff]
  %v1332 = vld [vmem:[%s1 + $0x1c34] sm:$0xf]
  %v1333 = vld [vmem:[%s1 + $0x1c38] sm:$0xff]
  %v1334 = vld [vmem:[%s1 + $0x1c40] sm:$0xf]
  %v1335 = vld [vmem:[%s1 + $0x1c44] sm:$0xff]
  %v1336 = vld [vmem:[%s1 + $0x1c4c] sm:$0xf]
  %v1337 = vld [vmem:[%s1 + $0x1c50] sm:$0xff]
  %v1338 = vld [vmem:[%s1 + $0x1c58] sm:$0xf]
  %v1339 = vld [vmem:[%s1 + $0x1c5c] sm:$0xff]
  %v1340 = vld [vmem:[%s1 + $0x1c64] sm:$0xf]
  %v1341 = vld [vmem:[%s1 + $0x1c68] sm:$0xff]
  %v1342 = vld [vmem:[%s1 + $0x1c70] sm:$0xf]
  %v1343 = vld [vmem:[%s1 + $0x1c74] sm:$0xff]
  %v1344 = vld [vmem:[%s1 + $0x1c7c] sm:$0xf]
  %v1345 = vld [vmem:[%s1 + $0x1c80] sm:$0xff]
  %v1346 = vld [vmem:[%s1 + $0x1c88] sm:$0xf]
  %v1347 = vld [vmem:[%s1 + $0x1c8c] sm:$0xff]
  %v1348 = vld [vmem:[%s1 + $0x1c94] sm:$0xf]
  %v1349 = vld [vmem:[%s1 + $0x1c98] sm:$0xff]
  %v1350 = vld [vmem:[%s1 + $0x1ca0] sm:$0xf]
  %v1351 = vld [vmem:[%s1 + $0x1ca4] sm:$0xff]
  %v1352 = vld [vmem:[%s1 + $0x1cac] sm:$0xf]
  %v1353 = vld [vmem:[%s1 + $0x1cb0] sm:$0xff]
  %v1354 = vld [vmem:[%s1 + $0x1cb8] sm:$0xf]
  %v1355 = vld [vmem:[%s1 + $0x1cbc] sm:$0xff]
  %v1356 = vld [vmem:[%s1 + $0x1cc4] sm:$0xf]
  %v1357 = vld [vmem:[%s1 + $0x1cc8] sm:$0xff]
  %v1358 = vld [vmem:[%s1 + $0x1cd0] sm:$0xf]
  %v1359 = vld [vmem:[%s1 + $0x1cd4] sm:$0xff]
  %v1360 = vld [vmem:[%s1 + $0x1cdc] sm:$0xf]
  %v1361 = vld [vmem:[%s1 + $0x1ce0] sm:$0xff]
  %v1362 = vld [vmem:[%s1 + $0x1ce8] sm:$0xf]
  %v1363 = vld [vmem:[%s1 + $0x1cec] sm:$0xff]
  %v1364 = vld [vmem:[%s1 + $0x1cf4] sm:$0xf]
  %v1365 = vld [vmem:[%s1 + $0x1cf8] sm:$0xff]
  %v1366 = vld [vmem:[%s1 + $0x1d00] sm:$0xf]
  %v1367 = vld [vmem:[%s1 + $0x1d04] sm:$0xff]
  %v1368 = vld [vmem:[%s1 + $0x1d0c] sm:$0xf]
  %v1369 = vld [vmem:[%s1 + $0x1d10] sm:$0xff]
  %v1370 = vld [vmem:[%s1 + $0x1d18] sm:$0xf]
  %v1371 = vld [vmem:[%s1 + $0x1d1c] sm:$0xff]
  %v1372 = vld [vmem:[%s1 + $0x1d24] sm:$0xf]
  %v1373 = vld [vmem:[%s1 + $0x1d28] sm:$0xff]
  %v1374 = vld [vmem:[%s1 + $0x1d30] sm:$0xf]
  %v1375 = vld [vmem:[%s1 + $0x1d34] sm:$0xff]
  %v1376 = vld [vmem:[%s1 + $0x1d3c] sm:$0xf]
  %v1377 = vld [vmem:[%s1 + $0x1d40] sm:$0xff]
  %v1378 = vld [vmem:[%s1 + $0x1d48] sm:$0xf]
  %v1379 = vld [vmem:[%s1 + $0x1d4c] sm:$0xff]
  %v1380 = vld [vmem:[%s1 + $0x1d54] sm:$0xf]
  %v1381 = vld [vmem:[%s1 + $0x1d58] sm:$0xff]
  %v1382 = vld [vmem:[%s1 + $0x1d60] sm:$0xf]
  %v1383 = vld [vmem:[%s1 + $0x1d64] sm:$0xff]
  %v1384 = vld [vmem:[%s1 + $0x1d6c] sm:$0xf]
  %v1385 = vld [vmem:[%s1 + $0x1d70] sm:$0xff]
  %v1386 = vld [vmem:[%s1 + $0x1d78] sm:$0xf]
  %v1387 = vld [vmem:[%s1 + $0x1d7c] sm:$0xff]
  %v1388 = vld [vmem:[%s1 + $0x1d84] sm:$0xf]
  %v1389 = vld [vmem:[%s1 + $0x1d88] sm:$0xff]
  %v1390 = vld [vmem:[%s1 + $0x1d90] sm:$0xf]
  %v1391 = vld [vmem:[%s1 + $0x1d94] sm:$0xff]
  %v1392 = vld [vmem:[%s1 + $0x1d9c] sm:$0xf]
  %v1393 = vld [vmem:[%s1 + $0x1da0] sm:$0xff]
  %v1394 = vld [vmem:[%s1 + $0x1da8] sm:$0xf]
  %v1395 = vld [vmem:[%s1 + $0x1dac] sm:$0xff]
  %v1396 = vld [vmem:[%s1 + $0x1db4] sm:$0xf]
  %v1397 = vld [vmem:[%s1 + $0x1db8] sm:$0xff]
  %v1398 = vld [vmem:[%s1 + $0x1dc0] sm:$0xf]
  %v1399 = vld [vmem:[%s1 + $0x1dc4] sm:$0xff]
  %v1400 = vld [vmem:[%s1 + $0x1dcc] sm:$0xf]
  %v1401 = vld [vmem:[%s1 + $0x1dd0] sm:$0xff]
  %v1402 = vld [vmem:[%s1 + $0x1dd8] sm:$0xf]
  %v1403 = vld [vmem:[%s1 + $0x1ddc] sm:$0xff]
  %v1404 = vld [vmem:[%s1 + $0x1de4] sm:$0xf]
  %v1405 = vld [vmem:[%s1 + $0x1de8] sm:$0xff]
  %v1406 = vld [vmem:[%s1 + $0x1df0] sm:$0xf]
  %v1407 = vld [vmem:[%s1 + $0x1df4] sm:$0xff]
  %v1408 = vld [vmem:[%s1 + $0x1dfc] sm:$0xf]
  %v1409 = vld [vmem:[%s1 + $0x1e00] sm:$0xff]
  %v1410 = vld [vmem:[%s1 + $0x1e08] sm:$0xf]
  %v1411 = vld [vmem:[%s1 + $0x1e0c] sm:$0xff]
  %v1412 = vld [vmem:[%s1 + $0x1e14] sm:$0xf]
  %v1413 = vld [vmem:[%s1 + $0x1e18] sm:$0xff]
  %v1414 = vld [vmem:[%s1 + $0x1e20] sm:$0xf]
  %v1415 = vld [vmem:[%s1 + $0x1e24] sm:$0xff]
  %v1416 = vld [vmem:[%s1 + $0x1e2c] sm:$0xf]
  %v1417 = vld [vmem:[%s1 + $0x1e30] sm:$0xff]
  %v1418 = vld [vmem:[%s1 + $0x1e38] sm:$0xf]
  %v1419 = vld [vmem:[%s1 + $0x1e3c] sm:$0xff]
  %v1420 = vld [vmem:[%s1 + $0x1e44] sm:$0xf]
  %v1421 = vld [vmem:[%s1 + $0x1e48] sm:$0xff]
  %v1422 = vld [vmem:[%s1 + $0x1e50] sm:$0xf]
  %v1423 = vld [vmem:[%s1 + $0x1e54] sm:$0xff]
  %v1424 = vld [vmem:[%s1 + $0x1e5c] sm:$0xf]
  %v1425 = vld [vmem:[%s1 + $0x1e60] sm:$0xff]
  %v1426 = vld [vmem:[%s1 + $0x1e68] sm:$0xf]
  %v1427 = vld [vmem:[%s1 + $0x1e6c] sm:$0xff]
  %v1428 = vld [vmem:[%s1 + $0x1e74] sm:$0xf]
  %v1429 = vld [vmem:[%s1 + $0x1e78] sm:$0xff]
  %v1430 = vld [vmem:[%s1 + $0x1e80] sm:$0xf]
  %v1431 = vld [vmem:[%s1 + $0x1e84] sm:$0xff]
  %v1432 = vld [vmem:[%s1 + $0x1e8c] sm:$0xf]
  %v1433 = vld [vmem:[%s1 + $0x1e90] sm:$0xff]
  %v1434 = vld [vmem:[%s1 + $0x1e98] sm:$0xf]
  %v1435 = vld [vmem:[%s1 + $0x1e9c] sm:$0xff]
  %v1436 = vld [vmem:[%s1 + $0x1ea4] sm:$0xf]
  %v1437 = vld [vmem:[%s1 + $0x1ea8] sm:$0xff]
  %v1438 = vld [vmem:[%s1 + $0x1eb0] sm:$0xf]
  %v1439 = vld [vmem:[%s1 + $0x1eb4] sm:$0xff]
  %v1440 = vld [vmem:[%s1 + $0x1ebc] sm:$0xf]
  %v1441 = vld [vmem:[%s1 + $0x1ec0] sm:$0xff]
  %v1442 = vld [vmem:[%s1 + $0x1ec8] sm:$0xf]
  %v1443 = vld [vmem:[%s1 + $0x1ecc] sm:$0xff]
  %v1444 = vld [vmem:[%s1 + $0x1ed4] sm:$0xf]
  %v1445 = vld [vmem:[%s1 + $0x1ed8] sm:$0xff]
  %v1446 = vld [vmem:[%s1 + $0x1ee0] sm:$0xf]
  %v1447 = vld [vmem:[%s1 + $0x1ee4] sm:$0xff]
  %v1448 = vld [vmem:[%s1 + $0x1eec] sm:$0xf]
  %v1449 = vld [vmem:[%s1 + $0x1ef0] sm:$0xff]
  %v1450 = vld [vmem:[%s1 + $0x1ef8] sm:$0xf]
  %v1451 = vld [vmem:[%s1 + $0x1efc] sm:$0xff]
  %v1452 = vld [vmem:[%s1 + $0x1f04] sm:$0xf]
  %v1453 = vld [vmem:[%s1 + $0x1f08] sm:$0xff]
  %v1454 = vld [vmem:[%s1 + $0x1f10] sm:$0xf]
  %v1455 = vld [vmem:[%s1 + $0x1f14] sm:$0xff]
  %v1456 = vld [vmem:[%s1 + $0x1f1c] sm:$0xf]
  %v1457 = vld [vmem:[%s1 + $0x1f20] sm:$0xff]
  %v1458 = vld [vmem:[%s1 + $0x1f28] sm:$0xf]
  %v1459 = vld [vmem:[%s1 + $0x1f2c] sm:$0xff]
  %v1460 = vld [vmem:[%s1 + $0x1f34] sm:$0xf]
  %v1461 = vld [vmem:[%s1 + $0x1f38] sm:$0xff]
  %v1462 = vld [vmem:[%s1 + $0x1f40] sm:$0xf]
  %v1463 = vld [vmem:[%s1 + $0x1f44] sm:$0xff]
  %v1464 = vld [vmem:[%s1 + $0x1f4c] sm:$0xf]
  %v1465 = vld [vmem:[%s1 + $0x1f50] sm:$0xff]
  %v1466 = vld [vmem:[%s1 + $0x1f58] sm:$0xf]
  %v1467 = vld [vmem:[%s1 + $0x1f5c] sm:$0xff]
  %v1468 = vld [vmem:[%s1 + $0x1f64] sm:$0xf]
  %v1469 = vld [vmem:[%s1 + $0x1f68] sm:$0xff]
  %v1470 = vld [vmem:[%s1 + $0x1f70] sm:$0xf]
  %v1471 = vld [vmem:[%s1 + $0x1f74] sm:$0xff]
  %v1472 = vld [vmem:[%s1 + $0x1f7c] sm:$0xf]
  %v1473 = vld [vmem:[%s1 + $0x1f80] sm:$0xff]
  %v1474 = vld [vmem:[%s1 + $0x1f88] sm:$0xf]
  %v1475 = vld [vmem:[%s1 + $0x1f8c] sm:$0xff]
  %v1476 = vld [vmem:[%s1 + $0x1f94] sm:$0xf]
  %v1477 = vld [vmem:[%s1 + $0x1f98] sm:$0xff]
  %v1478 = vld [vmem:[%s1 + $0x1fa0] sm:$0xf]
  %v1479 = vld [vmem:[%s1 + $0x1fa4] sm:$0xff]
  %v1480 = vld [vmem:[%s1 + $0x1fac] sm:$0xf]
  %v1481 = vld [vmem:[%s1 + $0x1fb0] sm:$0xff]
  %v1482 = vld [vmem:[%s1 + $0x1fb8] sm:$0xf]
  %v1483 = vld [vmem:[%s1 + $0x1fbc] sm:$0xff]
  %v1484 = vld [vmem:[%s1 + $0x1fc4] sm:$0xf]
  %v1485 = vld [vmem:[%s1 + $0x1fc8] sm:$0xff]
  %v1486 = vld [vmem:[%s1 + $0x1fd0] sm:$0xf]
  %v1487 = vld [vmem:[%s1 + $0x1fd4] sm:$0xff]
  %v1488 = vld [vmem:[%s1 + $0x1fdc] sm:$0xf]
  %v1489 = vld [vmem:[%s1 + $0x1fe0] sm:$0xff]
  %v1490 = vld [vmem:[%s1 + $0x1fe8] sm:$0xf]
  %v1491 = vld [vmem:[%s1 + $0x1fec] sm:$0xff]
  %v1492 = vld [vmem:[%s1 + $0x1ff4] sm:$0xf]
  %v1493 = vld [vmem:[%s1 + $0x1ff8] sm:$0xff]
  %v1494 = vld [vmem:[%s1 + $0x2000] sm:$0xf]
  %v1495 = vld [vmem:[%s1 + $0x2004] sm:$0xff]
  %v1496 = vld [vmem:[%s1 + $0x200c] sm:$0xf]
  %v1497 = vld [vmem:[%s1 + $0x2010] sm:$0xff]
  %v1498 = vld [vmem:[%s1 + $0x2018] sm:$0xf]
  %v1499 = vld [vmem:[%s1 + $0x201c] sm:$0xff]
  %v1500 = vld [vmem:[%s1 + $0x2024] sm:$0xf]
  %v1501 = vld [vmem:[%s1 + $0x2028] sm:$0xff]
  %v1502 = vld [vmem:[%s1 + $0x2030] sm:$0xf]
  %v1503 = vld [vmem:[%s1 + $0x2034] sm:$0xff]
  %v1504 = vld [vmem:[%s1 + $0x203c] sm:$0xf]
  %v1505 = vld [vmem:[%s1 + $0x2040] sm:$0xff]
  %v1506 = vld [vmem:[%s1 + $0x2048] sm:$0xf]
  %v1507 = vld [vmem:[%s1 + $0x204c] sm:$0xff]
  %v1508 = vld [vmem:[%s1 + $0x2054] sm:$0xf]
  %v1509 = vld [vmem:[%s1 + $0x2058] sm:$0xff]
  %v1510 = vld [vmem:[%s1 + $0x2060] sm:$0xf]
  %v1511 = vld [vmem:[%s1 + $0x2064] sm:$0xff]
  %v1512 = vld [vmem:[%s1 + $0x206c] sm:$0xf]
  %v1513 = vld [vmem:[%s1 + $0x2070] sm:$0xff]
  %v1514 = vld [vmem:[%s1 + $0x2078] sm:$0xf]
  %v1515 = vld [vmem:[%s1 + $0x207c] sm:$0xff]
  %v1516 = vld [vmem:[%s1 + $0x2084] sm:$0xf]
  %v1517 = vld [vmem:[%s1 + $0x2088] sm:$0xff]
  %v1518 = vld [vmem:[%s1 + $0x2090] sm:$0xf]
  %v1519 = vld [vmem:[%s1 + $0x2094] sm:$0xff]
  %v1520 = vld [vmem:[%s1 + $0x209c] sm:$0xf]
  %v1521 = vld [vmem:[%s1 + $0x20a0] sm:$0xff]
  %v1522 = vld [vmem:[%s1 + $0x20a8] sm:$0xf]
  %v1523 = vld [vmem:[%s1 + $0x20ac] sm:$0xff]
  %v1524 = vld [vmem:[%s1 + $0x20b4] sm:$0xf]
  %v1525 = vld [vmem:[%s1 + $0x20b8] sm:$0xff]
  %v1526 = vld [vmem:[%s1 + $0x20c0] sm:$0xf]
  %v1527 = vld [vmem:[%s1 + $0x20c4] sm:$0xff]
  %v1528 = vld [vmem:[%s1 + $0x20cc] sm:$0xf]
  %v1529 = vld [vmem:[%s1 + $0x20d0] sm:$0xff]
  %v1530 = vld [vmem:[%s1 + $0x20d8] sm:$0xf]
  %v1531 = vld [vmem:[%s1 + $0x20dc] sm:$0xff]
  %v1532 = vld [vmem:[%s1 + $0x20e4] sm:$0xf]
  %v1533 = vld [vmem:[%s1 + $0x20e8] sm:$0xff]
  %v1534 = vld [vmem:[%s1 + $0x20f0] sm:$0xf]
  %v1535 = vld [vmem:[%s1 + $0x20f4] sm:$0xff]
  %v1536 = vld [vmem:[%s1 + $0x20fc] sm:$0xf]
  %v1537 = vld [vmem:[%s1 + $0x2100] sm:$0xff]
  %v1538 = vld [vmem:[%s1 + $0x2108] sm:$0xf]
  %v1539 = vld [vmem:[%s1 + $0x210c] sm:$0xff]
  %v1540 = vld [vmem:[%s1 + $0x2114] sm:$0xf]
  %v1541 = vld [vmem:[%s1 + $0x2118] sm:$0xff]
  %v1542 = vld [vmem:[%s1 + $0x2120] sm:$0xf]
  %v1543 = vld [vmem:[%s1 + $0x2124] sm:$0xff]
  %v1544 = vld [vmem:[%s1 + $0x212c] sm:$0xf]
  %v1545 = vld [vmem:[%s1 + $0x2130] sm:$0xff]
  %v1546 = vld [vmem:[%s1 + $0x2138] sm:$0xf]
  %v1547 = vld [vmem:[%s1 + $0x213c] sm:$0xff]
  %v1548 = vld [vmem:[%s1 + $0x2144] sm:$0xf]
  %v1549 = vld [vmem:[%s1 + $0x2148] sm:$0xff]
  %v1550 = vld [vmem:[%s1 + $0x2150] sm:$0xf]
  %v1551 = vld [vmem:[%s1 + $0x2154] sm:$0xff]
  %v1552 = vld [vmem:[%s1 + $0x215c] sm:$0xf]
  %v1553 = vld [vmem:[%s1 + $0x2160] sm:$0xff]
  %v1554 = vld [vmem:[%s1 + $0x2168] sm:$0xf]
  %v1555 = vld [vmem:[%s1 + $0x216c] sm:$0xff]
  %v1556 = vld [vmem:[%s1 + $0x2174] sm:$0xf]
  %v1557 = vld [vmem:[%s1 + $0x2178] sm:$0xff]
  %v1558 = vld [vmem:[%s1 + $0x2180] sm:$0xf]
  %v1559 = vld [vmem:[%s1 + $0x2184] sm:$0xff]
  %v1560 = vld [vmem:[%s1 + $0x218c] sm:$0xf]
  %v1561 = vld [vmem:[%s1 + $0x2190] sm:$0xff]
  %v1562 = vld [vmem:[%s1 + $0x2198] sm:$0xf]
  %v1563 = vld [vmem:[%s1 + $0x219c] sm:$0xff]
  %v1564 = vld [vmem:[%s1 + $0x21a4] sm:$0xf]
  %v1565 = vld [vmem:[%s1 + $0x21a8] sm:$0xff]
  %v1566 = vld [vmem:[%s1 + $0x21b0] sm:$0xf]
  %v1567 = vld [vmem:[%s1 + $0x21b4] sm:$0xff]
  %v1568 = vld [vmem:[%s1 + $0x21bc] sm:$0xf]
  %v1569 = vld [vmem:[%s1 + $0x21c0] sm:$0xff]
  %v1570 = vld [vmem:[%s1 + $0x21c8] sm:$0xf]
  %v1571 = vld [vmem:[%s1 + $0x21cc] sm:$0xff]
  %v1572 = vld [vmem:[%s1 + $0x21d4] sm:$0xf]
  %v1573 = vld [vmem:[%s1 + $0x21d8] sm:$0xff]
  %v1574 = vld [vmem:[%s1 + $0x21e0] sm:$0xf]
  %v1575 = vld [vmem:[%s1 + $0x21e4] sm:$0xff]
  %v1576 = vld [vmem:[%s1 + $0x21ec] sm:$0xf]
  %v1577 = vld [vmem:[%s1 + $0x21f0] sm:$0xff]
  %v1578 = vld [vmem:[%s1 + $0x21f8] sm:$0xf]
  %v1579 = vld [vmem:[%s1 + $0x21fc] sm:$0xff]
  %v1580 = vld [vmem:[%s1 + $0x2204] sm:$0xf]
  %v1581 = vld [vmem:[%s1 + $0x2208] sm:$0xff]
  %v1582 = vld [vmem:[%s1 + $0x2210] sm:$0xf]
  %v1583 = vld [vmem:[%s1 + $0x2214] sm:$0xff]
  %v1584 = vld [vmem:[%s1 + $0x221c] sm:$0xf]
  %v1585 = vld [vmem:[%s1 + $0x2220] sm:$0xff]
  %v1586 = vld [vmem:[%s1 + $0x2228] sm:$0xf]
  %v1587 = vld [vmem:[%s1 + $0x222c] sm:$0xff]
  %v1588 = vld [vmem:[%s1 + $0x2234] sm:$0xf]
  %v1589 = vld [vmem:[%s1 + $0x2238] sm:$0xff]
  %v1590 = vld [vmem:[%s1 + $0x2240] sm:$0xf]
  %v1591 = vld [vmem:[%s1 + $0x2244] sm:$0xff]
  %v1592 = vld [vmem:[%s1 + $0x224c] sm:$0xf]
  %v1593 = vld [vmem:[%s1 + $0x2250] sm:$0xff]
  %v1594 = vld [vmem:[%s1 + $0x2258] sm:$0xf]
  %v1595 = vld [vmem:[%s1 + $0x225c] sm:$0xff]
  %v1596 = vld [vmem:[%s1 + $0x2264] sm:$0xf]
  %v1597 = vld [vmem:[%s1 + $0x2268] sm:$0xff]
  %v1598 = vld [vmem:[%s1 + $0x2270] sm:$0xf]
  %v1599 = vld [vmem:[%s1 + $0x2274] sm:$0xff]
  %v1600 = vld [vmem:[%s1 + $0x227c] sm:$0xf]
  %v1601 = vld [vmem:[%s1 + $0x2280] sm:$0xff]
  %v1602 = vld [vmem:[%s1 + $0x2288] sm:$0xf]
  %v1603 = vld [vmem:[%s1 + $0x228c] sm:$0xff]
  %v1604 = vld [vmem:[%s1 + $0x2294] sm:$0xf]
  %v1605 = vld [vmem:[%s1 + $0x2298] sm:$0xff]
  %v1606 = vld [vmem:[%s1 + $0x22a0] sm:$0xf]
  %v1607 = vld [vmem:[%s1 + $0x22a4] sm:$0xff]
  %v1608 = vld [vmem:[%s1 + $0x22ac] sm:$0xf]
  %v1609 = vld [vmem:[%s1 + $0x22b0] sm:$0xff]
  %v1610 = vld [vmem:[%s1 + $0x22b8] sm:$0xf]
  %v1611 = vld [vmem:[%s1 + $0x22bc] sm:$0xff]
  %v1612 = vld [vmem:[%s1 + $0x22c4] sm:$0xf]
  %v1613 = vld [vmem:[%s1 + $0x22c8] sm:$0xff]
  %v1614 = vld [vmem:[%s1 + $0x22d0] sm:$0xf]
  %v1615 = vld [vmem:[%s1 + $0x22d4] sm:$0xff]
  %v1616 = vld [vmem:[%s1 + $0x22dc] sm:$0xf]
  %v1617 = vld [vmem:[%s1 + $0x22e0] sm:$0xff]
  %v1618 = vld [vmem:[%s1 + $0x22e8] sm:$0xf]
  %v1619 = vld [vmem:[%s1 + $0x22ec] sm:$0xff]
  %v1620 = vld [vmem:[%s1 + $0x22f4] sm:$0xf]
  %v1621 = vld [vmem:[%s1 + $0x22f8] sm:$0xff]
  %v1622 = vld [vmem:[%s1 + $0x2300] sm:$0xf]
  %v1623 = vld [vmem:[%s1 + $0x2304] sm:$0xff]
  %v1624 = vld [vmem:[%s1 + $0x230c] sm:$0xf]
  %v1625 = vld [vmem:[%s1 + $0x2310] sm:$0xff]
  %v1626 = vld [vmem:[%s1 + $0x2318] sm:$0xf]
  %v1627 = vld [vmem:[%s1 + $0x231c] sm:$0xff]
  %v1628 = vld [vmem:[%s1 + $0x2324] sm:$0xf]
  %v1629 = vld [vmem:[%s1 + $0x2328] sm:$0xff]
  %v1630 = vld [vmem:[%s1 + $0x2330] sm:$0xf]
  %v1631 = vld [vmem:[%s1 + $0x2334] sm:$0xff]
  %v1632 = vld [vmem:[%s1 + $0x233c] sm:$0xf]
  %v1633 = vld [vmem:[%s1 + $0x2340] sm:$0xff]
  %v1634 = vld [vmem:[%s1 + $0x2348] sm:$0xf]
  %v1635 = vld [vmem:[%s1 + $0x234c] sm:$0xff]
  %v1636 = vld [vmem:[%s1 + $0x2354] sm:$0xf]
  %v1637 = vld [vmem:[%s1 + $0x2358] sm:$0xff]
  %v1638 = vld [vmem:[%s1 + $0x2360] sm:$0xf]
  %v1639 = vld [vmem:[%s1 + $0x2364] sm:$0xff]
  %v1640 = vld [vmem:[%s1 + $0x236c] sm:$0xf]
  %v1641 = vld [vmem:[%s1 + $0x2370] sm:$0xff]
  %v1642 = vld [vmem:[%s1 + $0x2378] sm:$0xf]
  %v1643 = vld [vmem:[%s1 + $0x237c] sm:$0xff]
  %v1644 = vld [vmem:[%s1 + $0x2384] sm:$0xf]
  %v1645 = vld [vmem:[%s1 + $0x2388] sm:$0xff]
  %v1646 = vld [vmem:[%s1 + $0x2390] sm:$0xf]
  %v1647 = vld [vmem:[%s1 + $0x2394] sm:$0xff]
  %v1648 = vld [vmem:[%s1 + $0x239c] sm:$0xf]
  %v1649 = vld [vmem:[%s1 + $0x23a0] sm:$0xff]
  %v1650 = vld [vmem:[%s1 + $0x23a8] sm:$0xf]
  %v1651 = vld [vmem:[%s1 + $0x23ac] sm:$0xff]
  %v1652 = vld [vmem:[%s1 + $0x23b4] sm:$0xf]
  %v1653 = vld [vmem:[%s1 + $0x23b8] sm:$0xff]
  %v1654 = vld [vmem:[%s1 + $0x23c0] sm:$0xf]
  %v1655 = vld [vmem:[%s1 + $0x23c4] sm:$0xff]
  %v1656 = vld [vmem:[%s1 + $0x23cc] sm:$0xf]
  %v1657 = vld [vmem:[%s1 + $0x23d0] sm:$0xff]
  %v1658 = vld [vmem:[%s1 + $0x23d8] sm:$0xf]
  %v1659 = vld [vmem:[%s1 + $0x23dc] sm:$0xff]
  %v1660 = vld [vmem:[%s1 + $0x23e4] sm:$0xf]
  %v1661 = vld [vmem:[%s1 + $0x23e8] sm:$0xff]
  %v1662 = vld [vmem:[%s1 + $0x23f0] sm:$0xf]
  %v1663 = vld [vmem:[%s1 + $0x23f4] sm:$0xff]
  %v1664 = vld [vmem:[%s1 + $0x23fc] sm:$0xf]
  %v1665 = vld [vmem:[%s1 + $0x2400] sm:$0xff]
  %v1666 = vld [vmem:[%s1 + $0x2408] sm:$0xf]
  %v1667 = vld [vmem:[%s1 + $0x240c] sm:$0xff]
  %v1668 = vld [vmem:[%s1 + $0x2414] sm:$0xf]
  %v1669 = vld [vmem:[%s1 + $0x2418] sm:$0xff]
  %v1670 = vld [vmem:[%s1 + $0x2420] sm:$0xf]
  %v1671 = vld [vmem:[%s1 + $0x2424] sm:$0xff]
  %v1672 = vld [vmem:[%s1 + $0x242c] sm:$0xf]
  %v1673 = vld [vmem:[%s1 + $0x2430] sm:$0xff]
  %v1674 = vld [vmem:[%s1 + $0x2438] sm:$0xf]
  %v1675 = vld [vmem:[%s1 + $0x243c] sm:$0xff]
  %v1676 = vld [vmem:[%s1 + $0x2444] sm:$0xf]
  %v1677 = vld [vmem:[%s1 + $0x2448] sm:$0xff]
  %v1678 = vld [vmem:[%s1 + $0x2450] sm:$0xf]
  %v1679 = vld [vmem:[%s1 + $0x2454] sm:$0xff]
  %v1680 = vld [vmem:[%s1 + $0x245c] sm:$0xf]
  %v1681 = vld [vmem:[%s1 + $0x2460] sm:$0xff]
  %v1682 = vld [vmem:[%s1 + $0x2468] sm:$0xf]
  %v1683 = vld [vmem:[%s1 + $0x246c] sm:$0xff]
  %v1684 = vld [vmem:[%s1 + $0x2474] sm:$0xf]
  %v1685 = vld [vmem:[%s1 + $0x2478] sm:$0xff]
  %v1686 = vld [vmem:[%s1 + $0x2480] sm:$0xf]
  %v1687 = vld [vmem:[%s1 + $0x2484] sm:$0xff]
  %v1688 = vld [vmem:[%s1 + $0x248c] sm:$0xf]
  %v1689 = vld [vmem:[%s1 + $0x2490] sm:$0xff]
  %v1690 = vld [vmem:[%s1 + $0x2498] sm:$0xf]
  %v1691 = vld [vmem:[%s1 + $0x249c] sm:$0xff]
  %v1692 = vld [vmem:[%s1 + $0x24a4] sm:$0xf]
  %v1693 = vld [vmem:[%s1 + $0x24a8] sm:$0xff]
  %v1694 = vld [vmem:[%s1 + $0x24b0] sm:$0xf]
  %v1695 = vld [vmem:[%s1 + $0x24b4] sm:$0xff]
  %v1696 = vld [vmem:[%s1 + $0x24bc] sm:$0xf]
  %v1697 = vld [vmem:[%s1 + $0x24c0] sm:$0xff]
  %v1698 = vld [vmem:[%s1 + $0x24c8] sm:$0xf]
  %v1699 = vld [vmem:[%s1 + $0x24cc] sm:$0xff]
  %v1700 = vld [vmem:[%s1 + $0x24d4] sm:$0xf]
  %v1701 = vld [vmem:[%s1 + $0x24d8] sm:$0xff]
  %v1702 = vld [vmem:[%s1 + $0x24e0] sm:$0xf]
  %v1703 = vld [vmem:[%s1 + $0x24e4] sm:$0xff]
  %v1704 = vld [vmem:[%s1 + $0x24ec] sm:$0xf]
  %v1705 = vld [vmem:[%s1 + $0x24f0] sm:$0xff]
  %v1706 = vld [vmem:[%s1 + $0x24f8] sm:$0xf]
  %v1707 = vld [vmem:[%s1 + $0x24fc] sm:$0xff]
  %v1708 = vld [vmem:[%s1 + $0x2504] sm:$0xf]
  %v1709 = vld [vmem:[%s1 + $0x2508] sm:$0xff]
  %v1710 = vld [vmem:[%s1 + $0x2510] sm:$0xf]
  %v1711 = vld [vmem:[%s1 + $0x2514] sm:$0xff]
  %v1712 = vld [vmem:[%s1 + $0x251c] sm:$0xf]
  %v1713 = vld [vmem:[%s1 + $0x2520] sm:$0xff]
  %v1714 = vld [vmem:[%s1 + $0x2528] sm:$0xf]
  %v1715 = vld [vmem:[%s1 + $0x252c] sm:$0xff]
  %v1716 = vld [vmem:[%s1 + $0x2534] sm:$0xf]
  %v1717 = vld [vmem:[%s1 + $0x2538] sm:$0xff]
  %v1718 = vld [vmem:[%s1 + $0x2540] sm:$0xf]
  %v1719 = vld [vmem:[%s1 + $0x2544] sm:$0xff]
  %v1720 = vld [vmem:[%s1 + $0x254c] sm:$0xf]
  %v1721 = vld [vmem:[%s1 + $0x2550] sm:$0xff]
  %v1722 = vld [vmem:[%s1 + $0x2558] sm:$0xf]
  %v1723 = vld [vmem:[%s1 + $0x255c] sm:$0xff]
  %v1724 = vld [vmem:[%s1 + $0x2564] sm:$0xf]
  %v1725 = vld [vmem:[%s1 + $0x2568] sm:$0xff]
  %v1726 = vld [vmem:[%s1 + $0x2570] sm:$0xf]
  %v1727 = vld [vmem:[%s1 + $0x2574] sm:$0xff]
  %v1728 = vld [vmem:[%s1 + $0x257c] sm:$0xf]
  %v1729 = vld [vmem:[%s1 + $0x2580] sm:$0xff]
  %v1730 = vld [vmem:[%s1 + $0x2588] sm:$0xf]
  %v1731 = vld [vmem:[%s1 + $0x258c] sm:$0xff]
  %v1732 = vld [vmem:[%s1 + $0x2594] sm:$0xf]
  %v1733 = vld [vmem:[%s1 + $0x2598] sm:$0xff]
  %v1734 = vld [vmem:[%s1 + $0x25a0] sm:$0xf]
  %v1735 = vld [vmem:[%s1 + $0x25a4] sm:$0xff]
  %v1736 = vld [vmem:[%s1 + $0x25ac] sm:$0xf]
  %v1737 = vld [vmem:[%s1 + $0x25b0] sm:$0xff]
  %v1738 = vld [vmem:[%s1 + $0x25b8] sm:$0xf]
  %v1739 = vld [vmem:[%s1 + $0x25bc] sm:$0xff]
  %v1740 = vld [vmem:[%s1 + $0x25c4] sm:$0xf]
  %v1741 = vld [vmem:[%s1 + $0x25c8] sm:$0xff]
  %v1742 = vld [vmem:[%s1 + $0x25d0] sm:$0xf]
  %v1743 = vld [vmem:[%s1 + $0x25d4] sm:$0xff]
  %v1744 = vld [vmem:[%s1 + $0x25dc] sm:$0xf]
  %v1745 = vld [vmem:[%s1 + $0x25e0] sm:$0xff]
  %v1746 = vld [vmem:[%s1 + $0x25e8] sm:$0xf]
  %v1747 = vld [vmem:[%s1 + $0x25ec] sm:$0xff]
  %v1748 = vld [vmem:[%s1 + $0x25f4] sm:$0xf]
  %v1749 = vld [vmem:[%s1 + $0x25f8] sm:$0xff]
  %v1750 = vld [vmem:[%s1 + $0x2600] sm:$0xf]
  %v1751 = vld [vmem:[%s1 + $0x2604] sm:$0xff]
  %v1752 = vld [vmem:[%s1 + $0x260c] sm:$0xf]
  %v1753 = vld [vmem:[%s1 + $0x2610] sm:$0xff]
  %v1754 = vld [vmem:[%s1 + $0x2618] sm:$0xf]
  %v1755 = vld [vmem:[%s1 + $0x261c] sm:$0xff]
  %v1756 = vld [vmem:[%s1 + $0x2624] sm:$0xf]
  %v1757 = vld [vmem:[%s1 + $0x2628] sm:$0xff]
  %v1758 = vld [vmem:[%s1 + $0x2630] sm:$0xf]
  %v1759 = vld [vmem:[%s1 + $0x2634] sm:$0x77]
  %v1760 = vld [vmem:[%s1 + $0x263c] sm:$0x7]
  %v1761 = vld [vmem:[%s2] sm:$0x7]
  %v1763 = vlaneseq
  %v1764 = vshrl.u32 %v1763, 7
  %v1765 = vsub.s32 0, %v1764
  %v1766 = vrot.slane %v1761, %v1765
  %v1767 = vlaneseq
  %v1768 = vshrl.u32 %v1767, 7
  %v1769 = vsub.s32 1, %v1768
  %v1770 = vrot.slane %v1761, %v1769
  %v1771 = vlaneseq
  %v1772 = vshrl.u32 %v1771, 7
  %v1773 = vsub.s32 2, %v1772
  %v1774 = vrot.slane %v1761, %v1773
  %v3410 = vunpack.c.l.b16 %v129
  %v3411 = vunpack.c.h.b16 %v129
  %v3412 = vunpack.c.l.b16 %v130
  %v3413 = vunpack.c.l.b16 %v131
  %v3414 = vunpack.c.h.b16 %v131
  %v3415 = vunpack.c.l.b16 %v132
  %v3416 = vunpack.c.l.b16 %v133
  %v3417 = vunpack.c.h.b16 %v133
  %v3418 = vunpack.c.l.b16 %v134
  %v3419 = vunpack.c.l.b16 %v135
  %v3420 = vunpack.c.h.b16 %v135
  %v3421 = vunpack.c.l.b16 %v136
  %v3422 = vunpack.c.l.b16 %v137
  %v3423 = vunpack.c.h.b16 %v137
  %v3424 = vunpack.c.l.b16 %v138
  %v3425 = vunpack.c.l.b16 %v139
  %v3426 = vunpack.c.h.b16 %v139
  %v3427 = vunpack.c.l.b16 %v140
  %v3428 = vunpack.c.l.b16 %v141
  %v3429 = vunpack.c.h.b16 %v141
  %v3430 = vunpack.c.l.b16 %v142
  %v3431 = vunpack.c.l.b16 %v143
  %v3432 = vunpack.c.h.b16 %v143
  %v3433 = vunpack.c.l.b16 %v144
  %v3434 = vunpack.c.l.b16 %v145
  %v3435 = vunpack.c.h.b16 %v145
  %v3436 = vunpack.c.l.b16 %v146
  %v3437 = vunpack.c.l.b16 %v147
  %v3438 = vunpack.c.h.b16 %v147
  %v3439 = vunpack.c.l.b16 %v148
  %v3440 = vunpack.c.l.b16 %v149
  %v3441 = vunpack.c.h.b16 %v149
  %v3442 = vunpack.c.l.b16 %v150
  %v3443 = vunpack.c.l.b16 %v151
  %v3444 = vunpack.c.h.b16 %v151
  %v3445 = vunpack.c.l.b16 %v152
  %v3446 = vunpack.c.l.b16 %v153
  %v3447 = vunpack.c.h.b16 %v153
  %v3448 = vunpack.c.l.b16 %v154
  %v3449 = vunpack.c.l.b16 %v155
  %v3450 = vunpack.c.h.b16 %v155
  %v3451 = vunpack.c.l.b16 %v156
  %v3452 = vunpack.c.l.b16 %v157
  %v3453 = vunpack.c.h.b16 %v157
  %v3454 = vunpack.c.l.b16 %v158
  %v3455 = vunpack.c.l.b16 %v159
  %v3456 = vunpack.c.h.b16 %v159
  %v3457 = vunpack.c.l.b16 %v160
  %v3458 = vunpack.c.l.b16 %v161
  %v3459 = vunpack.c.h.b16 %v161
  %v3460 = vunpack.c.l.b16 %v162
  %v3461 = vunpack.c.l.b16 %v163
  %v3462 = vunpack.c.h.b16 %v163
  %v3463 = vunpack.c.l.b16 %v164
  %v3464 = vunpack.c.l.b16 %v165
  %v3465 = vunpack.c.h.b16 %v165
  %v3466 = vunpack.c.l.b16 %v166
  %v3467 = vunpack.c.l.b16 %v167
  %v3468 = vunpack.c.h.b16 %v167
  %v3469 = vunpack.c.l.b16 %v168
  %v3470 = vunpack.c.l.b16 %v169
  %v3471 = vunpack.c.h.b16 %v169
  %v3472 = vunpack.c.l.b16 %v170
  %v3473 = vunpack.c.l.b16 %v171
  %v3474 = vunpack.c.h.b16 %v171
  %v3475 = vunpack.c.l.b16 %v172
  %v3476 = vunpack.c.l.b16 %v173
  %v3477 = vunpack.c.h.b16 %v173
  %v3478 = vunpack.c.l.b16 %v174
  %v3479 = vunpack.c.l.b16 %v175
  %v3480 = vunpack.c.h.b16 %v175
  %v3481 = vunpack.c.l.b16 %v176
  %v3482 = vunpack.c.l.b16 %v177
  %v3483 = vunpack.c.h.b16 %v177
  %v3484 = vunpack.c.l.b16 %v178
  %v3485 = vunpack.c.l.b16 %v179
  %v3486 = vunpack.c.h.b16 %v179
  %v3487 = vunpack.c.l.b16 %v180
  %v3488 = vunpack.c.l.b16 %v181
  %v3489 = vunpack.c.h.b16 %v181
  %v3490 = vunpack.c.l.b16 %v182
  %v3491 = vunpack.c.l.b16 %v183
  %v3492 = vunpack.c.h.b16 %v183
  %v3493 = vunpack.c.l.b16 %v184
  %v3494 = vunpack.c.l.b16 %v185
  %v3495 = vunpack.c.h.b16 %v185
  %v3496 = vunpack.c.l.b16 %v186
  %v3497 = vunpack.c.l.b16 %v187
  %v3498 = vunpack.c.h.b16 %v187
  %v3499 = vunpack.c.l.b16 %v188
  %v3500 = vunpack.c.l.b16 %v189
  %v3501 = vunpack.c.h.b16 %v189
  %v3502 = vunpack.c.l.b16 %v190
  %v3503 = vunpack.c.l.b16 %v191
  %v3504 = vunpack.c.h.b16 %v191
  %v3505 = vunpack.c.l.b16 %v192
  %v3506 = vunpack.c.l.b16 %v193
  %v3507 = vunpack.c.h.b16 %v193
  %v3508 = vunpack.c.l.b16 %v194
  %v3509 = vunpack.c.l.b16 %v195
  %v3510 = vunpack.c.h.b16 %v195
  %v3511 = vunpack.c.l.b16 %v196
  %v3512 = vunpack.c.l.b16 %v197
  %v3513 = vunpack.c.h.b16 %v197
  %v3514 = vunpack.c.l.b16 %v198
  %v3515 = vunpack.c.l.b16 %v199
  %v3516 = vunpack.c.h.b16 %v199
  %v3517 = vunpack.c.l.b16 %v200
  %v3518 = vunpack.c.l.b16 %v201
  %v3519 = vunpack.c.h.b16 %v201
  %v3520 = vunpack.c.l.b16 %v202
  %v3521 = vunpack.c.l.b16 %v203
  %v3522 = vunpack.c.h.b16 %v203
  %v3523 = vunpack.c.l.b16 %v204
  %v3524 = vunpack.c.l.b16 %v205
  %v3525 = vunpack.c.h.b16 %v205
  %v3526 = vunpack.c.l.b16 %v206
  %v3527 = vunpack.c.l.b16 %v207
  %v3528 = vunpack.c.h.b16 %v207
  %v3529 = vunpack.c.l.b16 %v208
  %v3530 = vunpack.c.l.b16 %v209
  %v3531 = vunpack.c.h.b16 %v209
  %v3532 = vunpack.c.l.b16 %v210
  %v3533 = vunpack.c.l.b16 %v211
  %v3534 = vunpack.c.h.b16 %v211
  %v3535 = vunpack.c.l.b16 %v212
  %v3536 = vunpack.c.l.b16 %v213
  %v3537 = vunpack.c.h.b16 %v213
  %v3538 = vunpack.c.l.b16 %v214
  %v3539 = vunpack.c.l.b16 %v215
  %v3540 = vunpack.c.h.b16 %v215
  %v3541 = vunpack.c.l.b16 %v216
  %v3542 = vunpack.c.l.b16 %v217
  %v3543 = vunpack.c.h.b16 %v217
  %v3544 = vunpack.c.l.b16 %v218
  %v3545 = vunpack.c.l.b16 %v219
  %v3546 = vunpack.c.h.b16 %v219
  %v3547 = vunpack.c.l.b16 %v220
  %v3548 = vunpack.c.l.b16 %v221
  %v3549 = vunpack.c.h.b16 %v221
  %v3550 = vunpack.c.l.b16 %v222
  %v3551 = vunpack.c.l.b16 %v223
  %v3552 = vunpack.c.h.b16 %v223
  %v3553 = vunpack.c.l.b16 %v224
  %v3554 = vunpack.c.l.b16 %v225
  %v3555 = vunpack.c.h.b16 %v225
  %v3556 = vunpack.c.l.b16 %v226
  %v3557 = vunpack.c.l.b16 %v227
  %v3558 = vunpack.c.h.b16 %v227
  %v3559 = vunpack.c.l.b16 %v228
  %v3560 = vunpack.c.l.b16 %v229
  %v3561 = vunpack.c.h.b16 %v229
  %v3562 = vunpack.c.l.b16 %v230
  %v3563 = vunpack.c.l.b16 %v231
  %v3564 = vunpack.c.h.b16 %v231
  %v3565 = vunpack.c.l.b16 %v232
  %v3566 = vunpack.c.l.b16 %v233
  %v3567 = vunpack.c.h.b16 %v233
  %v3568 = vunpack.c.l.b16 %v234
  %v3569 = vunpack.c.l.b16 %v235
  %v3570 = vunpack.c.h.b16 %v235
  %v3571 = vunpack.c.l.b16 %v236
  %v3572 = vunpack.c.l.b16 %v237
  %v3573 = vunpack.c.h.b16 %v237
  %v3574 = vunpack.c.l.b16 %v238
  %v3575 = vunpack.c.l.b16 %v239
  %v3576 = vunpack.c.h.b16 %v239
  %v3577 = vunpack.c.l.b16 %v240
  %v3578 = vunpack.c.l.b16 %v241
  %v3579 = vunpack.c.h.b16 %v241
  %v3580 = vunpack.c.l.b16 %v242
  %v3581 = vunpack.c.l.b16 %v243
  %v3582 = vunpack.c.h.b16 %v243
  %v3583 = vunpack.c.l.b16 %v244
  %v3584 = vunpack.c.l.b16 %v245
  %v3585 = vunpack.c.h.b16 %v245
  %v3586 = vunpack.c.l.b16 %v246
  %v3587 = vunpack.c.l.b16 %v247
  %v3588 = vunpack.c.h.b16 %v247
  %v3589 = vunpack.c.l.b16 %v248
  %v3590 = vunpack.c.l.b16 %v249
  %v3591 = vunpack.c.h.b16 %v249
  %v3592 = vunpack.c.l.b16 %v250
  %v3593 = vunpack.c.l.b16 %v251
  %v3594 = vunpack.c.h.b16 %v251
  %v3595 = vunpack.c.l.b16 %v252
  %v3596 = vunpack.c.l.b16 %v253
  %v3597 = vunpack.c.h.b16 %v253
  %v3598 = vunpack.c.l.b16 %v254
  %v3599 = vunpack.c.l.b16 %v255
  %v3600 = vunpack.c.h.b16 %v255
  %v3601 = vunpack.c.l.b16 %v256
  %v3602 = vunpack.c.l.b16 %v257
  %v3603 = vunpack.c.h.b16 %v257
  %v3604 = vunpack.c.l.b16 %v258
  %v3605 = vunpack.c.l.b16 %v259
  %v3606 = vunpack.c.h.b16 %v259
  %v3607 = vunpack.c.l.b16 %v260
  %v3608 = vunpack.c.l.b16 %v261
  %v3609 = vunpack.c.h.b16 %v261
  %v3610 = vunpack.c.l.b16 %v262
  %v3611 = vunpack.c.l.b16 %v263
  %v3612 = vunpack.c.h.b16 %v263
  %v3613 = vunpack.c.l.b16 %v264
  %v3614 = vunpack.c.l.b16 %v265
  %v3615 = vunpack.c.h.b16 %v265
  %v3616 = vunpack.c.l.b16 %v266
  %v3617 = vunpack.c.l.b16 %v267
  %v3618 = vunpack.c.h.b16 %v267
  %v3619 = vunpack.c.l.b16 %v268
  %v3620 = vunpack.c.l.b16 %v269
  %v3621 = vunpack.c.h.b16 %v269
  %v3622 = vunpack.c.l.b16 %v270
  %v3623 = vunpack.c.l.b16 %v271
  %v3624 = vunpack.c.h.b16 %v271
  %v3625 = vunpack.c.l.b16 %v272
  %v3626 = vunpack.c.l.b16 %v273
  %v3627 = vunpack.c.h.b16 %v273
  %v3628 = vunpack.c.l.b16 %v274
  %v3629 = vunpack.c.l.b16 %v275
  %v3630 = vunpack.c.h.b16 %v275
  %v3631 = vunpack.c.l.b16 %v276
  %v3632 = vunpack.c.l.b16 %v277
  %v3633 = vunpack.c.h.b16 %v277
  %v3634 = vunpack.c.l.b16 %v278
  %v3635 = vunpack.c.l.b16 %v279
  %v3636 = vunpack.c.h.b16 %v279
  %v3637 = vunpack.c.l.b16 %v280
  %v3638 = vunpack.c.l.b16 %v281
  %v3639 = vunpack.c.h.b16 %v281
  %v3640 = vunpack.c.l.b16 %v282
  %v3641 = vunpack.c.l.b16 %v283
  %v3642 = vunpack.c.h.b16 %v283
  %v3643 = vunpack.c.l.b16 %v284
  %v3644 = vunpack.c.l.b16 %v285
  %v3645 = vunpack.c.h.b16 %v285
  %v3646 = vunpack.c.l.b16 %v286
  %v3647 = vunpack.c.l.b16 %v287
  %v3648 = vunpack.c.h.b16 %v287
  %v3649 = vunpack.c.l.b16 %v288
  %v3650 = vunpack.c.l.b16 %v289
  %v3651 = vunpack.c.h.b16 %v289
  %v3652 = vunpack.c.l.b16 %v290
  %v3653 = vunpack.c.l.b16 %v291
  %v3654 = vunpack.c.h.b16 %v291
  %v3655 = vunpack.c.l.b16 %v292
  %v3656 = vunpack.c.l.b16 %v293
  %v3657 = vunpack.c.h.b16 %v293
  %v3658 = vunpack.c.l.b16 %v294
  %v3659 = vunpack.c.l.b16 %v295
  %v3660 = vunpack.c.h.b16 %v295
  %v3661 = vunpack.c.l.b16 %v296
  %v3662 = vunpack.c.l.b16 %v297
  %v3663 = vunpack.c.h.b16 %v297
  %v3664 = vunpack.c.l.b16 %v298
  %v3665 = vunpack.c.l.b16 %v299
  %v3666 = vunpack.c.h.b16 %v299
  %v3667 = vunpack.c.l.b16 %v300
  %v3668 = vunpack.c.l.b16 %v301
  %v3669 = vunpack.c.h.b16 %v301
  %v3670 = vunpack.c.l.b16 %v302
  %v3671 = vunpack.c.l.b16 %v303
  %v3672 = vunpack.c.h.b16 %v303
  %v3673 = vunpack.c.l.b16 %v304
  %v3674 = vunpack.c.l.b16 %v305
  %v3675 = vunpack.c.h.b16 %v305
  %v3676 = vunpack.c.l.b16 %v306
  %v3677 = vunpack.c.l.b16 %v307
  %v3678 = vunpack.c.h.b16 %v307
  %v3679 = vunpack.c.l.b16 %v308
  %v3680 = vunpack.c.l.b16 %v309
  %v3681 = vunpack.c.h.b16 %v309
  %v3682 = vunpack.c.l.b16 %v310
  %v3683 = vunpack.c.l.b16 %v311
  %v3684 = vunpack.c.h.b16 %v311
  %v3685 = vunpack.c.l.b16 %v312
  %v3686 = vunpack.c.l.b16 %v313
  %v3687 = vunpack.c.h.b16 %v313
  %v3688 = vunpack.c.l.b16 %v314
  %v3689 = vunpack.c.l.b16 %v315
  %v3690 = vunpack.c.h.b16 %v315
  %v3691 = vunpack.c.l.b16 %v316
  %v3692 = vunpack.c.l.b16 %v317
  %v3693 = vunpack.c.h.b16 %v317
  %v3694 = vunpack.c.l.b16 %v318
  %v3695 = vunpack.c.l.b16 %v319
  %v3696 = vunpack.c.h.b16 %v319
  %v3697 = vunpack.c.l.b16 %v320
  %v3698 = vunpack.c.l.b16 %v321
  %v3699 = vunpack.c.h.b16 %v321
  %v3700 = vunpack.c.l.b16 %v322
  %v3701 = vunpack.c.l.b16 %v323
  %v3702 = vunpack.c.h.b16 %v323
  %v3703 = vunpack.c.l.b16 %v324
  %v3704 = vunpack.c.l.b16 %v325
  %v3705 = vunpack.c.h.b16 %v325
  %v3706 = vunpack.c.l.b16 %v326
  %v3707 = vunpack.c.l.b16 %v327
  %v3708 = vunpack.c.h.b16 %v327
  %v3709 = vunpack.c.l.b16 %v328
  %v3710 = vunpack.c.l.b16 %v329
  %v3711 = vunpack.c.h.b16 %v329
  %v3712 = vunpack.c.l.b16 %v330
  %v3713 = vunpack.c.l.b16 %v331
  %v3714 = vunpack.c.h.b16 %v331
  %v3715 = vunpack.c.l.b16 %v332
  %v3716 = vunpack.c.l.b16 %v333
  %v3717 = vunpack.c.h.b16 %v333
  %v3718 = vunpack.c.l.b16 %v334
  %v3719 = vunpack.c.l.b16 %v335
  %v3720 = vunpack.c.h.b16 %v335
  %v3721 = vunpack.c.l.b16 %v336
  %v3722 = vunpack.c.l.b16 %v337
  %v3723 = vunpack.c.h.b16 %v337
  %v3724 = vunpack.c.l.b16 %v338
  %v3725 = vunpack.c.l.b16 %v339
  %v3726 = vunpack.c.h.b16 %v339
  %v3727 = vunpack.c.l.b16 %v340
  %v3728 = vunpack.c.l.b16 %v341
  %v3729 = vunpack.c.h.b16 %v341
  %v3730 = vunpack.c.l.b16 %v342
  %v3731 = vunpack.c.l.b16 %v343
  %v3732 = vunpack.c.h.b16 %v343
  %v3733 = vunpack.c.l.b16 %v344
  %v3734 = vunpack.c.l.b16 %v345
  %v3735 = vunpack.c.h.b16 %v345
  %v3736 = vunpack.c.l.b16 %v346
  %v3737 = vunpack.c.l.b16 %v347
  %v3738 = vunpack.c.h.b16 %v347
  %v3739 = vunpack.c.l.b16 %v348
  %v3740 = vunpack.c.l.b16 %v349
  %v3741 = vunpack.c.h.b16 %v349
  %v3742 = vunpack.c.l.b16 %v350
  %v3743 = vunpack.c.l.b16 %v351
  %v3744 = vunpack.c.h.b16 %v351
  %v3745 = vunpack.c.l.b16 %v352
  %v3746 = vunpack.c.l.b16 %v353
  %v3747 = vunpack.c.h.b16 %v353
  %v3748 = vunpack.c.l.b16 %v354
  %v3749 = vunpack.c.l.b16 %v355
  %v3750 = vunpack.c.h.b16 %v355
  %v3751 = vunpack.c.l.b16 %v356
  %v3752 = vunpack.c.l.b16 %v357
  %v3753 = vunpack.c.h.b16 %v357
  %v3754 = vunpack.c.l.b16 %v358
  %v3755 = vunpack.c.l.b16 %v359
  %v3756 = vunpack.c.h.b16 %v359
  %v3757 = vunpack.c.l.b16 %v360
  %v3758 = vunpack.c.l.b16 %v361
  %v3759 = vunpack.c.h.b16 %v361
  %v3760 = vunpack.c.l.b16 %v362
  %v3761 = vunpack.c.l.b16 %v363
  %v3762 = vunpack.c.h.b16 %v363
  %v3763 = vunpack.c.l.b16 %v364
  %v3764 = vunpack.c.l.b16 %v365
  %v3765 = vunpack.c.h.b16 %v365
  %v3766 = vunpack.c.l.b16 %v366
  %v3767 = vunpack.c.l.b16 %v367
  %v3768 = vunpack.c.h.b16 %v367
  %v3769 = vunpack.c.l.b16 %v368
  %v3770 = vunpack.c.l.b16 %v369
  %v3771 = vunpack.c.h.b16 %v369
  %v3772 = vunpack.c.l.b16 %v370
  %v3773 = vunpack.c.l.b16 %v371
  %v3774 = vunpack.c.h.b16 %v371
  %v3775 = vunpack.c.l.b16 %v372
  %v3776 = vunpack.c.l.b16 %v373
  %v3777 = vunpack.c.h.b16 %v373
  %v3778 = vunpack.c.l.b16 %v374
  %v3779 = vunpack.c.l.b16 %v375
  %v3780 = vunpack.c.h.b16 %v375
  %v3781 = vunpack.c.l.b16 %v376
  %v3782 = vunpack.c.l.b16 %v377
  %v3783 = vunpack.c.h.b16 %v377
  %v3784 = vunpack.c.l.b16 %v378
  %v3785 = vunpack.c.l.b16 %v379
  %v3786 = vunpack.c.h.b16 %v379
  %v3787 = vunpack.c.l.b16 %v380
  %v3788 = vunpack.c.l.b16 %v381
  %v3789 = vunpack.c.h.b16 %v381
  %v3790 = vunpack.c.l.b16 %v382
  %v3791 = vunpack.c.l.b16 %v383
  %v3792 = vunpack.c.h.b16 %v383
  %v3793 = vunpack.c.l.b16 %v384
  %v3794 = vunpack.c.l.b16 %v385
  %v3795 = vunpack.c.h.b16 %v385
  %v3796 = vunpack.c.l.b16 %v386
  %v3797 = vunpack.c.l.b16 %v387
  %v3798 = vunpack.c.h.b16 %v387
  %v3799 = vunpack.c.l.b16 %v388
  %v3800 = vunpack.c.l.b16 %v389
  %v3801 = vunpack.c.h.b16 %v389
  %v3802 = vunpack.c.l.b16 %v390
  %v3803 = vunpack.c.l.b16 %v391
  %v3804 = vunpack.c.h.b16 %v391
  %v3805 = vunpack.c.l.b16 %v392
  %v3806 = vunpack.c.l.b16 %v393
  %v3807 = vunpack.c.h.b16 %v393
  %v3808 = vunpack.c.l.b16 %v394
  %v3809 = vunpack.c.l.b16 %v395
  %v3810 = vunpack.c.h.b16 %v395
  %v3811 = vunpack.c.l.b16 %v396
  %v3812 = vunpack.c.l.b16 %v397
  %v3813 = vunpack.c.h.b16 %v397
  %v3814 = vunpack.c.l.b16 %v398
  %v3815 = vunpack.c.l.b16 %v399
  %v3816 = vunpack.c.h.b16 %v399
  %v3817 = vunpack.c.l.b16 %v400
  %v3818 = vunpack.c.l.b16 %v401
  %v3819 = vunpack.c.h.b16 %v401
  %v3820 = vunpack.c.l.b16 %v402
  %v3821 = vunpack.c.l.b16 %v403
  %v3822 = vunpack.c.h.b16 %v403
  %v3823 = vunpack.c.l.b16 %v404
  %v3824 = vunpack.c.l.b16 %v405
  %v3825 = vunpack.c.h.b16 %v405
  %v3826 = vunpack.c.l.b16 %v406
  %v3827 = vunpack.c.l.b16 %v407
  %v3828 = vunpack.c.h.b16 %v407
  %v3829 = vunpack.c.l.b16 %v408
  %v3830 = vunpack.c.l.b16 %v409
  %v3831 = vunpack.c.h.b16 %v409
  %v3832 = vunpack.c.l.b16 %v410
  %v3833 = vunpack.c.l.b16 %v411
  %v3834 = vunpack.c.h.b16 %v411
  %v3835 = vunpack.c.l.b16 %v412
  %v3836 = vunpack.c.l.b16 %v413
  %v3837 = vunpack.c.h.b16 %v413
  %v3838 = vunpack.c.l.b16 %v414
  %v3839 = vunpack.c.l.b16 %v415
  %v3840 = vunpack.c.h.b16 %v415
  %v3841 = vunpack.c.l.b16 %v416
  %v3842 = vunpack.c.l.b16 %v417
  %v3843 = vunpack.c.h.b16 %v417
  %v3844 = vunpack.c.l.b16 %v418
  %v3845 = vunpack.c.l.b16 %v419
  %v3846 = vunpack.c.h.b16 %v419
  %v3847 = vunpack.c.l.b16 %v420
  %v3848 = vunpack.c.l.b16 %v421
  %v3849 = vunpack.c.h.b16 %v421
  %v3850 = vunpack.c.l.b16 %v422
  %v3851 = vunpack.c.l.b16 %v423
  %v3852 = vunpack.c.h.b16 %v423
  %v3853 = vunpack.c.l.b16 %v424
  %v3854 = vunpack.c.l.b16 %v425
  %v3855 = vunpack.c.h.b16 %v425
  %v3856 = vunpack.c.l.b16 %v426
  %v3857 = vunpack.c.l.b16 %v427
  %v3858 = vunpack.c.h.b16 %v427
  %v3859 = vunpack.c.l.b16 %v428
  %v3860 = vunpack.c.l.b16 %v429
  %v3861 = vunpack.c.h.b16 %v429
  %v3862 = vunpack.c.l.b16 %v430
  %v3863 = vunpack.c.l.b16 %v431
  %v3864 = vunpack.c.h.b16 %v431
  %v3865 = vunpack.c.l.b16 %v432
  %v3866 = vunpack.c.l.b16 %v433
  %v3867 = vunpack.c.h.b16 %v433
  %v3868 = vunpack.c.l.b16 %v434
  %v3869 = vunpack.c.l.b16 %v435
  %v3870 = vunpack.c.h.b16 %v435
  %v3871 = vunpack.c.l.b16 %v436
  %v3872 = vunpack.c.l.b16 %v437
  %v3873 = vunpack.c.h.b16 %v437
  %v3874 = vunpack.c.l.b16 %v438
  %v3875 = vunpack.c.l.b16 %v439
  %v3876 = vunpack.c.h.b16 %v439
  %v3877 = vunpack.c.l.b16 %v440
  %v3878 = vunpack.c.l.b16 %v441
  %v3879 = vunpack.c.h.b16 %v441
  %v3880 = vunpack.c.l.b16 %v442
  %v3881 = vunpack.c.l.b16 %v443
  %v3882 = vunpack.c.h.b16 %v443
  %v3883 = vunpack.c.l.b16 %v444
  %v3884 = vunpack.c.l.b16 %v445
  %v3885 = vunpack.c.h.b16 %v445
  %v3886 = vunpack.c.l.b16 %v446
  %v3887 = vunpack.c.l.b16 %v447
  %v3888 = vunpack.c.h.b16 %v447
  %v3889 = vunpack.c.l.b16 %v448
  %v3890 = vunpack.c.l.b16 %v449
  %v3891 = vunpack.c.h.b16 %v449
  %v3892 = vunpack.c.l.b16 %v450
  %v3893 = vunpack.c.l.b16 %v451
  %v3894 = vunpack.c.h.b16 %v451
  %v3895 = vunpack.c.l.b16 %v452
  %v3896 = vunpack.c.l.b16 %v453
  %v3897 = vunpack.c.h.b16 %v453
  %v3898 = vunpack.c.l.b16 %v454
  %v3899 = vunpack.c.l.b16 %v455
  %v3900 = vunpack.c.h.b16 %v455
  %v3901 = vunpack.c.l.b16 %v456
  %v3902 = vunpack.c.l.b16 %v457
  %v3903 = vunpack.c.h.b16 %v457
  %v3904 = vunpack.c.l.b16 %v458
  %v3905 = vunpack.c.l.b16 %v459
  %v3906 = vunpack.c.h.b16 %v459
  %v3907 = vunpack.c.l.b16 %v460
  %v3908 = vunpack.c.l.b16 %v461
  %v3909 = vunpack.c.h.b16 %v461
  %v3910 = vunpack.c.l.b16 %v462
  %v3911 = vunpack.c.l.b16 %v463
  %v3912 = vunpack.c.h.b16 %v463
  %v3913 = vunpack.c.l.b16 %v464
  %v3914 = vunpack.c.l.b16 %v465
  %v3915 = vunpack.c.h.b16 %v465
  %v3916 = vunpack.c.l.b16 %v466
  %v3917 = vunpack.c.l.b16 %v467
  %v3918 = vunpack.c.h.b16 %v467
  %v3919 = vunpack.c.l.b16 %v468
  %v3920 = vunpack.c.l.b16 %v469
  %v3921 = vunpack.c.h.b16 %v469
  %v3922 = vunpack.c.l.b16 %v470
  %v3923 = vunpack.c.l.b16 %v471
  %v3924 = vunpack.c.h.b16 %v471
  %v3925 = vunpack.c.l.b16 %v472
  %v3926 = vunpack.c.l.b16 %v473
  %v3927 = vunpack.c.h.b16 %v473
  %v3928 = vunpack.c.l.b16 %v474
  %v3929 = vunpack.c.l.b16 %v475
  %v3930 = vunpack.c.h.b16 %v475
  %v3931 = vunpack.c.l.b16 %v476
  %v3932 = vunpack.c.l.b16 %v477
  %v3933 = vunpack.c.h.b16 %v477
  %v3934 = vunpack.c.l.b16 %v478
  %v3935 = vunpack.c.l.b16 %v479
  %v3936 = vunpack.c.h.b16 %v479
  %v3937 = vunpack.c.l.b16 %v480
  %v3938 = vunpack.c.l.b16 %v481
  %v3939 = vunpack.c.h.b16 %v481
  %v3940 = vunpack.c.l.b16 %v482
  %v3941 = vunpack.c.l.b16 %v483
  %v3942 = vunpack.c.h.b16 %v483
  %v3943 = vunpack.c.l.b16 %v484
  %v3944 = vunpack.c.l.b16 %v485
  %v3945 = vunpack.c.h.b16 %v485
  %v3946 = vunpack.c.l.b16 %v486
  %v3947 = vunpack.c.l.b16 %v487
  %v3948 = vunpack.c.h.b16 %v487
  %v3949 = vunpack.c.l.b16 %v488
  %v3950 = vunpack.c.l.b16 %v489
  %v3951 = vunpack.c.h.b16 %v489
  %v3952 = vunpack.c.l.b16 %v490
  %v3953 = vunpack.c.l.b16 %v491
  %v3954 = vunpack.c.h.b16 %v491
  %v3955 = vunpack.c.l.b16 %v492
  %v3956 = vunpack.c.l.b16 %v493
  %v3957 = vunpack.c.h.b16 %v493
  %v3958 = vunpack.c.l.b16 %v494
  %v3959 = vunpack.c.l.b16 %v495
  %v3960 = vunpack.c.h.b16 %v495
  %v3961 = vunpack.c.l.b16 %v496
  %v3962 = vunpack.c.l.b16 %v497
  %v3963 = vunpack.c.h.b16 %v497
  %v3964 = vunpack.c.l.b16 %v498
  %v3965 = vunpack.c.l.b16 %v499
  %v3966 = vunpack.c.h.b16 %v499
  %v3967 = vunpack.c.l.b16 %v500
  %v3968 = vunpack.c.l.b16 %v501
  %v3969 = vunpack.c.h.b16 %v501
  %v3970 = vunpack.c.l.b16 %v502
  %v3971 = vunpack.c.l.b16 %v503
  %v3972 = vunpack.c.h.b16 %v503
  %v3973 = vunpack.c.l.b16 %v504
  %v3974 = vunpack.c.l.b16 %v505
  %v3975 = vunpack.c.h.b16 %v505
  %v3976 = vunpack.c.l.b16 %v506
  %v3977 = vunpack.c.l.b16 %v507
  %v3978 = vunpack.c.h.b16 %v507
  %v3979 = vunpack.c.l.b16 %v508
  %v3980 = vunpack.c.l.b16 %v509
  %v3981 = vunpack.c.h.b16 %v509
  %v3982 = vunpack.c.l.b16 %v510
  %v3983 = vunpack.c.l.b16 %v511
  %v3984 = vunpack.c.h.b16 %v511
  %v3985 = vunpack.c.l.b16 %v512
  %v3986 = vunpack.c.l.b16 %v513
  %v3987 = vunpack.c.h.b16 %v513
  %v3988 = vunpack.c.l.b16 %v514
  %v3989 = vunpack.c.l.b16 %v515
  %v3990 = vunpack.c.h.b16 %v515
  %v3991 = vunpack.c.l.b16 %v516
  %v3992 = vunpack.c.l.b16 %v517
  %v3993 = vunpack.c.h.b16 %v517
  %v3994 = vunpack.c.l.b16 %v518
  %v3995 = vunpack.c.l.b16 %v519
  %v3996 = vunpack.c.h.b16 %v519
  %v3997 = vunpack.c.l.b16 %v520
  %v3998 = vunpack.c.l.b16 %v521
  %v3999 = vunpack.c.h.b16 %v521
  %v4000 = vunpack.c.l.b16 %v522
  %v4001 = vunpack.c.l.b16 %v523
  %v4002 = vunpack.c.h.b16 %v523
  %v4003 = vunpack.c.l.b16 %v524
  %v4004 = vunpack.c.l.b16 %v525
  %v4005 = vunpack.c.h.b16 %v525
  %v4006 = vunpack.c.l.b16 %v526
  %v4007 = vunpack.c.l.b16 %v527
  %v4008 = vunpack.c.h.b16 %v527
  %v4009 = vunpack.c.l.b16 %v528
  %v4010 = vunpack.c.l.b16 %v529
  %v4011 = vunpack.c.h.b16 %v529
  %v4012 = vunpack.c.l.b16 %v530
  %v4013 = vunpack.c.l.b16 %v531
  %v4014 = vunpack.c.h.b16 %v531
  %v4015 = vunpack.c.l.b16 %v532
  %v4016 = vunpack.c.l.b16 %v533
  %v4017 = vunpack.c.h.b16 %v533
  %v4018 = vunpack.c.l.b16 %v534
  %v4019 = vunpack.c.l.b16 %v535
  %v4020 = vunpack.c.h.b16 %v535
  %v4021 = vunpack.c.l.b16 %v536
  %v4022 = vunpack.c.l.b16 %v537
  %v4023 = vunpack.c.h.b16 %v537
  %v4024 = vunpack.c.l.b16 %v538
  %v4025 = vunpack.c.l.b16 %v539
  %v4026 = vunpack.c.h.b16 %v539
  %v4027 = vunpack.c.l.b16 %v540
  %v4028 = vunpack.c.l.b16 %v541
  %v4029 = vunpack.c.h.b16 %v541
  %v4030 = vunpack.c.l.b16 %v542
  %v4031 = vunpack.c.l.b16 %v543
  %v4032 = vunpack.c.h.b16 %v543
  %v4033 = vunpack.c.l.b16 %v544
  %v4034 = vunpack.c.l.b16 %v545
  %v4035 = vunpack.c.h.b16 %v545
  %v4036 = vunpack.c.l.b16 %v546
  %v4037 = vunpack.c.l.b16 %v547
  %v4038 = vunpack.c.h.b16 %v547
  %v4039 = vunpack.c.l.b16 %v548
  %v4040 = vunpack.c.l.b16 %v549
  %v4041 = vunpack.c.h.b16 %v549
  %v4042 = vunpack.c.l.b16 %v550
  %v4043 = vunpack.c.l.b16 %v551
  %v4044 = vunpack.c.h.b16 %v551
  %v4045 = vunpack.c.l.b16 %v552
  %v4046 = vunpack.c.l.b16 %v553
  %v4047 = vunpack.c.h.b16 %v553
  %v4048 = vunpack.c.l.b16 %v554
  %v4049 = vunpack.c.l.b16 %v555
  %v4050 = vunpack.c.h.b16 %v555
  %v4051 = vunpack.c.l.b16 %v556
  %v4052 = vunpack.c.l.b16 %v557
  %v4053 = vunpack.c.h.b16 %v557
  %v4054 = vunpack.c.l.b16 %v558
  %v4055 = vunpack.c.l.b16 %v559
  %v4056 = vunpack.c.h.b16 %v559
  %v4057 = vunpack.c.l.b16 %v560
  %v4058 = vunpack.c.l.b16 %v561
  %v4059 = vunpack.c.h.b16 %v561
  %v4060 = vunpack.c.l.b16 %v562
  %v4061 = vunpack.c.l.b16 %v563
  %v4062 = vunpack.c.h.b16 %v563
  %v4063 = vunpack.c.l.b16 %v564
  %v4064 = vunpack.c.l.b16 %v565
  %v4065 = vunpack.c.h.b16 %v565
  %v4066 = vunpack.c.l.b16 %v566
  %v4067 = vunpack.c.l.b16 %v567
  %v4068 = vunpack.c.h.b16 %v567
  %v4069 = vunpack.c.l.b16 %v568
  %v4070 = vunpack.c.l.b16 %v569
  %v4071 = vunpack.c.h.b16 %v569
  %v4072 = vunpack.c.l.b16 %v570
  %v4073 = vunpack.c.l.b16 %v571
  %v4074 = vunpack.c.h.b16 %v571
  %v4075 = vunpack.c.l.b16 %v572
  %v4076 = vunpack.c.l.b16 %v573
  %v4077 = vunpack.c.h.b16 %v573
  %v4078 = vunpack.c.l.b16 %v574
  %v4079 = vunpack.c.l.b16 %v575
  %v4080 = vunpack.c.h.b16 %v575
  %v4081 = vunpack.c.l.b16 %v576
  %v4082 = vunpack.c.l.b16 %v577
  %v4083 = vunpack.c.h.b16 %v577
  %v4084 = vunpack.c.l.b16 %v578
  %v4085 = vunpack.c.l.b16 %v579
  %v4086 = vunpack.c.h.b16 %v579
  %v4087 = vunpack.c.l.b16 %v580
  %v4088 = vunpack.c.l.b16 %v581
  %v4089 = vunpack.c.h.b16 %v581
  %v4090 = vunpack.c.l.b16 %v582
  %v4091 = vunpack.c.l.b16 %v583
  %v4092 = vunpack.c.h.b16 %v583
  %v4093 = vunpack.c.l.b16 %v584
  %v4094 = vunpack.c.l.b16 %v585
  %v4095 = vunpack.c.h.b16 %v585
  %v4096 = vunpack.c.l.b16 %v586
  %v4097 = vunpack.c.l.b16 %v587
  %v4098 = vunpack.c.h.b16 %v587
  %v4099 = vunpack.c.l.b16 %v588
  %v4100 = vunpack.c.l.b16 %v589
  %v4101 = vunpack.c.h.b16 %v589
  %v4102 = vunpack.c.l.b16 %v590
  %v4103 = vunpack.c.l.b16 %v591
  %v4104 = vunpack.c.h.b16 %v591
  %v4105 = vunpack.c.l.b16 %v592
  %v4106 = vunpack.c.l.b16 %v593
  %v4107 = vunpack.c.h.b16 %v593
  %v4108 = vunpack.c.l.b16 %v594
  %v4109 = vunpack.c.l.b16 %v595
  %v4110 = vunpack.c.h.b16 %v595
  %v4111 = vunpack.c.l.b16 %v596
  %v4112 = vunpack.c.l.b16 %v597
  %v4113 = vunpack.c.h.b16 %v597
  %v4114 = vunpack.c.l.b16 %v598
  %v4115 = vunpack.c.l.b16 %v599
  %v4116 = vunpack.c.h.b16 %v599
  %v4117 = vunpack.c.l.b16 %v600
  %v4118 = vunpack.c.l.b16 %v601
  %v4119 = vunpack.c.h.b16 %v601
  %v4120 = vunpack.c.l.b16 %v602
  %v4121 = vunpack.c.l.b16 %v603
  %v4122 = vunpack.c.h.b16 %v603
  %v4123 = vunpack.c.l.b16 %v604
  %v4124 = vunpack.c.l.b16 %v605
  %v4125 = vunpack.c.h.b16 %v605
  %v4126 = vunpack.c.l.b16 %v606
  %v4127 = vunpack.c.l.b16 %v607
  %v4128 = vunpack.c.h.b16 %v607
  %v4129 = vunpack.c.l.b16 %v608
  %v4130 = vunpack.c.l.b16 %v609
  %v4131 = vunpack.c.h.b16 %v609
  %v4132 = vunpack.c.l.b16 %v610
  %v4133 = vunpack.c.l.b16 %v611
  %v4134 = vunpack.c.h.b16 %v611
  %v4135 = vunpack.c.l.b16 %v612
  %v4136 = vunpack.c.l.b16 %v613
  %v4137 = vunpack.c.h.b16 %v613
  %v4138 = vunpack.c.l.b16 %v614
  %v4139 = vunpack.c.l.b16 %v615
  %v4140 = vunpack.c.h.b16 %v615
  %v4141 = vunpack.c.l.b16 %v616
  %v4142 = vunpack.c.l.b16 %v617
  %v4143 = vunpack.c.h.b16 %v617
  %v4144 = vunpack.c.l.b16 %v618
  %v4145 = vunpack.c.l.b16 %v619
  %v4146 = vunpack.c.h.b16 %v619
  %v4147 = vunpack.c.l.b16 %v620
  %v4148 = vunpack.c.l.b16 %v621
  %v4149 = vunpack.c.h.b16 %v621
  %v4150 = vunpack.c.l.b16 %v622
  %v4151 = vunpack.c.l.b16 %v623
  %v4152 = vunpack.c.h.b16 %v623
  %v4153 = vunpack.c.l.b16 %v624
  %v4154 = vunpack.c.l.b16 %v625
  %v4155 = vunpack.c.h.b16 %v625
  %v4156 = vunpack.c.l.b16 %v626
  %v4157 = vunpack.c.l.b16 %v627
  %v4158 = vunpack.c.h.b16 %v627
  %v4159 = vunpack.c.l.b16 %v628
  %v4160 = vunpack.c.l.b16 %v629
  %v4161 = vunpack.c.h.b16 %v629
  %v4162 = vunpack.c.l.b16 %v630
  %v4163 = vunpack.c.l.b16 %v631
  %v4164 = vunpack.c.h.b16 %v631
  %v4165 = vunpack.c.l.b16 %v632
  %v4166 = vunpack.c.l.b16 %v633
  %v4167 = vunpack.c.h.b16 %v633
  %v4168 = vunpack.c.l.b16 %v634
  %v4169 = vunpack.c.l.b16 %v635
  %v4170 = vunpack.c.h.b16 %v635
  %v4171 = vunpack.c.l.b16 %v636
  %v4172 = vunpack.c.l.b16 %v637
  %v4173 = vunpack.c.h.b16 %v637
  %v4174 = vunpack.c.l.b16 %v638
  %v4175 = vunpack.c.l.b16 %v639
  %v4176 = vunpack.c.h.b16 %v639
  %v4177 = vunpack.c.l.b16 %v640
  %v4178 = vunpack.c.l.b16 %v641
  %v4179 = vunpack.c.h.b16 %v641
  %v4180 = vunpack.c.l.b16 %v642
  %v4181 = vunpack.c.l.b16 %v643
  %v4182 = vunpack.c.h.b16 %v643
  %v4183 = vunpack.c.l.b16 %v644
  %v4184 = vunpack.c.l.b16 %v645
  %v4185 = vunpack.c.h.b16 %v645
  %v4186 = vunpack.c.l.b16 %v646
  %v4187 = vunpack.c.l.b16 %v647
  %v4188 = vunpack.c.h.b16 %v647
  %v4189 = vunpack.c.l.b16 %v648
  %v4190 = vunpack.c.l.b16 %v649
  %v4191 = vunpack.c.h.b16 %v649
  %v4192 = vunpack.c.l.b16 %v650
  %v4193 = vunpack.c.l.b16 %v651
  %v4194 = vunpack.c.h.b16 %v651
  %v4195 = vunpack.c.l.b16 %v652
  %v4196 = vunpack.c.l.b16 %v653
  %v4197 = vunpack.c.h.b16 %v653
  %v4198 = vunpack.c.l.b16 %v654
  %v4199 = vunpack.c.l.b16 %v655
  %v4200 = vunpack.c.h.b16 %v655
  %v4201 = vunpack.c.l.b16 %v656
  %v4202 = vunpack.c.l.b16 %v657
  %v4203 = vunpack.c.h.b16 %v657
  %v4204 = vunpack.c.l.b16 %v658
  %v4205 = vunpack.c.l.b16 %v659
  %v4206 = vunpack.c.h.b16 %v659
  %v4207 = vunpack.c.l.b16 %v660
  %v4208 = vunpack.c.l.b16 %v661
  %v4209 = vunpack.c.h.b16 %v661
  %v4210 = vunpack.c.l.b16 %v662
  %v4211 = vunpack.c.l.b16 %v663
  %v4212 = vunpack.c.h.b16 %v663
  %v4213 = vunpack.c.l.b16 %v664
  %v4214 = vunpack.c.l.b16 %v665
  %v4215 = vunpack.c.h.b16 %v665
  %v4216 = vunpack.c.l.b16 %v666
  %v4217 = vunpack.c.l.b16 %v667
  %v4218 = vunpack.c.h.b16 %v667
  %v4219 = vunpack.c.l.b16 %v668
  %v4220 = vunpack.c.l.b16 %v669
  %v4221 = vunpack.c.h.b16 %v669
  %v4222 = vunpack.c.l.b16 %v670
  %v4223 = vunpack.c.l.b16 %v671
  %v4224 = vunpack.c.h.b16 %v671
  %v4225 = vunpack.c.l.b16 %v672
  %v4226 = vunpack.c.l.b16 %v673
  %v4227 = vunpack.c.h.b16 %v673
  %v4228 = vunpack.c.l.b16 %v674
  %v4229 = vunpack.c.l.b16 %v675
  %v4230 = vunpack.c.h.b16 %v675
  %v4231 = vunpack.c.l.b16 %v676
  %v4232 = vunpack.c.l.b16 %v677
  %v4233 = vunpack.c.h.b16 %v677
  %v4234 = vunpack.c.l.b16 %v678
  %v4235 = vunpack.c.l.b16 %v679
  %v4236 = vunpack.c.h.b16 %v679
  %v4237 = vunpack.c.l.b16 %v680
  %v4238 = vunpack.c.l.b16 %v681
  %v4239 = vunpack.c.h.b16 %v681
  %v4240 = vunpack.c.l.b16 %v682
  %v4241 = vunpack.c.l.b16 %v683
  %v4242 = vunpack.c.h.b16 %v683
  %v4243 = vunpack.c.l.b16 %v684
  %v4244 = vunpack.c.l.b16 %v685
  %v4245 = vunpack.c.h.b16 %v685
  %v4246 = vunpack.c.l.b16 %v686
  %v4247 = vunpack.c.l.b16 %v687
  %v4248 = vunpack.c.h.b16 %v687
  %v4249 = vunpack.c.l.b16 %v688
  %v4250 = vunpack.c.l.b16 %v689
  %v4251 = vunpack.c.h.b16 %v689
  %v4252 = vunpack.c.l.b16 %v690
  %v4253 = vunpack.c.l.b16 %v691
  %v4254 = vunpack.c.h.b16 %v691
  %v4255 = vunpack.c.l.b16 %v692
  %v4256 = vunpack.c.l.b16 %v693
  %v4257 = vunpack.c.h.b16 %v693
  %v4258 = vunpack.c.l.b16 %v694
  %v4259 = vunpack.c.l.b16 %v695
  %v4260 = vunpack.c.h.b16 %v695
  %v4261 = vunpack.c.l.b16 %v696
  %v4262 = vunpack.c.l.b16 %v697
  %v4263 = vunpack.c.h.b16 %v697
  %v4264 = vunpack.c.l.b16 %v698
  %v4265 = vunpack.c.l.b16 %v699
  %v4266 = vunpack.c.h.b16 %v699
  %v4267 = vunpack.c.l.b16 %v700
  %v4268 = vunpack.c.l.b16 %v701
  %v4269 = vunpack.c.h.b16 %v701
  %v4270 = vunpack.c.l.b16 %v702
  %v4271 = vunpack.c.l.b16 %v703
  %v4272 = vunpack.c.h.b16 %v703
  %v4273 = vunpack.c.l.b16 %v704
  %v4274 = vunpack.c.l.b16 %v705
  %v4275 = vunpack.c.h.b16 %v705
  %v4276 = vunpack.c.l.b16 %v706
  %v4277 = vunpack.c.l.b16 %v707
  %v4278 = vunpack.c.h.b16 %v707
  %v4279 = vunpack.c.l.b16 %v708
  %v4280 = vunpack.c.l.b16 %v709
  %v4281 = vunpack.c.h.b16 %v709
  %v4282 = vunpack.c.l.b16 %v710
  %v4283 = vunpack.c.l.b16 %v711
  %v4284 = vunpack.c.h.b16 %v711
  %v4285 = vunpack.c.l.b16 %v712
  %v4286 = vunpack.c.l.b16 %v713
  %v4287 = vunpack.c.h.b16 %v713
  %v4288 = vunpack.c.l.b16 %v714
  %v4289 = vunpack.c.l.b16 %v715
  %v4290 = vunpack.c.h.b16 %v715
  %v4291 = vunpack.c.l.b16 %v716
  %v4292 = vunpack.c.l.b16 %v717
  %v4293 = vunpack.c.h.b16 %v717
  %v4294 = vunpack.c.l.b16 %v718
  %v4295 = vunpack.c.l.b16 %v719
  %v4296 = vunpack.c.h.b16 %v719
  %v4297 = vunpack.c.l.b16 %v720
  %v4298 = vunpack.c.l.b16 %v721
  %v4299 = vunpack.c.h.b16 %v721
  %v4300 = vunpack.c.l.b16 %v722
  %v4301 = vunpack.c.l.b16 %v723
  %v4302 = vunpack.c.h.b16 %v723
  %v4303 = vunpack.c.l.b16 %v724
  %v4304 = vunpack.c.l.b16 %v725
  %v4305 = vunpack.c.h.b16 %v725
  %v4306 = vunpack.c.l.b16 %v726
  %v4307 = vunpack.c.l.b16 %v727
  %v4308 = vunpack.c.h.b16 %v727
  %v4309 = vunpack.c.l.b16 %v728
  %v4310 = vunpack.c.l.b16 %v729
  %v4311 = vunpack.c.h.b16 %v729
  %v4312 = vunpack.c.l.b16 %v730
  %v4313 = vunpack.c.l.b16 %v731
  %v4314 = vunpack.c.h.b16 %v731
  %v4315 = vunpack.c.l.b16 %v732
  %v4316 = vunpack.c.l.b16 %v733
  %v4317 = vunpack.c.h.b16 %v733
  %v4318 = vunpack.c.l.b16 %v734
  %v4319 = vunpack.c.l.b16 %v735
  %v4320 = vunpack.c.h.b16 %v735
  %v4321 = vunpack.c.l.b16 %v736
  %v4322 = vunpack.c.l.b16 %v737
  %v4323 = vunpack.c.h.b16 %v737
  %v4324 = vunpack.c.l.b16 %v738
  %v4325 = vunpack.c.l.b16 %v739
  %v4326 = vunpack.c.h.b16 %v739
  %v4327 = vunpack.c.l.b16 %v740
  %v4328 = vunpack.c.l.b16 %v741
  %v4329 = vunpack.c.h.b16 %v741
  %v4330 = vunpack.c.l.b16 %v742
  %v4331 = vunpack.c.l.b16 %v743
  %v4332 = vunpack.c.h.b16 %v743
  %v4333 = vunpack.c.l.b16 %v744
  %v4334 = vunpack.c.l.b16 %v745
  %v4335 = vunpack.c.h.b16 %v745
  %v4336 = vunpack.c.l.b16 %v746
  %v4337 = vunpack.c.l.b16 %v747
  %v4338 = vunpack.c.h.b16 %v747
  %v4339 = vunpack.c.l.b16 %v748
  %v4340 = vunpack.c.l.b16 %v749
  %v4341 = vunpack.c.h.b16 %v749
  %v4342 = vunpack.c.l.b16 %v750
  %v4343 = vunpack.c.l.b16 %v751
  %v4344 = vunpack.c.h.b16 %v751
  %v4345 = vunpack.c.l.b16 %v752
  %v4346 = vunpack.c.l.b16 %v753
  %v4347 = vunpack.c.h.b16 %v753
  %v4348 = vunpack.c.l.b16 %v754
  %v4349 = vunpack.c.l.b16 %v755
  %v4350 = vunpack.c.h.b16 %v755
  %v4351 = vunpack.c.l.b16 %v756
  %v4352 = vunpack.c.l.b16 %v757
  %v4353 = vunpack.c.h.b16 %v757
  %v4354 = vunpack.c.l.b16 %v758
  %v4355 = vunpack.c.l.b16 %v759
  %v4356 = vunpack.c.h.b16 %v759
  %v4357 = vunpack.c.l.b16 %v760
  %v4358 = vunpack.c.l.b16 %v761
  %v4359 = vunpack.c.h.b16 %v761
  %v4360 = vunpack.c.l.b16 %v762
  %v4361 = vunpack.c.l.b16 %v763
  %v4362 = vunpack.c.h.b16 %v763
  %v4363 = vunpack.c.l.b16 %v764
  %v4364 = vunpack.c.l.b16 %v765
  %v4365 = vunpack.c.h.b16 %v765
  %v4366 = vunpack.c.l.b16 %v766
  %v4367 = vunpack.c.l.b16 %v767
  %v4368 = vunpack.c.h.b16 %v767
  %v4369 = vunpack.c.l.b16 %v768
  %v4370 = vunpack.c.l.b16 %v769
  %v4371 = vunpack.c.h.b16 %v769
  %v4372 = vunpack.c.l.b16 %v770
  %v4373 = vunpack.c.l.b16 %v771
  %v4374 = vunpack.c.h.b16 %v771
  %v4375 = vunpack.c.l.b16 %v772
  %v4376 = vunpack.c.l.b16 %v773
  %v4377 = vunpack.c.h.b16 %v773
  %v4378 = vunpack.c.l.b16 %v774
  %v4379 = vunpack.c.l.b16 %v775
  %v4380 = vunpack.c.h.b16 %v775
  %v4381 = vunpack.c.l.b16 %v776
  %v4382 = vunpack.c.l.b16 %v777
  %v4383 = vunpack.c.h.b16 %v777
  %v4384 = vunpack.c.l.b16 %v778
  %v4385 = vunpack.c.l.b16 %v779
  %v4386 = vunpack.c.h.b16 %v779
  %v4387 = vunpack.c.l.b16 %v780
  %v4388 = vunpack.c.l.b16 %v781
  %v4389 = vunpack.c.h.b16 %v781
  %v4390 = vunpack.c.l.b16 %v782
  %v4391 = vunpack.c.l.b16 %v783
  %v4392 = vunpack.c.h.b16 %v783
  %v4393 = vunpack.c.l.b16 %v784
  %v4394 = vunpack.c.l.b16 %v785
  %v4395 = vunpack.c.h.b16 %v785
  %v4396 = vunpack.c.l.b16 %v786
  %v4397 = vunpack.c.l.b16 %v787
  %v4398 = vunpack.c.h.b16 %v787
  %v4399 = vunpack.c.l.b16 %v788
  %v4400 = vunpack.c.l.b16 %v789
  %v4401 = vunpack.c.h.b16 %v789
  %v4402 = vunpack.c.l.b16 %v790
  %v4403 = vunpack.c.l.b16 %v791
  %v4404 = vunpack.c.h.b16 %v791
  %v4405 = vunpack.c.l.b16 %v792
  %v4406 = vunpack.c.l.b16 %v793
  %v4407 = vunpack.c.h.b16 %v793
  %v4408 = vunpack.c.l.b16 %v794
  %v4409 = vunpack.c.l.b16 %v795
  %v4410 = vunpack.c.h.b16 %v795
  %v4411 = vunpack.c.l.b16 %v796
  %v4412 = vunpack.c.l.b16 %v797
  %v4413 = vunpack.c.h.b16 %v797
  %v4414 = vunpack.c.l.b16 %v798
  %v4415 = vunpack.c.l.b16 %v799
  %v4416 = vunpack.c.h.b16 %v799
  %v4417 = vunpack.c.l.b16 %v800
  %v4418 = vunpack.c.l.b16 %v801
  %v4419 = vunpack.c.h.b16 %v801
  %v4420 = vunpack.c.l.b16 %v802
  %v4421 = vunpack.c.l.b16 %v803
  %v4422 = vunpack.c.h.b16 %v803
  %v4423 = vunpack.c.l.b16 %v804
  %v4424 = vunpack.c.l.b16 %v805
  %v4425 = vunpack.c.h.b16 %v805
  %v4426 = vunpack.c.l.b16 %v806
  %v4427 = vunpack.c.l.b16 %v807
  %v4428 = vunpack.c.h.b16 %v807
  %v4429 = vunpack.c.l.b16 %v808
  %v4430 = vunpack.c.l.b16 %v809
  %v4431 = vunpack.c.h.b16 %v809
  %v4432 = vunpack.c.l.b16 %v810
  %v4433 = vunpack.c.l.b16 %v811
  %v4434 = vunpack.c.h.b16 %v811
  %v4435 = vunpack.c.l.b16 %v812
  %v4436 = vunpack.c.l.b16 %v813
  %v4437 = vunpack.c.h.b16 %v813
  %v4438 = vunpack.c.l.b16 %v814
  %v4439 = vunpack.c.l.b16 %v815
  %v4440 = vunpack.c.h.b16 %v815
  %v4441 = vunpack.c.l.b16 %v816
  %v4442 = vunpack.c.l.b16 %v817
  %v4443 = vunpack.c.h.b16 %v817
  %v4444 = vunpack.c.l.b16 %v818
  %v4445 = vunpack.c.l.b16 %v819
  %v4446 = vunpack.c.h.b16 %v819
  %v4447 = vunpack.c.l.b16 %v820
  %v4448 = vunpack.c.l.b16 %v821
  %v4449 = vunpack.c.h.b16 %v821
  %v4450 = vunpack.c.l.b16 %v822
  %v4451 = vunpack.c.l.b16 %v823
  %v4452 = vunpack.c.h.b16 %v823
  %v4453 = vunpack.c.l.b16 %v824
  %v4454 = vunpack.c.l.b16 %v825
  %v4455 = vunpack.c.h.b16 %v825
  %v4456 = vunpack.c.l.b16 %v826
  %v4457 = vunpack.c.l.b16 %v827
  %v4458 = vunpack.c.h.b16 %v827
  %v4459 = vunpack.c.l.b16 %v828
  %v4460 = vunpack.c.l.b16 %v829
  %v4461 = vunpack.c.h.b16 %v829
  %v4462 = vunpack.c.l.b16 %v830
  %v4463 = vunpack.c.l.b16 %v831
  %v4464 = vunpack.c.h.b16 %v831
  %v4465 = vunpack.c.l.b16 %v832
  %v4466 = vunpack.c.l.b16 %v833
  %v4467 = vunpack.c.h.b16 %v833
  %v4468 = vunpack.c.l.b16 %v834
  %v4469 = vunpack.c.l.b16 %v835
  %v4470 = vunpack.c.h.b16 %v835
  %v4471 = vunpack.c.l.b16 %v836
  %v4472 = vunpack.c.l.b16 %v837
  %v4473 = vunpack.c.h.b16 %v837
  %v4474 = vunpack.c.l.b16 %v838
  %v4475 = vunpack.c.l.b16 %v839
  %v4476 = vunpack.c.h.b16 %v839
  %v4477 = vunpack.c.l.b16 %v840
  %v4478 = vunpack.c.l.b16 %v841
  %v4479 = vunpack.c.h.b16 %v841
  %v4480 = vunpack.c.l.b16 %v842
  %v4481 = vunpack.c.l.b16 %v843
  %v4482 = vunpack.c.h.b16 %v843
  %v4483 = vunpack.c.l.b16 %v844
  %v4484 = vunpack.c.l.b16 %v845
  %v4485 = vunpack.c.h.b16 %v845
  %v4486 = vunpack.c.l.b16 %v846
  %v4487 = vunpack.c.l.b16 %v847
  %v4488 = vunpack.c.h.b16 %v847
  %v4489 = vunpack.c.l.b16 %v848
  %v4490 = vunpack.c.l.b16 %v849
  %v4491 = vunpack.c.h.b16 %v849
  %v4492 = vunpack.c.l.b16 %v850
  %v4493 = vunpack.c.l.b16 %v851
  %v4494 = vunpack.c.h.b16 %v851
  %v4495 = vunpack.c.l.b16 %v852
  %v4496 = vunpack.c.l.b16 %v853
  %v4497 = vunpack.c.h.b16 %v853
  %v4498 = vunpack.c.l.b16 %v854
  %v4499 = vunpack.c.l.b16 %v855
  %v4500 = vunpack.c.h.b16 %v855
  %v4501 = vunpack.c.l.b16 %v856
  %v4502 = vunpack.c.l.b16 %v857
  %v4503 = vunpack.c.h.b16 %v857
  %v4504 = vunpack.c.l.b16 %v858
  %v4505 = vunpack.c.l.b16 %v859
  %v4506 = vunpack.c.h.b16 %v859
  %v4507 = vunpack.c.l.b16 %v860
  %v4508 = vunpack.c.l.b16 %v861
  %v4509 = vunpack.c.h.b16 %v861
  %v4510 = vunpack.c.l.b16 %v862
  %v4511 = vunpack.c.l.b16 %v863
  %v4512 = vunpack.c.h.b16 %v863
  %v4513 = vunpack.c.l.b16 %v864
  %v4514 = vunpack.c.l.b16 %v865
  %v4515 = vunpack.c.h.b16 %v865
  %v4516 = vunpack.c.l.b16 %v866
  %v4517 = vunpack.c.l.b16 %v867
  %v4518 = vunpack.c.h.b16 %v867
  %v4519 = vunpack.c.l.b16 %v868
  %v4520 = vunpack.c.l.b16 %v869
  %v4521 = vunpack.c.h.b16 %v869
  %v4522 = vunpack.c.l.b16 %v870
  %v4523 = vunpack.c.l.b16 %v871
  %v4524 = vunpack.c.h.b16 %v871
  %v4525 = vunpack.c.l.b16 %v872
  %v4526 = vunpack.c.l.b16 %v873
  %v4527 = vunpack.c.h.b16 %v873
  %v4528 = vunpack.c.l.b16 %v874
  %v4529 = vunpack.c.l.b16 %v875
  %v4530 = vunpack.c.h.b16 %v875
  %v4531 = vunpack.c.l.b16 %v876
  %v4532 = vunpack.c.l.b16 %v877
  %v4533 = vunpack.c.h.b16 %v877
  %v4534 = vunpack.c.l.b16 %v878
  %v4535 = vunpack.c.l.b16 %v879
  %v4536 = vunpack.c.h.b16 %v879
  %v4537 = vunpack.c.l.b16 %v880
  %v4538 = vunpack.c.l.b16 %v881
  %v4539 = vunpack.c.h.b16 %v881
  %v4540 = vunpack.c.l.b16 %v882
  %v4541 = vunpack.c.l.b16 %v883
  %v4542 = vunpack.c.h.b16 %v883
  %v4543 = vunpack.c.l.b16 %v884
  %v4544 = vunpack.c.l.b16 %v885
  %v4545 = vunpack.c.h.b16 %v885
  %v4546 = vunpack.c.l.b16 %v886
  %v4547 = vunpack.c.l.b16 %v887
  %v4548 = vunpack.c.h.b16 %v887
  %v4549 = vunpack.c.l.b16 %v888
  %v4550 = vunpack.c.l.b16 %v889
  %v4551 = vunpack.c.h.b16 %v889
  %v4552 = vunpack.c.l.b16 %v890
  %v4553 = vunpack.c.l.b16 %v891
  %v4554 = vunpack.c.h.b16 %v891
  %v4555 = vunpack.c.l.b16 %v892
  %v4556 = vunpack.c.l.b16 %v893
  %v4557 = vunpack.c.h.b16 %v893
  %v4558 = vunpack.c.l.b16 %v894
  %v4559 = vunpack.c.l.b16 %v895
  %v4560 = vunpack.c.h.b16 %v895
  %v4561 = vunpack.c.l.b16 %v896
  %v4562 = vunpack.c.l.b16 %v897
  %v4563 = vunpack.c.h.b16 %v897
  %v4564 = vunpack.c.l.b16 %v898
  %v4565 = vunpack.c.l.b16 %v899
  %v4566 = vunpack.c.h.b16 %v899
  %v4567 = vunpack.c.l.b16 %v900
  %v4568 = vunpack.c.l.b16 %v901
  %v4569 = vunpack.c.h.b16 %v901
  %v4570 = vunpack.c.l.b16 %v902
  %v4571 = vunpack.c.l.b16 %v903
  %v4572 = vunpack.c.h.b16 %v903
  %v4573 = vunpack.c.l.b16 %v904
  %v4574 = vunpack.c.l.b16 %v905
  %v4575 = vunpack.c.h.b16 %v905
  %v4576 = vunpack.c.l.b16 %v906
  %v4577 = vunpack.c.l.b16 %v907
  %v4578 = vunpack.c.h.b16 %v907
  %v4579 = vunpack.c.l.b16 %v908
  %v4580 = vunpack.c.l.b16 %v909
  %v4581 = vunpack.c.h.b16 %v909
  %v4582 = vunpack.c.l.b16 %v910
  %v4583 = vunpack.c.l.b16 %v911
  %v4584 = vunpack.c.h.b16 %v911
  %v4585 = vunpack.c.l.b16 %v912
  %v4586 = vunpack.c.l.b16 %v913
  %v4587 = vunpack.c.h.b16 %v913
  %v4588 = vunpack.c.l.b16 %v914
  %v4589 = vunpack.c.l.b16 %v915
  %v4590 = vunpack.c.h.b16 %v915
  %v4591 = vunpack.c.l.b16 %v916
  %v4592 = vunpack.c.l.b16 %v917
  %v4593 = vunpack.c.h.b16 %v917
  %v4594 = vunpack.c.l.b16 %v918
  %v4595 = vunpack.c.l.b16 %v919
  %v4596 = vunpack.c.h.b16 %v919
  %v4597 = vunpack.c.l.b16 %v920
  %v4598 = vunpack.c.l.b16 %v921
  %v4599 = vunpack.c.h.b16 %v921
  %v4600 = vunpack.c.l.b16 %v922
  %v4601 = vunpack.c.l.b16 %v923
  %v4602 = vunpack.c.h.b16 %v923
  %v4603 = vunpack.c.l.b16 %v924
  %v4604 = vunpack.c.l.b16 %v925
  %v4605 = vunpack.c.h.b16 %v925
  %v4606 = vunpack.c.l.b16 %v926
  %v4607 = vunpack.c.l.b16 %v927
  %v4608 = vunpack.c.h.b16 %v927
  %v4609 = vunpack.c.l.b16 %v928
  %v4610 = vunpack.c.l.b16 %v929
  %v4611 = vunpack.c.h.b16 %v929
  %v4612 = vunpack.c.l.b16 %v930
  %v4613 = vunpack.c.l.b16 %v931
  %v4614 = vunpack.c.h.b16 %v931
  %v4615 = vunpack.c.l.b16 %v932
  %v4616 = vunpack.c.l.b16 %v933
  %v4617 = vunpack.c.h.b16 %v933
  %v4618 = vunpack.c.l.b16 %v934
  %v4619 = vunpack.c.l.b16 %v935
  %v4620 = vunpack.c.h.b16 %v935
  %v4621 = vunpack.c.l.b16 %v936
  %v4622 = vunpack.c.l.b16 %v937
  %v4623 = vunpack.c.h.b16 %v937
  %v4624 = vunpack.c.l.b16 %v938
  %v4625 = vunpack.c.l.b16 %v939
  %v4626 = vunpack.c.h.b16 %v939
  %v4627 = vunpack.c.l.b16 %v940
  %v4628 = vunpack.c.l.b16 %v941
  %v4629 = vunpack.c.h.b16 %v941
  %v4630 = vunpack.c.l.b16 %v942
  %v4631 = vunpack.c.l.b16 %v943
  %v4632 = vunpack.c.h.b16 %v943
  %v4633 = vunpack.c.l.b16 %v944
  %v4634 = vunpack.c.l.b16 %v945
  %v4635 = vunpack.c.h.b16 %v945
  %v4636 = vunpack.c.l.b16 %v946
  %v4637 = vunpack.c.l.b16 %v947
  %v4638 = vunpack.c.h.b16 %v947
  %v4639 = vunpack.c.l.b16 %v948
  %v4640 = vunpack.c.l.b16 %v949
  %v4641 = vunpack.c.h.b16 %v949
  %v4642 = vunpack.c.l.b16 %v950
  %v4643 = vunpack.c.l.b16 %v951
  %v4644 = vunpack.c.h.b16 %v951
  %v4645 = vunpack.c.l.b16 %v952
  %v4646 = vunpack.c.l.b16 %v953
  %v4647 = vunpack.c.h.b16 %v953
  %v4648 = vunpack.c.l.b16 %v954
  %v4649 = vunpack.c.l.b16 %v955
  %v4650 = vunpack.c.h.b16 %v955
  %v4651 = vunpack.c.l.b16 %v956
  %v4652 = vunpack.c.l.b16 %v957
  %v4653 = vunpack.c.h.b16 %v957
  %v4654 = vunpack.c.l.b16 %v958
  %v4655 = vunpack.c.l.b16 %v959
  %v4656 = vunpack.c.h.b16 %v959
  %v4657 = vunpack.c.l.b16 %v960
  %v4658 = vunpack.c.l.b16 %v961
  %v4659 = vunpack.c.h.b16 %v961
  %v4660 = vunpack.c.l.b16 %v962
  %v4661 = vunpack.c.l.b16 %v963
  %v4662 = vunpack.c.h.b16 %v963
  %v4663 = vunpack.c.l.b16 %v964
  %v4664 = vunpack.c.l.b16 %v965
  %v4665 = vunpack.c.h.b16 %v965
  %v4666 = vunpack.c.l.b16 %v966
  %v4667 = vunpack.c.l.b16 %v967
  %v4668 = vunpack.c.h.b16 %v967
  %v4669 = vunpack.c.l.b16 %v968
  %v4670 = vunpack.c.l.b16 %v969
  %v4671 = vunpack.c.h.b16 %v969
  %v4672 = vunpack.c.l.b16 %v970
  %v4673 = vunpack.c.l.b16 %v971
  %v4674 = vunpack.c.h.b16 %v971
  %v4675 = vunpack.c.l.b16 %v972
  %v4676 = vunpack.c.l.b16 %v973
  %v4677 = vunpack.c.h.b16 %v973
  %v4678 = vunpack.c.l.b16 %v974
  %v4679 = vunpack.c.l.b16 %v975
  %v4680 = vunpack.c.h.b16 %v975
  %v4681 = vunpack.c.l.b16 %v976
  %v4682 = vunpack.c.l.b16 %v977
  %v4683 = vunpack.c.h.b16 %v977
  %v4684 = vunpack.c.l.b16 %v978
  %v4685 = vunpack.c.l.b16 %v979
  %v4686 = vunpack.c.h.b16 %v979
  %v4687 = vunpack.c.l.b16 %v980
  %v4688 = vunpack.c.l.b16 %v981
  %v4689 = vunpack.c.h.b16 %v981
  %v4690 = vunpack.c.l.b16 %v982
  %v4691 = vunpack.c.l.b16 %v983
  %v4692 = vunpack.c.h.b16 %v983
  %v4693 = vunpack.c.l.b16 %v984
  %v4694 = vunpack.c.l.b16 %v985
  %v4695 = vunpack.c.h.b16 %v985
  %v4696 = vunpack.c.l.b16 %v986
  %v4697 = vunpack.c.l.b16 %v987
  %v4698 = vunpack.c.h.b16 %v987
  %v4699 = vunpack.c.l.b16 %v988
  %v4700 = vunpack.c.l.b16 %v989
  %v4701 = vunpack.c.h.b16 %v989
  %v4702 = vunpack.c.l.b16 %v990
  %v4703 = vunpack.c.l.b16 %v991
  %v4704 = vunpack.c.h.b16 %v991
  %v4705 = vunpack.c.l.b16 %v992
  %v4706 = vunpack.c.l.b16 %v993
  %v4707 = vunpack.c.h.b16 %v993
  %v4708 = vunpack.c.l.b16 %v994
  %v4709 = vunpack.c.l.b16 %v995
  %v4710 = vunpack.c.h.b16 %v995
  %v4711 = vunpack.c.l.b16 %v996
  %v4712 = vunpack.c.l.b16 %v997
  %v4713 = vunpack.c.h.b16 %v997
  %v4714 = vunpack.c.l.b16 %v998
  %v4715 = vunpack.c.l.b16 %v999
  %v4716 = vunpack.c.h.b16 %v999
  %v4717 = vunpack.c.l.b16 %v1000
  %v4718 = vunpack.c.l.b16 %v1001
  %v4719 = vunpack.c.h.b16 %v1001
  %v4720 = vunpack.c.l.b16 %v1002
  %v4721 = vunpack.c.l.b16 %v1003
  %v4722 = vunpack.c.h.b16 %v1003
  %v4723 = vunpack.c.l.b16 %v1004
  %v4724 = vunpack.c.l.b16 %v1005
  %v4725 = vunpack.c.h.b16 %v1005
  %v4726 = vunpack.c.l.b16 %v1006
  %v4727 = vunpack.c.l.b16 %v1007
  %v4728 = vunpack.c.h.b16 %v1007
  %v4729 = vunpack.c.l.b16 %v1008
  %v4730 = vunpack.c.l.b16 %v1009
  %v4731 = vunpack.c.h.b16 %v1009
  %v4732 = vunpack.c.l.b16 %v1010
  %v4733 = vunpack.c.l.b16 %v1011
  %v4734 = vunpack.c.h.b16 %v1011
  %v4735 = vunpack.c.l.b16 %v1012
  %v4736 = vunpack.c.l.b16 %v1013
  %v4737 = vunpack.c.h.b16 %v1013
  %v4738 = vunpack.c.l.b16 %v1014
  %v4739 = vunpack.c.l.b16 %v1015
  %v4740 = vunpack.c.h.b16 %v1015
  %v4741 = vunpack.c.l.b16 %v1016
  %v4742 = vunpack.c.l.b16 %v1017
  %v4743 = vunpack.c.h.b16 %v1017
  %v4744 = vunpack.c.l.b16 %v1018
  %v4745 = vunpack.c.l.b16 %v1019
  %v4746 = vunpack.c.h.b16 %v1019
  %v4747 = vunpack.c.l.b16 %v1020
  %v4748 = vunpack.c.l.b16 %v1021
  %v4749 = vunpack.c.h.b16 %v1021
  %v4750 = vunpack.c.l.b16 %v1022
  %v4751 = vunpack.c.l.b16 %v1023
  %v4752 = vunpack.c.h.b16 %v1023
  %v4753 = vunpack.c.l.b16 %v1024
  %v4754 = vunpack.c.l.b16 %v1025
  %v4755 = vunpack.c.h.b16 %v1025
  %v4756 = vunpack.c.l.b16 %v1026
  %v4757 = vunpack.c.l.b16 %v1027
  %v4758 = vunpack.c.h.b16 %v1027
  %v4759 = vunpack.c.l.b16 %v1028
  %v4760 = vunpack.c.l.b16 %v1029
  %v4761 = vunpack.c.h.b16 %v1029
  %v4762 = vunpack.c.l.b16 %v1030
  %v4763 = vunpack.c.l.b16 %v1031
  %v4764 = vunpack.c.h.b16 %v1031
  %v4765 = vunpack.c.l.b16 %v1032
  %v4766 = vunpack.c.l.b16 %v1033
  %v4767 = vunpack.c.h.b16 %v1033
  %v4768 = vunpack.c.l.b16 %v1034
  %v4769 = vunpack.c.l.b16 %v1035
  %v4770 = vunpack.c.h.b16 %v1035
  %v4771 = vunpack.c.l.b16 %v1036
  %v4772 = vunpack.c.l.b16 %v1037
  %v4773 = vunpack.c.h.b16 %v1037
  %v4774 = vunpack.c.l.b16 %v1038
  %v4775 = vunpack.c.l.b16 %v1039
  %v4776 = vunpack.c.h.b16 %v1039
  %v4777 = vunpack.c.l.b16 %v1040
  %v4778 = vunpack.c.l.b16 %v1041
  %v4779 = vunpack.c.h.b16 %v1041
  %v4780 = vunpack.c.l.b16 %v1042
  %v4781 = vunpack.c.l.b16 %v1043
  %v4782 = vunpack.c.h.b16 %v1043
  %v4783 = vunpack.c.l.b16 %v1044
  %v4784 = vunpack.c.l.b16 %v1045
  %v4785 = vunpack.c.h.b16 %v1045
  %v4786 = vunpack.c.l.b16 %v1046
  %v4787 = vunpack.c.l.b16 %v1047
  %v4788 = vunpack.c.h.b16 %v1047
  %v4789 = vunpack.c.l.b16 %v1048
  %v4790 = vunpack.c.l.b16 %v1049
  %v4791 = vunpack.c.h.b16 %v1049
  %v4792 = vunpack.c.l.b16 %v1050
  %v4793 = vunpack.c.l.b16 %v1051
  %v4794 = vunpack.c.h.b16 %v1051
  %v4795 = vunpack.c.l.b16 %v1052
  %v4796 = vunpack.c.l.b16 %v1053
  %v4797 = vunpack.c.h.b16 %v1053
  %v4798 = vunpack.c.l.b16 %v1054
  %v4799 = vunpack.c.l.b16 %v1055
  %v4800 = vunpack.c.h.b16 %v1055
  %v4801 = vunpack.c.l.b16 %v1056
  %v4802 = vunpack.c.l.b16 %v1057
  %v4803 = vunpack.c.h.b16 %v1057
  %v4804 = vunpack.c.l.b16 %v1058
  %v4805 = vunpack.c.l.b16 %v1059
  %v4806 = vunpack.c.h.b16 %v1059
  %v4807 = vunpack.c.l.b16 %v1060
  %v4808 = vunpack.c.l.b16 %v1061
  %v4809 = vunpack.c.h.b16 %v1061
  %v4810 = vunpack.c.l.b16 %v1062
  %v4811 = vunpack.c.l.b16 %v1063
  %v4812 = vunpack.c.h.b16 %v1063
  %v4813 = vunpack.c.l.b16 %v1064
  %v4814 = vunpack.c.l.b16 %v1065
  %v4815 = vunpack.c.h.b16 %v1065
  %v4816 = vunpack.c.l.b16 %v1066
  %v4817 = vunpack.c.l.b16 %v1067
  %v4818 = vunpack.c.h.b16 %v1067
  %v4819 = vunpack.c.l.b16 %v1068
  %v4820 = vunpack.c.l.b16 %v1069
  %v4821 = vunpack.c.h.b16 %v1069
  %v4822 = vunpack.c.l.b16 %v1070
  %v4823 = vunpack.c.l.b16 %v1071
  %v4824 = vunpack.c.h.b16 %v1071
  %v4825 = vunpack.c.l.b16 %v1072
  %v4826 = vunpack.c.l.b16 %v1073
  %v4827 = vunpack.c.h.b16 %v1073
  %v4828 = vunpack.c.l.b16 %v1074
  %v4829 = vunpack.c.l.b16 %v1075
  %v4830 = vunpack.c.h.b16 %v1075
  %v4831 = vunpack.c.l.b16 %v1076
  %v4832 = vunpack.c.l.b16 %v1077
  %v4833 = vunpack.c.h.b16 %v1077
  %v4834 = vunpack.c.l.b16 %v1078
  %v4835 = vunpack.c.l.b16 %v1079
  %v4836 = vunpack.c.h.b16 %v1079
  %v4837 = vunpack.c.l.b16 %v1080
  %v4838 = vunpack.c.l.b16 %v1081
  %v4839 = vunpack.c.h.b16 %v1081
  %v4840 = vunpack.c.l.b16 %v1082
  %v4841 = vunpack.c.l.b16 %v1083
  %v4842 = vunpack.c.h.b16 %v1083
  %v4843 = vunpack.c.l.b16 %v1084
  %v4844 = vunpack.c.l.b16 %v1085
  %v4845 = vunpack.c.h.b16 %v1085
  %v4846 = vunpack.c.l.b16 %v1086
  %v4847 = vunpack.c.l.b16 %v1087
  %v4848 = vunpack.c.h.b16 %v1087
  %v4849 = vunpack.c.l.b16 %v1088
  %v4850 = vunpack.c.l.b16 %v1089
  %v4851 = vunpack.c.h.b16 %v1089
  %v4852 = vunpack.c.l.b16 %v1090
  %v4853 = vunpack.c.l.b16 %v1091
  %v4854 = vunpack.c.h.b16 %v1091
  %v4855 = vunpack.c.l.b16 %v1092
  %v4856 = vunpack.c.l.b16 %v1093
  %v4857 = vunpack.c.h.b16 %v1093
  %v4858 = vunpack.c.l.b16 %v1094
  %v4859 = vunpack.c.l.b16 %v1095
  %v4860 = vunpack.c.h.b16 %v1095
  %v4861 = vunpack.c.l.b16 %v1096
  %v4862 = vunpack.c.l.b16 %v1097
  %v4863 = vunpack.c.h.b16 %v1097
  %v4864 = vunpack.c.l.b16 %v1098
  %v4865 = vunpack.c.l.b16 %v1099
  %v4866 = vunpack.c.h.b16 %v1099
  %v4867 = vunpack.c.l.b16 %v1100
  %v4868 = vunpack.c.l.b16 %v1101
  %v4869 = vunpack.c.h.b16 %v1101
  %v4870 = vunpack.c.l.b16 %v1102
  %v4871 = vunpack.c.l.b16 %v1103
  %v4872 = vunpack.c.h.b16 %v1103
  %v4873 = vunpack.c.l.b16 %v1104
  %v4874 = vunpack.c.l.b16 %v1105
  %v4875 = vunpack.c.h.b16 %v1105
  %v4876 = vunpack.c.l.b16 %v1106
  %v4877 = vunpack.c.l.b16 %v1107
  %v4878 = vunpack.c.h.b16 %v1107
  %v4879 = vunpack.c.l.b16 %v1108
  %v4880 = vunpack.c.l.b16 %v1109
  %v4881 = vunpack.c.h.b16 %v1109
  %v4882 = vunpack.c.l.b16 %v1110
  %v4883 = vunpack.c.l.b16 %v1111
  %v4884 = vunpack.c.h.b16 %v1111
  %v4885 = vunpack.c.l.b16 %v1112
  %v4886 = vunpack.c.l.b16 %v1113
  %v4887 = vunpack.c.h.b16 %v1113
  %v4888 = vunpack.c.l.b16 %v1114
  %v4889 = vunpack.c.l.b16 %v1115
  %v4890 = vunpack.c.h.b16 %v1115
  %v4891 = vunpack.c.l.b16 %v1116
  %v4892 = vunpack.c.l.b16 %v1117
  %v4893 = vunpack.c.h.b16 %v1117
  %v4894 = vunpack.c.l.b16 %v1118
  %v4895 = vunpack.c.l.b16 %v1119
  %v4896 = vunpack.c.h.b16 %v1119
  %v4897 = vunpack.c.l.b16 %v1120
  %v4898 = vunpack.c.l.b16 %v1121
  %v4899 = vunpack.c.h.b16 %v1121
  %v4900 = vunpack.c.l.b16 %v1122
  %v4901 = vunpack.c.l.b16 %v1123
  %v4902 = vunpack.c.h.b16 %v1123
  %v4903 = vunpack.c.l.b16 %v1124
  %v4904 = vunpack.c.l.b16 %v1125
  %v4905 = vunpack.c.h.b16 %v1125
  %v4906 = vunpack.c.l.b16 %v1126
  %v4907 = vunpack.c.l.b16 %v1127
  %v4908 = vunpack.c.h.b16 %v1127
  %v4909 = vunpack.c.l.b16 %v1128
  %v4910 = vunpack.c.l.b16 %v1129
  %v4911 = vunpack.c.h.b16 %v1129
  %v4912 = vunpack.c.l.b16 %v1130
  %v4913 = vunpack.c.l.b16 %v1131
  %v4914 = vunpack.c.h.b16 %v1131
  %v4915 = vunpack.c.l.b16 %v1132
  %v4916 = vunpack.c.l.b16 %v1133
  %v4917 = vunpack.c.h.b16 %v1133
  %v4918 = vunpack.c.l.b16 %v1134
  %v4919 = vunpack.c.l.b16 %v1135
  %v4920 = vunpack.c.h.b16 %v1135
  %v4921 = vunpack.c.l.b16 %v1136
  %v4922 = vunpack.c.l.b16 %v1137
  %v4923 = vunpack.c.h.b16 %v1137
  %v4924 = vunpack.c.l.b16 %v1138
  %v4925 = vunpack.c.l.b16 %v1139
  %v4926 = vunpack.c.h.b16 %v1139
  %v4927 = vunpack.c.l.b16 %v1140
  %v4928 = vunpack.c.l.b16 %v1141
  %v4929 = vunpack.c.h.b16 %v1141
  %v4930 = vunpack.c.l.b16 %v1142
  %v4931 = vunpack.c.l.b16 %v1143
  %v4932 = vunpack.c.h.b16 %v1143
  %v4933 = vunpack.c.l.b16 %v1144
  %v4934 = vunpack.c.l.b16 %v1145
  %v4935 = vunpack.c.h.b16 %v1145
  %v4936 = vunpack.c.l.b16 %v1146
  %v4937 = vunpack.c.l.b16 %v1147
  %v4938 = vunpack.c.h.b16 %v1147
  %v4939 = vunpack.c.l.b16 %v1148
  %v4940 = vunpack.c.l.b16 %v1149
  %v4941 = vunpack.c.h.b16 %v1149
  %v4942 = vunpack.c.l.b16 %v1150
  %v4943 = vunpack.c.l.b16 %v1151
  %v4944 = vunpack.c.h.b16 %v1151
  %v4945 = vunpack.c.l.b16 %v1152
  %v4946 = vunpack.c.l.b16 %v1153
  %v4947 = vunpack.c.h.b16 %v1153
  %v4948 = vunpack.c.l.b16 %v1154
  %v4949 = vunpack.c.l.b16 %v1155
  %v4950 = vunpack.c.h.b16 %v1155
  %v4951 = vunpack.c.l.b16 %v1156
  %v4952 = vunpack.c.l.b16 %v1157
  %v4953 = vunpack.c.h.b16 %v1157
  %v4954 = vunpack.c.l.b16 %v1158
  %v4955 = vunpack.c.l.b16 %v1159
  %v4956 = vunpack.c.h.b16 %v1159
  %v4957 = vunpack.c.l.b16 %v1160
  %v4958 = vunpack.c.l.b16 %v1161
  %v4959 = vunpack.c.h.b16 %v1161
  %v4960 = vunpack.c.l.b16 %v1162
  %v4961 = vunpack.c.l.b16 %v1163
  %v4962 = vunpack.c.h.b16 %v1163
  %v4963 = vunpack.c.l.b16 %v1164
  %v4964 = vunpack.c.l.b16 %v1165
  %v4965 = vunpack.c.h.b16 %v1165
  %v4966 = vunpack.c.l.b16 %v1166
  %v4967 = vunpack.c.l.b16 %v1167
  %v4968 = vunpack.c.h.b16 %v1167
  %v4969 = vunpack.c.l.b16 %v1168
  %v4970 = vunpack.c.l.b16 %v1169
  %v4971 = vunpack.c.h.b16 %v1169
  %v4972 = vunpack.c.l.b16 %v1170
  %v4973 = vunpack.c.l.b16 %v1171
  %v4974 = vunpack.c.h.b16 %v1171
  %v4975 = vunpack.c.l.b16 %v1172
  %v4976 = vunpack.c.l.b16 %v1173
  %v4977 = vunpack.c.h.b16 %v1173
  %v4978 = vunpack.c.l.b16 %v1174
  %v4979 = vunpack.c.l.b16 %v1175
  %v4980 = vunpack.c.h.b16 %v1175
  %v4981 = vunpack.c.l.b16 %v1176
  %v4982 = vunpack.c.l.b16 %v1177
  %v4983 = vunpack.c.h.b16 %v1177
  %v4984 = vunpack.c.l.b16 %v1178
  %v4985 = vunpack.c.l.b16 %v1179
  %v4986 = vunpack.c.h.b16 %v1179
  %v4987 = vunpack.c.l.b16 %v1180
  %v4988 = vunpack.c.l.b16 %v1181
  %v4989 = vunpack.c.h.b16 %v1181
  %v4990 = vunpack.c.l.b16 %v1182
  %v4991 = vunpack.c.l.b16 %v1183
  %v4992 = vunpack.c.h.b16 %v1183
  %v4993 = vunpack.c.l.b16 %v1184
  %v4994 = vunpack.c.l.b16 %v1185
  %v4995 = vunpack.c.h.b16 %v1185
  %v4996 = vunpack.c.l.b16 %v1186
  %v4997 = vunpack.c.l.b16 %v1187
  %v4998 = vunpack.c.h.b16 %v1187
  %v4999 = vunpack.c.l.b16 %v1188
  %v5000 = vunpack.c.l.b16 %v1189
  %v5001 = vunpack.c.h.b16 %v1189
  %v5002 = vunpack.c.l.b16 %v1190
  %v5003 = vunpack.c.l.b16 %v1191
  %v5004 = vunpack.c.h.b16 %v1191
  %v5005 = vunpack.c.l.b16 %v1192
  %v5006 = vunpack.c.l.b16 %v1193
  %v5007 = vunpack.c.h.b16 %v1193
  %v5008 = vunpack.c.l.b16 %v1194
  %v5009 = vunpack.c.l.b16 %v1195
  %v5010 = vunpack.c.h.b16 %v1195
  %v5011 = vunpack.c.l.b16 %v1196
  %v5012 = vunpack.c.l.b16 %v1197
  %v5013 = vunpack.c.h.b16 %v1197
  %v5014 = vunpack.c.l.b16 %v1198
  %v5015 = vunpack.c.l.b16 %v1199
  %v5016 = vunpack.c.h.b16 %v1199
  %v5017 = vunpack.c.l.b16 %v1200
  %v5018 = vunpack.c.l.b16 %v1201
  %v5019 = vunpack.c.h.b16 %v1201
  %v5020 = vunpack.c.l.b16 %v1202
  %v5021 = vunpack.c.l.b16 %v1203
  %v5022 = vunpack.c.h.b16 %v1203
  %v5023 = vunpack.c.l.b16 %v1204
  %v5024 = vunpack.c.l.b16 %v1205
  %v5025 = vunpack.c.h.b16 %v1205
  %v5026 = vunpack.c.l.b16 %v1206
  %v5027 = vunpack.c.l.b16 %v1207
  %v5028 = vunpack.c.h.b16 %v1207
  %v5029 = vunpack.c.l.b16 %v1208
  %v5030 = vunpack.c.l.b16 %v1209
  %v5031 = vunpack.c.h.b16 %v1209
  %v5032 = vunpack.c.l.b16 %v1210
  %v5033 = vunpack.c.l.b16 %v1211
  %v5034 = vunpack.c.h.b16 %v1211
  %v5035 = vunpack.c.l.b16 %v1212
  %v5036 = vunpack.c.l.b16 %v1213
  %v5037 = vunpack.c.h.b16 %v1213
  %v5038 = vunpack.c.l.b16 %v1214
  %v5039 = vunpack.c.l.b16 %v1215
  %v5040 = vunpack.c.h.b16 %v1215
  %v5041 = vunpack.c.l.b16 %v1216
  %v5042 = vunpack.c.l.b16 %v1217
  %v5043 = vunpack.c.h.b16 %v1217
  %v5044 = vunpack.c.l.b16 %v1218
  %v5045 = vunpack.c.l.b16 %v1219
  %v5046 = vunpack.c.h.b16 %v1219
  %v5047 = vunpack.c.l.b16 %v1220
  %v5048 = vunpack.c.l.b16 %v1221
  %v5049 = vunpack.c.h.b16 %v1221
  %v5050 = vunpack.c.l.b16 %v1222
  %v5051 = vunpack.c.l.b16 %v1223
  %v5052 = vunpack.c.h.b16 %v1223
  %v5053 = vunpack.c.l.b16 %v1224
  %v5054 = vunpack.c.l.b16 %v1225
  %v5055 = vunpack.c.h.b16 %v1225
  %v5056 = vunpack.c.l.b16 %v1226
  %v5057 = vunpack.c.l.b16 %v1227
  %v5058 = vunpack.c.h.b16 %v1227
  %v5059 = vunpack.c.l.b16 %v1228
  %v5060 = vunpack.c.l.b16 %v1229
  %v5061 = vunpack.c.h.b16 %v1229
  %v5062 = vunpack.c.l.b16 %v1230
  %v5063 = vunpack.c.l.b16 %v1231
  %v5064 = vunpack.c.h.b16 %v1231
  %v5065 = vunpack.c.l.b16 %v1232
  %v5066 = vunpack.c.l.b16 %v1233
  %v5067 = vunpack.c.h.b16 %v1233
  %v5068 = vunpack.c.l.b16 %v1234
  %v5069 = vunpack.c.l.b16 %v1235
  %v5070 = vunpack.c.h.b16 %v1235
  %v5071 = vunpack.c.l.b16 %v1236
  %v5072 = vunpack.c.l.b16 %v1237
  %v5073 = vunpack.c.h.b16 %v1237
  %v5074 = vunpack.c.l.b16 %v1238
  %v5075 = vunpack.c.l.b16 %v1239
  %v5076 = vunpack.c.h.b16 %v1239
  %v5077 = vunpack.c.l.b16 %v1240
  %v5078 = vunpack.c.l.b16 %v1241
  %v5079 = vunpack.c.h.b16 %v1241
  %v5080 = vunpack.c.l.b16 %v1242
  %v5081 = vunpack.c.l.b16 %v1243
  %v5082 = vunpack.c.h.b16 %v1243
  %v5083 = vunpack.c.l.b16 %v1244
  %v5084 = vunpack.c.l.b16 %v1245
  %v5085 = vunpack.c.h.b16 %v1245
  %v5086 = vunpack.c.l.b16 %v1246
  %v5087 = vunpack.c.l.b16 %v1247
  %v5088 = vunpack.c.h.b16 %v1247
  %v5089 = vunpack.c.l.b16 %v1248
  %v5090 = vunpack.c.l.b16 %v1249
  %v5091 = vunpack.c.h.b16 %v1249
  %v5092 = vunpack.c.l.b16 %v1250
  %v5093 = vunpack.c.l.b16 %v1251
  %v5094 = vunpack.c.h.b16 %v1251
  %v5095 = vunpack.c.l.b16 %v1252
  %v5096 = vunpack.c.l.b16 %v1253
  %v5097 = vunpack.c.h.b16 %v1253
  %v5098 = vunpack.c.l.b16 %v1254
  %v5099 = vunpack.c.l.b16 %v1255
  %v5100 = vunpack.c.h.b16 %v1255
  %v5101 = vunpack.c.l.b16 %v1256
  %v5102 = vunpack.c.l.b16 %v1257
  %v5103 = vunpack.c.h.b16 %v1257
  %v5104 = vunpack.c.l.b16 %v1258
  %v5105 = vunpack.c.l.b16 %v1259
  %v5106 = vunpack.c.h.b16 %v1259
  %v5107 = vunpack.c.l.b16 %v1260
  %v5108 = vunpack.c.l.b16 %v1261
  %v5109 = vunpack.c.h.b16 %v1261
  %v5110 = vunpack.c.l.b16 %v1262
  %v5111 = vunpack.c.l.b16 %v1263
  %v5112 = vunpack.c.h.b16 %v1263
  %v5113 = vunpack.c.l.b16 %v1264
  %v5114 = vunpack.c.l.b16 %v1265
  %v5115 = vunpack.c.h.b16 %v1265
  %v5116 = vunpack.c.l.b16 %v1266
  %v5117 = vunpack.c.l.b16 %v1267
  %v5118 = vunpack.c.h.b16 %v1267
  %v5119 = vunpack.c.l.b16 %v1268
  %v5120 = vunpack.c.l.b16 %v1269
  %v5121 = vunpack.c.h.b16 %v1269
  %v5122 = vunpack.c.l.b16 %v1270
  %v5123 = vunpack.c.l.b16 %v1271
  %v5124 = vunpack.c.h.b16 %v1271
  %v5125 = vunpack.c.l.b16 %v1272
  %v5126 = vunpack.c.l.b16 %v1273
  %v5127 = vunpack.c.h.b16 %v1273
  %v5128 = vunpack.c.l.b16 %v1274
  %v5129 = vunpack.c.l.b16 %v1275
  %v5130 = vunpack.c.h.b16 %v1275
  %v5131 = vunpack.c.l.b16 %v1276
  %v5132 = vunpack.c.l.b16 %v1277
  %v5133 = vunpack.c.h.b16 %v1277
  %v5134 = vunpack.c.l.b16 %v1278
  %v5135 = vunpack.c.l.b16 %v1279
  %v5136 = vunpack.c.h.b16 %v1279
  %v5137 = vunpack.c.l.b16 %v1280
  %v5138 = vunpack.c.l.b16 %v1281
  %v5139 = vunpack.c.h.b16 %v1281
  %v5140 = vunpack.c.l.b16 %v1282
  %v5141 = vunpack.c.l.b16 %v1283
  %v5142 = vunpack.c.h.b16 %v1283
  %v5143 = vunpack.c.l.b16 %v1284
  %v5144 = vunpack.c.l.b16 %v1285
  %v5145 = vunpack.c.h.b16 %v1285
  %v5146 = vunpack.c.l.b16 %v1286
  %v5147 = vunpack.c.l.b16 %v1287
  %v5148 = vunpack.c.h.b16 %v1287
  %v5149 = vunpack.c.l.b16 %v1288
  %v5150 = vunpack.c.l.b16 %v1289
  %v5151 = vunpack.c.h.b16 %v1289
  %v5152 = vunpack.c.l.b16 %v1290
  %v5153 = vunpack.c.l.b16 %v1291
  %v5154 = vunpack.c.h.b16 %v1291
  %v5155 = vunpack.c.l.b16 %v1292
  %v5156 = vunpack.c.l.b16 %v1293
  %v5157 = vunpack.c.h.b16 %v1293
  %v5158 = vunpack.c.l.b16 %v1294
  %v5159 = vunpack.c.l.b16 %v1295
  %v5160 = vunpack.c.h.b16 %v1295
  %v5161 = vunpack.c.l.b16 %v1296
  %v5162 = vunpack.c.l.b16 %v1297
  %v5163 = vunpack.c.h.b16 %v1297
  %v5164 = vunpack.c.l.b16 %v1298
  %v5165 = vunpack.c.l.b16 %v1299
  %v5166 = vunpack.c.h.b16 %v1299
  %v5167 = vunpack.c.l.b16 %v1300
  %v5168 = vunpack.c.l.b16 %v1301
  %v5169 = vunpack.c.h.b16 %v1301
  %v5170 = vunpack.c.l.b16 %v1302
  %v5171 = vunpack.c.l.b16 %v1303
  %v5172 = vunpack.c.h.b16 %v1303
  %v5173 = vunpack.c.l.b16 %v1304
  %v5174 = vunpack.c.l.b16 %v1305
  %v5175 = vunpack.c.h.b16 %v1305
  %v5176 = vunpack.c.l.b16 %v1306
  %v5177 = vunpack.c.l.b16 %v1307
  %v5178 = vunpack.c.h.b16 %v1307
  %v5179 = vunpack.c.l.b16 %v1308
  %v5180 = vunpack.c.l.b16 %v1309
  %v5181 = vunpack.c.h.b16 %v1309
  %v5182 = vunpack.c.l.b16 %v1310
  %v5183 = vunpack.c.l.b16 %v1311
  %v5184 = vunpack.c.h.b16 %v1311
  %v5185 = vunpack.c.l.b16 %v1312
  %v5186 = vunpack.c.l.b16 %v1313
  %v5187 = vunpack.c.h.b16 %v1313
  %v5188 = vunpack.c.l.b16 %v1314
  %v5189 = vunpack.c.l.b16 %v1315
  %v5190 = vunpack.c.h.b16 %v1315
  %v5191 = vunpack.c.l.b16 %v1316
  %v5192 = vunpack.c.l.b16 %v1317
  %v5193 = vunpack.c.h.b16 %v1317
  %v5194 = vunpack.c.l.b16 %v1318
  %v5195 = vunpack.c.l.b16 %v1319
  %v5196 = vunpack.c.h.b16 %v1319
  %v5197 = vunpack.c.l.b16 %v1320
  %v5198 = vunpack.c.l.b16 %v1321
  %v5199 = vunpack.c.h.b16 %v1321
  %v5200 = vunpack.c.l.b16 %v1322
  %v5201 = vunpack.c.l.b16 %v1323
  %v5202 = vunpack.c.h.b16 %v1323
  %v5203 = vunpack.c.l.b16 %v1324
  %v5204 = vunpack.c.l.b16 %v1325
  %v5205 = vunpack.c.h.b16 %v1325
  %v5206 = vunpack.c.l.b16 %v1326
  %v5207 = vunpack.c.l.b16 %v1327
  %v5208 = vunpack.c.h.b16 %v1327
  %v5209 = vunpack.c.l.b16 %v1328
  %v5210 = vunpack.c.l.b16 %v1329
  %v5211 = vunpack.c.h.b16 %v1329
  %v5212 = vunpack.c.l.b16 %v1330
  %v5213 = vunpack.c.l.b16 %v1331
  %v5214 = vunpack.c.h.b16 %v1331
  %v5215 = vunpack.c.l.b16 %v1332
  %v5216 = vunpack.c.l.b16 %v1333
  %v5217 = vunpack.c.h.b16 %v1333
  %v5218 = vunpack.c.l.b16 %v1334
  %v5219 = vunpack.c.l.b16 %v1335
  %v5220 = vunpack.c.h.b16 %v1335
  %v5221 = vunpack.c.l.b16 %v1336
  %v5222 = vunpack.c.l.b16 %v1337
  %v5223 = vunpack.c.h.b16 %v1337
  %v5224 = vunpack.c.l.b16 %v1338
  %v5225 = vunpack.c.l.b16 %v1339
  %v5226 = vunpack.c.h.b16 %v1339
  %v5227 = vunpack.c.l.b16 %v1340
  %v5228 = vunpack.c.l.b16 %v1341
  %v5229 = vunpack.c.h.b16 %v1341
  %v5230 = vunpack.c.l.b16 %v1342
  %v5231 = vunpack.c.l.b16 %v1343
  %v5232 = vunpack.c.h.b16 %v1343
  %v5233 = vunpack.c.l.b16 %v1344
  %v5234 = vunpack.c.l.b16 %v1345
  %v5235 = vunpack.c.h.b16 %v1345
  %v5236 = vunpack.c.l.b16 %v1346
  %v5237 = vunpack.c.l.b16 %v1347
  %v5238 = vunpack.c.h.b16 %v1347
  %v5239 = vunpack.c.l.b16 %v1348
  %v5240 = vunpack.c.l.b16 %v1349
  %v5241 = vunpack.c.h.b16 %v1349
  %v5242 = vunpack.c.l.b16 %v1350
  %v5243 = vunpack.c.l.b16 %v1351
  %v5244 = vunpack.c.h.b16 %v1351
  %v5245 = vunpack.c.l.b16 %v1352
  %v5246 = vunpack.c.l.b16 %v1353
  %v5247 = vunpack.c.h.b16 %v1353
  %v5248 = vunpack.c.l.b16 %v1354
  %v5249 = vunpack.c.l.b16 %v1355
  %v5250 = vunpack.c.h.b16 %v1355
  %v5251 = vunpack.c.l.b16 %v1356
  %v5252 = vunpack.c.l.b16 %v1357
  %v5253 = vunpack.c.h.b16 %v1357
  %v5254 = vunpack.c.l.b16 %v1358
  %v5255 = vunpack.c.l.b16 %v1359
  %v5256 = vunpack.c.h.b16 %v1359
  %v5257 = vunpack.c.l.b16 %v1360
  %v5258 = vunpack.c.l.b16 %v1361
  %v5259 = vunpack.c.h.b16 %v1361
  %v5260 = vunpack.c.l.b16 %v1362
  %v5261 = vunpack.c.l.b16 %v1363
  %v5262 = vunpack.c.h.b16 %v1363
  %v5263 = vunpack.c.l.b16 %v1364
  %v5264 = vunpack.c.l.b16 %v1365
  %v5265 = vunpack.c.h.b16 %v1365
  %v5266 = vunpack.c.l.b16 %v1366
  %v5267 = vunpack.c.l.b16 %v1367
  %v5268 = vunpack.c.h.b16 %v1367
  %v5269 = vunpack.c.l.b16 %v1368
  %v5270 = vunpack.c.l.b16 %v1369
  %v5271 = vunpack.c.h.b16 %v1369
  %v5272 = vunpack.c.l.b16 %v1370
  %v5273 = vunpack.c.l.b16 %v1371
  %v5274 = vunpack.c.h.b16 %v1371
  %v5275 = vunpack.c.l.b16 %v1372
  %v5276 = vunpack.c.l.b16 %v1373
  %v5277 = vunpack.c.h.b16 %v1373
  %v5278 = vunpack.c.l.b16 %v1374
  %v5279 = vunpack.c.l.b16 %v1375
  %v5280 = vunpack.c.h.b16 %v1375
  %v5281 = vunpack.c.l.b16 %v1376
  %v5282 = vunpack.c.l.b16 %v1377
  %v5283 = vunpack.c.h.b16 %v1377
  %v5284 = vunpack.c.l.b16 %v1378
  %v5285 = vunpack.c.l.b16 %v1379
  %v5286 = vunpack.c.h.b16 %v1379
  %v5287 = vunpack.c.l.b16 %v1380
  %v5288 = vunpack.c.l.b16 %v1381
  %v5289 = vunpack.c.h.b16 %v1381
  %v5290 = vunpack.c.l.b16 %v1382
  %v5291 = vunpack.c.l.b16 %v1383
  %v5292 = vunpack.c.h.b16 %v1383
  %v5293 = vunpack.c.l.b16 %v1384
  %v5294 = vunpack.c.l.b16 %v1385
  %v5295 = vunpack.c.h.b16 %v1385
  %v5296 = vunpack.c.l.b16 %v1386
  %v5297 = vunpack.c.l.b16 %v1387
  %v5298 = vunpack.c.h.b16 %v1387
  %v5299 = vunpack.c.l.b16 %v1388
  %v5300 = vunpack.c.l.b16 %v1389
  %v5301 = vunpack.c.h.b16 %v1389
  %v5302 = vunpack.c.l.b16 %v1390
  %v5303 = vunpack.c.l.b16 %v1391
  %v5304 = vunpack.c.h.b16 %v1391
  %v5305 = vunpack.c.l.b16 %v1392
  %v5306 = vunpack.c.l.b16 %v1393
  %v5307 = vunpack.c.h.b16 %v1393
  %v5308 = vunpack.c.l.b16 %v1394
  %v5309 = vunpack.c.l.b16 %v1395
  %v5310 = vunpack.c.h.b16 %v1395
  %v5311 = vunpack.c.l.b16 %v1396
  %v5312 = vunpack.c.l.b16 %v1397
  %v5313 = vunpack.c.h.b16 %v1397
  %v5314 = vunpack.c.l.b16 %v1398
  %v5315 = vunpack.c.l.b16 %v1399
  %v5316 = vunpack.c.h.b16 %v1399
  %v5317 = vunpack.c.l.b16 %v1400
  %v5318 = vunpack.c.l.b16 %v1401
  %v5319 = vunpack.c.h.b16 %v1401
  %v5320 = vunpack.c.l.b16 %v1402
  %v5321 = vunpack.c.l.b16 %v1403
  %v5322 = vunpack.c.h.b16 %v1403
  %v5323 = vunpack.c.l.b16 %v1404
  %v5324 = vunpack.c.l.b16 %v1405
  %v5325 = vunpack.c.h.b16 %v1405
  %v5326 = vunpack.c.l.b16 %v1406
  %v5327 = vunpack.c.l.b16 %v1407
  %v5328 = vunpack.c.h.b16 %v1407
  %v5329 = vunpack.c.l.b16 %v1408
  %v5330 = vunpack.c.l.b16 %v1409
  %v5331 = vunpack.c.h.b16 %v1409
  %v5332 = vunpack.c.l.b16 %v1410
  %v5333 = vunpack.c.l.b16 %v1411
  %v5334 = vunpack.c.h.b16 %v1411
  %v5335 = vunpack.c.l.b16 %v1412
  %v5336 = vunpack.c.l.b16 %v1413
  %v5337 = vunpack.c.h.b16 %v1413
  %v5338 = vunpack.c.l.b16 %v1414
  %v5339 = vunpack.c.l.b16 %v1415
  %v5340 = vunpack.c.h.b16 %v1415
  %v5341 = vunpack.c.l.b16 %v1416
  %v5342 = vunpack.c.l.b16 %v1417
  %v5343 = vunpack.c.h.b16 %v1417
  %v5344 = vunpack.c.l.b16 %v1418
  %v5345 = vunpack.c.l.b16 %v1419
  %v5346 = vunpack.c.h.b16 %v1419
  %v5347 = vunpack.c.l.b16 %v1420
  %v5348 = vunpack.c.l.b16 %v1421
  %v5349 = vunpack.c.h.b16 %v1421
  %v5350 = vunpack.c.l.b16 %v1422
  %v5351 = vunpack.c.l.b16 %v1423
  %v5352 = vunpack.c.h.b16 %v1423
  %v5353 = vunpack.c.l.b16 %v1424
  %v5354 = vunpack.c.l.b16 %v1425
  %v5355 = vunpack.c.h.b16 %v1425
  %v5356 = vunpack.c.l.b16 %v1426
  %v5357 = vunpack.c.l.b16 %v1427
  %v5358 = vunpack.c.h.b16 %v1427
  %v5359 = vunpack.c.l.b16 %v1428
  %v5360 = vunpack.c.l.b16 %v1429
  %v5361 = vunpack.c.h.b16 %v1429
  %v5362 = vunpack.c.l.b16 %v1430
  %v5363 = vunpack.c.l.b16 %v1431
  %v5364 = vunpack.c.h.b16 %v1431
  %v5365 = vunpack.c.l.b16 %v1432
  %v5366 = vunpack.c.l.b16 %v1433
  %v5367 = vunpack.c.h.b16 %v1433
  %v5368 = vunpack.c.l.b16 %v1434
  %v5369 = vunpack.c.l.b16 %v1435
  %v5370 = vunpack.c.h.b16 %v1435
  %v5371 = vunpack.c.l.b16 %v1436
  %v5372 = vunpack.c.l.b16 %v1437
  %v5373 = vunpack.c.h.b16 %v1437
  %v5374 = vunpack.c.l.b16 %v1438
  %v5375 = vunpack.c.l.b16 %v1439
  %v5376 = vunpack.c.h.b16 %v1439
  %v5377 = vunpack.c.l.b16 %v1440
  %v5378 = vunpack.c.l.b16 %v1441
  %v5379 = vunpack.c.h.b16 %v1441
  %v5380 = vunpack.c.l.b16 %v1442
  %v5381 = vunpack.c.l.b16 %v1443
  %v5382 = vunpack.c.h.b16 %v1443
  %v5383 = vunpack.c.l.b16 %v1444
  %v5384 = vunpack.c.l.b16 %v1445
  %v5385 = vunpack.c.h.b16 %v1445
  %v5386 = vunpack.c.l.b16 %v1446
  %v5387 = vunpack.c.l.b16 %v1447
  %v5388 = vunpack.c.h.b16 %v1447
  %v5389 = vunpack.c.l.b16 %v1448
  %v5390 = vunpack.c.l.b16 %v1449
  %v5391 = vunpack.c.h.b16 %v1449
  %v5392 = vunpack.c.l.b16 %v1450
  %v5393 = vunpack.c.l.b16 %v1451
  %v5394 = vunpack.c.h.b16 %v1451
  %v5395 = vunpack.c.l.b16 %v1452
  %v5396 = vunpack.c.l.b16 %v1453
  %v5397 = vunpack.c.h.b16 %v1453
  %v5398 = vunpack.c.l.b16 %v1454
  %v5399 = vunpack.c.l.b16 %v1455
  %v5400 = vunpack.c.h.b16 %v1455
  %v5401 = vunpack.c.l.b16 %v1456
  %v5402 = vunpack.c.l.b16 %v1457
  %v5403 = vunpack.c.h.b16 %v1457
  %v5404 = vunpack.c.l.b16 %v1458
  %v5405 = vunpack.c.l.b16 %v1459
  %v5406 = vunpack.c.h.b16 %v1459
  %v5407 = vunpack.c.l.b16 %v1460
  %v5408 = vunpack.c.l.b16 %v1461
  %v5409 = vunpack.c.h.b16 %v1461
  %v5410 = vunpack.c.l.b16 %v1462
  %v5411 = vunpack.c.l.b16 %v1463
  %v5412 = vunpack.c.h.b16 %v1463
  %v5413 = vunpack.c.l.b16 %v1464
  %v5414 = vunpack.c.l.b16 %v1465
  %v5415 = vunpack.c.h.b16 %v1465
  %v5416 = vunpack.c.l.b16 %v1466
  %v5417 = vunpack.c.l.b16 %v1467
  %v5418 = vunpack.c.h.b16 %v1467
  %v5419 = vunpack.c.l.b16 %v1468
  %v5420 = vunpack.c.l.b16 %v1469
  %v5421 = vunpack.c.h.b16 %v1469
  %v5422 = vunpack.c.l.b16 %v1470
  %v5423 = vunpack.c.l.b16 %v1471
  %v5424 = vunpack.c.h.b16 %v1471
  %v5425 = vunpack.c.l.b16 %v1472
  %v5426 = vunpack.c.l.b16 %v1473
  %v5427 = vunpack.c.h.b16 %v1473
  %v5428 = vunpack.c.l.b16 %v1474
  %v5429 = vunpack.c.l.b16 %v1475
  %v5430 = vunpack.c.h.b16 %v1475
  %v5431 = vunpack.c.l.b16 %v1476
  %v5432 = vunpack.c.l.b16 %v1477
  %v5433 = vunpack.c.h.b16 %v1477
  %v5434 = vunpack.c.l.b16 %v1478
  %v5435 = vunpack.c.l.b16 %v1479
  %v5436 = vunpack.c.h.b16 %v1479
  %v5437 = vunpack.c.l.b16 %v1480
  %v5438 = vunpack.c.l.b16 %v1481
  %v5439 = vunpack.c.h.b16 %v1481
  %v5440 = vunpack.c.l.b16 %v1482
  %v5441 = vunpack.c.l.b16 %v1483
  %v5442 = vunpack.c.h.b16 %v1483
  %v5443 = vunpack.c.l.b16 %v1484
  %v5444 = vunpack.c.l.b16 %v1485
  %v5445 = vunpack.c.h.b16 %v1485
  %v5446 = vunpack.c.l.b16 %v1486
  %v5447 = vunpack.c.l.b16 %v1487
  %v5448 = vunpack.c.h.b16 %v1487
  %v5449 = vunpack.c.l.b16 %v1488
  %v5450 = vunpack.c.l.b16 %v1489
  %v5451 = vunpack.c.h.b16 %v1489
  %v5452 = vunpack.c.l.b16 %v1490
  %v5453 = vunpack.c.l.b16 %v1491
  %v5454 = vunpack.c.h.b16 %v1491
  %v5455 = vunpack.c.l.b16 %v1492
  %v5456 = vunpack.c.l.b16 %v1493
  %v5457 = vunpack.c.h.b16 %v1493
  %v5458 = vunpack.c.l.b16 %v1494
  %v5459 = vunpack.c.l.b16 %v1495
  %v5460 = vunpack.c.h.b16 %v1495
  %v5461 = vunpack.c.l.b16 %v1496
  %v5462 = vunpack.c.l.b16 %v1497
  %v5463 = vunpack.c.h.b16 %v1497
  %v5464 = vunpack.c.l.b16 %v1498
  %v5465 = vunpack.c.l.b16 %v1499
  %v5466 = vunpack.c.h.b16 %v1499
  %v5467 = vunpack.c.l.b16 %v1500
  %v5468 = vunpack.c.l.b16 %v1501
  %v5469 = vunpack.c.h.b16 %v1501
  %v5470 = vunpack.c.l.b16 %v1502
  %v5471 = vunpack.c.l.b16 %v1503
  %v5472 = vunpack.c.h.b16 %v1503
  %v5473 = vunpack.c.l.b16 %v1504
  %v5474 = vunpack.c.l.b16 %v1505
  %v5475 = vunpack.c.h.b16 %v1505
  %v5476 = vunpack.c.l.b16 %v1506
  %v5477 = vunpack.c.l.b16 %v1507
  %v5478 = vunpack.c.h.b16 %v1507
  %v5479 = vunpack.c.l.b16 %v1508
  %v5480 = vunpack.c.l.b16 %v1509
  %v5481 = vunpack.c.h.b16 %v1509
  %v5482 = vunpack.c.l.b16 %v1510
  %v5483 = vunpack.c.l.b16 %v1511
  %v5484 = vunpack.c.h.b16 %v1511
  %v5485 = vunpack.c.l.b16 %v1512
  %v5486 = vunpack.c.l.b16 %v1513
  %v5487 = vunpack.c.h.b16 %v1513
  %v5488 = vunpack.c.l.b16 %v1514
  %v5489 = vunpack.c.l.b16 %v1515
  %v5490 = vunpack.c.h.b16 %v1515
  %v5491 = vunpack.c.l.b16 %v1516
  %v5492 = vunpack.c.l.b16 %v1517
  %v5493 = vunpack.c.h.b16 %v1517
  %v5494 = vunpack.c.l.b16 %v1518
  %v5495 = vunpack.c.l.b16 %v1519
  %v5496 = vunpack.c.h.b16 %v1519
  %v5497 = vunpack.c.l.b16 %v1520
  %v5498 = vunpack.c.l.b16 %v1521
  %v5499 = vunpack.c.h.b16 %v1521
  %v5500 = vunpack.c.l.b16 %v1522
  %v5501 = vunpack.c.l.b16 %v1523
  %v5502 = vunpack.c.h.b16 %v1523
  %v5503 = vunpack.c.l.b16 %v1524
  %v5504 = vunpack.c.l.b16 %v1525
  %v5505 = vunpack.c.h.b16 %v1525
  %v5506 = vunpack.c.l.b16 %v1526
  %v5507 = vunpack.c.l.b16 %v1527
  %v5508 = vunpack.c.h.b16 %v1527
  %v5509 = vunpack.c.l.b16 %v1528
  %v5510 = vunpack.c.l.b16 %v1529
  %v5511 = vunpack.c.h.b16 %v1529
  %v5512 = vunpack.c.l.b16 %v1530
  %v5513 = vunpack.c.l.b16 %v1531
  %v5514 = vunpack.c.h.b16 %v1531
  %v5515 = vunpack.c.l.b16 %v1532
  %v5516 = vunpack.c.l.b16 %v1533
  %v5517 = vunpack.c.h.b16 %v1533
  %v5518 = vunpack.c.l.b16 %v1534
  %v5519 = vunpack.c.l.b16 %v1535
  %v5520 = vunpack.c.h.b16 %v1535
  %v5521 = vunpack.c.l.b16 %v1536
  %v5522 = vunpack.c.l.b16 %v1537
  %v5523 = vunpack.c.h.b16 %v1537
  %v5524 = vunpack.c.l.b16 %v1538
  %v5525 = vunpack.c.l.b16 %v1539
  %v5526 = vunpack.c.h.b16 %v1539
  %v5527 = vunpack.c.l.b16 %v1540
  %v5528 = vunpack.c.l.b16 %v1541
  %v5529 = vunpack.c.h.b16 %v1541
  %v5530 = vunpack.c.l.b16 %v1542
  %v5531 = vunpack.c.l.b16 %v1543
  %v5532 = vunpack.c.h.b16 %v1543
  %v5533 = vunpack.c.l.b16 %v1544
  %v5534 = vunpack.c.l.b16 %v1545
  %v5535 = vunpack.c.h.b16 %v1545
  %v5536 = vunpack.c.l.b16 %v1546
  %v5537 = vunpack.c.l.b16 %v1547
  %v5538 = vunpack.c.h.b16 %v1547
  %v5539 = vunpack.c.l.b16 %v1548
  %v5540 = vunpack.c.l.b16 %v1549
  %v5541 = vunpack.c.h.b16 %v1549
  %v5542 = vunpack.c.l.b16 %v1550
  %v5543 = vunpack.c.l.b16 %v1551
  %v5544 = vunpack.c.h.b16 %v1551
  %v5545 = vunpack.c.l.b16 %v1552
  %v5546 = vunpack.c.l.b16 %v1553
  %v5547 = vunpack.c.h.b16 %v1553
  %v5548 = vunpack.c.l.b16 %v1554
  %v5549 = vunpack.c.l.b16 %v1555
  %v5550 = vunpack.c.h.b16 %v1555
  %v5551 = vunpack.c.l.b16 %v1556
  %v5552 = vunpack.c.l.b16 %v1557
  %v5553 = vunpack.c.h.b16 %v1557
  %v5554 = vunpack.c.l.b16 %v1558
  %v5555 = vunpack.c.l.b16 %v1559
  %v5556 = vunpack.c.h.b16 %v1559
  %v5557 = vunpack.c.l.b16 %v1560
  %v5558 = vunpack.c.l.b16 %v1561
  %v5559 = vunpack.c.h.b16 %v1561
  %v5560 = vunpack.c.l.b16 %v1562
  %v5561 = vunpack.c.l.b16 %v1563
  %v5562 = vunpack.c.h.b16 %v1563
  %v5563 = vunpack.c.l.b16 %v1564
  %v5564 = vunpack.c.l.b16 %v1565
  %v5565 = vunpack.c.h.b16 %v1565
  %v5566 = vunpack.c.l.b16 %v1566
  %v5567 = vunpack.c.l.b16 %v1567
  %v5568 = vunpack.c.h.b16 %v1567
  %v5569 = vunpack.c.l.b16 %v1568
  %v5570 = vunpack.c.l.b16 %v1569
  %v5571 = vunpack.c.h.b16 %v1569
  %v5572 = vunpack.c.l.b16 %v1570
  %v5573 = vunpack.c.l.b16 %v1571
  %v5574 = vunpack.c.h.b16 %v1571
  %v5575 = vunpack.c.l.b16 %v1572
  %v5576 = vunpack.c.l.b16 %v1573
  %v5577 = vunpack.c.h.b16 %v1573
  %v5578 = vunpack.c.l.b16 %v1574
  %v5579 = vunpack.c.l.b16 %v1575
  %v5580 = vunpack.c.h.b16 %v1575
  %v5581 = vunpack.c.l.b16 %v1576
  %v5582 = vunpack.c.l.b16 %v1577
  %v5583 = vunpack.c.h.b16 %v1577
  %v5584 = vunpack.c.l.b16 %v1578
  %v5585 = vunpack.c.l.b16 %v1579
  %v5586 = vunpack.c.h.b16 %v1579
  %v5587 = vunpack.c.l.b16 %v1580
  %v5588 = vunpack.c.l.b16 %v1581
  %v5589 = vunpack.c.h.b16 %v1581
  %v5590 = vunpack.c.l.b16 %v1582
  %v5591 = vunpack.c.l.b16 %v1583
  %v5592 = vunpack.c.h.b16 %v1583
  %v5593 = vunpack.c.l.b16 %v1584
  %v5594 = vunpack.c.l.b16 %v1585
  %v5595 = vunpack.c.h.b16 %v1585
  %v5596 = vunpack.c.l.b16 %v1586
  %v5597 = vunpack.c.l.b16 %v1587
  %v5598 = vunpack.c.h.b16 %v1587
  %v5599 = vunpack.c.l.b16 %v1588
  %v5600 = vunpack.c.l.b16 %v1589
  %v5601 = vunpack.c.h.b16 %v1589
  %v5602 = vunpack.c.l.b16 %v1590
  %v5603 = vunpack.c.l.b16 %v1591
  %v5604 = vunpack.c.h.b16 %v1591
  %v5605 = vunpack.c.l.b16 %v1592
  %v5606 = vunpack.c.l.b16 %v1593
  %v5607 = vunpack.c.h.b16 %v1593
  %v5608 = vunpack.c.l.b16 %v1594
  %v5609 = vunpack.c.l.b16 %v1595
  %v5610 = vunpack.c.h.b16 %v1595
  %v5611 = vunpack.c.l.b16 %v1596
  %v5612 = vunpack.c.l.b16 %v1597
  %v5613 = vunpack.c.h.b16 %v1597
  %v5614 = vunpack.c.l.b16 %v1598
  %v5615 = vunpack.c.l.b16 %v1599
  %v5616 = vunpack.c.h.b16 %v1599
  %v5617 = vunpack.c.l.b16 %v1600
  %v5618 = vunpack.c.l.b16 %v1601
  %v5619 = vunpack.c.h.b16 %v1601
  %v5620 = vunpack.c.l.b16 %v1602
  %v5621 = vunpack.c.l.b16 %v1603
  %v5622 = vunpack.c.h.b16 %v1603
  %v5623 = vunpack.c.l.b16 %v1604
  %v5624 = vunpack.c.l.b16 %v1605
  %v5625 = vunpack.c.h.b16 %v1605
  %v5626 = vunpack.c.l.b16 %v1606
  %v5627 = vunpack.c.l.b16 %v1607
  %v5628 = vunpack.c.h.b16 %v1607
  %v5629 = vunpack.c.l.b16 %v1608
  %v5630 = vunpack.c.l.b16 %v1609
  %v5631 = vunpack.c.h.b16 %v1609
  %v5632 = vunpack.c.l.b16 %v1610
  %v5633 = vunpack.c.l.b16 %v1611
  %v5634 = vunpack.c.h.b16 %v1611
  %v5635 = vunpack.c.l.b16 %v1612
  %v5636 = vunpack.c.l.b16 %v1613
  %v5637 = vunpack.c.h.b16 %v1613
  %v5638 = vunpack.c.l.b16 %v1614
  %v5639 = vunpack.c.l.b16 %v1615
  %v5640 = vunpack.c.h.b16 %v1615
  %v5641 = vunpack.c.l.b16 %v1616
  %v5642 = vunpack.c.l.b16 %v1617
  %v5643 = vunpack.c.h.b16 %v1617
  %v5644 = vunpack.c.l.b16 %v1618
  %v5645 = vunpack.c.l.b16 %v1619
  %v5646 = vunpack.c.h.b16 %v1619
  %v5647 = vunpack.c.l.b16 %v1620
  %v5648 = vunpack.c.l.b16 %v1621
  %v5649 = vunpack.c.h.b16 %v1621
  %v5650 = vunpack.c.l.b16 %v1622
  %v5651 = vunpack.c.l.b16 %v1623
  %v5652 = vunpack.c.h.b16 %v1623
  %v5653 = vunpack.c.l.b16 %v1624
  %v5654 = vunpack.c.l.b16 %v1625
  %v5655 = vunpack.c.h.b16 %v1625
  %v5656 = vunpack.c.l.b16 %v1626
  %v5657 = vunpack.c.l.b16 %v1627
  %v5658 = vunpack.c.h.b16 %v1627
  %v5659 = vunpack.c.l.b16 %v1628
  %v5660 = vunpack.c.l.b16 %v1629
  %v5661 = vunpack.c.h.b16 %v1629
  %v5662 = vunpack.c.l.b16 %v1630
  %v5663 = vunpack.c.l.b16 %v1631
  %v5664 = vunpack.c.h.b16 %v1631
  %v5665 = vunpack.c.l.b16 %v1632
  %v5666 = vunpack.c.l.b16 %v1633
  %v5667 = vunpack.c.h.b16 %v1633
  %v5668 = vunpack.c.l.b16 %v1634
  %v5669 = vunpack.c.l.b16 %v1635
  %v5670 = vunpack.c.h.b16 %v1635
  %v5671 = vunpack.c.l.b16 %v1636
  %v5672 = vunpack.c.l.b16 %v1637
  %v5673 = vunpack.c.h.b16 %v1637
  %v5674 = vunpack.c.l.b16 %v1638
  %v5675 = vunpack.c.l.b16 %v1639
  %v5676 = vunpack.c.h.b16 %v1639
  %v5677 = vunpack.c.l.b16 %v1640
  %v5678 = vunpack.c.l.b16 %v1641
  %v5679 = vunpack.c.h.b16 %v1641
  %v5680 = vunpack.c.l.b16 %v1642
  %v5681 = vunpack.c.l.b16 %v1643
  %v5682 = vunpack.c.h.b16 %v1643
  %v5683 = vunpack.c.l.b16 %v1644
  %v5684 = vunpack.c.l.b16 %v1645
  %v5685 = vunpack.c.h.b16 %v1645
  %v5686 = vunpack.c.l.b16 %v1646
  %v5687 = vunpack.c.l.b16 %v1647
  %v5688 = vunpack.c.h.b16 %v1647
  %v5689 = vunpack.c.l.b16 %v1648
  %v5690 = vunpack.c.l.b16 %v1649
  %v5691 = vunpack.c.h.b16 %v1649
  %v5692 = vunpack.c.l.b16 %v1650
  %v5693 = vunpack.c.l.b16 %v1651
  %v5694 = vunpack.c.h.b16 %v1651
  %v5695 = vunpack.c.l.b16 %v1652
  %v5696 = vunpack.c.l.b16 %v1653
  %v5697 = vunpack.c.h.b16 %v1653
  %v5698 = vunpack.c.l.b16 %v1654
  %v5699 = vunpack.c.l.b16 %v1655
  %v5700 = vunpack.c.h.b16 %v1655
  %v5701 = vunpack.c.l.b16 %v1656
  %v5702 = vunpack.c.l.b16 %v1657
  %v5703 = vunpack.c.h.b16 %v1657
  %v5704 = vunpack.c.l.b16 %v1658
  %v5705 = vunpack.c.l.b16 %v1659
  %v5706 = vunpack.c.h.b16 %v1659
  %v5707 = vunpack.c.l.b16 %v1660
  %v5708 = vunpack.c.l.b16 %v1661
  %v5709 = vunpack.c.h.b16 %v1661
  %v5710 = vunpack.c.l.b16 %v1662
  %v5711 = vunpack.c.l.b16 %v1663
  %v5712 = vunpack.c.h.b16 %v1663
  %v5713 = vunpack.c.l.b16 %v1664
  %v5714 = vunpack.c.l.b16 %v1665
  %v5715 = vunpack.c.h.b16 %v1665
  %v5716 = vunpack.c.l.b16 %v1666
  %v5717 = vunpack.c.l.b16 %v1667
  %v5718 = vunpack.c.h.b16 %v1667
  %v5719 = vunpack.c.l.b16 %v1668
  %v5720 = vunpack.c.l.b16 %v1669
  %v5721 = vunpack.c.h.b16 %v1669
  %v5722 = vunpack.c.l.b16 %v1670
  %v5723 = vunpack.c.l.b16 %v1671
  %v5724 = vunpack.c.h.b16 %v1671
  %v5725 = vunpack.c.l.b16 %v1672
  %v5726 = vunpack.c.l.b16 %v1673
  %v5727 = vunpack.c.h.b16 %v1673
  %v5728 = vunpack.c.l.b16 %v1674
  %v5729 = vunpack.c.l.b16 %v1675
  %v5730 = vunpack.c.h.b16 %v1675
  %v5731 = vunpack.c.l.b16 %v1676
  %v5732 = vunpack.c.l.b16 %v1677
  %v5733 = vunpack.c.h.b16 %v1677
  %v5734 = vunpack.c.l.b16 %v1678
  %v5735 = vunpack.c.l.b16 %v1679
  %v5736 = vunpack.c.h.b16 %v1679
  %v5737 = vunpack.c.l.b16 %v1680
  %v5738 = vunpack.c.l.b16 %v1681
  %v5739 = vunpack.c.h.b16 %v1681
  %v5740 = vunpack.c.l.b16 %v1682
  %v5741 = vunpack.c.l.b16 %v1683
  %v5742 = vunpack.c.h.b16 %v1683
  %v5743 = vunpack.c.l.b16 %v1684
  %v5744 = vunpack.c.l.b16 %v1685
  %v5745 = vunpack.c.h.b16 %v1685
  %v5746 = vunpack.c.l.b16 %v1686
  %v5747 = vunpack.c.l.b16 %v1687
  %v5748 = vunpack.c.h.b16 %v1687
  %v5749 = vunpack.c.l.b16 %v1688
  %v5750 = vunpack.c.l.b16 %v1689
  %v5751 = vunpack.c.h.b16 %v1689
  %v5752 = vunpack.c.l.b16 %v1690
  %v5753 = vunpack.c.l.b16 %v1691
  %v5754 = vunpack.c.h.b16 %v1691
  %v5755 = vunpack.c.l.b16 %v1692
  %v5756 = vunpack.c.l.b16 %v1693
  %v5757 = vunpack.c.h.b16 %v1693
  %v5758 = vunpack.c.l.b16 %v1694
  %v5759 = vunpack.c.l.b16 %v1695
  %v5760 = vunpack.c.h.b16 %v1695
  %v5761 = vunpack.c.l.b16 %v1696
  %v5762 = vunpack.c.l.b16 %v1697
  %v5763 = vunpack.c.h.b16 %v1697
  %v5764 = vunpack.c.l.b16 %v1698
  %v5765 = vunpack.c.l.b16 %v1699
  %v5766 = vunpack.c.h.b16 %v1699
  %v5767 = vunpack.c.l.b16 %v1700
  %v5768 = vunpack.c.l.b16 %v1701
  %v5769 = vunpack.c.h.b16 %v1701
  %v5770 = vunpack.c.l.b16 %v1702
  %v5771 = vunpack.c.l.b16 %v1703
  %v5772 = vunpack.c.h.b16 %v1703
  %v5773 = vunpack.c.l.b16 %v1704
  %v5774 = vunpack.c.l.b16 %v1705
  %v5775 = vunpack.c.h.b16 %v1705
  %v5776 = vunpack.c.l.b16 %v1706
  %v5777 = vunpack.c.l.b16 %v1707
  %v5778 = vunpack.c.h.b16 %v1707
  %v5779 = vunpack.c.l.b16 %v1708
  %v5780 = vunpack.c.l.b16 %v1709
  %v5781 = vunpack.c.h.b16 %v1709
  %v5782 = vunpack.c.l.b16 %v1710
  %v5783 = vunpack.c.l.b16 %v1711
  %v5784 = vunpack.c.h.b16 %v1711
  %v5785 = vunpack.c.l.b16 %v1712
  %v5786 = vunpack.c.l.b16 %v1713
  %v5787 = vunpack.c.h.b16 %v1713
  %v5788 = vunpack.c.l.b16 %v1714
  %v5789 = vunpack.c.l.b16 %v1715
  %v5790 = vunpack.c.h.b16 %v1715
  %v5791 = vunpack.c.l.b16 %v1716
  %v5792 = vunpack.c.l.b16 %v1717
  %v5793 = vunpack.c.h.b16 %v1717
  %v5794 = vunpack.c.l.b16 %v1718
  %v5795 = vunpack.c.l.b16 %v1719
  %v5796 = vunpack.c.h.b16 %v1719
  %v5797 = vunpack.c.l.b16 %v1720
  %v5798 = vunpack.c.l.b16 %v1721
  %v5799 = vunpack.c.h.b16 %v1721
  %v5800 = vunpack.c.l.b16 %v1722
  %v5801 = vunpack.c.l.b16 %v1723
  %v5802 = vunpack.c.h.b16 %v1723
  %v5803 = vunpack.c.l.b16 %v1724
  %v5804 = vunpack.c.l.b16 %v1725
  %v5805 = vunpack.c.h.b16 %v1725
  %v5806 = vunpack.c.l.b16 %v1726
  %v5807 = vunpack.c.l.b16 %v1727
  %v5808 = vunpack.c.h.b16 %v1727
  %v5809 = vunpack.c.l.b16 %v1728
  %v5810 = vunpack.c.l.b16 %v1729
  %v5811 = vunpack.c.h.b16 %v1729
  %v5812 = vunpack.c.l.b16 %v1730
  %v5813 = vunpack.c.l.b16 %v1731
  %v5814 = vunpack.c.h.b16 %v1731
  %v5815 = vunpack.c.l.b16 %v1732
  %v5816 = vunpack.c.l.b16 %v1733
  %v5817 = vunpack.c.h.b16 %v1733
  %v5818 = vunpack.c.l.b16 %v1734
  %v5819 = vunpack.c.l.b16 %v1735
  %v5820 = vunpack.c.h.b16 %v1735
  %v5821 = vunpack.c.l.b16 %v1736
  %v5822 = vunpack.c.l.b16 %v1737
  %v5823 = vunpack.c.h.b16 %v1737
  %v5824 = vunpack.c.l.b16 %v1738
  %v5825 = vunpack.c.l.b16 %v1739
  %v5826 = vunpack.c.h.b16 %v1739
  %v5827 = vunpack.c.l.b16 %v1740
  %v5828 = vunpack.c.l.b16 %v1741
  %v5829 = vunpack.c.h.b16 %v1741
  %v5830 = vunpack.c.l.b16 %v1742
  %v5831 = vunpack.c.l.b16 %v1743
  %v5832 = vunpack.c.h.b16 %v1743
  %v5833 = vunpack.c.l.b16 %v1744
  %v5834 = vunpack.c.l.b16 %v1745
  %v5835 = vunpack.c.h.b16 %v1745
  %v5836 = vunpack.c.l.b16 %v1746
  %v5837 = vunpack.c.l.b16 %v1747
  %v5838 = vunpack.c.h.b16 %v1747
  %v5839 = vunpack.c.l.b16 %v1748
  %v5840 = vunpack.c.l.b16 %v1749
  %v5841 = vunpack.c.h.b16 %v1749
  %v5842 = vunpack.c.l.b16 %v1750
  %v5843 = vunpack.c.l.b16 %v1751
  %v5844 = vunpack.c.h.b16 %v1751
  %v5845 = vunpack.c.l.b16 %v1752
  %v5846 = vunpack.c.l.b16 %v1753
  %v5847 = vunpack.c.h.b16 %v1753
  %v5848 = vunpack.c.l.b16 %v1754
  %v5849 = vunpack.c.l.b16 %v1755
  %v5850 = vunpack.c.h.b16 %v1755
  %v5851 = vunpack.c.l.b16 %v1756
  %v5852 = vunpack.c.l.b16 %v1757
  %v5853 = vunpack.c.h.b16 %v1757
  %v5854 = vunpack.c.l.b16 %v1758
  %v5855 = vunpack.c.l.b16 %v1759
  %v5856 = vunpack.c.h.b16 %v1759
  %v5857 = vunpack.c.l.b16 %v1760
  %v5858 = vpack.c.b16 %v3413, %v3410
  %v5859 = vpack.c.b16 %v3414, %v3411
  %v5860 = vpack.c.b16 %v3415, %v3412
  %v5861 = vpack.c.b16 %v3419, %v3416
  %v5862 = vpack.c.b16 %v3420, %v3417
  %v5863 = vpack.c.b16 %v3421, %v3418
  %v5864 = vpack.c.b16 %v3425, %v3422
  %v5865 = vpack.c.b16 %v3426, %v3423
  %v5866 = vpack.c.b16 %v3427, %v3424
  %v5867 = vpack.c.b16 %v3431, %v3428
  %v5868 = vpack.c.b16 %v3432, %v3429
  %v5869 = vpack.c.b16 %v3433, %v3430
  %v5870 = vpack.c.b16 %v3437, %v3434
  %v5871 = vpack.c.b16 %v3438, %v3435
  %v5872 = vpack.c.b16 %v3439, %v3436
  %v5873 = vpack.c.b16 %v3443, %v3440
  %v5874 = vpack.c.b16 %v3444, %v3441
  %v5875 = vpack.c.b16 %v3445, %v3442
  %v5876 = vpack.c.b16 %v3449, %v3446
  %v5877 = vpack.c.b16 %v3450, %v3447
  %v5878 = vpack.c.b16 %v3451, %v3448
  %v5879 = vpack.c.b16 %v3455, %v3452
  %v5880 = vpack.c.b16 %v3456, %v3453
  %v5881 = vpack.c.b16 %v3457, %v3454
  %v5882 = vpack.c.b16 %v3461, %v3458
  %v5883 = vpack.c.b16 %v3462, %v3459
  %v5884 = vpack.c.b16 %v3463, %v3460
  %v5885 = vpack.c.b16 %v3467, %v3464
  %v5886 = vpack.c.b16 %v3468, %v3465
  %v5887 = vpack.c.b16 %v3469, %v3466
  %v5888 = vpack.c.b16 %v3473, %v3470
  %v5889 = vpack.c.b16 %v3474, %v3471
  %v5890 = vpack.c.b16 %v3475, %v3472
  %v5891 = vpack.c.b16 %v3479, %v3476
  %v5892 = vpack.c.b16 %v3480, %v3477
  %v5893 = vpack.c.b16 %v3481, %v3478
  %v5894 = vpack.c.b16 %v3485, %v3482
  %v5895 = vpack.c.b16 %v3486, %v3483
  %v5896 = vpack.c.b16 %v3487, %v3484
  %v5897 = vpack.c.b16 %v3491, %v3488
  %v5898 = vpack.c.b16 %v3492, %v3489
  %v5899 = vpack.c.b16 %v3493, %v3490
  %v5900 = vpack.c.b16 %v3497, %v3494
  %v5901 = vpack.c.b16 %v3498, %v3495
  %v5902 = vpack.c.b16 %v3499, %v3496
  %v5903 = vpack.c.b16 %v3503, %v3500
  %v5904 = vpack.c.b16 %v3504, %v3501
  %v5905 = vpack.c.b16 %v3505, %v3502
  %v5906 = vpack.c.b16 %v3509, %v3506
  %v5907 = vpack.c.b16 %v3510, %v3507
  %v5908 = vpack.c.b16 %v3511, %v3508
  %v5909 = vpack.c.b16 %v3515, %v3512
  %v5910 = vpack.c.b16 %v3516, %v3513
  %v5911 = vpack.c.b16 %v3517, %v3514
  %v5912 = vpack.c.b16 %v3521, %v3518
  %v5913 = vpack.c.b16 %v3522, %v3519
  %v5914 = vpack.c.b16 %v3523, %v3520
  %v5915 = vpack.c.b16 %v3527, %v3524
  %v5916 = vpack.c.b16 %v3528, %v3525
  %v5917 = vpack.c.b16 %v3529, %v3526
  %v5918 = vpack.c.b16 %v3533, %v3530
  %v5919 = vpack.c.b16 %v3534, %v3531
  %v5920 = vpack.c.b16 %v3535, %v3532
  %v5921 = vpack.c.b16 %v3539, %v3536
  %v5922 = vpack.c.b16 %v3540, %v3537
  %v5923 = vpack.c.b16 %v3541, %v3538
  %v5924 = vpack.c.b16 %v3545, %v3542
  %v5925 = vpack.c.b16 %v3546, %v3543
  %v5926 = vpack.c.b16 %v3547, %v3544
  %v5927 = vpack.c.b16 %v3551, %v3548
  %v5928 = vpack.c.b16 %v3552, %v3549
  %v5929 = vpack.c.b16 %v3553, %v3550
  %v5930 = vpack.c.b16 %v3557, %v3554
  %v5931 = vpack.c.b16 %v3558, %v3555
  %v5932 = vpack.c.b16 %v3559, %v3556
  %v5933 = vpack.c.b16 %v3563, %v3560
  %v5934 = vpack.c.b16 %v3564, %v3561
  %v5935 = vpack.c.b16 %v3565, %v3562
  %v5936 = vpack.c.b16 %v3569, %v3566
  %v5937 = vpack.c.b16 %v3570, %v3567
  %v5938 = vpack.c.b16 %v3571, %v3568
  %v5939 = vpack.c.b16 %v3575, %v3572
  %v5940 = vpack.c.b16 %v3576, %v3573
  %v5941 = vpack.c.b16 %v3577, %v3574
  %v5942 = vpack.c.b16 %v3581, %v3578
  %v5943 = vpack.c.b16 %v3582, %v3579
  %v5944 = vpack.c.b16 %v3583, %v3580
  %v5945 = vpack.c.b16 %v3587, %v3584
  %v5946 = vpack.c.b16 %v3588, %v3585
  %v5947 = vpack.c.b16 %v3589, %v3586
  %v5948 = vpack.c.b16 %v3593, %v3590
  %v5949 = vpack.c.b16 %v3594, %v3591
  %v5950 = vpack.c.b16 %v3595, %v3592
  %v5951 = vpack.c.b16 %v3599, %v3596
  %v5952 = vpack.c.b16 %v3600, %v3597
  %v5953 = vpack.c.b16 %v3601, %v3598
  %v5954 = vpack.c.b16 %v3605, %v3602
  %v5955 = vpack.c.b16 %v3606, %v3603
  %v5956 = vpack.c.b16 %v3607, %v3604
  %v5957 = vpack.c.b16 %v3611, %v3608
  %v5958 = vpack.c.b16 %v3612, %v3609
  %v5959 = vpack.c.b16 %v3613, %v3610
  %v5960 = vpack.c.b16 %v3617, %v3614
  %v5961 = vpack.c.b16 %v3618, %v3615
  %v5962 = vpack.c.b16 %v3619, %v3616
  %v5963 = vpack.c.b16 %v3623, %v3620
  %v5964 = vpack.c.b16 %v3624, %v3621
  %v5965 = vpack.c.b16 %v3625, %v3622
  %v5966 = vpack.c.b16 %v3629, %v3626
  %v5967 = vpack.c.b16 %v3630, %v3627
  %v5968 = vpack.c.b16 %v3631, %v3628
  %v5969 = vpack.c.b16 %v3635, %v3632
  %v5970 = vpack.c.b16 %v3636, %v3633
  %v5971 = vpack.c.b16 %v3637, %v3634
  %v5972 = vpack.c.b16 %v3641, %v3638
  %v5973 = vpack.c.b16 %v3642, %v3639
  %v5974 = vpack.c.b16 %v3643, %v3640
  %v5975 = vpack.c.b16 %v3647, %v3644
  %v5976 = vpack.c.b16 %v3648, %v3645
  %v5977 = vpack.c.b16 %v3649, %v3646
  %v5978 = vpack.c.b16 %v3653, %v3650
  %v5979 = vpack.c.b16 %v3654, %v3651
  %v5980 = vpack.c.b16 %v3655, %v3652
  %v5981 = vpack.c.b16 %v3659, %v3656
  %v5982 = vpack.c.b16 %v3660, %v3657
  %v5983 = vpack.c.b16 %v3661, %v3658
  %v5984 = vpack.c.b16 %v3665, %v3662
  %v5985 = vpack.c.b16 %v3666, %v3663
  %v5986 = vpack.c.b16 %v3667, %v3664
  %v5987 = vpack.c.b16 %v3671, %v3668
  %v5988 = vpack.c.b16 %v3672, %v3669
  %v5989 = vpack.c.b16 %v3673, %v3670
  %v5990 = vpack.c.b16 %v3677, %v3674
  %v5991 = vpack.c.b16 %v3678, %v3675
  %v5992 = vpack.c.b16 %v3679, %v3676
  %v5993 = vpack.c.b16 %v3683, %v3680
  %v5994 = vpack.c.b16 %v3684, %v3681
  %v5995 = vpack.c.b16 %v3685, %v3682
  %v5996 = vpack.c.b16 %v3689, %v3686
  %v5997 = vpack.c.b16 %v3690, %v3687
  %v5998 = vpack.c.b16 %v3691, %v3688
  %v5999 = vpack.c.b16 %v3695, %v3692
  %v6000 = vpack.c.b16 %v3696, %v3693
  %v6001 = vpack.c.b16 %v3697, %v3694
  %v6002 = vpack.c.b16 %v3701, %v3698
  %v6003 = vpack.c.b16 %v3702, %v3699
  %v6004 = vpack.c.b16 %v3703, %v3700
  %v6005 = vpack.c.b16 %v3707, %v3704
  %v6006 = vpack.c.b16 %v3708, %v3705
  %v6007 = vpack.c.b16 %v3709, %v3706
  %v6008 = vpack.c.b16 %v3713, %v3710
  %v6009 = vpack.c.b16 %v3714, %v3711
  %v6010 = vpack.c.b16 %v3715, %v3712
  %v6011 = vpack.c.b16 %v3719, %v3716
  %v6012 = vpack.c.b16 %v3720, %v3717
  %v6013 = vpack.c.b16 %v3721, %v3718
  %v6014 = vpack.c.b16 %v3725, %v3722
  %v6015 = vpack.c.b16 %v3726, %v3723
  %v6016 = vpack.c.b16 %v3727, %v3724
  %v6017 = vpack.c.b16 %v3731, %v3728
  %v6018 = vpack.c.b16 %v3732, %v3729
  %v6019 = vpack.c.b16 %v3733, %v3730
  %v6020 = vpack.c.b16 %v3737, %v3734
  %v6021 = vpack.c.b16 %v3738, %v3735
  %v6022 = vpack.c.b16 %v3739, %v3736
  %v6023 = vpack.c.b16 %v3743, %v3740
  %v6024 = vpack.c.b16 %v3744, %v3741
  %v6025 = vpack.c.b16 %v3745, %v3742
  %v6026 = vpack.c.b16 %v3749, %v3746
  %v6027 = vpack.c.b16 %v3750, %v3747
  %v6028 = vpack.c.b16 %v3751, %v3748
  %v6029 = vpack.c.b16 %v3755, %v3752
  %v6030 = vpack.c.b16 %v3756, %v3753
  %v6031 = vpack.c.b16 %v3757, %v3754
  %v6032 = vpack.c.b16 %v3761, %v3758
  %v6033 = vpack.c.b16 %v3762, %v3759
  %v6034 = vpack.c.b16 %v3763, %v3760
  %v6035 = vpack.c.b16 %v3767, %v3764
  %v6036 = vpack.c.b16 %v3768, %v3765
  %v6037 = vpack.c.b16 %v3769, %v3766
  %v6038 = vpack.c.b16 %v3773, %v3770
  %v6039 = vpack.c.b16 %v3774, %v3771
  %v6040 = vpack.c.b16 %v3775, %v3772
  %v6041 = vpack.c.b16 %v3779, %v3776
  %v6042 = vpack.c.b16 %v3780, %v3777
  %v6043 = vpack.c.b16 %v3781, %v3778
  %v6044 = vpack.c.b16 %v3785, %v3782
  %v6045 = vpack.c.b16 %v3786, %v3783
  %v6046 = vpack.c.b16 %v3787, %v3784
  %v6047 = vpack.c.b16 %v3791, %v3788
  %v6048 = vpack.c.b16 %v3792, %v3789
  %v6049 = vpack.c.b16 %v3793, %v3790
  %v6050 = vpack.c.b16 %v3797, %v3794
  %v6051 = vpack.c.b16 %v3798, %v3795
  %v6052 = vpack.c.b16 %v3799, %v3796
  %v6053 = vpack.c.b16 %v3803, %v3800
  %v6054 = vpack.c.b16 %v3804, %v3801
  %v6055 = vpack.c.b16 %v3805, %v3802
  %v6056 = vpack.c.b16 %v3809, %v3806
  %v6057 = vpack.c.b16 %v3810, %v3807
  %v6058 = vpack.c.b16 %v3811, %v3808
  %v6059 = vpack.c.b16 %v3815, %v3812
  %v6060 = vpack.c.b16 %v3816, %v3813
  %v6061 = vpack.c.b16 %v3817, %v3814
  %v6062 = vpack.c.b16 %v3821, %v3818
  %v6063 = vpack.c.b16 %v3822, %v3819
  %v6064 = vpack.c.b16 %v3823, %v3820
  %v6065 = vpack.c.b16 %v3827, %v3824
  %v6066 = vpack.c.b16 %v3828, %v3825
  %v6067 = vpack.c.b16 %v3829, %v3826
  %v6068 = vpack.c.b16 %v3833, %v3830
  %v6069 = vpack.c.b16 %v3834, %v3831
  %v6070 = vpack.c.b16 %v3835, %v3832
  %v6071 = vpack.c.b16 %v3839, %v3836
  %v6072 = vpack.c.b16 %v3840, %v3837
  %v6073 = vpack.c.b16 %v3841, %v3838
  %v6074 = vpack.c.b16 %v3845, %v3842
  %v6075 = vpack.c.b16 %v3846, %v3843
  %v6076 = vpack.c.b16 %v3847, %v3844
  %v6077 = vpack.c.b16 %v3851, %v3848
  %v6078 = vpack.c.b16 %v3852, %v3849
  %v6079 = vpack.c.b16 %v3853, %v3850
  %v6080 = vpack.c.b16 %v3857, %v3854
  %v6081 = vpack.c.b16 %v3858, %v3855
  %v6082 = vpack.c.b16 %v3859, %v3856
  %v6083 = vpack.c.b16 %v3863, %v3860
  %v6084 = vpack.c.b16 %v3864, %v3861
  %v6085 = vpack.c.b16 %v3865, %v3862
  %v6086 = vpack.c.b16 %v3869, %v3866
  %v6087 = vpack.c.b16 %v3870, %v3867
  %v6088 = vpack.c.b16 %v3871, %v3868
  %v6089 = vpack.c.b16 %v3875, %v3872
  %v6090 = vpack.c.b16 %v3876, %v3873
  %v6091 = vpack.c.b16 %v3877, %v3874
  %v6092 = vpack.c.b16 %v3881, %v3878
  %v6093 = vpack.c.b16 %v3882, %v3879
  %v6094 = vpack.c.b16 %v3883, %v3880
  %v6095 = vpack.c.b16 %v3887, %v3884
  %v6096 = vpack.c.b16 %v3888, %v3885
  %v6097 = vpack.c.b16 %v3889, %v3886
  %v6098 = vpack.c.b16 %v3893, %v3890
  %v6099 = vpack.c.b16 %v3894, %v3891
  %v6100 = vpack.c.b16 %v3895, %v3892
  %v6101 = vpack.c.b16 %v3899, %v3896
  %v6102 = vpack.c.b16 %v3900, %v3897
  %v6103 = vpack.c.b16 %v3901, %v3898
  %v6104 = vpack.c.b16 %v3905, %v3902
  %v6105 = vpack.c.b16 %v3906, %v3903
  %v6106 = vpack.c.b16 %v3907, %v3904
  %v6107 = vpack.c.b16 %v3911, %v3908
  %v6108 = vpack.c.b16 %v3912, %v3909
  %v6109 = vpack.c.b16 %v3913, %v3910
  %v6110 = vpack.c.b16 %v3917, %v3914
  %v6111 = vpack.c.b16 %v3918, %v3915
  %v6112 = vpack.c.b16 %v3919, %v3916
  %v6113 = vpack.c.b16 %v3923, %v3920
  %v6114 = vpack.c.b16 %v3924, %v3921
  %v6115 = vpack.c.b16 %v3925, %v3922
  %v6116 = vpack.c.b16 %v3929, %v3926
  %v6117 = vpack.c.b16 %v3930, %v3927
  %v6118 = vpack.c.b16 %v3931, %v3928
  %v6119 = vpack.c.b16 %v3935, %v3932
  %v6120 = vpack.c.b16 %v3936, %v3933
  %v6121 = vpack.c.b16 %v3937, %v3934
  %v6122 = vpack.c.b16 %v3941, %v3938
  %v6123 = vpack.c.b16 %v3942, %v3939
  %v6124 = vpack.c.b16 %v3943, %v3940
  %v6125 = vpack.c.b16 %v3947, %v3944
  %v6126 = vpack.c.b16 %v3948, %v3945
  %v6127 = vpack.c.b16 %v3949, %v3946
  %v6128 = vpack.c.b16 %v3953, %v3950
  %v6129 = vpack.c.b16 %v3954, %v3951
  %v6130 = vpack.c.b16 %v3955, %v3952
  %v6131 = vpack.c.b16 %v3959, %v3956
  %v6132 = vpack.c.b16 %v3960, %v3957
  %v6133 = vpack.c.b16 %v3961, %v3958
  %v6134 = vpack.c.b16 %v3965, %v3962
  %v6135 = vpack.c.b16 %v3966, %v3963
  %v6136 = vpack.c.b16 %v3967, %v3964
  %v6137 = vpack.c.b16 %v3971, %v3968
  %v6138 = vpack.c.b16 %v3972, %v3969
  %v6139 = vpack.c.b16 %v3973, %v3970
  %v6140 = vpack.c.b16 %v3977, %v3974
  %v6141 = vpack.c.b16 %v3978, %v3975
  %v6142 = vpack.c.b16 %v3979, %v3976
  %v6143 = vpack.c.b16 %v3983, %v3980
  %v6144 = vpack.c.b16 %v3984, %v3981
  %v6145 = vpack.c.b16 %v3985, %v3982
  %v6146 = vpack.c.b16 %v3989, %v3986
  %v6147 = vpack.c.b16 %v3990, %v3987
  %v6148 = vpack.c.b16 %v3991, %v3988
  %v6149 = vpack.c.b16 %v3995, %v3992
  %v6150 = vpack.c.b16 %v3996, %v3993
  %v6151 = vpack.c.b16 %v3997, %v3994
  %v6152 = vpack.c.b16 %v4001, %v3998
  %v6153 = vpack.c.b16 %v4002, %v3999
  %v6154 = vpack.c.b16 %v4003, %v4000
  %v6155 = vpack.c.b16 %v4007, %v4004
  %v6156 = vpack.c.b16 %v4008, %v4005
  %v6157 = vpack.c.b16 %v4009, %v4006
  %v6158 = vpack.c.b16 %v4013, %v4010
  %v6159 = vpack.c.b16 %v4014, %v4011
  %v6160 = vpack.c.b16 %v4015, %v4012
  %v6161 = vpack.c.b16 %v4019, %v4016
  %v6162 = vpack.c.b16 %v4020, %v4017
  %v6163 = vpack.c.b16 %v4021, %v4018
  %v6164 = vpack.c.b16 %v4025, %v4022
  %v6165 = vpack.c.b16 %v4026, %v4023
  %v6166 = vpack.c.b16 %v4027, %v4024
  %v6167 = vpack.c.b16 %v4031, %v4028
  %v6168 = vpack.c.b16 %v4032, %v4029
  %v6169 = vpack.c.b16 %v4033, %v4030
  %v6170 = vpack.c.b16 %v4037, %v4034
  %v6171 = vpack.c.b16 %v4038, %v4035
  %v6172 = vpack.c.b16 %v4039, %v4036
  %v6173 = vpack.c.b16 %v4043, %v4040
  %v6174 = vpack.c.b16 %v4044, %v4041
  %v6175 = vpack.c.b16 %v4045, %v4042
  %v6176 = vpack.c.b16 %v4049, %v4046
  %v6177 = vpack.c.b16 %v4050, %v4047
  %v6178 = vpack.c.b16 %v4051, %v4048
  %v6179 = vpack.c.b16 %v4055, %v4052
  %v6180 = vpack.c.b16 %v4056, %v4053
  %v6181 = vpack.c.b16 %v4057, %v4054
  %v6182 = vpack.c.b16 %v4061, %v4058
  %v6183 = vpack.c.b16 %v4062, %v4059
  %v6184 = vpack.c.b16 %v4063, %v4060
  %v6185 = vpack.c.b16 %v4067, %v4064
  %v6186 = vpack.c.b16 %v4068, %v4065
  %v6187 = vpack.c.b16 %v4069, %v4066
  %v6188 = vpack.c.b16 %v4073, %v4070
  %v6189 = vpack.c.b16 %v4074, %v4071
  %v6190 = vpack.c.b16 %v4075, %v4072
  %v6191 = vpack.c.b16 %v4079, %v4076
  %v6192 = vpack.c.b16 %v4080, %v4077
  %v6193 = vpack.c.b16 %v4081, %v4078
  %v6194 = vpack.c.b16 %v4085, %v4082
  %v6195 = vpack.c.b16 %v4086, %v4083
  %v6196 = vpack.c.b16 %v4087, %v4084
  %v6197 = vpack.c.b16 %v4091, %v4088
  %v6198 = vpack.c.b16 %v4092, %v4089
  %v6199 = vpack.c.b16 %v4093, %v4090
  %v6200 = vpack.c.b16 %v4097, %v4094
  %v6201 = vpack.c.b16 %v4098, %v4095
  %v6202 = vpack.c.b16 %v4099, %v4096
  %v6203 = vpack.c.b16 %v4103, %v4100
  %v6204 = vpack.c.b16 %v4104, %v4101
  %v6205 = vpack.c.b16 %v4105, %v4102
  %v6206 = vpack.c.b16 %v4109, %v4106
  %v6207 = vpack.c.b16 %v4110, %v4107
  %v6208 = vpack.c.b16 %v4111, %v4108
  %v6209 = vpack.c.b16 %v4115, %v4112
  %v6210 = vpack.c.b16 %v4116, %v4113
  %v6211 = vpack.c.b16 %v4117, %v4114
  %v6212 = vpack.c.b16 %v4121, %v4118
  %v6213 = vpack.c.b16 %v4122, %v4119
  %v6214 = vpack.c.b16 %v4123, %v4120
  %v6215 = vpack.c.b16 %v4127, %v4124
  %v6216 = vpack.c.b16 %v4128, %v4125
  %v6217 = vpack.c.b16 %v4129, %v4126
  %v6218 = vpack.c.b16 %v4133, %v4130
  %v6219 = vpack.c.b16 %v4134, %v4131
  %v6220 = vpack.c.b16 %v4135, %v4132
  %v6221 = vpack.c.b16 %v4139, %v4136
  %v6222 = vpack.c.b16 %v4140, %v4137
  %v6223 = vpack.c.b16 %v4141, %v4138
  %v6224 = vpack.c.b16 %v4145, %v4142
  %v6225 = vpack.c.b16 %v4146, %v4143
  %v6226 = vpack.c.b16 %v4147, %v4144
  %v6227 = vpack.c.b16 %v4151, %v4148
  %v6228 = vpack.c.b16 %v4152, %v4149
  %v6229 = vpack.c.b16 %v4153, %v4150
  %v6230 = vpack.c.b16 %v4157, %v4154
  %v6231 = vpack.c.b16 %v4158, %v4155
  %v6232 = vpack.c.b16 %v4159, %v4156
  %v6233 = vpack.c.b16 %v4163, %v4160
  %v6234 = vpack.c.b16 %v4164, %v4161
  %v6235 = vpack.c.b16 %v4165, %v4162
  %v6236 = vpack.c.b16 %v4169, %v4166
  %v6237 = vpack.c.b16 %v4170, %v4167
  %v6238 = vpack.c.b16 %v4171, %v4168
  %v6239 = vpack.c.b16 %v4175, %v4172
  %v6240 = vpack.c.b16 %v4176, %v4173
  %v6241 = vpack.c.b16 %v4177, %v4174
  %v6242 = vpack.c.b16 %v4181, %v4178
  %v6243 = vpack.c.b16 %v4182, %v4179
  %v6244 = vpack.c.b16 %v4183, %v4180
  %v6245 = vpack.c.b16 %v4187, %v4184
  %v6246 = vpack.c.b16 %v4188, %v4185
  %v6247 = vpack.c.b16 %v4189, %v4186
  %v6248 = vpack.c.b16 %v4193, %v4190
  %v6249 = vpack.c.b16 %v4194, %v4191
  %v6250 = vpack.c.b16 %v4195, %v4192
  %v6251 = vpack.c.b16 %v4199, %v4196
  %v6252 = vpack.c.b16 %v4200, %v4197
  %v6253 = vpack.c.b16 %v4201, %v4198
  %v6254 = vpack.c.b16 %v4205, %v4202
  %v6255 = vpack.c.b16 %v4206, %v4203
  %v6256 = vpack.c.b16 %v4207, %v4204
  %v6257 = vpack.c.b16 %v4211, %v4208
  %v6258 = vpack.c.b16 %v4212, %v4209
  %v6259 = vpack.c.b16 %v4213, %v4210
  %v6260 = vpack.c.b16 %v4217, %v4214
  %v6261 = vpack.c.b16 %v4218, %v4215
  %v6262 = vpack.c.b16 %v4219, %v4216
  %v6263 = vpack.c.b16 %v4223, %v4220
  %v6264 = vpack.c.b16 %v4224, %v4221
  %v6265 = vpack.c.b16 %v4225, %v4222
  %v6266 = vpack.c.b16 %v4229, %v4226
  %v6267 = vpack.c.b16 %v4230, %v4227
  %v6268 = vpack.c.b16 %v4231, %v4228
  %v6269 = vpack.c.b16 %v4235, %v4232
  %v6270 = vpack.c.b16 %v4236, %v4233
  %v6271 = vpack.c.b16 %v4237, %v4234
  %v6272 = vpack.c.b16 %v4241, %v4238
  %v6273 = vpack.c.b16 %v4242, %v4239
  %v6274 = vpack.c.b16 %v4243, %v4240
  %v6275 = vpack.c.b16 %v4247, %v4244
  %v6276 = vpack.c.b16 %v4248, %v4245
  %v6277 = vpack.c.b16 %v4249, %v4246
  %v6278 = vpack.c.b16 %v4253, %v4250
  %v6279 = vpack.c.b16 %v4254, %v4251
  %v6280 = vpack.c.b16 %v4255, %v4252
  %v6281 = vpack.c.b16 %v4259, %v4256
  %v6282 = vpack.c.b16 %v4260, %v4257
  %v6283 = vpack.c.b16 %v4261, %v4258
  %v6284 = vpack.c.b16 %v4265, %v4262
  %v6285 = vpack.c.b16 %v4266, %v4263
  %v6286 = vpack.c.b16 %v4267, %v4264
  %v6287 = vpack.c.b16 %v4271, %v4268
  %v6288 = vpack.c.b16 %v4272, %v4269
  %v6289 = vpack.c.b16 %v4273, %v4270
  %v6290 = vpack.c.b16 %v4277, %v4274
  %v6291 = vpack.c.b16 %v4278, %v4275
  %v6292 = vpack.c.b16 %v4279, %v4276
  %v6293 = vpack.c.b16 %v4283, %v4280
  %v6294 = vpack.c.b16 %v4284, %v4281
  %v6295 = vpack.c.b16 %v4285, %v4282
  %v6296 = vpack.c.b16 %v4289, %v4286
  %v6297 = vpack.c.b16 %v4290, %v4287
  %v6298 = vpack.c.b16 %v4291, %v4288
  %v6299 = vpack.c.b16 %v4295, %v4292
  %v6300 = vpack.c.b16 %v4296, %v4293
  %v6301 = vpack.c.b16 %v4297, %v4294
  %v6302 = vpack.c.b16 %v4301, %v4298
  %v6303 = vpack.c.b16 %v4302, %v4299
  %v6304 = vpack.c.b16 %v4303, %v4300
  %v6305 = vpack.c.b16 %v4307, %v4304
  %v6306 = vpack.c.b16 %v4308, %v4305
  %v6307 = vpack.c.b16 %v4309, %v4306
  %v6308 = vpack.c.b16 %v4313, %v4310
  %v6309 = vpack.c.b16 %v4314, %v4311
  %v6310 = vpack.c.b16 %v4315, %v4312
  %v6311 = vpack.c.b16 %v4319, %v4316
  %v6312 = vpack.c.b16 %v4320, %v4317
  %v6313 = vpack.c.b16 %v4321, %v4318
  %v6314 = vpack.c.b16 %v4325, %v4322
  %v6315 = vpack.c.b16 %v4326, %v4323
  %v6316 = vpack.c.b16 %v4327, %v4324
  %v6317 = vpack.c.b16 %v4331, %v4328
  %v6318 = vpack.c.b16 %v4332, %v4329
  %v6319 = vpack.c.b16 %v4333, %v4330
  %v6320 = vpack.c.b16 %v4337, %v4334
  %v6321 = vpack.c.b16 %v4338, %v4335
  %v6322 = vpack.c.b16 %v4339, %v4336
  %v6323 = vpack.c.b16 %v4343, %v4340
  %v6324 = vpack.c.b16 %v4344, %v4341
  %v6325 = vpack.c.b16 %v4345, %v4342
  %v6326 = vpack.c.b16 %v4349, %v4346
  %v6327 = vpack.c.b16 %v4350, %v4347
  %v6328 = vpack.c.b16 %v4351, %v4348
  %v6329 = vpack.c.b16 %v4355, %v4352
  %v6330 = vpack.c.b16 %v4356, %v4353
  %v6331 = vpack.c.b16 %v4357, %v4354
  %v6332 = vpack.c.b16 %v4361, %v4358
  %v6333 = vpack.c.b16 %v4362, %v4359
  %v6334 = vpack.c.b16 %v4363, %v4360
  %v6335 = vpack.c.b16 %v4367, %v4364
  %v6336 = vpack.c.b16 %v4368, %v4365
  %v6337 = vpack.c.b16 %v4369, %v4366
  %v6338 = vpack.c.b16 %v4373, %v4370
  %v6339 = vpack.c.b16 %v4374, %v4371
  %v6340 = vpack.c.b16 %v4375, %v4372
  %v6341 = vpack.c.b16 %v4379, %v4376
  %v6342 = vpack.c.b16 %v4380, %v4377
  %v6343 = vpack.c.b16 %v4381, %v4378
  %v6344 = vpack.c.b16 %v4385, %v4382
  %v6345 = vpack.c.b16 %v4386, %v4383
  %v6346 = vpack.c.b16 %v4387, %v4384
  %v6347 = vpack.c.b16 %v4391, %v4388
  %v6348 = vpack.c.b16 %v4392, %v4389
  %v6349 = vpack.c.b16 %v4393, %v4390
  %v6350 = vpack.c.b16 %v4397, %v4394
  %v6351 = vpack.c.b16 %v4398, %v4395
  %v6352 = vpack.c.b16 %v4399, %v4396
  %v6353 = vpack.c.b16 %v4403, %v4400
  %v6354 = vpack.c.b16 %v4404, %v4401
  %v6355 = vpack.c.b16 %v4405, %v4402
  %v6356 = vpack.c.b16 %v4409, %v4406
  %v6357 = vpack.c.b16 %v4410, %v4407
  %v6358 = vpack.c.b16 %v4411, %v4408
  %v6359 = vpack.c.b16 %v4415, %v4412
  %v6360 = vpack.c.b16 %v4416, %v4413
  %v6361 = vpack.c.b16 %v4417, %v4414
  %v6362 = vpack.c.b16 %v4421, %v4418
  %v6363 = vpack.c.b16 %v4422, %v4419
  %v6364 = vpack.c.b16 %v4423, %v4420
  %v6365 = vpack.c.b16 %v4427, %v4424
  %v6366 = vpack.c.b16 %v4428, %v4425
  %v6367 = vpack.c.b16 %v4429, %v4426
  %v6368 = vpack.c.b16 %v4433, %v4430
  %v6369 = vpack.c.b16 %v4434, %v4431
  %v6370 = vpack.c.b16 %v4435, %v4432
  %v6371 = vpack.c.b16 %v4439, %v4436
  %v6372 = vpack.c.b16 %v4440, %v4437
  %v6373 = vpack.c.b16 %v4441, %v4438
  %v6374 = vpack.c.b16 %v4445, %v4442
  %v6375 = vpack.c.b16 %v4446, %v4443
  %v6376 = vpack.c.b16 %v4447, %v4444
  %v6377 = vpack.c.b16 %v4451, %v4448
  %v6378 = vpack.c.b16 %v4452, %v4449
  %v6379 = vpack.c.b16 %v4453, %v4450
  %v6380 = vpack.c.b16 %v4457, %v4454
  %v6381 = vpack.c.b16 %v4458, %v4455
  %v6382 = vpack.c.b16 %v4459, %v4456
  %v6383 = vpack.c.b16 %v4463, %v4460
  %v6384 = vpack.c.b16 %v4464, %v4461
  %v6385 = vpack.c.b16 %v4465, %v4462
  %v6386 = vpack.c.b16 %v4469, %v4466
  %v6387 = vpack.c.b16 %v4470, %v4467
  %v6388 = vpack.c.b16 %v4471, %v4468
  %v6389 = vpack.c.b16 %v4475, %v4472
  %v6390 = vpack.c.b16 %v4476, %v4473
  %v6391 = vpack.c.b16 %v4477, %v4474
  %v6392 = vpack.c.b16 %v4481, %v4478
  %v6393 = vpack.c.b16 %v4482, %v4479
  %v6394 = vpack.c.b16 %v4483, %v4480
  %v6395 = vpack.c.b16 %v4487, %v4484
  %v6396 = vpack.c.b16 %v4488, %v4485
  %v6397 = vpack.c.b16 %v4489, %v4486
  %v6398 = vpack.c.b16 %v4493, %v4490
  %v6399 = vpack.c.b16 %v4494, %v4491
  %v6400 = vpack.c.b16 %v4495, %v4492
  %v6401 = vpack.c.b16 %v4499, %v4496
  %v6402 = vpack.c.b16 %v4500, %v4497
  %v6403 = vpack.c.b16 %v4501, %v4498
  %v6404 = vpack.c.b16 %v4505, %v4502
  %v6405 = vpack.c.b16 %v4506, %v4503
  %v6406 = vpack.c.b16 %v4507, %v4504
  %v6407 = vpack.c.b16 %v4511, %v4508
  %v6408 = vpack.c.b16 %v4512, %v4509
  %v6409 = vpack.c.b16 %v4513, %v4510
  %v6410 = vpack.c.b16 %v4517, %v4514
  %v6411 = vpack.c.b16 %v4518, %v4515
  %v6412 = vpack.c.b16 %v4519, %v4516
  %v6413 = vpack.c.b16 %v4523, %v4520
  %v6414 = vpack.c.b16 %v4524, %v4521
  %v6415 = vpack.c.b16 %v4525, %v4522
  %v6416 = vpack.c.b16 %v4529, %v4526
  %v6417 = vpack.c.b16 %v4530, %v4527
  %v6418 = vpack.c.b16 %v4531, %v4528
  %v6419 = vpack.c.b16 %v4535, %v4532
  %v6420 = vpack.c.b16 %v4536, %v4533
  %v6421 = vpack.c.b16 %v4537, %v4534
  %v6422 = vpack.c.b16 %v4541, %v4538
  %v6423 = vpack.c.b16 %v4542, %v4539
  %v6424 = vpack.c.b16 %v4543, %v4540
  %v6425 = vpack.c.b16 %v4547, %v4544
  %v6426 = vpack.c.b16 %v4548, %v4545
  %v6427 = vpack.c.b16 %v4549, %v4546
  %v6428 = vpack.c.b16 %v4553, %v4550
  %v6429 = vpack.c.b16 %v4554, %v4551
  %v6430 = vpack.c.b16 %v4555, %v4552
  %v6431 = vpack.c.b16 %v4559, %v4556
  %v6432 = vpack.c.b16 %v4560, %v4557
  %v6433 = vpack.c.b16 %v4561, %v4558
  %v6434 = vpack.c.b16 %v4565, %v4562
  %v6435 = vpack.c.b16 %v4566, %v4563
  %v6436 = vpack.c.b16 %v4567, %v4564
  %v6437 = vpack.c.b16 %v4571, %v4568
  %v6438 = vpack.c.b16 %v4572, %v4569
  %v6439 = vpack.c.b16 %v4573, %v4570
  %v6440 = vpack.c.b16 %v4577, %v4574
  %v6441 = vpack.c.b16 %v4578, %v4575
  %v6442 = vpack.c.b16 %v4579, %v4576
  %v6443 = vpack.c.b16 %v4583, %v4580
  %v6444 = vpack.c.b16 %v4584, %v4581
  %v6445 = vpack.c.b16 %v4585, %v4582
  %v6446 = vpack.c.b16 %v4589, %v4586
  %v6447 = vpack.c.b16 %v4590, %v4587
  %v6448 = vpack.c.b16 %v4591, %v4588
  %v6449 = vpack.c.b16 %v4595, %v4592
  %v6450 = vpack.c.b16 %v4596, %v4593
  %v6451 = vpack.c.b16 %v4597, %v4594
  %v6452 = vpack.c.b16 %v4601, %v4598
  %v6453 = vpack.c.b16 %v4602, %v4599
  %v6454 = vpack.c.b16 %v4603, %v4600
  %v6455 = vpack.c.b16 %v4607, %v4604
  %v6456 = vpack.c.b16 %v4608, %v4605
  %v6457 = vpack.c.b16 %v4609, %v4606
  %v6458 = vpack.c.b16 %v4613, %v4610
  %v6459 = vpack.c.b16 %v4614, %v4611
  %v6460 = vpack.c.b16 %v4615, %v4612
  %v6461 = vpack.c.b16 %v4619, %v4616
  %v6462 = vpack.c.b16 %v4620, %v4617
  %v6463 = vpack.c.b16 %v4621, %v4618
  %v6464 = vpack.c.b16 %v4625, %v4622
  %v6465 = vpack.c.b16 %v4626, %v4623
  %v6466 = vpack.c.b16 %v4627, %v4624
  %v6467 = vpack.c.b16 %v4631, %v4628
  %v6468 = vpack.c.b16 %v4632, %v4629
  %v6469 = vpack.c.b16 %v4633, %v4630
  %v6470 = vpack.c.b16 %v4637, %v4634
  %v6471 = vpack.c.b16 %v4638, %v4635
  %v6472 = vpack.c.b16 %v4639, %v4636
  %v6473 = vpack.c.b16 %v4643, %v4640
  %v6474 = vpack.c.b16 %v4644, %v4641
  %v6475 = vpack.c.b16 %v4645, %v4642
  %v6476 = vpack.c.b16 %v4649, %v4646
  %v6477 = vpack.c.b16 %v4650, %v4647
  %v6478 = vpack.c.b16 %v4651, %v4648
  %v6479 = vpack.c.b16 %v4655, %v4652
  %v6480 = vpack.c.b16 %v4656, %v4653
  %v6481 = vpack.c.b16 %v4657, %v4654
  %v6482 = vpack.c.b16 %v4661, %v4658
  %v6483 = vpack.c.b16 %v4662, %v4659
  %v6484 = vpack.c.b16 %v4663, %v4660
  %v6485 = vpack.c.b16 %v4667, %v4664
  %v6486 = vpack.c.b16 %v4668, %v4665
  %v6487 = vpack.c.b16 %v4669, %v4666
  %v6488 = vpack.c.b16 %v4673, %v4670
  %v6489 = vpack.c.b16 %v4674, %v4671
  %v6490 = vpack.c.b16 %v4675, %v4672
  %v6491 = vpack.c.b16 %v4679, %v4676
  %v6492 = vpack.c.b16 %v4680, %v4677
  %v6493 = vpack.c.b16 %v4681, %v4678
  %v6494 = vpack.c.b16 %v4685, %v4682
  %v6495 = vpack.c.b16 %v4686, %v4683
  %v6496 = vpack.c.b16 %v4687, %v4684
  %v6497 = vpack.c.b16 %v4691, %v4688
  %v6498 = vpack.c.b16 %v4692, %v4689
  %v6499 = vpack.c.b16 %v4693, %v4690
  %v6500 = vpack.c.b16 %v4697, %v4694
  %v6501 = vpack.c.b16 %v4698, %v4695
  %v6502 = vpack.c.b16 %v4699, %v4696
  %v6503 = vpack.c.b16 %v4703, %v4700
  %v6504 = vpack.c.b16 %v4704, %v4701
  %v6505 = vpack.c.b16 %v4705, %v4702
  %v6506 = vpack.c.b16 %v4709, %v4706
  %v6507 = vpack.c.b16 %v4710, %v4707
  %v6508 = vpack.c.b16 %v4711, %v4708
  %v6509 = vpack.c.b16 %v4715, %v4712
  %v6510 = vpack.c.b16 %v4716, %v4713
  %v6511 = vpack.c.b16 %v4717, %v4714
  %v6512 = vpack.c.b16 %v4721, %v4718
  %v6513 = vpack.c.b16 %v4722, %v4719
  %v6514 = vpack.c.b16 %v4723, %v4720
  %v6515 = vpack.c.b16 %v4727, %v4724
  %v6516 = vpack.c.b16 %v4728, %v4725
  %v6517 = vpack.c.b16 %v4729, %v4726
  %v6518 = vpack.c.b16 %v4733, %v4730
  %v6519 = vpack.c.b16 %v4734, %v4731
  %v6520 = vpack.c.b16 %v4735, %v4732
  %v6521 = vpack.c.b16 %v4739, %v4736
  %v6522 = vpack.c.b16 %v4740, %v4737
  %v6523 = vpack.c.b16 %v4741, %v4738
  %v6524 = vpack.c.b16 %v4745, %v4742
  %v6525 = vpack.c.b16 %v4746, %v4743
  %v6526 = vpack.c.b16 %v4747, %v4744
  %v6527 = vpack.c.b16 %v4751, %v4748
  %v6528 = vpack.c.b16 %v4752, %v4749
  %v6529 = vpack.c.b16 %v4753, %v4750
  %v6530 = vpack.c.b16 %v4757, %v4754
  %v6531 = vpack.c.b16 %v4758, %v4755
  %v6532 = vpack.c.b16 %v4759, %v4756
  %v6533 = vpack.c.b16 %v4763, %v4760
  %v6534 = vpack.c.b16 %v4764, %v4761
  %v6535 = vpack.c.b16 %v4765, %v4762
  %v6536 = vpack.c.b16 %v4769, %v4766
  %v6537 = vpack.c.b16 %v4770, %v4767
  %v6538 = vpack.c.b16 %v4771, %v4768
  %v6539 = vpack.c.b16 %v4775, %v4772
  %v6540 = vpack.c.b16 %v4776, %v4773
  %v6541 = vpack.c.b16 %v4777, %v4774
  %v6542 = vpack.c.b16 %v4781, %v4778
  %v6543 = vpack.c.b16 %v4782, %v4779
  %v6544 = vpack.c.b16 %v4783, %v4780
  %v6545 = vpack.c.b16 %v4787, %v4784
  %v6546 = vpack.c.b16 %v4788, %v4785
  %v6547 = vpack.c.b16 %v4789, %v4786
  %v6548 = vpack.c.b16 %v4793, %v4790
  %v6549 = vpack.c.b16 %v4794, %v4791
  %v6550 = vpack.c.b16 %v4795, %v4792
  %v6551 = vpack.c.b16 %v4799, %v4796
  %v6552 = vpack.c.b16 %v4800, %v4797
  %v6553 = vpack.c.b16 %v4801, %v4798
  %v6554 = vpack.c.b16 %v4805, %v4802
  %v6555 = vpack.c.b16 %v4806, %v4803
  %v6556 = vpack.c.b16 %v4807, %v4804
  %v6557 = vpack.c.b16 %v4811, %v4808
  %v6558 = vpack.c.b16 %v4812, %v4809
  %v6559 = vpack.c.b16 %v4813, %v4810
  %v6560 = vpack.c.b16 %v4817, %v4814
  %v6561 = vpack.c.b16 %v4818, %v4815
  %v6562 = vpack.c.b16 %v4819, %v4816
  %v6563 = vpack.c.b16 %v4823, %v4820
  %v6564 = vpack.c.b16 %v4824, %v4821
  %v6565 = vpack.c.b16 %v4825, %v4822
  %v6566 = vpack.c.b16 %v4829, %v4826
  %v6567 = vpack.c.b16 %v4830, %v4827
  %v6568 = vpack.c.b16 %v4831, %v4828
  %v6569 = vpack.c.b16 %v4835, %v4832
  %v6570 = vpack.c.b16 %v4836, %v4833
  %v6571 = vpack.c.b16 %v4837, %v4834
  %v6572 = vpack.c.b16 %v4841, %v4838
  %v6573 = vpack.c.b16 %v4842, %v4839
  %v6574 = vpack.c.b16 %v4843, %v4840
  %v6575 = vpack.c.b16 %v4847, %v4844
  %v6576 = vpack.c.b16 %v4848, %v4845
  %v6577 = vpack.c.b16 %v4849, %v4846
  %v6578 = vpack.c.b16 %v4853, %v4850
  %v6579 = vpack.c.b16 %v4854, %v4851
  %v6580 = vpack.c.b16 %v4855, %v4852
  %v6581 = vpack.c.b16 %v4859, %v4856
  %v6582 = vpack.c.b16 %v4860, %v4857
  %v6583 = vpack.c.b16 %v4861, %v4858
  %v6584 = vpack.c.b16 %v4865, %v4862
  %v6585 = vpack.c.b16 %v4866, %v4863
  %v6586 = vpack.c.b16 %v4867, %v4864
  %v6587 = vpack.c.b16 %v4871, %v4868
  %v6588 = vpack.c.b16 %v4872, %v4869
  %v6589 = vpack.c.b16 %v4873, %v4870
  %v6590 = vpack.c.b16 %v4877, %v4874
  %v6591 = vpack.c.b16 %v4878, %v4875
  %v6592 = vpack.c.b16 %v4879, %v4876
  %v6593 = vpack.c.b16 %v4883, %v4880
  %v6594 = vpack.c.b16 %v4884, %v4881
  %v6595 = vpack.c.b16 %v4885, %v4882
  %v6596 = vpack.c.b16 %v4889, %v4886
  %v6597 = vpack.c.b16 %v4890, %v4887
  %v6598 = vpack.c.b16 %v4891, %v4888
  %v6599 = vpack.c.b16 %v4895, %v4892
  %v6600 = vpack.c.b16 %v4896, %v4893
  %v6601 = vpack.c.b16 %v4897, %v4894
  %v6602 = vpack.c.b16 %v4901, %v4898
  %v6603 = vpack.c.b16 %v4902, %v4899
  %v6604 = vpack.c.b16 %v4903, %v4900
  %v6605 = vpack.c.b16 %v4907, %v4904
  %v6606 = vpack.c.b16 %v4908, %v4905
  %v6607 = vpack.c.b16 %v4909, %v4906
  %v6608 = vpack.c.b16 %v4913, %v4910
  %v6609 = vpack.c.b16 %v4914, %v4911
  %v6610 = vpack.c.b16 %v4915, %v4912
  %v6611 = vpack.c.b16 %v4919, %v4916
  %v6612 = vpack.c.b16 %v4920, %v4917
  %v6613 = vpack.c.b16 %v4921, %v4918
  %v6614 = vpack.c.b16 %v4925, %v4922
  %v6615 = vpack.c.b16 %v4926, %v4923
  %v6616 = vpack.c.b16 %v4927, %v4924
  %v6617 = vpack.c.b16 %v4931, %v4928
  %v6618 = vpack.c.b16 %v4932, %v4929
  %v6619 = vpack.c.b16 %v4933, %v4930
  %v6620 = vpack.c.b16 %v4937, %v4934
  %v6621 = vpack.c.b16 %v4938, %v4935
  %v6622 = vpack.c.b16 %v4939, %v4936
  %v6623 = vpack.c.b16 %v4943, %v4940
  %v6624 = vpack.c.b16 %v4944, %v4941
  %v6625 = vpack.c.b16 %v4945, %v4942
  %v6626 = vpack.c.b16 %v4949, %v4946
  %v6627 = vpack.c.b16 %v4950, %v4947
  %v6628 = vpack.c.b16 %v4951, %v4948
  %v6629 = vpack.c.b16 %v4955, %v4952
  %v6630 = vpack.c.b16 %v4956, %v4953
  %v6631 = vpack.c.b16 %v4957, %v4954
  %v6632 = vpack.c.b16 %v4961, %v4958
  %v6633 = vpack.c.b16 %v4962, %v4959
  %v6634 = vpack.c.b16 %v4963, %v4960
  %v6635 = vpack.c.b16 %v4967, %v4964
  %v6636 = vpack.c.b16 %v4968, %v4965
  %v6637 = vpack.c.b16 %v4969, %v4966
  %v6638 = vpack.c.b16 %v4973, %v4970
  %v6639 = vpack.c.b16 %v4974, %v4971
  %v6640 = vpack.c.b16 %v4975, %v4972
  %v6641 = vpack.c.b16 %v4979, %v4976
  %v6642 = vpack.c.b16 %v4980, %v4977
  %v6643 = vpack.c.b16 %v4981, %v4978
  %v6644 = vpack.c.b16 %v4985, %v4982
  %v6645 = vpack.c.b16 %v4986, %v4983
  %v6646 = vpack.c.b16 %v4987, %v4984
  %v6647 = vpack.c.b16 %v4991, %v4988
  %v6648 = vpack.c.b16 %v4992, %v4989
  %v6649 = vpack.c.b16 %v4993, %v4990
  %v6650 = vpack.c.b16 %v4997, %v4994
  %v6651 = vpack.c.b16 %v4998, %v4995
  %v6652 = vpack.c.b16 %v4999, %v4996
  %v6653 = vpack.c.b16 %v5003, %v5000
  %v6654 = vpack.c.b16 %v5004, %v5001
  %v6655 = vpack.c.b16 %v5005, %v5002
  %v6656 = vpack.c.b16 %v5009, %v5006
  %v6657 = vpack.c.b16 %v5010, %v5007
  %v6658 = vpack.c.b16 %v5011, %v5008
  %v6659 = vpack.c.b16 %v5015, %v5012
  %v6660 = vpack.c.b16 %v5016, %v5013
  %v6661 = vpack.c.b16 %v5017, %v5014
  %v6662 = vpack.c.b16 %v5021, %v5018
  %v6663 = vpack.c.b16 %v5022, %v5019
  %v6664 = vpack.c.b16 %v5023, %v5020
  %v6665 = vpack.c.b16 %v5027, %v5024
  %v6666 = vpack.c.b16 %v5028, %v5025
  %v6667 = vpack.c.b16 %v5029, %v5026
  %v6668 = vpack.c.b16 %v5033, %v5030
  %v6669 = vpack.c.b16 %v5034, %v5031
  %v6670 = vpack.c.b16 %v5035, %v5032
  %v6671 = vpack.c.b16 %v5039, %v5036
  %v6672 = vpack.c.b16 %v5040, %v5037
  %v6673 = vpack.c.b16 %v5041, %v5038
  %v6674 = vpack.c.b16 %v5045, %v5042
  %v6675 = vpack.c.b16 %v5046, %v5043
  %v6676 = vpack.c.b16 %v5047, %v5044
  %v6677 = vpack.c.b16 %v5051, %v5048
  %v6678 = vpack.c.b16 %v5052, %v5049
  %v6679 = vpack.c.b16 %v5053, %v5050
  %v6680 = vpack.c.b16 %v5057, %v5054
  %v6681 = vpack.c.b16 %v5058, %v5055
  %v6682 = vpack.c.b16 %v5059, %v5056
  %v6683 = vpack.c.b16 %v5063, %v5060
  %v6684 = vpack.c.b16 %v5064, %v5061
  %v6685 = vpack.c.b16 %v5065, %v5062
  %v6686 = vpack.c.b16 %v5069, %v5066
  %v6687 = vpack.c.b16 %v5070, %v5067
  %v6688 = vpack.c.b16 %v5071, %v5068
  %v6689 = vpack.c.b16 %v5075, %v5072
  %v6690 = vpack.c.b16 %v5076, %v5073
  %v6691 = vpack.c.b16 %v5077, %v5074
  %v6692 = vpack.c.b16 %v5081, %v5078
  %v6693 = vpack.c.b16 %v5082, %v5079
  %v6694 = vpack.c.b16 %v5083, %v5080
  %v6695 = vpack.c.b16 %v5087, %v5084
  %v6696 = vpack.c.b16 %v5088, %v5085
  %v6697 = vpack.c.b16 %v5089, %v5086
  %v6698 = vpack.c.b16 %v5093, %v5090
  %v6699 = vpack.c.b16 %v5094, %v5091
  %v6700 = vpack.c.b16 %v5095, %v5092
  %v6701 = vpack.c.b16 %v5099, %v5096
  %v6702 = vpack.c.b16 %v5100, %v5097
  %v6703 = vpack.c.b16 %v5101, %v5098
  %v6704 = vpack.c.b16 %v5105, %v5102
  %v6705 = vpack.c.b16 %v5106, %v5103
  %v6706 = vpack.c.b16 %v5107, %v5104
  %v6707 = vpack.c.b16 %v5111, %v5108
  %v6708 = vpack.c.b16 %v5112, %v5109
  %v6709 = vpack.c.b16 %v5113, %v5110
  %v6710 = vpack.c.b16 %v5117, %v5114
  %v6711 = vpack.c.b16 %v5118, %v5115
  %v6712 = vpack.c.b16 %v5119, %v5116
  %v6713 = vpack.c.b16 %v5123, %v5120
  %v6714 = vpack.c.b16 %v5124, %v5121
  %v6715 = vpack.c.b16 %v5125, %v5122
  %v6716 = vpack.c.b16 %v5129, %v5126
  %v6717 = vpack.c.b16 %v5130, %v5127
  %v6718 = vpack.c.b16 %v5131, %v5128
  %v6719 = vpack.c.b16 %v5135, %v5132
  %v6720 = vpack.c.b16 %v5136, %v5133
  %v6721 = vpack.c.b16 %v5137, %v5134
  %v6722 = vpack.c.b16 %v5141, %v5138
  %v6723 = vpack.c.b16 %v5142, %v5139
  %v6724 = vpack.c.b16 %v5143, %v5140
  %v6725 = vpack.c.b16 %v5147, %v5144
  %v6726 = vpack.c.b16 %v5148, %v5145
  %v6727 = vpack.c.b16 %v5149, %v5146
  %v6728 = vpack.c.b16 %v5153, %v5150
  %v6729 = vpack.c.b16 %v5154, %v5151
  %v6730 = vpack.c.b16 %v5155, %v5152
  %v6731 = vpack.c.b16 %v5159, %v5156
  %v6732 = vpack.c.b16 %v5160, %v5157
  %v6733 = vpack.c.b16 %v5161, %v5158
  %v6734 = vpack.c.b16 %v5165, %v5162
  %v6735 = vpack.c.b16 %v5166, %v5163
  %v6736 = vpack.c.b16 %v5167, %v5164
  %v6737 = vpack.c.b16 %v5171, %v5168
  %v6738 = vpack.c.b16 %v5172, %v5169
  %v6739 = vpack.c.b16 %v5173, %v5170
  %v6740 = vpack.c.b16 %v5177, %v5174
  %v6741 = vpack.c.b16 %v5178, %v5175
  %v6742 = vpack.c.b16 %v5179, %v5176
  %v6743 = vpack.c.b16 %v5183, %v5180
  %v6744 = vpack.c.b16 %v5184, %v5181
  %v6745 = vpack.c.b16 %v5185, %v5182
  %v6746 = vpack.c.b16 %v5189, %v5186
  %v6747 = vpack.c.b16 %v5190, %v5187
  %v6748 = vpack.c.b16 %v5191, %v5188
  %v6749 = vpack.c.b16 %v5195, %v5192
  %v6750 = vpack.c.b16 %v5196, %v5193
  %v6751 = vpack.c.b16 %v5197, %v5194
  %v6752 = vpack.c.b16 %v5201, %v5198
  %v6753 = vpack.c.b16 %v5202, %v5199
  %v6754 = vpack.c.b16 %v5203, %v5200
  %v6755 = vpack.c.b16 %v5207, %v5204
  %v6756 = vpack.c.b16 %v5208, %v5205
  %v6757 = vpack.c.b16 %v5209, %v5206
  %v6758 = vpack.c.b16 %v5213, %v5210
  %v6759 = vpack.c.b16 %v5214, %v5211
  %v6760 = vpack.c.b16 %v5215, %v5212
  %v6761 = vpack.c.b16 %v5219, %v5216
  %v6762 = vpack.c.b16 %v5220, %v5217
  %v6763 = vpack.c.b16 %v5221, %v5218
  %v6764 = vpack.c.b16 %v5225, %v5222
  %v6765 = vpack.c.b16 %v5226, %v5223
  %v6766 = vpack.c.b16 %v5227, %v5224
  %v6767 = vpack.c.b16 %v5231, %v5228
  %v6768 = vpack.c.b16 %v5232, %v5229
  %v6769 = vpack.c.b16 %v5233, %v5230
  %v6770 = vpack.c.b16 %v5237, %v5234
  %v6771 = vpack.c.b16 %v5238, %v5235
  %v6772 = vpack.c.b16 %v5239, %v5236
  %v6773 = vpack.c.b16 %v5243, %v5240
  %v6774 = vpack.c.b16 %v5244, %v5241
  %v6775 = vpack.c.b16 %v5245, %v5242
  %v6776 = vpack.c.b16 %v5249, %v5246
  %v6777 = vpack.c.b16 %v5250, %v5247
  %v6778 = vpack.c.b16 %v5251, %v5248
  %v6779 = vpack.c.b16 %v5255, %v5252
  %v6780 = vpack.c.b16 %v5256, %v5253
  %v6781 = vpack.c.b16 %v5257, %v5254
  %v6782 = vpack.c.b16 %v5261, %v5258
  %v6783 = vpack.c.b16 %v5262, %v5259
  %v6784 = vpack.c.b16 %v5263, %v5260
  %v6785 = vpack.c.b16 %v5267, %v5264
  %v6786 = vpack.c.b16 %v5268, %v5265
  %v6787 = vpack.c.b16 %v5269, %v5266
  %v6788 = vpack.c.b16 %v5273, %v5270
  %v6789 = vpack.c.b16 %v5274, %v5271
  %v6790 = vpack.c.b16 %v5275, %v5272
  %v6791 = vpack.c.b16 %v5279, %v5276
  %v6792 = vpack.c.b16 %v5280, %v5277
  %v6793 = vpack.c.b16 %v5281, %v5278
  %v6794 = vpack.c.b16 %v5285, %v5282
  %v6795 = vpack.c.b16 %v5286, %v5283
  %v6796 = vpack.c.b16 %v5287, %v5284
  %v6797 = vpack.c.b16 %v5291, %v5288
  %v6798 = vpack.c.b16 %v5292, %v5289
  %v6799 = vpack.c.b16 %v5293, %v5290
  %v6800 = vpack.c.b16 %v5297, %v5294
  %v6801 = vpack.c.b16 %v5298, %v5295
  %v6802 = vpack.c.b16 %v5299, %v5296
  %v6803 = vpack.c.b16 %v5303, %v5300
  %v6804 = vpack.c.b16 %v5304, %v5301
  %v6805 = vpack.c.b16 %v5305, %v5302
  %v6806 = vpack.c.b16 %v5309, %v5306
  %v6807 = vpack.c.b16 %v5310, %v5307
  %v6808 = vpack.c.b16 %v5311, %v5308
  %v6809 = vpack.c.b16 %v5315, %v5312
  %v6810 = vpack.c.b16 %v5316, %v5313
  %v6811 = vpack.c.b16 %v5317, %v5314
  %v6812 = vpack.c.b16 %v5321, %v5318
  %v6813 = vpack.c.b16 %v5322, %v5319
  %v6814 = vpack.c.b16 %v5323, %v5320
  %v6815 = vpack.c.b16 %v5327, %v5324
  %v6816 = vpack.c.b16 %v5328, %v5325
  %v6817 = vpack.c.b16 %v5329, %v5326
  %v6818 = vpack.c.b16 %v5333, %v5330
  %v6819 = vpack.c.b16 %v5334, %v5331
  %v6820 = vpack.c.b16 %v5335, %v5332
  %v6821 = vpack.c.b16 %v5339, %v5336
  %v6822 = vpack.c.b16 %v5340, %v5337
  %v6823 = vpack.c.b16 %v5341, %v5338
  %v6824 = vpack.c.b16 %v5345, %v5342
  %v6825 = vpack.c.b16 %v5346, %v5343
  %v6826 = vpack.c.b16 %v5347, %v5344
  %v6827 = vpack.c.b16 %v5351, %v5348
  %v6828 = vpack.c.b16 %v5352, %v5349
  %v6829 = vpack.c.b16 %v5353, %v5350
  %v6830 = vpack.c.b16 %v5357, %v5354
  %v6831 = vpack.c.b16 %v5358, %v5355
  %v6832 = vpack.c.b16 %v5359, %v5356
  %v6833 = vpack.c.b16 %v5363, %v5360
  %v6834 = vpack.c.b16 %v5364, %v5361
  %v6835 = vpack.c.b16 %v5365, %v5362
  %v6836 = vpack.c.b16 %v5369, %v5366
  %v6837 = vpack.c.b16 %v5370, %v5367
  %v6838 = vpack.c.b16 %v5371, %v5368
  %v6839 = vpack.c.b16 %v5375, %v5372
  %v6840 = vpack.c.b16 %v5376, %v5373
  %v6841 = vpack.c.b16 %v5377, %v5374
  %v6842 = vpack.c.b16 %v5381, %v5378
  %v6843 = vpack.c.b16 %v5382, %v5379
  %v6844 = vpack.c.b16 %v5383, %v5380
  %v6845 = vpack.c.b16 %v5387, %v5384
  %v6846 = vpack.c.b16 %v5388, %v5385
  %v6847 = vpack.c.b16 %v5389, %v5386
  %v6848 = vpack.c.b16 %v5393, %v5390
  %v6849 = vpack.c.b16 %v5394, %v5391
  %v6850 = vpack.c.b16 %v5395, %v5392
  %v6851 = vpack.c.b16 %v5399, %v5396
  %v6852 = vpack.c.b16 %v5400, %v5397
  %v6853 = vpack.c.b16 %v5401, %v5398
  %v6854 = vpack.c.b16 %v5405, %v5402
  %v6855 = vpack.c.b16 %v5406, %v5403
  %v6856 = vpack.c.b16 %v5407, %v5404
  %v6857 = vpack.c.b16 %v5411, %v5408
  %v6858 = vpack.c.b16 %v5412, %v5409
  %v6859 = vpack.c.b16 %v5413, %v5410
  %v6860 = vpack.c.b16 %v5417, %v5414
  %v6861 = vpack.c.b16 %v5418, %v5415
  %v6862 = vpack.c.b16 %v5419, %v5416
  %v6863 = vpack.c.b16 %v5423, %v5420
  %v6864 = vpack.c.b16 %v5424, %v5421
  %v6865 = vpack.c.b16 %v5425, %v5422
  %v6866 = vpack.c.b16 %v5429, %v5426
  %v6867 = vpack.c.b16 %v5430, %v5427
  %v6868 = vpack.c.b16 %v5431, %v5428
  %v6869 = vpack.c.b16 %v5435, %v5432
  %v6870 = vpack.c.b16 %v5436, %v5433
  %v6871 = vpack.c.b16 %v5437, %v5434
  %v6872 = vpack.c.b16 %v5441, %v5438
  %v6873 = vpack.c.b16 %v5442, %v5439
  %v6874 = vpack.c.b16 %v5443, %v5440
  %v6875 = vpack.c.b16 %v5447, %v5444
  %v6876 = vpack.c.b16 %v5448, %v5445
  %v6877 = vpack.c.b16 %v5449, %v5446
  %v6878 = vpack.c.b16 %v5453, %v5450
  %v6879 = vpack.c.b16 %v5454, %v5451
  %v6880 = vpack.c.b16 %v5455, %v5452
  %v6881 = vpack.c.b16 %v5459, %v5456
  %v6882 = vpack.c.b16 %v5460, %v5457
  %v6883 = vpack.c.b16 %v5461, %v5458
  %v6884 = vpack.c.b16 %v5465, %v5462
  %v6885 = vpack.c.b16 %v5466, %v5463
  %v6886 = vpack.c.b16 %v5467, %v5464
  %v6887 = vpack.c.b16 %v5471, %v5468
  %v6888 = vpack.c.b16 %v5472, %v5469
  %v6889 = vpack.c.b16 %v5473, %v5470
  %v6890 = vpack.c.b16 %v5477, %v5474
  %v6891 = vpack.c.b16 %v5478, %v5475
  %v6892 = vpack.c.b16 %v5479, %v5476
  %v6893 = vpack.c.b16 %v5483, %v5480
  %v6894 = vpack.c.b16 %v5484, %v5481
  %v6895 = vpack.c.b16 %v5485, %v5482
  %v6896 = vpack.c.b16 %v5489, %v5486
  %v6897 = vpack.c.b16 %v5490, %v5487
  %v6898 = vpack.c.b16 %v5491, %v5488
  %v6899 = vpack.c.b16 %v5495, %v5492
  %v6900 = vpack.c.b16 %v5496, %v5493
  %v6901 = vpack.c.b16 %v5497, %v5494
  %v6902 = vpack.c.b16 %v5501, %v5498
  %v6903 = vpack.c.b16 %v5502, %v5499
  %v6904 = vpack.c.b16 %v5503, %v5500
  %v6905 = vpack.c.b16 %v5507, %v5504
  %v6906 = vpack.c.b16 %v5508, %v5505
  %v6907 = vpack.c.b16 %v5509, %v5506
  %v6908 = vpack.c.b16 %v5513, %v5510
  %v6909 = vpack.c.b16 %v5514, %v5511
  %v6910 = vpack.c.b16 %v5515, %v5512
  %v6911 = vpack.c.b16 %v5519, %v5516
  %v6912 = vpack.c.b16 %v5520, %v5517
  %v6913 = vpack.c.b16 %v5521, %v5518
  %v6914 = vpack.c.b16 %v5525, %v5522
  %v6915 = vpack.c.b16 %v5526, %v5523
  %v6916 = vpack.c.b16 %v5527, %v5524
  %v6917 = vpack.c.b16 %v5531, %v5528
  %v6918 = vpack.c.b16 %v5532, %v5529
  %v6919 = vpack.c.b16 %v5533, %v5530
  %v6920 = vpack.c.b16 %v5537, %v5534
  %v6921 = vpack.c.b16 %v5538, %v5535
  %v6922 = vpack.c.b16 %v5539, %v5536
  %v6923 = vpack.c.b16 %v5543, %v5540
  %v6924 = vpack.c.b16 %v5544, %v5541
  %v6925 = vpack.c.b16 %v5545, %v5542
  %v6926 = vpack.c.b16 %v5549, %v5546
  %v6927 = vpack.c.b16 %v5550, %v5547
  %v6928 = vpack.c.b16 %v5551, %v5548
  %v6929 = vpack.c.b16 %v5555, %v5552
  %v6930 = vpack.c.b16 %v5556, %v5553
  %v6931 = vpack.c.b16 %v5557, %v5554
  %v6932 = vpack.c.b16 %v5561, %v5558
  %v6933 = vpack.c.b16 %v5562, %v5559
  %v6934 = vpack.c.b16 %v5563, %v5560
  %v6935 = vpack.c.b16 %v5567, %v5564
  %v6936 = vpack.c.b16 %v5568, %v5565
  %v6937 = vpack.c.b16 %v5569, %v5566
  %v6938 = vpack.c.b16 %v5573, %v5570
  %v6939 = vpack.c.b16 %v5574, %v5571
  %v6940 = vpack.c.b16 %v5575, %v5572
  %v6941 = vpack.c.b16 %v5579, %v5576
  %v6942 = vpack.c.b16 %v5580, %v5577
  %v6943 = vpack.c.b16 %v5581, %v5578
  %v6944 = vpack.c.b16 %v5585, %v5582
  %v6945 = vpack.c.b16 %v5586, %v5583
  %v6946 = vpack.c.b16 %v5587, %v5584
  %v6947 = vpack.c.b16 %v5591, %v5588
  %v6948 = vpack.c.b16 %v5592, %v5589
  %v6949 = vpack.c.b16 %v5593, %v5590
  %v6950 = vpack.c.b16 %v5597, %v5594
  %v6951 = vpack.c.b16 %v5598, %v5595
  %v6952 = vpack.c.b16 %v5599, %v5596
  %v6953 = vpack.c.b16 %v5603, %v5600
  %v6954 = vpack.c.b16 %v5604, %v5601
  %v6955 = vpack.c.b16 %v5605, %v5602
  %v6956 = vpack.c.b16 %v5609, %v5606
  %v6957 = vpack.c.b16 %v5610, %v5607
  %v6958 = vpack.c.b16 %v5611, %v5608
  %v6959 = vpack.c.b16 %v5615, %v5612
  %v6960 = vpack.c.b16 %v5616, %v5613
  %v6961 = vpack.c.b16 %v5617, %v5614
  %v6962 = vpack.c.b16 %v5621, %v5618
  %v6963 = vpack.c.b16 %v5622, %v5619
  %v6964 = vpack.c.b16 %v5623, %v5620
  %v6965 = vpack.c.b16 %v5627, %v5624
  %v6966 = vpack.c.b16 %v5628, %v5625
  %v6967 = vpack.c.b16 %v5629, %v5626
  %v6968 = vpack.c.b16 %v5633, %v5630
  %v6969 = vpack.c.b16 %v5634, %v5631
  %v6970 = vpack.c.b16 %v5635, %v5632
  %v6971 = vpack.c.b16 %v5639, %v5636
  %v6972 = vpack.c.b16 %v5640, %v5637
  %v6973 = vpack.c.b16 %v5641, %v5638
  %v6974 = vpack.c.b16 %v5645, %v5642
  %v6975 = vpack.c.b16 %v5646, %v5643
  %v6976 = vpack.c.b16 %v5647, %v5644
  %v6977 = vpack.c.b16 %v5651, %v5648
  %v6978 = vpack.c.b16 %v5652, %v5649
  %v6979 = vpack.c.b16 %v5653, %v5650
  %v6980 = vpack.c.b16 %v5657, %v5654
  %v6981 = vpack.c.b16 %v5658, %v5655
  %v6982 = vpack.c.b16 %v5659, %v5656
  %v6983 = vpack.c.b16 %v5663, %v5660
  %v6984 = vpack.c.b16 %v5664, %v5661
  %v6985 = vpack.c.b16 %v5665, %v5662
  %v6986 = vpack.c.b16 %v5669, %v5666
  %v6987 = vpack.c.b16 %v5670, %v5667
  %v6988 = vpack.c.b16 %v5671, %v5668
  %v6989 = vpack.c.b16 %v5675, %v5672
  %v6990 = vpack.c.b16 %v5676, %v5673
  %v6991 = vpack.c.b16 %v5677, %v5674
  %v6992 = vpack.c.b16 %v5681, %v5678
  %v6993 = vpack.c.b16 %v5682, %v5679
  %v6994 = vpack.c.b16 %v5683, %v5680
  %v6995 = vpack.c.b16 %v5687, %v5684
  %v6996 = vpack.c.b16 %v5688, %v5685
  %v6997 = vpack.c.b16 %v5689, %v5686
  %v6998 = vpack.c.b16 %v5693, %v5690
  %v6999 = vpack.c.b16 %v5694, %v5691
  %v7000 = vpack.c.b16 %v5695, %v5692
  %v7001 = vpack.c.b16 %v5699, %v5696
  %v7002 = vpack.c.b16 %v5700, %v5697
  %v7003 = vpack.c.b16 %v5701, %v5698
  %v7004 = vpack.c.b16 %v5705, %v5702
  %v7005 = vpack.c.b16 %v5706, %v5703
  %v7006 = vpack.c.b16 %v5707, %v5704
  %v7007 = vpack.c.b16 %v5711, %v5708
  %v7008 = vpack.c.b16 %v5712, %v5709
  %v7009 = vpack.c.b16 %v5713, %v5710
  %v7010 = vpack.c.b16 %v5717, %v5714
  %v7011 = vpack.c.b16 %v5718, %v5715
  %v7012 = vpack.c.b16 %v5719, %v5716
  %v7013 = vpack.c.b16 %v5723, %v5720
  %v7014 = vpack.c.b16 %v5724, %v5721
  %v7015 = vpack.c.b16 %v5725, %v5722
  %v7016 = vpack.c.b16 %v5729, %v5726
  %v7017 = vpack.c.b16 %v5730, %v5727
  %v7018 = vpack.c.b16 %v5731, %v5728
  %v7019 = vpack.c.b16 %v5735, %v5732
  %v7020 = vpack.c.b16 %v5736, %v5733
  %v7021 = vpack.c.b16 %v5737, %v5734
  %v7022 = vpack.c.b16 %v5741, %v5738
  %v7023 = vpack.c.b16 %v5742, %v5739
  %v7024 = vpack.c.b16 %v5743, %v5740
  %v7025 = vpack.c.b16 %v5747, %v5744
  %v7026 = vpack.c.b16 %v5748, %v5745
  %v7027 = vpack.c.b16 %v5749, %v5746
  %v7028 = vpack.c.b16 %v5753, %v5750
  %v7029 = vpack.c.b16 %v5754, %v5751
  %v7030 = vpack.c.b16 %v5755, %v5752
  %v7031 = vpack.c.b16 %v5759, %v5756
  %v7032 = vpack.c.b16 %v5760, %v5757
  %v7033 = vpack.c.b16 %v5761, %v5758
  %v7034 = vpack.c.b16 %v5765, %v5762
  %v7035 = vpack.c.b16 %v5766, %v5763
  %v7036 = vpack.c.b16 %v5767, %v5764
  %v7037 = vpack.c.b16 %v5771, %v5768
  %v7038 = vpack.c.b16 %v5772, %v5769
  %v7039 = vpack.c.b16 %v5773, %v5770
  %v7040 = vpack.c.b16 %v5777, %v5774
  %v7041 = vpack.c.b16 %v5778, %v5775
  %v7042 = vpack.c.b16 %v5779, %v5776
  %v7043 = vpack.c.b16 %v5783, %v5780
  %v7044 = vpack.c.b16 %v5784, %v5781
  %v7045 = vpack.c.b16 %v5785, %v5782
  %v7046 = vpack.c.b16 %v5789, %v5786
  %v7047 = vpack.c.b16 %v5790, %v5787
  %v7048 = vpack.c.b16 %v5791, %v5788
  %v7049 = vpack.c.b16 %v5795, %v5792
  %v7050 = vpack.c.b16 %v5796, %v5793
  %v7051 = vpack.c.b16 %v5797, %v5794
  %v7052 = vpack.c.b16 %v5801, %v5798
  %v7053 = vpack.c.b16 %v5802, %v5799
  %v7054 = vpack.c.b16 %v5803, %v5800
  %v7055 = vpack.c.b16 %v5807, %v5804
  %v7056 = vpack.c.b16 %v5808, %v5805
  %v7057 = vpack.c.b16 %v5809, %v5806
  %v7058 = vpack.c.b16 %v5813, %v5810
  %v7059 = vpack.c.b16 %v5814, %v5811
  %v7060 = vpack.c.b16 %v5815, %v5812
  %v7061 = vpack.c.b16 %v5819, %v5816
  %v7062 = vpack.c.b16 %v5820, %v5817
  %v7063 = vpack.c.b16 %v5821, %v5818
  %v7064 = vpack.c.b16 %v5825, %v5822
  %v7065 = vpack.c.b16 %v5826, %v5823
  %v7066 = vpack.c.b16 %v5827, %v5824
  %v7067 = vpack.c.b16 %v5831, %v5828
  %v7068 = vpack.c.b16 %v5832, %v5829
  %v7069 = vpack.c.b16 %v5833, %v5830
  %v7070 = vpack.c.b16 %v5837, %v5834
  %v7071 = vpack.c.b16 %v5838, %v5835
  %v7072 = vpack.c.b16 %v5839, %v5836
  %v7073 = vpack.c.b16 %v5843, %v5840
  %v7074 = vpack.c.b16 %v5844, %v5841
  %v7075 = vpack.c.b16 %v5845, %v5842
  %v7076 = vpack.c.b16 %v5849, %v5846
  %v7077 = vpack.c.b16 %v5850, %v5847
  %v7078 = vpack.c.b16 %v5851, %v5848
  %v7079 = vpack.c.b16 %v5855, %v5852
  %v7080 = vpack.c.b16 %v5856, %v5853
  %v7081 = vpack.c.b16 %v5857, %v5854
  %vm8303 = vcmask 1022976
  %v8305 = vsel %vm8303, %v128, 0
  %vm8307 = vcmask 1045504
  %vm8308 = vcmask 1046528
  %v8309 = vsel %vm8307, 4294967295, 65535
  %v8310 = vsel %vm8308, %v8309, 0
  %v8312 = vand.u32 %v7079, %v8310
  %v8315 = vand.u32 %v7080, %v8310
  %v8318 = vand.u32 %v7081, %v8310
  %8320 = vmatprep.subr.bf16.mxu0 %v5859
  %8321 = vmatpush1.bf16.msra.mxu0 %v5858
  %8322 = vmatprep.subr.bf16.mxu0 %v5862
  %8323 = vmatpush1.bf16.msra.mxu0 %v5861
  %8324 = vmatprep.subr.bf16.mxu0 %v5865
  %8325 = vmatpush1.bf16.msra.mxu0 %v5864
  %8326 = vmatprep.subr.bf16.mxu0 %v5868
  %8327 = vmatpush1.bf16.msra.mxu0 %v5867
  %8328 = vmatprep.subr.bf16.mxu0 %v5871
  %8329 = vmatpush1.bf16.msra.mxu0 %v5870
  %8330 = vmatprep.subr.bf16.mxu0 %v5874
  %8331 = vmatpush1.bf16.msra.mxu0 %v5873
  %8332 = vmatprep.subr.bf16.mxu0 %v5877
  %8333 = vmatpush1.bf16.msra.mxu0 %v5876
  %8334 = vmatprep.subr.bf16.mxu0 %v5880
  %8335 = vmatpush1.bf16.msra.mxu0 %v5879
  %8336 = vmatprep.subr.bf16.mxu0 %v5883
  %8337 = vmatpush1.bf16.msra.mxu0 %v5882
  %8338 = vmatprep.subr.bf16.mxu0 %v5886
  %8339 = vmatpush1.bf16.msra.mxu0 %v5885
  %8340 = vmatprep.subr.bf16.mxu0 %v5889
  %8341 = vmatpush1.bf16.msra.mxu0 %v5888
  %8342 = vmatprep.subr.bf16.mxu0 %v5892
  %8343 = vmatpush1.bf16.msra.mxu0 %v5891
  %8344 = vmatprep.subr.bf16.mxu0 %v5895
  %8345 = vmatpush1.bf16.msra.mxu0 %v5894
  %8346 = vmatprep.subr.bf16.mxu0 %v5898
  %8347 = vmatpush1.bf16.msra.mxu0 %v5897
  %8348 = vmatprep.subr.bf16.mxu0 %v5901
  %8349 = vmatpush1.bf16.msra.mxu0 %v5900
  %8350 = vmatprep.subr.bf16.mxu0 %v5904
  %8351 = vmatpush1.bf16.msra.mxu0 %v5903
  %8352 = vmatprep.mubr.bf16.mxu0 %v79
  %8353 = vmatmul.mubr.bf16.gmra.mrb[0].mxu0 %v78
  %v8354 = vpop.f32.mrb[0].mxu0
  %v8355 = vadd.f32 %v1766, %v8354
  %v8356 = vpop.f32.mrb[0].mxu0
  %v8357 = vadd.f32 %v1770, %v8356
  %v8358 = vpop.f32.mrb[0].mxu0
  %v8359 = vpop.f32.mrb[0].mxu0
  %8360 = vdwg.mxu0
  %8361 = vmatprep.subr.bf16.mxu0 %v5907
  %8362 = vmatpush1.bf16.msra.mxu0 %v5906
  %8363 = vmatprep.subr.bf16.mxu0 %v5910
  %8364 = vmatpush1.bf16.msra.mxu0 %v5909
  %8365 = vmatprep.subr.bf16.mxu0 %v5913
  %8366 = vmatpush1.bf16.msra.mxu0 %v5912
  %8367 = vmatprep.subr.bf16.mxu0 %v5916
  %8368 = vmatpush1.bf16.msra.mxu0 %v5915
  %8369 = vmatprep.subr.bf16.mxu0 %v5919
  %8370 = vmatpush1.bf16.msra.mxu0 %v5918
  %8371 = vmatprep.subr.bf16.mxu0 %v5922
  %8372 = vmatpush1.bf16.msra.mxu0 %v5921
  %8373 = vmatprep.subr.bf16.mxu0 %v5925
  %8374 = vmatpush1.bf16.msra.mxu0 %v5924
  %8375 = vmatprep.subr.bf16.mxu0 %v5928
  %8376 = vmatpush1.bf16.msra.mxu0 %v5927
  %8377 = vmatprep.subr.bf16.mxu0 %v5931
  %8378 = vmatpush1.bf16.msra.mxu0 %v5930
  %8379 = vmatprep.subr.bf16.mxu0 %v5934
  %8380 = vmatpush1.bf16.msra.mxu0 %v5933
  %8381 = vmatprep.subr.bf16.mxu0 %v5937
  %8382 = vmatpush1.bf16.msra.mxu0 %v5936
  %8383 = vmatprep.subr.bf16.mxu0 %v5940
  %8384 = vmatpush1.bf16.msra.mxu0 %v5939
  %8385 = vmatprep.subr.bf16.mxu0 %v5943
  %8386 = vmatpush1.bf16.msra.mxu0 %v5942
  %8387 = vmatprep.subr.bf16.mxu0 %v5946
  %8388 = vmatpush1.bf16.msra.mxu0 %v5945
  %8389 = vmatprep.subr.bf16.mxu0 %v5949
  %8390 = vmatpush1.bf16.msra.mxu0 %v5948
  %8391 = vmatprep.subr.bf16.mxu0 %v5952
  %8392 = vmatpush1.bf16.msra.mxu0 %v5951
  %8393 = vmatprep.mubr.bf16.mxu0 %v81
  %8394 = vmatmul.mubr.bf16.gmra.mrb[0].mxu0 %v80
  %v8395 = vpop.f32.mrb[0].mxu0
  %v8396 = vadd.f32 %v8355, %v8395
  %v8397 = vpop.f32.mrb[0].mxu0
  %v8398 = vadd.f32 %v8357, %v8397
  %v8399 = vpop.f32.mrb[0].mxu0
  %v8400 = vpop.f32.mrb[0].mxu0
  %8401 = vdwg.mxu0
  %8402 = vmatprep.subr.bf16.mxu0 %v5955
  %8403 = vmatpush1.bf16.msra.mxu0 %v5954
  %8404 = vmatprep.subr.bf16.mxu0 %v5958
  %8405 = vmatpush1.bf16.msra.mxu0 %v5957
  %8406 = vmatprep.subr.bf16.mxu0 %v5961
  %8407 = vmatpush1.bf16.msra.mxu0 %v5960
  %8408 = vmatprep.subr.bf16.mxu0 %v5964
  %8409 = vmatpush1.bf16.msra.mxu0 %v5963
  %8410 = vmatprep.subr.bf16.mxu0 %v5967
  %8411 = vmatpush1.bf16.msra.mxu0 %v5966
  %8412 = vmatprep.subr.bf16.mxu0 %v5970
  %8413 = vmatpush1.bf16.msra.mxu0 %v5969
  %8414 = vmatprep.subr.bf16.mxu0 %v5973
  %8415 = vmatpush1.bf16.msra.mxu0 %v5972
  %8416 = vmatprep.subr.bf16.mxu0 %v5976
  %8417 = vmatpush1.bf16.msra.mxu0 %v5975
  %8418 = vmatprep.subr.bf16.mxu0 %v5979
  %8419 = vmatpush1.bf16.msra.mxu0 %v5978
  %8420 = vmatprep.subr.bf16.mxu0 %v5982
  %8421 = vmatpush1.bf16.msra.mxu0 %v5981
  %8422 = vmatprep.subr.bf16.mxu0 %v5985
  %8423 = vmatpush1.bf16.msra.mxu0 %v5984
  %8424 = vmatprep.subr.bf16.mxu0 %v5988
  %8425 = vmatpush1.bf16.msra.mxu0 %v5987
  %8426 = vmatprep.subr.bf16.mxu0 %v5991
  %8427 = vmatpush1.bf16.msra.mxu0 %v5990
  %8428 = vmatprep.subr.bf16.mxu0 %v5994
  %8429 = vmatpush1.bf16.msra.mxu0 %v5993
  %8430 = vmatprep.subr.bf16.mxu0 %v5997
  %8431 = vmatpush1.bf16.msra.mxu0 %v5996
  %8432 = vmatprep.subr.bf16.mxu0 %v6000
  %8433 = vmatpush1.bf16.msra.mxu0 %v5999
  %8434 = vmatprep.mubr.bf16.mxu0 %v83
  %8435 = vmatmul.mubr.bf16.gmra.mrb[0].mxu0 %v82
  %v8436 = vpop.f32.mrb[0].mxu0
  %v8437 = vadd.f32 %v8396, %v8436
  %v8438 = vpop.f32.mrb[0].mxu0
  %v8439 = vadd.f32 %v8398, %v8438
  %v8440 = vpop.f32.mrb[0].mxu0
  %v8441 = vpop.f32.mrb[0].mxu0
  %8442 = vdwg.mxu0
  %8443 = vmatprep.subr.bf16.mxu0 %v6003
  %8444 = vmatpush1.bf16.msra.mxu0 %v6002
  %8445 = vmatprep.subr.bf16.mxu0 %v6006
  %8446 = vmatpush1.bf16.msra.mxu0 %v6005
  %8447 = vmatprep.subr.bf16.mxu0 %v6009
  %8448 = vmatpush1.bf16.msra.mxu0 %v6008
  %8449 = vmatprep.subr.bf16.mxu0 %v6012
  %8450 = vmatpush1.bf16.msra.mxu0 %v6011
  %8451 = vmatprep.subr.bf16.mxu0 %v6015
  %8452 = vmatpush1.bf16.msra.mxu0 %v6014
  %8453 = vmatprep.subr.bf16.mxu0 %v6018
  %8454 = vmatpush1.bf16.msra.mxu0 %v6017
  %8455 = vmatprep.subr.bf16.mxu0 %v6021
  %8456 = vmatpush1.bf16.msra.mxu0 %v6020
  %8457 = vmatprep.subr.bf16.mxu0 %v6024
  %8458 = vmatpush1.bf16.msra.mxu0 %v6023
  %8459 = vmatprep.subr.bf16.mxu0 %v6027
  %8460 = vmatpush1.bf16.msra.mxu0 %v6026
  %8461 = vmatprep.subr.bf16.mxu0 %v6030
  %8462 = vmatpush1.bf16.msra.mxu0 %v6029
  %8463 = vmatprep.subr.bf16.mxu0 %v6033
  %8464 = vmatpush1.bf16.msra.mxu0 %v6032
  %8465 = vmatprep.subr.bf16.mxu0 %v6036
  %8466 = vmatpush1.bf16.msra.mxu0 %v6035
  %8467 = vmatprep.subr.bf16.mxu0 %v6039
  %8468 = vmatpush1.bf16.msra.mxu0 %v6038
  %8469 = vmatprep.subr.bf16.mxu0 %v6042
  %8470 = vmatpush1.bf16.msra.mxu0 %v6041
  %8471 = vmatprep.subr.bf16.mxu0 %v6045
  %8472 = vmatpush1.bf16.msra.mxu0 %v6044
  %8473 = vmatprep.subr.bf16.mxu0 %v6048
  %8474 = vmatpush1.bf16.msra.mxu0 %v6047
  %8475 = vmatprep.mubr.bf16.mxu0 %v85
  %8476 = vmatmul.mubr.bf16.gmra.mrb[0].mxu0 %v84
  %v8477 = vpop.f32.mrb[0].mxu0
  %v8478 = vadd.f32 %v8437, %v8477
  %v8479 = vpop.f32.mrb[0].mxu0
  %v8480 = vadd.f32 %v8439, %v8479
  %v8481 = vpop.f32.mrb[0].mxu0
  %v8482 = vpop.f32.mrb[0].mxu0
  %8483 = vdwg.mxu0
  %8484 = vmatprep.subr.bf16.mxu0 %v6051
  %8485 = vmatpush1.bf16.msra.mxu0 %v6050
  %8486 = vmatprep.subr.bf16.mxu0 %v6054
  %8487 = vmatpush1.bf16.msra.mxu0 %v6053
  %8488 = vmatprep.subr.bf16.mxu0 %v6057
  %8489 = vmatpush1.bf16.msra.mxu0 %v6056
  %8490 = vmatprep.subr.bf16.mxu0 %v6060
  %8491 = vmatpush1.bf16.msra.mxu0 %v6059
  %8492 = vmatprep.subr.bf16.mxu0 %v6063
  %8493 = vmatpush1.bf16.msra.mxu0 %v6062
  %8494 = vmatprep.subr.bf16.mxu0 %v6066
  %8495 = vmatpush1.bf16.msra.mxu0 %v6065
  %8496 = vmatprep.subr.bf16.mxu0 %v6069
  %8497 = vmatpush1.bf16.msra.mxu0 %v6068
  %8498 = vmatprep.subr.bf16.mxu0 %v6072
  %8499 = vmatpush1.bf16.msra.mxu0 %v6071
  %8500 = vmatprep.subr.bf16.mxu0 %v6075
  %8501 = vmatpush1.bf16.msra.mxu0 %v6074
  %8502 = vmatprep.subr.bf16.mxu0 %v6078
  %8503 = vmatpush1.bf16.msra.mxu0 %v6077
  %8504 = vmatprep.subr.bf16.mxu0 %v6081
  %8505 = vmatpush1.bf16.msra.mxu0 %v6080
  %8506 = vmatprep.subr.bf16.mxu0 %v6084
  %8507 = vmatpush1.bf16.msra.mxu0 %v6083
  %8508 = vmatprep.subr.bf16.mxu0 %v6087
  %8509 = vmatpush1.bf16.msra.mxu0 %v6086
  %8510 = vmatprep.subr.bf16.mxu0 %v6090
  %8511 = vmatpush1.bf16.msra.mxu0 %v6089
  %8512 = vmatprep.subr.bf16.mxu0 %v6093
  %8513 = vmatpush1.bf16.msra.mxu0 %v6092
  %8514 = vmatprep.subr.bf16.mxu0 %v6096
  %8515 = vmatpush1.bf16.msra.mxu0 %v6095
  %8516 = vmatprep.mubr.bf16.mxu0 %v87
  %8517 = vmatmul.mubr.bf16.gmra.mrb[0].mxu0 %v86
  %v8518 = vpop.f32.mrb[0].mxu0
  %v8519 = vadd.f32 %v8478, %v8518
  %v8520 = vpop.f32.mrb[0].mxu0
  %v8521 = vadd.f32 %v8480, %v8520
  %v8522 = vpop.f32.mrb[0].mxu0
  %v8523 = vpop.f32.mrb[0].mxu0
  %8524 = vdwg.mxu0
  %8525 = vmatprep.subr.bf16.mxu0 %v6099
  %8526 = vmatpush1.bf16.msra.mxu0 %v6098
  %8527 = vmatprep.subr.bf16.mxu0 %v6102
  %8528 = vmatpush1.bf16.msra.mxu0 %v6101
  %8529 = vmatprep.subr.bf16.mxu0 %v6105
  %8530 = vmatpush1.bf16.msra.mxu0 %v6104
  %8531 = vmatprep.subr.bf16.mxu0 %v6108
  %8532 = vmatpush1.bf16.msra.mxu0 %v6107
  %8533 = vmatprep.subr.bf16.mxu0 %v6111
  %8534 = vmatpush1.bf16.msra.mxu0 %v6110
  %8535 = vmatprep.subr.bf16.mxu0 %v6114
  %8536 = vmatpush1.bf16.msra.mxu0 %v6113
  %8537 = vmatprep.subr.bf16.mxu0 %v6117
  %8538 = vmatpush1.bf16.msra.mxu0 %v6116
  %8539 = vmatprep.subr.bf16.mxu0 %v6120
  %8540 = vmatpush1.bf16.msra.mxu0 %v6119
  %8541 = vmatprep.subr.bf16.mxu0 %v6123
  %8542 = vmatpush1.bf16.msra.mxu0 %v6122
  %8543 = vmatprep.subr.bf16.mxu0 %v6126
  %8544 = vmatpush1.bf16.msra.mxu0 %v6125
  %8545 = vmatprep.subr.bf16.mxu0 %v6129
  %8546 = vmatpush1.bf16.msra.mxu0 %v6128
  %8547 = vmatprep.subr.bf16.mxu0 %v6132
  %8548 = vmatpush1.bf16.msra.mxu0 %v6131
  %8549 = vmatprep.subr.bf16.mxu0 %v6135
  %8550 = vmatpush1.bf16.msra.mxu0 %v6134
  %8551 = vmatprep.subr.bf16.mxu0 %v6138
  %8552 = vmatpush1.bf16.msra.mxu0 %v6137
  %8553 = vmatprep.subr.bf16.mxu0 %v6141
  %8554 = vmatpush1.bf16.msra.mxu0 %v6140
  %8555 = vmatprep.subr.bf16.mxu0 %v6144
  %8556 = vmatpush1.bf16.msra.mxu0 %v6143
  %8557 = vmatprep.mubr.bf16.mxu0 %v89
  %8558 = vmatmul.mubr.bf16.gmra.mrb[0].mxu0 %v88
  %v8559 = vpop.f32.mrb[0].mxu0
  %v8560 = vadd.f32 %v8519, %v8559
  %v8561 = vpop.f32.mrb[0].mxu0
  %v8562 = vadd.f32 %v8521, %v8561
  %v8563 = vpop.f32.mrb[0].mxu0
  %v8564 = vpop.f32.mrb[0].mxu0
  %8565 = vdwg.mxu0
  %8566 = vmatprep.subr.bf16.mxu0 %v6147
  %8567 = vmatpush1.bf16.msra.mxu0 %v6146
  %8568 = vmatprep.subr.bf16.mxu0 %v6150
  %8569 = vmatpush1.bf16.msra.mxu0 %v6149
  %8570 = vmatprep.subr.bf16.mxu0 %v6153
  %8571 = vmatpush1.bf16.msra.mxu0 %v6152
  %8572 = vmatprep.subr.bf16.mxu0 %v6156
  %8573 = vmatpush1.bf16.msra.mxu0 %v6155
  %8574 = vmatprep.subr.bf16.mxu0 %v6159
  %8575 = vmatpush1.bf16.msra.mxu0 %v6158
  %8576 = vmatprep.subr.bf16.mxu0 %v6162
  %8577 = vmatpush1.bf16.msra.mxu0 %v6161
  %8578 = vmatprep.subr.bf16.mxu0 %v6165
  %8579 = vmatpush1.bf16.msra.mxu0 %v6164
  %8580 = vmatprep.subr.bf16.mxu0 %v6168
  %8581 = vmatpush1.bf16.msra.mxu0 %v6167
  %8582 = vmatprep.subr.bf16.mxu0 %v6171
  %8583 = vmatpush1.bf16.msra.mxu0 %v6170
  %8584 = vmatprep.subr.bf16.mxu0 %v6174
  %8585 = vmatpush1.bf16.msra.mxu0 %v6173
  %8586 = vmatprep.subr.bf16.mxu0 %v6177
  %8587 = vmatpush1.bf16.msra.mxu0 %v6176
  %8588 = vmatprep.subr.bf16.mxu0 %v6180
  %8589 = vmatpush1.bf16.msra.mxu0 %v6179
  %8590 = vmatprep.subr.bf16.mxu0 %v6183
  %8591 = vmatpush1.bf16.msra.mxu0 %v6182
  %8592 = vmatprep.subr.bf16.mxu0 %v6186
  %8593 = vmatpush1.bf16.msra.mxu0 %v6185
  %8594 = vmatprep.subr.bf16.mxu0 %v6189
  %8595 = vmatpush1.bf16.msra.mxu0 %v6188
  %8596 = vmatprep.subr.bf16.mxu0 %v6192
  %8597 = vmatpush1.bf16.msra.mxu0 %v6191
  %8598 = vmatprep.mubr.bf16.mxu0 %v91
  %8599 = vmatmul.mubr.bf16.gmra.mrb[0].mxu0 %v90
  %v8600 = vpop.f32.mrb[0].mxu0
  %v8601 = vadd.f32 %v8560, %v8600
  %v8602 = vpop.f32.mrb[0].mxu0
  %v8603 = vadd.f32 %v8562, %v8602
  %v8604 = vpop.f32.mrb[0].mxu0
  %v8605 = vpop.f32.mrb[0].mxu0
  %8606 = vdwg.mxu0
  %8607 = vmatprep.subr.bf16.mxu0 %v6195
  %8608 = vmatpush1.bf16.msra.mxu0 %v6194
  %8609 = vmatprep.subr.bf16.mxu0 %v6198
  %8610 = vmatpush1.bf16.msra.mxu0 %v6197
  %8611 = vmatprep.subr.bf16.mxu0 %v6201
  %8612 = vmatpush1.bf16.msra.mxu0 %v6200
  %8613 = vmatprep.subr.bf16.mxu0 %v6204
  %8614 = vmatpush1.bf16.msra.mxu0 %v6203
  %8615 = vmatprep.subr.bf16.mxu0 %v6207
  %8616 = vmatpush1.bf16.msra.mxu0 %v6206
  %8617 = vmatprep.subr.bf16.mxu0 %v6210
  %8618 = vmatpush1.bf16.msra.mxu0 %v6209
  %8619 = vmatprep.subr.bf16.mxu0 %v6213
  %8620 = vmatpush1.bf16.msra.mxu0 %v6212
  %8621 = vmatprep.subr.bf16.mxu0 %v6216
  %8622 = vmatpush1.bf16.msra.mxu0 %v6215
  %8623 = vmatprep.subr.bf16.mxu0 %v6219
  %8624 = vmatpush1.bf16.msra.mxu0 %v6218
  %8625 = vmatprep.subr.bf16.mxu0 %v6222
  %8626 = vmatpush1.bf16.msra.mxu0 %v6221
  %8627 = vmatprep.subr.bf16.mxu0 %v6225
  %8628 = vmatpush1.bf16.msra.mxu0 %v6224
  %8629 = vmatprep.subr.bf16.mxu0 %v6228
  %8630 = vmatpush1.bf16.msra.mxu0 %v6227
  %8631 = vmatprep.subr.bf16.mxu0 %v6231
  %8632 = vmatpush1.bf16.msra.mxu0 %v6230
  %8633 = vmatprep.subr.bf16.mxu0 %v6234
  %8634 = vmatpush1.bf16.msra.mxu0 %v6233
  %8635 = vmatprep.subr.bf16.mxu0 %v6237
  %8636 = vmatpush1.bf16.msra.mxu0 %v6236
  %8637 = vmatprep.subr.bf16.mxu0 %v6240
  %8638 = vmatpush1.bf16.msra.mxu0 %v6239
  %8639 = vmatprep.mubr.bf16.mxu0 %v93
  %8640 = vmatmul.mubr.bf16.gmra.mrb[0].mxu0 %v92
  %v8641 = vpop.f32.mrb[0].mxu0
  %v8642 = vadd.f32 %v8601, %v8641
  %v8643 = vpop.f32.mrb[0].mxu0
  %v8644 = vadd.f32 %v8603, %v8643
  %v8645 = vpop.f32.mrb[0].mxu0
  %v8646 = vpop.f32.mrb[0].mxu0
  %8647 = vdwg.mxu0
  %8648 = vmatprep.subr.bf16.mxu0 %v6243
  %8649 = vmatpush1.bf16.msra.mxu0 %v6242
  %8650 = vmatprep.subr.bf16.mxu0 %v6246
  %8651 = vmatpush1.bf16.msra.mxu0 %v6245
  %8652 = vmatprep.subr.bf16.mxu0 %v6249
  %8653 = vmatpush1.bf16.msra.mxu0 %v6248
  %8654 = vmatprep.subr.bf16.mxu0 %v6252
  %8655 = vmatpush1.bf16.msra.mxu0 %v6251
  %8656 = vmatprep.subr.bf16.mxu0 %v6255
  %8657 = vmatpush1.bf16.msra.mxu0 %v6254
  %8658 = vmatprep.subr.bf16.mxu0 %v6258
  %8659 = vmatpush1.bf16.msra.mxu0 %v6257
  %8660 = vmatprep.subr.bf16.mxu0 %v6261
  %8661 = vmatpush1.bf16.msra.mxu0 %v6260
  %8662 = vmatprep.subr.bf16.mxu0 %v6264
  %8663 = vmatpush1.bf16.msra.mxu0 %v6263
  %8664 = vmatprep.subr.bf16.mxu0 %v6267
  %8665 = vmatpush1.bf16.msra.mxu0 %v6266
  %8666 = vmatprep.subr.bf16.mxu0 %v6270
  %8667 = vmatpush1.bf16.msra.mxu0 %v6269
  %8668 = vmatprep.subr.bf16.mxu0 %v6273
  %8669 = vmatpush1.bf16.msra.mxu0 %v6272
  %8670 = vmatprep.subr.bf16.mxu0 %v6276
  %8671 = vmatpush1.bf16.msra.mxu0 %v6275
  %8672 = vmatprep.subr.bf16.mxu0 %v6279
  %8673 = vmatpush1.bf16.msra.mxu0 %v6278
  %8674 = vmatprep.subr.bf16.mxu0 %v6282
  %8675 = vmatpush1.bf16.msra.mxu0 %v6281
  %8676 = vmatprep.subr.bf16.mxu0 %v6285
  %8677 = vmatpush1.bf16.msra.mxu0 %v6284
  %8678 = vmatprep.subr.bf16.mxu0 %v6288
  %8679 = vmatpush1.bf16.msra.mxu0 %v6287
  %8680 = vmatprep.mubr.bf16.mxu0 %v95
  %8681 = vmatmul.mubr.bf16.gmra.mrb[0].mxu0 %v94
  %v8682 = vpop.f32.mrb[0].mxu0
  %v8683 = vadd.f32 %v8642, %v8682
  %v8684 = vpop.f32.mrb[0].mxu0
  %v8685 = vadd.f32 %v8644, %v8684
  %v8686 = vpop.f32.mrb[0].mxu0
  %v8687 = vpop.f32.mrb[0].mxu0
  %8688 = vdwg.mxu0
  %8689 = vmatprep.subr.bf16.mxu0 %v6291
  %8690 = vmatpush1.bf16.msra.mxu0 %v6290
  %8691 = vmatprep.subr.bf16.mxu0 %v6294
  %8692 = vmatpush1.bf16.msra.mxu0 %v6293
  %8693 = vmatprep.subr.bf16.mxu0 %v6297
  %8694 = vmatpush1.bf16.msra.mxu0 %v6296
  %8695 = vmatprep.subr.bf16.mxu0 %v6300
  %8696 = vmatpush1.bf16.msra.mxu0 %v6299
  %8697 = vmatprep.subr.bf16.mxu0 %v6303
  %8698 = vmatpush1.bf16.msra.mxu0 %v6302
  %8699 = vmatprep.subr.bf16.mxu0 %v6306
  %8700 = vmatpush1.bf16.msra.mxu0 %v6305
  %8701 = vmatprep.subr.bf16.mxu0 %v6309
  %8702 = vmatpush1.bf16.msra.mxu0 %v6308
  %8703 = vmatprep.subr.bf16.mxu0 %v6312
  %8704 = vmatpush1.bf16.msra.mxu0 %v6311
  %8705 = vmatprep.subr.bf16.mxu0 %v6315
  %8706 = vmatpush1.bf16.msra.mxu0 %v6314
  %8707 = vmatprep.subr.bf16.mxu0 %v6318
  %8708 = vmatpush1.bf16.msra.mxu0 %v6317
  %8709 = vmatprep.subr.bf16.mxu0 %v6321
  %8710 = vmatpush1.bf16.msra.mxu0 %v6320
  %8711 = vmatprep.subr.bf16.mxu0 %v6324
  %8712 = vmatpush1.bf16.msra.mxu0 %v6323
  %8713 = vmatprep.subr.bf16.mxu0 %v6327
  %8714 = vmatpush1.bf16.msra.mxu0 %v6326
  %8715 = vmatprep.subr.bf16.mxu0 %v6330
  %8716 = vmatpush1.bf16.msra.mxu0 %v6329
  %8717 = vmatprep.subr.bf16.mxu0 %v6333
  %8718 = vmatpush1.bf16.msra.mxu0 %v6332
  %8719 = vmatprep.subr.bf16.mxu0 %v6336
  %8720 = vmatpush1.bf16.msra.mxu0 %v6335
  %8721 = vmatprep.mubr.bf16.mxu0 %v97
  %8722 = vmatmul.mubr.bf16.gmra.mrb[0].mxu0 %v96
  %v8723 = vpop.f32.mrb[0].mxu0
  %v8724 = vadd.f32 %v8683, %v8723
  %v8725 = vpop.f32.mrb[0].mxu0
  %v8726 = vadd.f32 %v8685, %v8725
  %v8727 = vpop.f32.mrb[0].mxu0
  %v8728 = vpop.f32.mrb[0].mxu0
  %8729 = vdwg.mxu0
  %8730 = vmatprep.subr.bf16.mxu0 %v6339
  %8731 = vmatpush1.bf16.msra.mxu0 %v6338
  %8732 = vmatprep.subr.bf16.mxu0 %v6342
  %8733 = vmatpush1.bf16.msra.mxu0 %v6341
  %8734 = vmatprep.subr.bf16.mxu0 %v6345
  %8735 = vmatpush1.bf16.msra.mxu0 %v6344
  %8736 = vmatprep.subr.bf16.mxu0 %v6348
  %8737 = vmatpush1.bf16.msra.mxu0 %v6347
  %8738 = vmatprep.subr.bf16.mxu0 %v6351
  %8739 = vmatpush1.bf16.msra.mxu0 %v6350
  %8740 = vmatprep.subr.bf16.mxu0 %v6354
  %8741 = vmatpush1.bf16.msra.mxu0 %v6353
  %8742 = vmatprep.subr.bf16.mxu0 %v6357
  %8743 = vmatpush1.bf16.msra.mxu0 %v6356
  %8744 = vmatprep.subr.bf16.mxu0 %v6360
  %8745 = vmatpush1.bf16.msra.mxu0 %v6359
  %8746 = vmatprep.subr.bf16.mxu0 %v6363
  %8747 = vmatpush1.bf16.msra.mxu0 %v6362
  %8748 = vmatprep.subr.bf16.mxu0 %v6366
  %8749 = vmatpush1.bf16.msra.mxu0 %v6365
  %8750 = vmatprep.subr.bf16.mxu0 %v6369
  %8751 = vmatpush1.bf16.msra.mxu0 %v6368
  %8752 = vmatprep.subr.bf16.mxu0 %v6372
  %8753 = vmatpush1.bf16.msra.mxu0 %v6371
  %8754 = vmatprep.subr.bf16.mxu0 %v6375
  %8755 = vmatpush1.bf16.msra.mxu0 %v6374
  %8756 = vmatprep.subr.bf16.mxu0 %v6378
  %8757 = vmatpush1.bf16.msra.mxu0 %v6377
  %8758 = vmatprep.subr.bf16.mxu0 %v6381
  %8759 = vmatpush1.bf16.msra.mxu0 %v6380
  %8760 = vmatprep.subr.bf16.mxu0 %v6384
  %8761 = vmatpush1.bf16.msra.mxu0 %v6383
  %8762 = vmatprep.mubr.bf16.mxu0 %v99
  %8763 = vmatmul.mubr.bf16.gmra.mrb[0].mxu0 %v98
  %v8764 = vpop.f32.mrb[0].mxu0
  %v8765 = vadd.f32 %v8724, %v8764
  %v8766 = vpop.f32.mrb[0].mxu0
  %v8767 = vadd.f32 %v8726, %v8766
  %v8768 = vpop.f32.mrb[0].mxu0
  %v8769 = vpop.f32.mrb[0].mxu0
  %8770 = vdwg.mxu0
  %8771 = vmatprep.subr.bf16.mxu0 %v6387
  %8772 = vmatpush1.bf16.msra.mxu0 %v6386
  %8773 = vmatprep.subr.bf16.mxu0 %v6390
  %8774 = vmatpush1.bf16.msra.mxu0 %v6389
  %8775 = vmatprep.subr.bf16.mxu0 %v6393
  %8776 = vmatpush1.bf16.msra.mxu0 %v6392
  %8777 = vmatprep.subr.bf16.mxu0 %v6396
  %8778 = vmatpush1.bf16.msra.mxu0 %v6395
  %8779 = vmatprep.subr.bf16.mxu0 %v6399
  %8780 = vmatpush1.bf16.msra.mxu0 %v6398
  %8781 = vmatprep.subr.bf16.mxu0 %v6402
  %8782 = vmatpush1.bf16.msra.mxu0 %v6401
  %8783 = vmatprep.subr.bf16.mxu0 %v6405
  %8784 = vmatpush1.bf16.msra.mxu0 %v6404
  %8785 = vmatprep.subr.bf16.mxu0 %v6408
  %8786 = vmatpush1.bf16.msra.mxu0 %v6407
  %8787 = vmatprep.subr.bf16.mxu0 %v6411
  %8788 = vmatpush1.bf16.msra.mxu0 %v6410
  %8789 = vmatprep.subr.bf16.mxu0 %v6414
  %8790 = vmatpush1.bf16.msra.mxu0 %v6413
  %8791 = vmatprep.subr.bf16.mxu0 %v6417
  %8792 = vmatpush1.bf16.msra.mxu0 %v6416
  %8793 = vmatprep.subr.bf16.mxu0 %v6420
  %8794 = vmatpush1.bf16.msra.mxu0 %v6419
  %8795 = vmatprep.subr.bf16.mxu0 %v6423
  %8796 = vmatpush1.bf16.msra.mxu0 %v6422
  %8797 = vmatprep.subr.bf16.mxu0 %v6426
  %8798 = vmatpush1.bf16.msra.mxu0 %v6425
  %8799 = vmatprep.subr.bf16.mxu0 %v6429
  %8800 = vmatpush1.bf16.msra.mxu0 %v6428
  %8801 = vmatprep.subr.bf16.mxu0 %v6432
  %8802 = vmatpush1.bf16.msra.mxu0 %v6431
  %8803 = vmatprep.mubr.bf16.mxu0 %v101
  %8804 = vmatmul.mubr.bf16.gmra.mrb[0].mxu0 %v100
  %v8805 = vpop.f32.mrb[0].mxu0
  %v8806 = vadd.f32 %v8765, %v8805
  %v8807 = vpop.f32.mrb[0].mxu0
  %v8808 = vadd.f32 %v8767, %v8807
  %v8809 = vpop.f32.mrb[0].mxu0
  %v8810 = vpop.f32.mrb[0].mxu0
  %8811 = vdwg.mxu0
  %8812 = vmatprep.subr.bf16.mxu0 %v6435
  %8813 = vmatpush1.bf16.msra.mxu0 %v6434
  %8814 = vmatprep.subr.bf16.mxu0 %v6438
  %8815 = vmatpush1.bf16.msra.mxu0 %v6437
  %8816 = vmatprep.subr.bf16.mxu0 %v6441
  %8817 = vmatpush1.bf16.msra.mxu0 %v6440
  %8818 = vmatprep.subr.bf16.mxu0 %v6444
  %8819 = vmatpush1.bf16.msra.mxu0 %v6443
  %8820 = vmatprep.subr.bf16.mxu0 %v6447
  %8821 = vmatpush1.bf16.msra.mxu0 %v6446
  %8822 = vmatprep.subr.bf16.mxu0 %v6450
  %8823 = vmatpush1.bf16.msra.mxu0 %v6449
  %8824 = vmatprep.subr.bf16.mxu0 %v6453
  %8825 = vmatpush1.bf16.msra.mxu0 %v6452
  %8826 = vmatprep.subr.bf16.mxu0 %v6456
  %8827 = vmatpush1.bf16.msra.mxu0 %v6455
  %8828 = vmatprep.subr.bf16.mxu0 %v6459
  %8829 = vmatpush1.bf16.msra.mxu0 %v6458
  %8830 = vmatprep.subr.bf16.mxu0 %v6462
  %8831 = vmatpush1.bf16.msra.mxu0 %v6461
  %8832 = vmatprep.subr.bf16.mxu0 %v6465
  %8833 = vmatpush1.bf16.msra.mxu0 %v6464
  %8834 = vmatprep.subr.bf16.mxu0 %v6468
  %8835 = vmatpush1.bf16.msra.mxu0 %v6467
  %8836 = vmatprep.subr.bf16.mxu0 %v6471
  %8837 = vmatpush1.bf16.msra.mxu0 %v6470
  %8838 = vmatprep.subr.bf16.mxu0 %v6474
  %8839 = vmatpush1.bf16.msra.mxu0 %v6473
  %8840 = vmatprep.subr.bf16.mxu0 %v6477
  %8841 = vmatpush1.bf16.msra.mxu0 %v6476
  %8842 = vmatprep.subr.bf16.mxu0 %v6480
  %8843 = vmatpush1.bf16.msra.mxu0 %v6479
  %8844 = vmatprep.mubr.bf16.mxu0 %v103
  %8845 = vmatmul.mubr.bf16.gmra.mrb[0].mxu0 %v102
  %v8846 = vpop.f32.mrb[0].mxu0
  %v8847 = vadd.f32 %v8806, %v8846
  %v8848 = vpop.f32.mrb[0].mxu0
  %v8849 = vadd.f32 %v8808, %v8848
  %v8850 = vpop.f32.mrb[0].mxu0
  %v8851 = vpop.f32.mrb[0].mxu0
  %8852 = vdwg.mxu0
  %8853 = vmatprep.subr.bf16.mxu0 %v6483
  %8854 = vmatpush1.bf16.msra.mxu0 %v6482
  %8855 = vmatprep.subr.bf16.mxu0 %v6486
  %8856 = vmatpush1.bf16.msra.mxu0 %v6485
  %8857 = vmatprep.subr.bf16.mxu0 %v6489
  %8858 = vmatpush1.bf16.msra.mxu0 %v6488
  %8859 = vmatprep.subr.bf16.mxu0 %v6492
  %8860 = vmatpush1.bf16.msra.mxu0 %v6491
  %8861 = vmatprep.subr.bf16.mxu0 %v6495
  %8862 = vmatpush1.bf16.msra.mxu0 %v6494
  %8863 = vmatprep.subr.bf16.mxu0 %v6498
  %8864 = vmatpush1.bf16.msra.mxu0 %v6497
  %8865 = vmatprep.subr.bf16.mxu0 %v6501
  %8866 = vmatpush1.bf16.msra.mxu0 %v6500
  %8867 = vmatprep.subr.bf16.mxu0 %v6504
  %8868 = vmatpush1.bf16.msra.mxu0 %v6503
  %8869 = vmatprep.subr.bf16.mxu0 %v6507
  %8870 = vmatpush1.bf16.msra.mxu0 %v6506
  %8871 = vmatprep.subr.bf16.mxu0 %v6510
  %8872 = vmatpush1.bf16.msra.mxu0 %v6509
  %8873 = vmatprep.subr.bf16.mxu0 %v6513
  %8874 = vmatpush1.bf16.msra.mxu0 %v6512
  %8875 = vmatprep.subr.bf16.mxu0 %v6516
  %8876 = vmatpush1.bf16.msra.mxu0 %v6515
  %8877 = vmatprep.subr.bf16.mxu0 %v6519
  %8878 = vmatpush1.bf16.msra.mxu0 %v6518
  %8879 = vmatprep.subr.bf16.mxu0 %v6522
  %8880 = vmatpush1.bf16.msra.mxu0 %v6521
  %8881 = vmatprep.subr.bf16.mxu0 %v6525
  %8882 = vmatpush1.bf16.msra.mxu0 %v6524
  %8883 = vmatprep.subr.bf16.mxu0 %v6528
  %8884 = vmatpush1.bf16.msra.mxu0 %v6527
  %8885 = vmatprep.mubr.bf16.mxu0 %v105
  %8886 = vmatmul.mubr.bf16.gmra.mrb[0].mxu0 %v104
  %v8887 = vpop.f32.mrb[0].mxu0
  %v8888 = vadd.f32 %v8847, %v8887
  %v8889 = vpop.f32.mrb[0].mxu0
  %v8890 = vadd.f32 %v8849, %v8889
  %v8891 = vpop.f32.mrb[0].mxu0
  %v8892 = vpop.f32.mrb[0].mxu0
  %8893 = vdwg.mxu0
  %8894 = vmatprep.subr.bf16.mxu0 %v6531
  %8895 = vmatpush1.bf16.msra.mxu0 %v6530
  %8896 = vmatprep.subr.bf16.mxu0 %v6534
  %8897 = vmatpush1.bf16.msra.mxu0 %v6533
  %8898 = vmatprep.subr.bf16.mxu0 %v6537
  %8899 = vmatpush1.bf16.msra.mxu0 %v6536
  %8900 = vmatprep.subr.bf16.mxu0 %v6540
  %8901 = vmatpush1.bf16.msra.mxu0 %v6539
  %8902 = vmatprep.subr.bf16.mxu0 %v6543
  %8903 = vmatpush1.bf16.msra.mxu0 %v6542
  %8904 = vmatprep.subr.bf16.mxu0 %v6546
  %8905 = vmatpush1.bf16.msra.mxu0 %v6545
  %8906 = vmatprep.subr.bf16.mxu0 %v6549
  %8907 = vmatpush1.bf16.msra.mxu0 %v6548
  %8908 = vmatprep.subr.bf16.mxu0 %v6552
  %8909 = vmatpush1.bf16.msra.mxu0 %v6551
  %8910 = vmatprep.subr.bf16.mxu0 %v6555
  %8911 = vmatpush1.bf16.msra.mxu0 %v6554
  %8912 = vmatprep.subr.bf16.mxu0 %v6558
  %8913 = vmatpush1.bf16.msra.mxu0 %v6557
  %8914 = vmatprep.subr.bf16.mxu0 %v6561
  %8915 = vmatpush1.bf16.msra.mxu0 %v6560
  %8916 = vmatprep.subr.bf16.mxu0 %v6564
  %8917 = vmatpush1.bf16.msra.mxu0 %v6563
  %8918 = vmatprep.subr.bf16.mxu0 %v6567
  %8919 = vmatpush1.bf16.msra.mxu0 %v6566
  %8920 = vmatprep.subr.bf16.mxu0 %v6570
  %8921 = vmatpush1.bf16.msra.mxu0 %v6569
  %8922 = vmatprep.subr.bf16.mxu0 %v6573
  %8923 = vmatpush1.bf16.msra.mxu0 %v6572
  %8924 = vmatprep.subr.bf16.mxu0 %v6576
  %8925 = vmatpush1.bf16.msra.mxu0 %v6575
  %8926 = vmatprep.mubr.bf16.mxu0 %v107
  %8927 = vmatmul.mubr.bf16.gmra.mrb[0].mxu0 %v106
  %v8928 = vpop.f32.mrb[0].mxu0
  %v8929 = vadd.f32 %v8888, %v8928
  %v8930 = vpop.f32.mrb[0].mxu0
  %v8931 = vadd.f32 %v8890, %v8930
  %v8932 = vpop.f32.mrb[0].mxu0
  %v8933 = vpop.f32.mrb[0].mxu0
  %8934 = vdwg.mxu0
  %8935 = vmatprep.subr.bf16.mxu0 %v6579
  %8936 = vmatpush1.bf16.msra.mxu0 %v6578
  %8937 = vmatprep.subr.bf16.mxu0 %v6582
  %8938 = vmatpush1.bf16.msra.mxu0 %v6581
  %8939 = vmatprep.subr.bf16.mxu0 %v6585
  %8940 = vmatpush1.bf16.msra.mxu0 %v6584
  %8941 = vmatprep.subr.bf16.mxu0 %v6588
  %8942 = vmatpush1.bf16.msra.mxu0 %v6587
  %8943 = vmatprep.subr.bf16.mxu0 %v6591
  %8944 = vmatpush1.bf16.msra.mxu0 %v6590
  %8945 = vmatprep.subr.bf16.mxu0 %v6594
  %8946 = vmatpush1.bf16.msra.mxu0 %v6593
  %8947 = vmatprep.subr.bf16.mxu0 %v6597
  %8948 = vmatpush1.bf16.msra.mxu0 %v6596
  %8949 = vmatprep.subr.bf16.mxu0 %v6600
  %8950 = vmatpush1.bf16.msra.mxu0 %v6599
  %8951 = vmatprep.subr.bf16.mxu0 %v6603
  %8952 = vmatpush1.bf16.msra.mxu0 %v6602
  %8953 = vmatprep.subr.bf16.mxu0 %v6606
  %8954 = vmatpush1.bf16.msra.mxu0 %v6605
  %8955 = vmatprep.subr.bf16.mxu0 %v6609
  %8956 = vmatpush1.bf16.msra.mxu0 %v6608
  %8957 = vmatprep.subr.bf16.mxu0 %v6612
  %8958 = vmatpush1.bf16.msra.mxu0 %v6611
  %8959 = vmatprep.subr.bf16.mxu0 %v6615
  %8960 = vmatpush1.bf16.msra.mxu0 %v6614
  %8961 = vmatprep.subr.bf16.mxu0 %v6618
  %8962 = vmatpush1.bf16.msra.mxu0 %v6617
  %8963 = vmatprep.subr.bf16.mxu0 %v6621
  %8964 = vmatpush1.bf16.msra.mxu0 %v6620
  %8965 = vmatprep.subr.bf16.mxu0 %v6624
  %8966 = vmatpush1.bf16.msra.mxu0 %v6623
  %8967 = vmatprep.mubr.bf16.mxu0 %v109
  %8968 = vmatmul.mubr.bf16.gmra.mrb[0].mxu0 %v108
  %v8969 = vpop.f32.mrb[0].mxu0
  %v8970 = vadd.f32 %v8929, %v8969
  %v8971 = vpop.f32.mrb[0].mxu0
  %v8972 = vadd.f32 %v8931, %v8971
  %v8973 = vpop.f32.mrb[0].mxu0
  %v8974 = vpop.f32.mrb[0].mxu0
  %8975 = vdwg.mxu0
  %8976 = vmatprep.subr.bf16.mxu0 %v6627
  %8977 = vmatpush1.bf16.msra.mxu0 %v6626
  %8978 = vmatprep.subr.bf16.mxu0 %v6630
  %8979 = vmatpush1.bf16.msra.mxu0 %v6629
  %8980 = vmatprep.subr.bf16.mxu0 %v6633
  %8981 = vmatpush1.bf16.msra.mxu0 %v6632
  %8982 = vmatprep.subr.bf16.mxu0 %v6636
  %8983 = vmatpush1.bf16.msra.mxu0 %v6635
  %8984 = vmatprep.subr.bf16.mxu0 %v6639
  %8985 = vmatpush1.bf16.msra.mxu0 %v6638
  %8986 = vmatprep.subr.bf16.mxu0 %v6642
  %8987 = vmatpush1.bf16.msra.mxu0 %v6641
  %8988 = vmatprep.subr.bf16.mxu0 %v6645
  %8989 = vmatpush1.bf16.msra.mxu0 %v6644
  %8990 = vmatprep.subr.bf16.mxu0 %v6648
  %8991 = vmatpush1.bf16.msra.mxu0 %v6647
  %8992 = vmatprep.subr.bf16.mxu0 %v6651
  %8993 = vmatpush1.bf16.msra.mxu0 %v6650
  %8994 = vmatprep.subr.bf16.mxu0 %v6654
  %8995 = vmatpush1.bf16.msra.mxu0 %v6653
  %8996 = vmatprep.subr.bf16.mxu0 %v6657
  %8997 = vmatpush1.bf16.msra.mxu0 %v6656
  %8998 = vmatprep.subr.bf16.mxu0 %v6660
  %8999 = vmatpush1.bf16.msra.mxu0 %v6659
  %9000 = vmatprep.subr.bf16.mxu0 %v6663
  %9001 = vmatpush1.bf16.msra.mxu0 %v6662
  %9002 = vmatprep.subr.bf16.mxu0 %v6666
  %9003 = vmatpush1.bf16.msra.mxu0 %v6665
  %9004 = vmatprep.subr.bf16.mxu0 %v6669
  %9005 = vmatpush1.bf16.msra.mxu0 %v6668
  %9006 = vmatprep.subr.bf16.mxu0 %v6672
  %9007 = vmatpush1.bf16.msra.mxu0 %v6671
  %9008 = vmatprep.mubr.bf16.mxu0 %v111
  %9009 = vmatmul.mubr.bf16.gmra.mrb[0].mxu0 %v110
  %v9010 = vpop.f32.mrb[0].mxu0
  %v9011 = vadd.f32 %v8970, %v9010
  %v9012 = vpop.f32.mrb[0].mxu0
  %v9013 = vadd.f32 %v8972, %v9012
  %v9014 = vpop.f32.mrb[0].mxu0
  %v9015 = vpop.f32.mrb[0].mxu0
  %9016 = vdwg.mxu0
  %9017 = vmatprep.subr.bf16.mxu0 %v6675
  %9018 = vmatpush1.bf16.msra.mxu0 %v6674
  %9019 = vmatprep.subr.bf16.mxu0 %v6678
  %9020 = vmatpush1.bf16.msra.mxu0 %v6677
  %9021 = vmatprep.subr.bf16.mxu0 %v6681
  %9022 = vmatpush1.bf16.msra.mxu0 %v6680
  %9023 = vmatprep.subr.bf16.mxu0 %v6684
  %9024 = vmatpush1.bf16.msra.mxu0 %v6683
  %9025 = vmatprep.subr.bf16.mxu0 %v6687
  %9026 = vmatpush1.bf16.msra.mxu0 %v6686
  %9027 = vmatprep.subr.bf16.mxu0 %v6690
  %9028 = vmatpush1.bf16.msra.mxu0 %v6689
  %9029 = vmatprep.subr.bf16.mxu0 %v6693
  %9030 = vmatpush1.bf16.msra.mxu0 %v6692
  %9031 = vmatprep.subr.bf16.mxu0 %v6696
  %9032 = vmatpush1.bf16.msra.mxu0 %v6695
  %9033 = vmatprep.subr.bf16.mxu0 %v6699
  %9034 = vmatpush1.bf16.msra.mxu0 %v6698
  %9035 = vmatprep.subr.bf16.mxu0 %v6702
  %9036 = vmatpush1.bf16.msra.mxu0 %v6701
  %9037 = vmatprep.subr.bf16.mxu0 %v6705
  %9038 = vmatpush1.bf16.msra.mxu0 %v6704
  %9039 = vmatprep.subr.bf16.mxu0 %v6708
  %9040 = vmatpush1.bf16.msra.mxu0 %v6707
  %9041 = vmatprep.subr.bf16.mxu0 %v6711
  %9042 = vmatpush1.bf16.msra.mxu0 %v6710
  %9043 = vmatprep.subr.bf16.mxu0 %v6714
  %9044 = vmatpush1.bf16.msra.mxu0 %v6713
  %9045 = vmatprep.subr.bf16.mxu0 %v6717
  %9046 = vmatpush1.bf16.msra.mxu0 %v6716
  %9047 = vmatprep.subr.bf16.mxu0 %v6720
  %9048 = vmatpush1.bf16.msra.mxu0 %v6719
  %9049 = vmatprep.mubr.bf16.mxu0 %v113
  %9050 = vmatmul.mubr.bf16.gmra.mrb[0].mxu0 %v112
  %v9051 = vpop.f32.mrb[0].mxu0
  %v9052 = vadd.f32 %v9011, %v9051
  %v9053 = vpop.f32.mrb[0].mxu0
  %v9054 = vadd.f32 %v9013, %v9053
  %v9055 = vpop.f32.mrb[0].mxu0
  %v9056 = vpop.f32.mrb[0].mxu0
  %9057 = vdwg.mxu0
  %9058 = vmatprep.subr.bf16.mxu0 %v6723
  %9059 = vmatpush1.bf16.msra.mxu0 %v6722
  %9060 = vmatprep.subr.bf16.mxu0 %v6726
  %9061 = vmatpush1.bf16.msra.mxu0 %v6725
  %9062 = vmatprep.subr.bf16.mxu0 %v6729
  %9063 = vmatpush1.bf16.msra.mxu0 %v6728
  %9064 = vmatprep.subr.bf16.mxu0 %v6732
  %9065 = vmatpush1.bf16.msra.mxu0 %v6731
  %9066 = vmatprep.subr.bf16.mxu0 %v6735
  %9067 = vmatpush1.bf16.msra.mxu0 %v6734
  %9068 = vmatprep.subr.bf16.mxu0 %v6738
  %9069 = vmatpush1.bf16.msra.mxu0 %v6737
  %9070 = vmatprep.subr.bf16.mxu0 %v6741
  %9071 = vmatpush1.bf16.msra.mxu0 %v6740
  %9072 = vmatprep.subr.bf16.mxu0 %v6744
  %9073 = vmatpush1.bf16.msra.mxu0 %v6743
  %9074 = vmatprep.subr.bf16.mxu0 %v6747
  %9075 = vmatpush1.bf16.msra.mxu0 %v6746
  %9076 = vmatprep.subr.bf16.mxu0 %v6750
  %9077 = vmatpush1.bf16.msra.mxu0 %v6749
  %9078 = vmatprep.subr.bf16.mxu0 %v6753
  %9079 = vmatpush1.bf16.msra.mxu0 %v6752
  %9080 = vmatprep.subr.bf16.mxu0 %v6756
  %9081 = vmatpush1.bf16.msra.mxu0 %v6755
  %9082 = vmatprep.subr.bf16.mxu0 %v6759
  %9083 = vmatpush1.bf16.msra.mxu0 %v6758
  %9084 = vmatprep.subr.bf16.mxu0 %v6762
  %9085 = vmatpush1.bf16.msra.mxu0 %v6761
  %9086 = vmatprep.subr.bf16.mxu0 %v6765
  %9087 = vmatpush1.bf16.msra.mxu0 %v6764
  %9088 = vmatprep.subr.bf16.mxu0 %v6768
  %9089 = vmatpush1.bf16.msra.mxu0 %v6767
  %9090 = vmatprep.mubr.bf16.mxu0 %v115
  %9091 = vmatmul.mubr.bf16.gmra.mrb[0].mxu0 %v114
  %v9092 = vpop.f32.mrb[0].mxu0
  %v9093 = vadd.f32 %v9052, %v9092
  %v9094 = vpop.f32.mrb[0].mxu0
  %v9095 = vadd.f32 %v9054, %v9094
  %v9096 = vpop.f32.mrb[0].mxu0
  %v9097 = vpop.f32.mrb[0].mxu0
  %9098 = vdwg.mxu0
  %9099 = vmatprep.subr.bf16.mxu0 %v6771
  %9100 = vmatpush1.bf16.msra.mxu0 %v6770
  %9101 = vmatprep.subr.bf16.mxu0 %v6774
  %9102 = vmatpush1.bf16.msra.mxu0 %v6773
  %9103 = vmatprep.subr.bf16.mxu0 %v6777
  %9104 = vmatpush1.bf16.msra.mxu0 %v6776
  %9105 = vmatprep.subr.bf16.mxu0 %v6780
  %9106 = vmatpush1.bf16.msra.mxu0 %v6779
  %9107 = vmatprep.subr.bf16.mxu0 %v6783
  %9108 = vmatpush1.bf16.msra.mxu0 %v6782
  %9109 = vmatprep.subr.bf16.mxu0 %v6786
  %9110 = vmatpush1.bf16.msra.mxu0 %v6785
  %9111 = vmatprep.subr.bf16.mxu0 %v6789
  %9112 = vmatpush1.bf16.msra.mxu0 %v6788
  %9113 = vmatprep.subr.bf16.mxu0 %v6792
  %9114 = vmatpush1.bf16.msra.mxu0 %v6791
  %9115 = vmatprep.subr.bf16.mxu0 %v6795
  %9116 = vmatpush1.bf16.msra.mxu0 %v6794
  %9117 = vmatprep.subr.bf16.mxu0 %v6798
  %9118 = vmatpush1.bf16.msra.mxu0 %v6797
  %9119 = vmatprep.subr.bf16.mxu0 %v6801
  %9120 = vmatpush1.bf16.msra.mxu0 %v6800
  %9121 = vmatprep.subr.bf16.mxu0 %v6804
  %9122 = vmatpush1.bf16.msra.mxu0 %v6803
  %9123 = vmatprep.subr.bf16.mxu0 %v6807
  %9124 = vmatpush1.bf16.msra.mxu0 %v6806
  %9125 = vmatprep.subr.bf16.mxu0 %v6810
  %9126 = vmatpush1.bf16.msra.mxu0 %v6809
  %9127 = vmatprep.subr.bf16.mxu0 %v6813
  %9128 = vmatpush1.bf16.msra.mxu0 %v6812
  %9129 = vmatprep.subr.bf16.mxu0 %v6816
  %9130 = vmatpush1.bf16.msra.mxu0 %v6815
  %9131 = vmatprep.mubr.bf16.mxu0 %v117
  %9132 = vmatmul.mubr.bf16.gmra.mrb[0].mxu0 %v116
  %v9133 = vpop.f32.mrb[0].mxu0
  %v9134 = vadd.f32 %v9093, %v9133
  %v9135 = vpop.f32.mrb[0].mxu0
  %v9136 = vadd.f32 %v9095, %v9135
  %v9137 = vpop.f32.mrb[0].mxu0
  %v9138 = vpop.f32.mrb[0].mxu0
  %9139 = vdwg.mxu0
  %9140 = vmatprep.subr.bf16.mxu0 %v6819
  %9141 = vmatpush1.bf16.msra.mxu0 %v6818
  %9142 = vmatprep.subr.bf16.mxu0 %v6822
  %9143 = vmatpush1.bf16.msra.mxu0 %v6821
  %9144 = vmatprep.subr.bf16.mxu0 %v6825
  %9145 = vmatpush1.bf16.msra.mxu0 %v6824
  %9146 = vmatprep.subr.bf16.mxu0 %v6828
  %9147 = vmatpush1.bf16.msra.mxu0 %v6827
  %9148 = vmatprep.subr.bf16.mxu0 %v6831
  %9149 = vmatpush1.bf16.msra.mxu0 %v6830
  %9150 = vmatprep.subr.bf16.mxu0 %v6834
  %9151 = vmatpush1.bf16.msra.mxu0 %v6833
  %9152 = vmatprep.subr.bf16.mxu0 %v6837
  %9153 = vmatpush1.bf16.msra.mxu0 %v6836
  %9154 = vmatprep.subr.bf16.mxu0 %v6840
  %9155 = vmatpush1.bf16.msra.mxu0 %v6839
  %9156 = vmatprep.subr.bf16.mxu0 %v6843
  %9157 = vmatpush1.bf16.msra.mxu0 %v6842
  %9158 = vmatprep.subr.bf16.mxu0 %v6846
  %9159 = vmatpush1.bf16.msra.mxu0 %v6845
  %9160 = vmatprep.subr.bf16.mxu0 %v6849
  %9161 = vmatpush1.bf16.msra.mxu0 %v6848
  %9162 = vmatprep.subr.bf16.mxu0 %v6852
  %9163 = vmatpush1.bf16.msra.mxu0 %v6851
  %9164 = vmatprep.subr.bf16.mxu0 %v6855
  %9165 = vmatpush1.bf16.msra.mxu0 %v6854
  %9166 = vmatprep.subr.bf16.mxu0 %v6858
  %9167 = vmatpush1.bf16.msra.mxu0 %v6857
  %9168 = vmatprep.subr.bf16.mxu0 %v6861
  %9169 = vmatpush1.bf16.msra.mxu0 %v6860
  %9170 = vmatprep.subr.bf16.mxu0 %v6864
  %9171 = vmatpush1.bf16.msra.mxu0 %v6863
  %9172 = vmatprep.mubr.bf16.mxu0 %v119
  %9173 = vmatmul.mubr.bf16.gmra.mrb[0].mxu0 %v118
  %v9174 = vpop.f32.mrb[0].mxu0
  %v9175 = vadd.f32 %v9134, %v9174
  %v9176 = vpop.f32.mrb[0].mxu0
  %v9177 = vadd.f32 %v9136, %v9176
  %v9178 = vpop.f32.mrb[0].mxu0
  %v9179 = vpop.f32.mrb[0].mxu0
  %9180 = vdwg.mxu0
  %9181 = vmatprep.subr.bf16.mxu0 %v6867
  %9182 = vmatpush1.bf16.msra.mxu0 %v6866
  %9183 = vmatprep.subr.bf16.mxu0 %v6870
  %9184 = vmatpush1.bf16.msra.mxu0 %v6869
  %9185 = vmatprep.subr.bf16.mxu0 %v6873
  %9186 = vmatpush1.bf16.msra.mxu0 %v6872
  %9187 = vmatprep.subr.bf16.mxu0 %v6876
  %9188 = vmatpush1.bf16.msra.mxu0 %v6875
  %9189 = vmatprep.subr.bf16.mxu0 %v6879
  %9190 = vmatpush1.bf16.msra.mxu0 %v6878
  %9191 = vmatprep.subr.bf16.mxu0 %v6882
  %9192 = vmatpush1.bf16.msra.mxu0 %v6881
  %9193 = vmatprep.subr.bf16.mxu0 %v6885
  %9194 = vmatpush1.bf16.msra.mxu0 %v6884
  %9195 = vmatprep.subr.bf16.mxu0 %v6888
  %9196 = vmatpush1.bf16.msra.mxu0 %v6887
  %9197 = vmatprep.subr.bf16.mxu0 %v6891
  %9198 = vmatpush1.bf16.msra.mxu0 %v6890
  %9199 = vmatprep.subr.bf16.mxu0 %v6894
  %9200 = vmatpush1.bf16.msra.mxu0 %v6893
  %9201 = vmatprep.subr.bf16.mxu0 %v6897
  %9202 = vmatpush1.bf16.msra.mxu0 %v6896
  %9203 = vmatprep.subr.bf16.mxu0 %v6900
  %9204 = vmatpush1.bf16.msra.mxu0 %v6899
  %9205 = vmatprep.subr.bf16.mxu0 %v6903
  %9206 = vmatpush1.bf16.msra.mxu0 %v6902
  %9207 = vmatprep.subr.bf16.mxu0 %v6906
  %9208 = vmatpush1.bf16.msra.mxu0 %v6905
  %9209 = vmatprep.subr.bf16.mxu0 %v6909
  %9210 = vmatpush1.bf16.msra.mxu0 %v6908
  %9211 = vmatprep.subr.bf16.mxu0 %v6912
  %9212 = vmatpush1.bf16.msra.mxu0 %v6911
  %9213 = vmatprep.mubr.bf16.mxu0 %v121
  %9214 = vmatmul.mubr.bf16.gmra.mrb[0].mxu0 %v120
  %v9215 = vpop.f32.mrb[0].mxu0
  %v9216 = vadd.f32 %v9175, %v9215
  %v9217 = vpop.f32.mrb[0].mxu0
  %v9218 = vadd.f32 %v9177, %v9217
  %v9219 = vpop.f32.mrb[0].mxu0
  %v9220 = vpop.f32.mrb[0].mxu0
  %9221 = vdwg.mxu0
  %9222 = vmatprep.subr.bf16.mxu0 %v6915
  %9223 = vmatpush1.bf16.msra.mxu0 %v6914
  %9224 = vmatprep.subr.bf16.mxu0 %v6918
  %9225 = vmatpush1.bf16.msra.mxu0 %v6917
  %9226 = vmatprep.subr.bf16.mxu0 %v6921
  %9227 = vmatpush1.bf16.msra.mxu0 %v6920
  %9228 = vmatprep.subr.bf16.mxu0 %v6924
  %9229 = vmatpush1.bf16.msra.mxu0 %v6923
  %9230 = vmatprep.subr.bf16.mxu0 %v6927
  %9231 = vmatpush1.bf16.msra.mxu0 %v6926
  %9232 = vmatprep.subr.bf16.mxu0 %v6930
  %9233 = vmatpush1.bf16.msra.mxu0 %v6929
  %9234 = vmatprep.subr.bf16.mxu0 %v6933
  %9235 = vmatpush1.bf16.msra.mxu0 %v6932
  %9236 = vmatprep.subr.bf16.mxu0 %v6936
  %9237 = vmatpush1.bf16.msra.mxu0 %v6935
  %9238 = vmatprep.subr.bf16.mxu0 %v6939
  %9239 = vmatpush1.bf16.msra.mxu0 %v6938
  %9240 = vmatprep.subr.bf16.mxu0 %v6942
  %9241 = vmatpush1.bf16.msra.mxu0 %v6941
  %9242 = vmatprep.subr.bf16.mxu0 %v6945
  %9243 = vmatpush1.bf16.msra.mxu0 %v6944
  %9244 = vmatprep.subr.bf16.mxu0 %v6948
  %9245 = vmatpush1.bf16.msra.mxu0 %v6947
  %9246 = vmatprep.subr.bf16.mxu0 %v6951
  %9247 = vmatpush1.bf16.msra.mxu0 %v6950
  %9248 = vmatprep.subr.bf16.mxu0 %v6954
  %9249 = vmatpush1.bf16.msra.mxu0 %v6953
  %9250 = vmatprep.subr.bf16.mxu0 %v6957
  %9251 = vmatpush1.bf16.msra.mxu0 %v6956
  %9252 = vmatprep.subr.bf16.mxu0 %v6960
  %9253 = vmatpush1.bf16.msra.mxu0 %v6959
  %9254 = vmatprep.mubr.bf16.mxu0 %v123
  %9255 = vmatmul.mubr.bf16.gmra.mrb[0].mxu0 %v122
  %v9256 = vpop.f32.mrb[0].mxu0
  %v9257 = vadd.f32 %v9216, %v9256
  %v9258 = vpop.f32.mrb[0].mxu0
  %v9259 = vadd.f32 %v9218, %v9258
  %v9260 = vpop.f32.mrb[0].mxu0
  %v9261 = vpop.f32.mrb[0].mxu0
  %9262 = vdwg.mxu0
  %9263 = vmatprep.subr.bf16.mxu0 %v6963
  %9264 = vmatpush1.bf16.msra.mxu0 %v6962
  %9265 = vmatprep.subr.bf16.mxu0 %v6966
  %9266 = vmatpush1.bf16.msra.mxu0 %v6965
  %9267 = vmatprep.subr.bf16.mxu0 %v6969
  %9268 = vmatpush1.bf16.msra.mxu0 %v6968
  %9269 = vmatprep.subr.bf16.mxu0 %v6972
  %9270 = vmatpush1.bf16.msra.mxu0 %v6971
  %9271 = vmatprep.subr.bf16.mxu0 %v6975
  %9272 = vmatpush1.bf16.msra.mxu0 %v6974
  %9273 = vmatprep.subr.bf16.mxu0 %v6978
  %9274 = vmatpush1.bf16.msra.mxu0 %v6977
  %9275 = vmatprep.subr.bf16.mxu0 %v6981
  %9276 = vmatpush1.bf16.msra.mxu0 %v6980
  %9277 = vmatprep.subr.bf16.mxu0 %v6984
  %9278 = vmatpush1.bf16.msra.mxu0 %v6983
  %9279 = vmatprep.subr.bf16.mxu0 %v6987
  %9280 = vmatpush1.bf16.msra.mxu0 %v6986
  %9281 = vmatprep.subr.bf16.mxu0 %v6990
  %9282 = vmatpush1.bf16.msra.mxu0 %v6989
  %9283 = vmatprep.subr.bf16.mxu0 %v6993
  %9284 = vmatpush1.bf16.msra.mxu0 %v6992
  %9285 = vmatprep.subr.bf16.mxu0 %v6996
  %9286 = vmatpush1.bf16.msra.mxu0 %v6995
  %9287 = vmatprep.subr.bf16.mxu0 %v6999
  %9288 = vmatpush1.bf16.msra.mxu0 %v6998
  %9289 = vmatprep.subr.bf16.mxu0 %v7002
  %9290 = vmatpush1.bf16.msra.mxu0 %v7001
  %9291 = vmatprep.subr.bf16.mxu0 %v7005
  %9292 = vmatpush1.bf16.msra.mxu0 %v7004
  %9293 = vmatprep.subr.bf16.mxu0 %v7008
  %9294 = vmatpush1.bf16.msra.mxu0 %v7007
  %9295 = vmatprep.mubr.bf16.mxu0 %v125
  %9296 = vmatmul.mubr.bf16.gmra.mrb[0].mxu0 %v124
  %v9297 = vpop.f32.mrb[0].mxu0
  %v9298 = vadd.f32 %v9257, %v9297
  %v9299 = vpop.f32.mrb[0].mxu0
  %v9300 = vadd.f32 %v9259, %v9299
  %v9301 = vpop.f32.mrb[0].mxu0
  %v9302 = vpop.f32.mrb[0].mxu0
  %9303 = vdwg.mxu0
  %9304 = vmatprep.subr.bf16.mxu0 %v7011
  %9305 = vmatpush1.bf16.msra.mxu0 %v7010
  %9306 = vmatprep.subr.bf16.mxu0 %v7014
  %9307 = vmatpush1.bf16.msra.mxu0 %v7013
  %9308 = vmatprep.subr.bf16.mxu0 %v7017
  %9309 = vmatpush1.bf16.msra.mxu0 %v7016
  %9310 = vmatprep.subr.bf16.mxu0 %v7020
  %9311 = vmatpush1.bf16.msra.mxu0 %v7019
  %9312 = vmatprep.subr.bf16.mxu0 %v7023
  %9313 = vmatpush1.bf16.msra.mxu0 %v7022
  %9314 = vmatprep.subr.bf16.mxu0 %v7026
  %9315 = vmatpush1.bf16.msra.mxu0 %v7025
  %9316 = vmatprep.subr.bf16.mxu0 %v7029
  %9317 = vmatpush1.bf16.msra.mxu0 %v7028
  %9318 = vmatprep.subr.bf16.mxu0 %v7032
  %9319 = vmatpush1.bf16.msra.mxu0 %v7031
  %9320 = vmatprep.subr.bf16.mxu0 %v7035
  %9321 = vmatpush1.bf16.msra.mxu0 %v7034
  %9322 = vmatprep.subr.bf16.mxu0 %v7038
  %9323 = vmatpush1.bf16.msra.mxu0 %v7037
  %9324 = vmatprep.subr.bf16.mxu0 %v7041
  %9325 = vmatpush1.bf16.msra.mxu0 %v7040
  %9326 = vmatprep.subr.bf16.mxu0 %v7044
  %9327 = vmatpush1.bf16.msra.mxu0 %v7043
  %9328 = vmatprep.subr.bf16.mxu0 %v7047
  %9329 = vmatpush1.bf16.msra.mxu0 %v7046
  %9330 = vmatprep.subr.bf16.mxu0 %v7050
  %9331 = vmatpush1.bf16.msra.mxu0 %v7049
  %9332 = vmatprep.subr.bf16.mxu0 %v7053
  %9333 = vmatpush1.bf16.msra.mxu0 %v7052
  %9334 = vmatprep.subr.bf16.mxu0 %v7056
  %9335 = vmatpush1.bf16.msra.mxu0 %v7055
  %9336 = vmatprep.mubr.bf16.mxu0 %v127
  %9337 = vmatmul.mubr.bf16.gmra.mrb[0].mxu0 %v126
  %v9338 = vpop.f32.mrb[0].mxu0
  %v9339 = vadd.f32 %v9298, %v9338
  %v9340 = vpop.f32.mrb[0].mxu0
  %v9341 = vadd.f32 %v9300, %v9340
  %v9342 = vpop.f32.mrb[0].mxu0
  %v9343 = vpop.f32.mrb[0].mxu0
  %9344 = vdwg.mxu0
  %9345 = vmatprep.subr.bf16.mxu0 %v7059
  %9346 = vmatpush1.bf16.msra.mxu0 %v7058
  %9347 = vmatprep.subr.bf16.mxu0 %v7062
  %9348 = vmatpush1.bf16.msra.mxu0 %v7061
  %9349 = vmatprep.subr.bf16.mxu0 %v7065
  %9350 = vmatpush1.bf16.msra.mxu0 %v7064
  %9351 = vmatprep.subr.bf16.mxu0 %v7068
  %9352 = vmatpush1.bf16.msra.mxu0 %v7067
  %9353 = vmatprep.subr.bf16.mxu0 %v7071
  %9354 = vmatpush1.bf16.msra.mxu0 %v7070
  %9355 = vmatprep.subr.bf16.mxu0 %v7074
  %9356 = vmatpush1.bf16.msra.mxu0 %v7073
  %9357 = vmatprep.subr.bf16.mxu0 %v7077
  %9358 = vmatpush1.bf16.msra.mxu0 %v7076
  %9359 = vmatprep.subr.bf16.mxu0 %v8315
  %9360 = vmatpush1.bf16.msra.mxu0 %v8312
  %9361 = vmatprep.subr.bf16.mxu0 0
  %9362 = vmatpush1.bf16.msra.mxu0 0
  %9363 = vmatprep.subr.bf16.mxu0 0
  %9364 = vmatpush1.bf16.msra.mxu0 0
  %9365 = vmatprep.subr.bf16.mxu0 0
  %9366 = vmatpush1.bf16.msra.mxu0 0
  %9367 = vmatprep.subr.bf16.mxu0 0
  %9368 = vmatpush1.bf16.msra.mxu0 0
  %9369 = vmatprep.subr.bf16.mxu0 0
  %9370 = vmatpush1.bf16.msra.mxu0 0
  %9371 = vmatprep.subr.bf16.mxu0 0
  %9372 = vmatpush1.bf16.msra.mxu0 0
  %9373 = vmatprep.subr.bf16.mxu0 0
  %9374 = vmatpush1.bf16.msra.mxu0 0
  %9375 = vmatprep.subr.bf16.mxu0 0
  %9376 = vmatpush1.bf16.msra.mxu0 0
  %9377 = vmatprep.mubr.bf16.mxu0 0
  %9378 = vmatmul.mubr.bf16.gmra.mrb[0].mxu0 %v8305
  %v9379 = vpop.f32.mrb[0].mxu0
  %v9380 = vadd.f32 %v9339, %v9379
  %v9381 = vpop.f32.mrb[0].mxu0
  %v9382 = vadd.f32 %v9341, %v9381
  %v9383 = vpop.f32.mrb[0].mxu0
  %v9384 = vpop.f32.mrb[0].mxu0
  %9385 = vdwg.mxu0
  %9386 = vmatprep.subr.bf16.mxu0 0
  %9387 = vmatpush1.bf16.msra.mxu0 %v5860
  %9388 = vmatprep.subr.bf16.mxu0 0
  %9389 = vmatpush1.bf16.msra.mxu0 %v5863
  %9390 = vmatprep.subr.bf16.mxu0 0
  %9391 = vmatpush1.bf16.msra.mxu0 %v5866
  %9392 = vmatprep.subr.bf16.mxu0 0
  %9393 = vmatpush1.bf16.msra.mxu0 %v5869
  %9394 = vmatprep.subr.bf16.mxu0 0
  %9395 = vmatpush1.bf16.msra.mxu0 %v5872
  %9396 = vmatprep.subr.bf16.mxu0 0
  %9397 = vmatpush1.bf16.msra.mxu0 %v5875
  %9398 = vmatprep.subr.bf16.mxu0 0
  %9399 = vmatpush1.bf16.msra.mxu0 %v5878
  %9400 = vmatprep.subr.bf16.mxu0 0
  %9401 = vmatpush1.bf16.msra.mxu0 %v5881
  %9402 = vmatprep.subr.bf16.mxu0 0
  %9403 = vmatpush1.bf16.msra.mxu0 %v5884
  %9404 = vmatprep.subr.bf16.mxu0 0
  %9405 = vmatpush1.bf16.msra.mxu0 %v5887
  %9406 = vmatprep.subr.bf16.mxu0 0
  %9407 = vmatpush1.bf16.msra.mxu0 %v5890
  %9408 = vmatprep.subr.bf16.mxu0 0
  %9409 = vmatpush1.bf16.msra.mxu0 %v5893
  %9410 = vmatprep.subr.bf16.mxu0 0
  %9411 = vmatpush1.bf16.msra.mxu0 %v5896
  %9412 = vmatprep.subr.bf16.mxu0 0
  %9413 = vmatpush1.bf16.msra.mxu0 %v5899
  %9414 = vmatprep.subr.bf16.mxu0 0
  %9415 = vmatpush1.bf16.msra.mxu0 %v5902
  %9416 = vmatprep.subr.bf16.mxu0 0
  %9417 = vmatpush1.bf16.msra.mxu0 %v5905
  %9418 = vmatprep.mubr.bf16.mxu0 %v79
  %9419 = vmatmul.mubr.bf16.gmra.mrb[0].mxu0 %v78
  %v9420 = vpop.f32.mrb[0].mxu0
  %v9421 = vadd.f32 %v1774, %v9420
  %v9422 = vpop.f32.mrb[0].mxu0
  %v9423 = vpop.f32.mrb[0].mxu0
  %v9424 = vpop.f32.mrb[0].mxu0
  %9425 = vdwg.mxu0
  %9426 = vmatprep.subr.bf16.mxu0 0
  %9427 = vmatpush1.bf16.msra.mxu0 %v5908
  %9428 = vmatprep.subr.bf16.mxu0 0
  %9429 = vmatpush1.bf16.msra.mxu0 %v5911
  %9430 = vmatprep.subr.bf16.mxu0 0
  %9431 = vmatpush1.bf16.msra.mxu0 %v5914
  %9432 = vmatprep.subr.bf16.mxu0 0
  %9433 = vmatpush1.bf16.msra.mxu0 %v5917
  %9434 = vmatprep.subr.bf16.mxu0 0
  %9435 = vmatpush1.bf16.msra.mxu0 %v5920
  %9436 = vmatprep.subr.bf16.mxu0 0
  %9437 = vmatpush1.bf16.msra.mxu0 %v5923
  %9438 = vmatprep.subr.bf16.mxu0 0
  %9439 = vmatpush1.bf16.msra.mxu0 %v5926
  %9440 = vmatprep.subr.bf16.mxu0 0
  %9441 = vmatpush1.bf16.msra.mxu0 %v5929
  %9442 = vmatprep.subr.bf16.mxu0 0
  %9443 = vmatpush1.bf16.msra.mxu0 %v5932
  %9444 = vmatprep.subr.bf16.mxu0 0
  %9445 = vmatpush1.bf16.msra.mxu0 %v5935
  %9446 = vmatprep.subr.bf16.mxu0 0
  %9447 = vmatpush1.bf16.msra.mxu0 %v5938
  %9448 = vmatprep.subr.bf16.mxu0 0
  %9449 = vmatpush1.bf16.msra.mxu0 %v5941
  %9450 = vmatprep.subr.bf16.mxu0 0
  %9451 = vmatpush1.bf16.msra.mxu0 %v5944
  %9452 = vmatprep.subr.bf16.mxu0 0
  %9453 = vmatpush1.bf16.msra.mxu0 %v5947
  %9454 = vmatprep.subr.bf16.mxu0 0
  %9455 = vmatpush1.bf16.msra.mxu0 %v5950
  %9456 = vmatprep.subr.bf16.mxu0 0
  %9457 = vmatpush1.bf16.msra.mxu0 %v5953
  %9458 = vmatprep.mubr.bf16.mxu0 %v81
  %9459 = vmatmul.mubr.bf16.gmra.mrb[0].mxu0 %v80
  %v9460 = vpop.f32.mrb[0].mxu0
  %v9461 = vadd.f32 %v9421, %v9460
  %v9462 = vpop.f32.mrb[0].mxu0
  %v9463 = vpop.f32.mrb[0].mxu0
  %v9464 = vpop.f32.mrb[0].mxu0
  %9465 = vdwg.mxu0
  %9466 = vmatprep.subr.bf16.mxu0 0
  %9467 = vmatpush1.bf16.msra.mxu0 %v5956
  %9468 = vmatprep.subr.bf16.mxu0 0
  %9469 = vmatpush1.bf16.msra.mxu0 %v5959
  %9470 = vmatprep.subr.bf16.mxu0 0
  %9471 = vmatpush1.bf16.msra.mxu0 %v5962
  %9472 = vmatprep.subr.bf16.mxu0 0
  %9473 = vmatpush1.bf16.msra.mxu0 %v5965
  %9474 = vmatprep.subr.bf16.mxu0 0
  %9475 = vmatpush1.bf16.msra.mxu0 %v5968
  %9476 = vmatprep.subr.bf16.mxu0 0
  %9477 = vmatpush1.bf16.msra.mxu0 %v5971
  %9478 = vmatprep.subr.bf16.mxu0 0
  %9479 = vmatpush1.bf16.msra.mxu0 %v5974
  %9480 = vmatprep.subr.bf16.mxu0 0
  %9481 = vmatpush1.bf16.msra.mxu0 %v5977
  %9482 = vmatprep.subr.bf16.mxu0 0
  %9483 = vmatpush1.bf16.msra.mxu0 %v5980
  %9484 = vmatprep.subr.bf16.mxu0 0
  %9485 = vmatpush1.bf16.msra.mxu0 %v5983
  %9486 = vmatprep.subr.bf16.mxu0 0
  %9487 = vmatpush1.bf16.msra.mxu0 %v5986
  %9488 = vmatprep.subr.bf16.mxu0 0
  %9489 = vmatpush1.bf16.msra.mxu0 %v5989
  %9490 = vmatprep.subr.bf16.mxu0 0
  %9491 = vmatpush1.bf16.msra.mxu0 %v5992
  %9492 = vmatprep.subr.bf16.mxu0 0
  %9493 = vmatpush1.bf16.msra.mxu0 %v5995
  %9494 = vmatprep.subr.bf16.mxu0 0
  %9495 = vmatpush1.bf16.msra.mxu0 %v5998
  %9496 = vmatprep.subr.bf16.mxu0 0
  %9497 = vmatpush1.bf16.msra.mxu0 %v6001
  %9498 = vmatprep.mubr.bf16.mxu0 %v83
  %9499 = vmatmul.mubr.bf16.gmra.mrb[0].mxu0 %v82
  %v9500 = vpop.f32.mrb[0].mxu0
  %v9501 = vadd.f32 %v9461, %v9500
  %v9502 = vpop.f32.mrb[0].mxu0
  %v9503 = vpop.f32.mrb[0].mxu0
  %v9504 = vpop.f32.mrb[0].mxu0
  %9505 = vdwg.mxu0
  %9506 = vmatprep.subr.bf16.mxu0 0
  %9507 = vmatpush1.bf16.msra.mxu0 %v6004
  %9508 = vmatprep.subr.bf16.mxu0 0
  %9509 = vmatpush1.bf16.msra.mxu0 %v6007
  %9510 = vmatprep.subr.bf16.mxu0 0
  %9511 = vmatpush1.bf16.msra.mxu0 %v6010
  %9512 = vmatprep.subr.bf16.mxu0 0
  %9513 = vmatpush1.bf16.msra.mxu0 %v6013
  %9514 = vmatprep.subr.bf16.mxu0 0
  %9515 = vmatpush1.bf16.msra.mxu0 %v6016
  %9516 = vmatprep.subr.bf16.mxu0 0
  %9517 = vmatpush1.bf16.msra.mxu0 %v6019
  %9518 = vmatprep.subr.bf16.mxu0 0
  %9519 = vmatpush1.bf16.msra.mxu0 %v6022
  %9520 = vmatprep.subr.bf16.mxu0 0
  %9521 = vmatpush1.bf16.msra.mxu0 %v6025
  %9522 = vmatprep.subr.bf16.mxu0 0
  %9523 = vmatpush1.bf16.msra.mxu0 %v6028
  %9524 = vmatprep.subr.bf16.mxu0 0
  %9525 = vmatpush1.bf16.msra.mxu0 %v6031
  %9526 = vmatprep.subr.bf16.mxu0 0
  %9527 = vmatpush1.bf16.msra.mxu0 %v6034
  %9528 = vmatprep.subr.bf16.mxu0 0
  %9529 = vmatpush1.bf16.msra.mxu0 %v6037
  %9530 = vmatprep.subr.bf16.mxu0 0
  %9531 = vmatpush1.bf16.msra.mxu0 %v6040
  %9532 = vmatprep.subr.bf16.mxu0 0
  %9533 = vmatpush1.bf16.msra.mxu0 %v6043
  %9534 = vmatprep.subr.bf16.mxu0 0
  %9535 = vmatpush1.bf16.msra.mxu0 %v6046
  %9536 = vmatprep.subr.bf16.mxu0 0
  %9537 = vmatpush1.bf16.msra.mxu0 %v6049
  %9538 = vmatprep.mubr.bf16.mxu0 %v85
  %9539 = vmatmul.mubr.bf16.gmra.mrb[0].mxu0 %v84
  %v9540 = vpop.f32.mrb[0].mxu0
  %v9541 = vadd.f32 %v9501, %v9540
  %v9542 = vpop.f32.mrb[0].mxu0
  %v9543 = vpop.f32.mrb[0].mxu0
  %v9544 = vpop.f32.mrb[0].mxu0
  %9545 = vdwg.mxu0
  %9546 = vmatprep.subr.bf16.mxu0 0
  %9547 = vmatpush1.bf16.msra.mxu0 %v6052
  %9548 = vmatprep.subr.bf16.mxu0 0
  %9549 = vmatpush1.bf16.msra.mxu0 %v6055
  %9550 = vmatprep.subr.bf16.mxu0 0
  %9551 = vmatpush1.bf16.msra.mxu0 %v6058
  %9552 = vmatprep.subr.bf16.mxu0 0
  %9553 = vmatpush1.bf16.msra.mxu0 %v6061
  %9554 = vmatprep.subr.bf16.mxu0 0
  %9555 = vmatpush1.bf16.msra.mxu0 %v6064
  %9556 = vmatprep.subr.bf16.mxu0 0
  %9557 = vmatpush1.bf16.msra.mxu0 %v6067
  %9558 = vmatprep.subr.bf16.mxu0 0
  %9559 = vmatpush1.bf16.msra.mxu0 %v6070
  %9560 = vmatprep.subr.bf16.mxu0 0
  %9561 = vmatpush1.bf16.msra.mxu0 %v6073
  %9562 = vmatprep.subr.bf16.mxu0 0
  %9563 = vmatpush1.bf16.msra.mxu0 %v6076
  %9564 = vmatprep.subr.bf16.mxu0 0
  %9565 = vmatpush1.bf16.msra.mxu0 %v6079
  %9566 = vmatprep.subr.bf16.mxu0 0
  %9567 = vmatpush1.bf16.msra.mxu0 %v6082
  %9568 = vmatprep.subr.bf16.mxu0 0
  %9569 = vmatpush1.bf16.msra.mxu0 %v6085
  %9570 = vmatprep.subr.bf16.mxu0 0
  %9571 = vmatpush1.bf16.msra.mxu0 %v6088
  %9572 = vmatprep.subr.bf16.mxu0 0
  %9573 = vmatpush1.bf16.msra.mxu0 %v6091
  %9574 = vmatprep.subr.bf16.mxu0 0
  %9575 = vmatpush1.bf16.msra.mxu0 %v6094
  %9576 = vmatprep.subr.bf16.mxu0 0
  %9577 = vmatpush1.bf16.msra.mxu0 %v6097
  %9578 = vmatprep.mubr.bf16.mxu0 %v87
  %9579 = vmatmul.mubr.bf16.gmra.mrb[0].mxu0 %v86
  %v9580 = vpop.f32.mrb[0].mxu0
  %v9581 = vadd.f32 %v9541, %v9580
  %v9582 = vpop.f32.mrb[0].mxu0
  %v9583 = vpop.f32.mrb[0].mxu0
  %v9584 = vpop.f32.mrb[0].mxu0
  %9585 = vdwg.mxu0
  %9586 = vmatprep.subr.bf16.mxu0 0
  %9587 = vmatpush1.bf16.msra.mxu0 %v6100
  %9588 = vmatprep.subr.bf16.mxu0 0
  %9589 = vmatpush1.bf16.msra.mxu0 %v6103
  %9590 = vmatprep.subr.bf16.mxu0 0
  %9591 = vmatpush1.bf16.msra.mxu0 %v6106
  %9592 = vmatprep.subr.bf16.mxu0 0
  %9593 = vmatpush1.bf16.msra.mxu0 %v6109
  %9594 = vmatprep.subr.bf16.mxu0 0
  %9595 = vmatpush1.bf16.msra.mxu0 %v6112
  %9596 = vmatprep.subr.bf16.mxu0 0
  %9597 = vmatpush1.bf16.msra.mxu0 %v6115
  %9598 = vmatprep.subr.bf16.mxu0 0
  %9599 = vmatpush1.bf16.msra.mxu0 %v6118
  %9600 = vmatprep.subr.bf16.mxu0 0
  %9601 = vmatpush1.bf16.msra.mxu0 %v6121
  %9602 = vmatprep.subr.bf16.mxu0 0
  %9603 = vmatpush1.bf16.msra.mxu0 %v6124
  %9604 = vmatprep.subr.bf16.mxu0 0
  %9605 = vmatpush1.bf16.msra.mxu0 %v6127
  %9606 = vmatprep.subr.bf16.mxu0 0
  %9607 = vmatpush1.bf16.msra.mxu0 %v6130
  %9608 = vmatprep.subr.bf16.mxu0 0
  %9609 = vmatpush1.bf16.msra.mxu0 %v6133
  %9610 = vmatprep.subr.bf16.mxu0 0
  %9611 = vmatpush1.bf16.msra.mxu0 %v6136
  %9612 = vmatprep.subr.bf16.mxu0 0
  %9613 = vmatpush1.bf16.msra.mxu0 %v6139
  %9614 = vmatprep.subr.bf16.mxu0 0
  %9615 = vmatpush1.bf16.msra.mxu0 %v6142
  %9616 = vmatprep.subr.bf16.mxu0 0
  %9617 = vmatpush1.bf16.msra.mxu0 %v6145
  %9618 = vmatprep.mubr.bf16.mxu0 %v89
  %9619 = vmatmul.mubr.bf16.gmra.mrb[0].mxu0 %v88
  %v9620 = vpop.f32.mrb[0].mxu0
  %v9621 = vadd.f32 %v9581, %v9620
  %v9622 = vpop.f32.mrb[0].mxu0
  %v9623 = vpop.f32.mrb[0].mxu0
  %v9624 = vpop.f32.mrb[0].mxu0
  %9625 = vdwg.mxu0
  %9626 = vmatprep.subr.bf16.mxu0 0
  %9627 = vmatpush1.bf16.msra.mxu0 %v6148
  %9628 = vmatprep.subr.bf16.mxu0 0
  %9629 = vmatpush1.bf16.msra.mxu0 %v6151
  %9630 = vmatprep.subr.bf16.mxu0 0
  %9631 = vmatpush1.bf16.msra.mxu0 %v6154
  %9632 = vmatprep.subr.bf16.mxu0 0
  %9633 = vmatpush1.bf16.msra.mxu0 %v6157
  %9634 = vmatprep.subr.bf16.mxu0 0
  %9635 = vmatpush1.bf16.msra.mxu0 %v6160
  %9636 = vmatprep.subr.bf16.mxu0 0
  %9637 = vmatpush1.bf16.msra.mxu0 %v6163
  %9638 = vmatprep.subr.bf16.mxu0 0
  %9639 = vmatpush1.bf16.msra.mxu0 %v6166
  %9640 = vmatprep.subr.bf16.mxu0 0
  %9641 = vmatpush1.bf16.msra.mxu0 %v6169
  %9642 = vmatprep.subr.bf16.mxu0 0
  %9643 = vmatpush1.bf16.msra.mxu0 %v6172
  %9644 = vmatprep.subr.bf16.mxu0 0
  %9645 = vmatpush1.bf16.msra.mxu0 %v6175
  %9646 = vmatprep.subr.bf16.mxu0 0
  %9647 = vmatpush1.bf16.msra.mxu0 %v6178
  %9648 = vmatprep.subr.bf16.mxu0 0
  %9649 = vmatpush1.bf16.msra.mxu0 %v6181
  %9650 = vmatprep.subr.bf16.mxu0 0
  %9651 = vmatpush1.bf16.msra.mxu0 %v6184
  %9652 = vmatprep.subr.bf16.mxu0 0
  %9653 = vmatpush1.bf16.msra.mxu0 %v6187
  %9654 = vmatprep.subr.bf16.mxu0 0
  %9655 = vmatpush1.bf16.msra.mxu0 %v6190
  %9656 = vmatprep.subr.bf16.mxu0 0
  %9657 = vmatpush1.bf16.msra.mxu0 %v6193
  %9658 = vmatprep.mubr.bf16.mxu0 %v91
  %9659 = vmatmul.mubr.bf16.gmra.mrb[0].mxu0 %v90
  %v9660 = vpop.f32.mrb[0].mxu0
  %v9661 = vadd.f32 %v9621, %v9660
  %v9662 = vpop.f32.mrb[0].mxu0
  %v9663 = vpop.f32.mrb[0].mxu0
  %v9664 = vpop.f32.mrb[0].mxu0
  %9665 = vdwg.mxu0
  %9666 = vmatprep.subr.bf16.mxu0 0
  %9667 = vmatpush1.bf16.msra.mxu0 %v6196
  %9668 = vmatprep.subr.bf16.mxu0 0
  %9669 = vmatpush1.bf16.msra.mxu0 %v6199
  %9670 = vmatprep.subr.bf16.mxu0 0
  %9671 = vmatpush1.bf16.msra.mxu0 %v6202
  %9672 = vmatprep.subr.bf16.mxu0 0
  %9673 = vmatpush1.bf16.msra.mxu0 %v6205
  %9674 = vmatprep.subr.bf16.mxu0 0
  %9675 = vmatpush1.bf16.msra.mxu0 %v6208
  %9676 = vmatprep.subr.bf16.mxu0 0
  %9677 = vmatpush1.bf16.msra.mxu0 %v6211
  %9678 = vmatprep.subr.bf16.mxu0 0
  %9679 = vmatpush1.bf16.msra.mxu0 %v6214
  %9680 = vmatprep.subr.bf16.mxu0 0
  %9681 = vmatpush1.bf16.msra.mxu0 %v6217
  %9682 = vmatprep.subr.bf16.mxu0 0
  %9683 = vmatpush1.bf16.msra.mxu0 %v6220
  %9684 = vmatprep.subr.bf16.mxu0 0
  %9685 = vmatpush1.bf16.msra.mxu0 %v6223
  %9686 = vmatprep.subr.bf16.mxu0 0
  %9687 = vmatpush1.bf16.msra.mxu0 %v6226
  %9688 = vmatprep.subr.bf16.mxu0 0
  %9689 = vmatpush1.bf16.msra.mxu0 %v6229
  %9690 = vmatprep.subr.bf16.mxu0 0
  %9691 = vmatpush1.bf16.msra.mxu0 %v6232
  %9692 = vmatprep.subr.bf16.mxu0 0
  %9693 = vmatpush1.bf16.msra.mxu0 %v6235
  %9694 = vmatprep.subr.bf16.mxu0 0
  %9695 = vmatpush1.bf16.msra.mxu0 %v6238
  %9696 = vmatprep.subr.bf16.mxu0 0
  %9697 = vmatpush1.bf16.msra.mxu0 %v6241
  %9698 = vmatprep.mubr.bf16.mxu0 %v93
  %9699 = vmatmul.mubr.bf16.gmra.mrb[0].mxu0 %v92
  %v9700 = vpop.f32.mrb[0].mxu0
  %v9701 = vadd.f32 %v9661, %v9700
  %v9702 = vpop.f32.mrb[0].mxu0
  %v9703 = vpop.f32.mrb[0].mxu0
  %v9704 = vpop.f32.mrb[0].mxu0
  %9705 = vdwg.mxu0
  %9706 = vmatprep.subr.bf16.mxu0 0
  %9707 = vmatpush1.bf16.msra.mxu0 %v6244
  %9708 = vmatprep.subr.bf16.mxu0 0
  %9709 = vmatpush1.bf16.msra.mxu0 %v6247
  %9710 = vmatprep.subr.bf16.mxu0 0
  %9711 = vmatpush1.bf16.msra.mxu0 %v6250
  %9712 = vmatprep.subr.bf16.mxu0 0
  %9713 = vmatpush1.bf16.msra.mxu0 %v6253
  %9714 = vmatprep.subr.bf16.mxu0 0
  %9715 = vmatpush1.bf16.msra.mxu0 %v6256
  %9716 = vmatprep.subr.bf16.mxu0 0
  %9717 = vmatpush1.bf16.msra.mxu0 %v6259
  %9718 = vmatprep.subr.bf16.mxu0 0
  %9719 = vmatpush1.bf16.msra.mxu0 %v6262
  %9720 = vmatprep.subr.bf16.mxu0 0
  %9721 = vmatpush1.bf16.msra.mxu0 %v6265
  %9722 = vmatprep.subr.bf16.mxu0 0
  %9723 = vmatpush1.bf16.msra.mxu0 %v6268
  %9724 = vmatprep.subr.bf16.mxu0 0
  %9725 = vmatpush1.bf16.msra.mxu0 %v6271
  %9726 = vmatprep.subr.bf16.mxu0 0
  %9727 = vmatpush1.bf16.msra.mxu0 %v6274
  %9728 = vmatprep.subr.bf16.mxu0 0
  %9729 = vmatpush1.bf16.msra.mxu0 %v6277
  %9730 = vmatprep.subr.bf16.mxu0 0
  %9731 = vmatpush1.bf16.msra.mxu0 %v6280
  %9732 = vmatprep.subr.bf16.mxu0 0
  %9733 = vmatpush1.bf16.msra.mxu0 %v6283
  %9734 = vmatprep.subr.bf16.mxu0 0
  %9735 = vmatpush1.bf16.msra.mxu0 %v6286
  %9736 = vmatprep.subr.bf16.mxu0 0
  %9737 = vmatpush1.bf16.msra.mxu0 %v6289
  %9738 = vmatprep.mubr.bf16.mxu0 %v95
  %9739 = vmatmul.mubr.bf16.gmra.mrb[0].mxu0 %v94
  %v9740 = vpop.f32.mrb[0].mxu0
  %v9741 = vadd.f32 %v9701, %v9740
  %v9742 = vpop.f32.mrb[0].mxu0
  %v9743 = vpop.f32.mrb[0].mxu0
  %v9744 = vpop.f32.mrb[0].mxu0
  %9745 = vdwg.mxu0
  %9746 = vmatprep.subr.bf16.mxu0 0
  %9747 = vmatpush1.bf16.msra.mxu0 %v6292
  %9748 = vmatprep.subr.bf16.mxu0 0
  %9749 = vmatpush1.bf16.msra.mxu0 %v6295
  %9750 = vmatprep.subr.bf16.mxu0 0
  %9751 = vmatpush1.bf16.msra.mxu0 %v6298
  %9752 = vmatprep.subr.bf16.mxu0 0
  %9753 = vmatpush1.bf16.msra.mxu0 %v6301
  %9754 = vmatprep.subr.bf16.mxu0 0
  %9755 = vmatpush1.bf16.msra.mxu0 %v6304
  %9756 = vmatprep.subr.bf16.mxu0 0
  %9757 = vmatpush1.bf16.msra.mxu0 %v6307
  %9758 = vmatprep.subr.bf16.mxu0 0
  %9759 = vmatpush1.bf16.msra.mxu0 %v6310
  %9760 = vmatprep.subr.bf16.mxu0 0
  %9761 = vmatpush1.bf16.msra.mxu0 %v6313
  %9762 = vmatprep.subr.bf16.mxu0 0
  %9763 = vmatpush1.bf16.msra.mxu0 %v6316
  %9764 = vmatprep.subr.bf16.mxu0 0
  %9765 = vmatpush1.bf16.msra.mxu0 %v6319
  %9766 = vmatprep.subr.bf16.mxu0 0
  %9767 = vmatpush1.bf16.msra.mxu0 %v6322
  %9768 = vmatprep.subr.bf16.mxu0 0
  %9769 = vmatpush1.bf16.msra.mxu0 %v6325
  %9770 = vmatprep.subr.bf16.mxu0 0
  %9771 = vmatpush1.bf16.msra.mxu0 %v6328
  %9772 = vmatprep.subr.bf16.mxu0 0
  %9773 = vmatpush1.bf16.msra.mxu0 %v6331
  %9774 = vmatprep.subr.bf16.mxu0 0
  %9775 = vmatpush1.bf16.msra.mxu0 %v6334
  %9776 = vmatprep.subr.bf16.mxu0 0
  %9777 = vmatpush1.bf16.msra.mxu0 %v6337
  %9778 = vmatprep.mubr.bf16.mxu0 %v97
  %9779 = vmatmul.mubr.bf16.gmra.mrb[0].mxu0 %v96
  %v9780 = vpop.f32.mrb[0].mxu0
  %v9781 = vadd.f32 %v9741, %v9780
  %v9782 = vpop.f32.mrb[0].mxu0
  %v9783 = vpop.f32.mrb[0].mxu0
  %v9784 = vpop.f32.mrb[0].mxu0
  %9785 = vdwg.mxu0
  %9786 = vmatprep.subr.bf16.mxu0 0
  %9787 = vmatpush1.bf16.msra.mxu0 %v6340
  %9788 = vmatprep.subr.bf16.mxu0 0
  %9789 = vmatpush1.bf16.msra.mxu0 %v6343
  %9790 = vmatprep.subr.bf16.mxu0 0
  %9791 = vmatpush1.bf16.msra.mxu0 %v6346
  %9792 = vmatprep.subr.bf16.mxu0 0
  %9793 = vmatpush1.bf16.msra.mxu0 %v6349
  %9794 = vmatprep.subr.bf16.mxu0 0
  %9795 = vmatpush1.bf16.msra.mxu0 %v6352
  %9796 = vmatprep.subr.bf16.mxu0 0
  %9797 = vmatpush1.bf16.msra.mxu0 %v6355
  %9798 = vmatprep.subr.bf16.mxu0 0
  %9799 = vmatpush1.bf16.msra.mxu0 %v6358
  %9800 = vmatprep.subr.bf16.mxu0 0
  %9801 = vmatpush1.bf16.msra.mxu0 %v6361
  %9802 = vmatprep.subr.bf16.mxu0 0
  %9803 = vmatpush1.bf16.msra.mxu0 %v6364
  %9804 = vmatprep.subr.bf16.mxu0 0
  %9805 = vmatpush1.bf16.msra.mxu0 %v6367
  %9806 = vmatprep.subr.bf16.mxu0 0
  %9807 = vmatpush1.bf16.msra.mxu0 %v6370
  %9808 = vmatprep.subr.bf16.mxu0 0
  %9809 = vmatpush1.bf16.msra.mxu0 %v6373
  %9810 = vmatprep.subr.bf16.mxu0 0
  %9811 = vmatpush1.bf16.msra.mxu0 %v6376
  %9812 = vmatprep.subr.bf16.mxu0 0
  %9813 = vmatpush1.bf16.msra.mxu0 %v6379
  %9814 = vmatprep.subr.bf16.mxu0 0
  %9815 = vmatpush1.bf16.msra.mxu0 %v6382
  %9816 = vmatprep.subr.bf16.mxu0 0
  %9817 = vmatpush1.bf16.msra.mxu0 %v6385
  %9818 = vmatprep.mubr.bf16.mxu0 %v99
  %9819 = vmatmul.mubr.bf16.gmra.mrb[0].mxu0 %v98
  %v9820 = vpop.f32.mrb[0].mxu0
  %v9821 = vadd.f32 %v9781, %v9820
  %v9822 = vpop.f32.mrb[0].mxu0
  %v9823 = vpop.f32.mrb[0].mxu0
  %v9824 = vpop.f32.mrb[0].mxu0
  %9825 = vdwg.mxu0
  %9826 = vmatprep.subr.bf16.mxu0 0
  %9827 = vmatpush1.bf16.msra.mxu0 %v6388
  %9828 = vmatprep.subr.bf16.mxu0 0
  %9829 = vmatpush1.bf16.msra.mxu0 %v6391
  %9830 = vmatprep.subr.bf16.mxu0 0
  %9831 = vmatpush1.bf16.msra.mxu0 %v6394
  %9832 = vmatprep.subr.bf16.mxu0 0
  %9833 = vmatpush1.bf16.msra.mxu0 %v6397
  %9834 = vmatprep.subr.bf16.mxu0 0
  %9835 = vmatpush1.bf16.msra.mxu0 %v6400
  %9836 = vmatprep.subr.bf16.mxu0 0
  %9837 = vmatpush1.bf16.msra.mxu0 %v6403
  %9838 = vmatprep.subr.bf16.mxu0 0
  %9839 = vmatpush1.bf16.msra.mxu0 %v6406
  %9840 = vmatprep.subr.bf16.mxu0 0
  %9841 = vmatpush1.bf16.msra.mxu0 %v6409
  %9842 = vmatprep.subr.bf16.mxu0 0
  %9843 = vmatpush1.bf16.msra.mxu0 %v6412
  %9844 = vmatprep.subr.bf16.mxu0 0
  %9845 = vmatpush1.bf16.msra.mxu0 %v6415
  %9846 = vmatprep.subr.bf16.mxu0 0
  %9847 = vmatpush1.bf16.msra.mxu0 %v6418
  %9848 = vmatprep.subr.bf16.mxu0 0
  %9849 = vmatpush1.bf16.msra.mxu0 %v6421
  %9850 = vmatprep.subr.bf16.mxu0 0
  %9851 = vmatpush1.bf16.msra.mxu0 %v6424
  %9852 = vmatprep.subr.bf16.mxu0 0
  %9853 = vmatpush1.bf16.msra.mxu0 %v6427
  %9854 = vmatprep.subr.bf16.mxu0 0
  %9855 = vmatpush1.bf16.msra.mxu0 %v6430
  %9856 = vmatprep.subr.bf16.mxu0 0
  %9857 = vmatpush1.bf16.msra.mxu0 %v6433
  %9858 = vmatprep.mubr.bf16.mxu0 %v101
  %9859 = vmatmul.mubr.bf16.gmra.mrb[0].mxu0 %v100
  %v9860 = vpop.f32.mrb[0].mxu0
  %v9861 = vadd.f32 %v9821, %v9860
  %v9862 = vpop.f32.mrb[0].mxu0
  %v9863 = vpop.f32.mrb[0].mxu0
  %v9864 = vpop.f32.mrb[0].mxu0
  %9865 = vdwg.mxu0
  %9866 = vmatprep.subr.bf16.mxu0 0
  %9867 = vmatpush1.bf16.msra.mxu0 %v6436
  %9868 = vmatprep.subr.bf16.mxu0 0
  %9869 = vmatpush1.bf16.msra.mxu0 %v6439
  %9870 = vmatprep.subr.bf16.mxu0 0
  %9871 = vmatpush1.bf16.msra.mxu0 %v6442
  %9872 = vmatprep.subr.bf16.mxu0 0
  %9873 = vmatpush1.bf16.msra.mxu0 %v6445
  %9874 = vmatprep.subr.bf16.mxu0 0
  %9875 = vmatpush1.bf16.msra.mxu0 %v6448
  %9876 = vmatprep.subr.bf16.mxu0 0
  %9877 = vmatpush1.bf16.msra.mxu0 %v6451
  %9878 = vmatprep.subr.bf16.mxu0 0
  %9879 = vmatpush1.bf16.msra.mxu0 %v6454
  %9880 = vmatprep.subr.bf16.mxu0 0
  %9881 = vmatpush1.bf16.msra.mxu0 %v6457
  %9882 = vmatprep.subr.bf16.mxu0 0
  %9883 = vmatpush1.bf16.msra.mxu0 %v6460
  %9884 = vmatprep.subr.bf16.mxu0 0
  %9885 = vmatpush1.bf16.msra.mxu0 %v6463
  %9886 = vmatprep.subr.bf16.mxu0 0
  %9887 = vmatpush1.bf16.msra.mxu0 %v6466
  %9888 = vmatprep.subr.bf16.mxu0 0
  %9889 = vmatpush1.bf16.msra.mxu0 %v6469
  %9890 = vmatprep.subr.bf16.mxu0 0
  %9891 = vmatpush1.bf16.msra.mxu0 %v6472
  %9892 = vmatprep.subr.bf16.mxu0 0
  %9893 = vmatpush1.bf16.msra.mxu0 %v6475
  %9894 = vmatprep.subr.bf16.mxu0 0
  %9895 = vmatpush1.bf16.msra.mxu0 %v6478
  %9896 = vmatprep.subr.bf16.mxu0 0
  %9897 = vmatpush1.bf16.msra.mxu0 %v6481
  %9898 = vmatprep.mubr.bf16.mxu0 %v103
  %9899 = vmatmul.mubr.bf16.gmra.mrb[0].mxu0 %v102
  %v9900 = vpop.f32.mrb[0].mxu0
  %v9901 = vadd.f32 %v9861, %v9900
  %v9902 = vpop.f32.mrb[0].mxu0
  %v9903 = vpop.f32.mrb[0].mxu0
  %v9904 = vpop.f32.mrb[0].mxu0
  %9905 = vdwg.mxu0
  %9906 = vmatprep.subr.bf16.mxu0 0
  %9907 = vmatpush1.bf16.msra.mxu0 %v6484
  %9908 = vmatprep.subr.bf16.mxu0 0
  %9909 = vmatpush1.bf16.msra.mxu0 %v6487
  %9910 = vmatprep.subr.bf16.mxu0 0
  %9911 = vmatpush1.bf16.msra.mxu0 %v6490
  %9912 = vmatprep.subr.bf16.mxu0 0
  %9913 = vmatpush1.bf16.msra.mxu0 %v6493
  %9914 = vmatprep.subr.bf16.mxu0 0
  %9915 = vmatpush1.bf16.msra.mxu0 %v6496
  %9916 = vmatprep.subr.bf16.mxu0 0
  %9917 = vmatpush1.bf16.msra.mxu0 %v6499
  %9918 = vmatprep.subr.bf16.mxu0 0
  %9919 = vmatpush1.bf16.msra.mxu0 %v6502
  %9920 = vmatprep.subr.bf16.mxu0 0
  %9921 = vmatpush1.bf16.msra.mxu0 %v6505
  %9922 = vmatprep.subr.bf16.mxu0 0
  %9923 = vmatpush1.bf16.msra.mxu0 %v6508
  %9924 = vmatprep.subr.bf16.mxu0 0
  %9925 = vmatpush1.bf16.msra.mxu0 %v6511
  %9926 = vmatprep.subr.bf16.mxu0 0
  %9927 = vmatpush1.bf16.msra.mxu0 %v6514
  %9928 = vmatprep.subr.bf16.mxu0 0
  %9929 = vmatpush1.bf16.msra.mxu0 %v6517
  %9930 = vmatprep.subr.bf16.mxu0 0
  %9931 = vmatpush1.bf16.msra.mxu0 %v6520
  %9932 = vmatprep.subr.bf16.mxu0 0
  %9933 = vmatpush1.bf16.msra.mxu0 %v6523
  %9934 = vmatprep.subr.bf16.mxu0 0
  %9935 = vmatpush1.bf16.msra.mxu0 %v6526
  %9936 = vmatprep.subr.bf16.mxu0 0
  %9937 = vmatpush1.bf16.msra.mxu0 %v6529
  %9938 = vmatprep.mubr.bf16.mxu0 %v105
  %9939 = vmatmul.mubr.bf16.gmra.mrb[0].mxu0 %v104
  %v9940 = vpop.f32.mrb[0].mxu0
  %v9941 = vadd.f32 %v9901, %v9940
  %v9942 = vpop.f32.mrb[0].mxu0
  %v9943 = vpop.f32.mrb[0].mxu0
  %v9944 = vpop.f32.mrb[0].mxu0
  %9945 = vdwg.mxu0
  %9946 = vmatprep.subr.bf16.mxu0 0
  %9947 = vmatpush1.bf16.msra.mxu0 %v6532
  %9948 = vmatprep.subr.bf16.mxu0 0
  %9949 = vmatpush1.bf16.msra.mxu0 %v6535
  %9950 = vmatprep.subr.bf16.mxu0 0
  %9951 = vmatpush1.bf16.msra.mxu0 %v6538
  %9952 = vmatprep.subr.bf16.mxu0 0
  %9953 = vmatpush1.bf16.msra.mxu0 %v6541
  %9954 = vmatprep.subr.bf16.mxu0 0
  %9955 = vmatpush1.bf16.msra.mxu0 %v6544
  %9956 = vmatprep.subr.bf16.mxu0 0
  %9957 = vmatpush1.bf16.msra.mxu0 %v6547
  %9958 = vmatprep.subr.bf16.mxu0 0
  %9959 = vmatpush1.bf16.msra.mxu0 %v6550
  %9960 = vmatprep.subr.bf16.mxu0 0
  %9961 = vmatpush1.bf16.msra.mxu0 %v6553
  %9962 = vmatprep.subr.bf16.mxu0 0
  %9963 = vmatpush1.bf16.msra.mxu0 %v6556
  %9964 = vmatprep.subr.bf16.mxu0 0
  %9965 = vmatpush1.bf16.msra.mxu0 %v6559
  %9966 = vmatprep.subr.bf16.mxu0 0
  %9967 = vmatpush1.bf16.msra.mxu0 %v6562
  %9968 = vmatprep.subr.bf16.mxu0 0
  %9969 = vmatpush1.bf16.msra.mxu0 %v6565
  %9970 = vmatprep.subr.bf16.mxu0 0
  %9971 = vmatpush1.bf16.msra.mxu0 %v6568
  %9972 = vmatprep.subr.bf16.mxu0 0
  %9973 = vmatpush1.bf16.msra.mxu0 %v6571
  %9974 = vmatprep.subr.bf16.mxu0 0
  %9975 = vmatpush1.bf16.msra.mxu0 %v6574
  %9976 = vmatprep.subr.bf16.mxu0 0
  %9977 = vmatpush1.bf16.msra.mxu0 %v6577
  %9978 = vmatprep.mubr.bf16.mxu0 %v107
  %9979 = vmatmul.mubr.bf16.gmra.mrb[0].mxu0 %v106
  %v9980 = vpop.f32.mrb[0].mxu0
  %v9981 = vadd.f32 %v9941, %v9980
  %v9982 = vpop.f32.mrb[0].mxu0
  %v9983 = vpop.f32.mrb[0].mxu0
  %v9984 = vpop.f32.mrb[0].mxu0
  %9985 = vdwg.mxu0
  %9986 = vmatprep.subr.bf16.mxu0 0
  %9987 = vmatpush1.bf16.msra.mxu0 %v6580
  %9988 = vmatprep.subr.bf16.mxu0 0
  %9989 = vmatpush1.bf16.msra.mxu0 %v6583
  %9990 = vmatprep.subr.bf16.mxu0 0
  %9991 = vmatpush1.bf16.msra.mxu0 %v6586
  %9992 = vmatprep.subr.bf16.mxu0 0
  %9993 = vmatpush1.bf16.msra.mxu0 %v6589
  %9994 = vmatprep.subr.bf16.mxu0 0
  %9995 = vmatpush1.bf16.msra.mxu0 %v6592
  %9996 = vmatprep.subr.bf16.mxu0 0
  %9997 = vmatpush1.bf16.msra.mxu0 %v6595
  %9998 = vmatprep.subr.bf16.mxu0 0
  %9999 = vmatpush1.bf16.msra.mxu0 %v6598
  %10000 = vmatprep.subr.bf16.mxu0 0
  %10001 = vmatpush1.bf16.msra.mxu0 %v6601
  %10002 = vmatprep.subr.bf16.mxu0 0
  %10003 = vmatpush1.bf16.msra.mxu0 %v6604
  %10004 = vmatprep.subr.bf16.mxu0 0
  %10005 = vmatpush1.bf16.msra.mxu0 %v6607
  %10006 = vmatprep.subr.bf16.mxu0 0
  %10007 = vmatpush1.bf16.msra.mxu0 %v6610
  %10008 = vmatprep.subr.bf16.mxu0 0
  %10009 = vmatpush1.bf16.msra.mxu0 %v6613
  %10010 = vmatprep.subr.bf16.mxu0 0
  %10011 = vmatpush1.bf16.msra.mxu0 %v6616
  %10012 = vmatprep.subr.bf16.mxu0 0
  %10013 = vmatpush1.bf16.msra.mxu0 %v6619
  %10014 = vmatprep.subr.bf16.mxu0 0
  %10015 = vmatpush1.bf16.msra.mxu0 %v6622
  %10016 = vmatprep.subr.bf16.mxu0 0
  %10017 = vmatpush1.bf16.msra.mxu0 %v6625
  %10018 = vmatprep.mubr.bf16.mxu0 %v109
  %10019 = vmatmul.mubr.bf16.gmra.mrb[0].mxu0 %v108
  %v10020 = vpop.f32.mrb[0].mxu0
  %v10021 = vadd.f32 %v9981, %v10020
  %v10022 = vpop.f32.mrb[0].mxu0
  %v10023 = vpop.f32.mrb[0].mxu0
  %v10024 = vpop.f32.mrb[0].mxu0
  %10025 = vdwg.mxu0
  %10026 = vmatprep.subr.bf16.mxu0 0
  %10027 = vmatpush1.bf16.msra.mxu0 %v6628
  %10028 = vmatprep.subr.bf16.mxu0 0
  %10029 = vmatpush1.bf16.msra.mxu0 %v6631
  %10030 = vmatprep.subr.bf16.mxu0 0
  %10031 = vmatpush1.bf16.msra.mxu0 %v6634
  %10032 = vmatprep.subr.bf16.mxu0 0
  %10033 = vmatpush1.bf16.msra.mxu0 %v6637
  %10034 = vmatprep.subr.bf16.mxu0 0
  %10035 = vmatpush1.bf16.msra.mxu0 %v6640
  %10036 = vmatprep.subr.bf16.mxu0 0
  %10037 = vmatpush1.bf16.msra.mxu0 %v6643
  %10038 = vmatprep.subr.bf16.mxu0 0
  %10039 = vmatpush1.bf16.msra.mxu0 %v6646
  %10040 = vmatprep.subr.bf16.mxu0 0
  %10041 = vmatpush1.bf16.msra.mxu0 %v6649
  %10042 = vmatprep.subr.bf16.mxu0 0
  %10043 = vmatpush1.bf16.msra.mxu0 %v6652
  %10044 = vmatprep.subr.bf16.mxu0 0
  %10045 = vmatpush1.bf16.msra.mxu0 %v6655
  %10046 = vmatprep.subr.bf16.mxu0 0
  %10047 = vmatpush1.bf16.msra.mxu0 %v6658
  %10048 = vmatprep.subr.bf16.mxu0 0
  %10049 = vmatpush1.bf16.msra.mxu0 %v6661
  %10050 = vmatprep.subr.bf16.mxu0 0
  %10051 = vmatpush1.bf16.msra.mxu0 %v6664
  %10052 = vmatprep.subr.bf16.mxu0 0
  %10053 = vmatpush1.bf16.msra.mxu0 %v6667
  %10054 = vmatprep.subr.bf16.mxu0 0
  %10055 = vmatpush1.bf16.msra.mxu0 %v6670
  %10056 = vmatprep.subr.bf16.mxu0 0
  %10057 = vmatpush1.bf16.msra.mxu0 %v6673
  %10058 = vmatprep.mubr.bf16.mxu0 %v111
  %10059 = vmatmul.mubr.bf16.gmra.mrb[0].mxu0 %v110
  %v10060 = vpop.f32.mrb[0].mxu0
  %v10061 = vadd.f32 %v10021, %v10060
  %v10062 = vpop.f32.mrb[0].mxu0
  %v10063 = vpop.f32.mrb[0].mxu0
  %v10064 = vpop.f32.mrb[0].mxu0
  %10065 = vdwg.mxu0
  %10066 = vmatprep.subr.bf16.mxu0 0
  %10067 = vmatpush1.bf16.msra.mxu0 %v6676
  %10068 = vmatprep.subr.bf16.mxu0 0
  %10069 = vmatpush1.bf16.msra.mxu0 %v6679
  %10070 = vmatprep.subr.bf16.mxu0 0
  %10071 = vmatpush1.bf16.msra.mxu0 %v6682
  %10072 = vmatprep.subr.bf16.mxu0 0
  %10073 = vmatpush1.bf16.msra.mxu0 %v6685
  %10074 = vmatprep.subr.bf16.mxu0 0
  %10075 = vmatpush1.bf16.msra.mxu0 %v6688
  %10076 = vmatprep.subr.bf16.mxu0 0
  %10077 = vmatpush1.bf16.msra.mxu0 %v6691
  %10078 = vmatprep.subr.bf16.mxu0 0
  %10079 = vmatpush1.bf16.msra.mxu0 %v6694
  %10080 = vmatprep.subr.bf16.mxu0 0
  %10081 = vmatpush1.bf16.msra.mxu0 %v6697
  %10082 = vmatprep.subr.bf16.mxu0 0
  %10083 = vmatpush1.bf16.msra.mxu0 %v6700
  %10084 = vmatprep.subr.bf16.mxu0 0
  %10085 = vmatpush1.bf16.msra.mxu0 %v6703
  %10086 = vmatprep.subr.bf16.mxu0 0
  %10087 = vmatpush1.bf16.msra.mxu0 %v6706
  %10088 = vmatprep.subr.bf16.mxu0 0
  %10089 = vmatpush1.bf16.msra.mxu0 %v6709
  %10090 = vmatprep.subr.bf16.mxu0 0
  %10091 = vmatpush1.bf16.msra.mxu0 %v6712
  %10092 = vmatprep.subr.bf16.mxu0 0
  %10093 = vmatpush1.bf16.msra.mxu0 %v6715
  %10094 = vmatprep.subr.bf16.mxu0 0
  %10095 = vmatpush1.bf16.msra.mxu0 %v6718
  %10096 = vmatprep.subr.bf16.mxu0 0
  %10097 = vmatpush1.bf16.msra.mxu0 %v6721
  %10098 = vmatprep.mubr.bf16.mxu0 %v113
  %10099 = vmatmul.mubr.bf16.gmra.mrb[0].mxu0 %v112
  %v10100 = vpop.f32.mrb[0].mxu0
  %v10101 = vadd.f32 %v10061, %v10100
  %v10102 = vpop.f32.mrb[0].mxu0
  %v10103 = vpop.f32.mrb[0].mxu0
  %v10104 = vpop.f32.mrb[0].mxu0
  %10105 = vdwg.mxu0
  %10106 = vmatprep.subr.bf16.mxu0 0
  %10107 = vmatpush1.bf16.msra.mxu0 %v6724
  %10108 = vmatprep.subr.bf16.mxu0 0
  %10109 = vmatpush1.bf16.msra.mxu0 %v6727
  %10110 = vmatprep.subr.bf16.mxu0 0
  %10111 = vmatpush1.bf16.msra.mxu0 %v6730
  %10112 = vmatprep.subr.bf16.mxu0 0
  %10113 = vmatpush1.bf16.msra.mxu0 %v6733
  %10114 = vmatprep.subr.bf16.mxu0 0
  %10115 = vmatpush1.bf16.msra.mxu0 %v6736
  %10116 = vmatprep.subr.bf16.mxu0 0
  %10117 = vmatpush1.bf16.msra.mxu0 %v6739
  %10118 = vmatprep.subr.bf16.mxu0 0
  %10119 = vmatpush1.bf16.msra.mxu0 %v6742
  %10120 = vmatprep.subr.bf16.mxu0 0
  %10121 = vmatpush1.bf16.msra.mxu0 %v6745
  %10122 = vmatprep.subr.bf16.mxu0 0
  %10123 = vmatpush1.bf16.msra.mxu0 %v6748
  %10124 = vmatprep.subr.bf16.mxu0 0
  %10125 = vmatpush1.bf16.msra.mxu0 %v6751
  %10126 = vmatprep.subr.bf16.mxu0 0
  %10127 = vmatpush1.bf16.msra.mxu0 %v6754
  %10128 = vmatprep.subr.bf16.mxu0 0
  %10129 = vmatpush1.bf16.msra.mxu0 %v6757
  %10130 = vmatprep.subr.bf16.mxu0 0
  %10131 = vmatpush1.bf16.msra.mxu0 %v6760
  %10132 = vmatprep.subr.bf16.mxu0 0
  %10133 = vmatpush1.bf16.msra.mxu0 %v6763
  %10134 = vmatprep.subr.bf16.mxu0 0
  %10135 = vmatpush1.bf16.msra.mxu0 %v6766
  %10136 = vmatprep.subr.bf16.mxu0 0
  %10137 = vmatpush1.bf16.msra.mxu0 %v6769
  %10138 = vmatprep.mubr.bf16.mxu0 %v115
  %10139 = vmatmul.mubr.bf16.gmra.mrb[0].mxu0 %v114
  %v10140 = vpop.f32.mrb[0].mxu0
  %v10141 = vadd.f32 %v10101, %v10140
  %v10142 = vpop.f32.mrb[0].mxu0
  %v10143 = vpop.f32.mrb[0].mxu0
  %v10144 = vpop.f32.mrb[0].mxu0
  %10145 = vdwg.mxu0
  %10146 = vmatprep.subr.bf16.mxu0 0
  %10147 = vmatpush1.bf16.msra.mxu0 %v6772
  %10148 = vmatprep.subr.bf16.mxu0 0
  %10149 = vmatpush1.bf16.msra.mxu0 %v6775
  %10150 = vmatprep.subr.bf16.mxu0 0
  %10151 = vmatpush1.bf16.msra.mxu0 %v6778
  %10152 = vmatprep.subr.bf16.mxu0 0
  %10153 = vmatpush1.bf16.msra.mxu0 %v6781
  %10154 = vmatprep.subr.bf16.mxu0 0
  %10155 = vmatpush1.bf16.msra.mxu0 %v6784
  %10156 = vmatprep.subr.bf16.mxu0 0
  %10157 = vmatpush1.bf16.msra.mxu0 %v6787
  %10158 = vmatprep.subr.bf16.mxu0 0
  %10159 = vmatpush1.bf16.msra.mxu0 %v6790
  %10160 = vmatprep.subr.bf16.mxu0 0
  %10161 = vmatpush1.bf16.msra.mxu0 %v6793
  %10162 = vmatprep.subr.bf16.mxu0 0
  %10163 = vmatpush1.bf16.msra.mxu0 %v6796
  %10164 = vmatprep.subr.bf16.mxu0 0
  %10165 = vmatpush1.bf16.msra.mxu0 %v6799
  %10166 = vmatprep.subr.bf16.mxu0 0
  %10167 = vmatpush1.bf16.msra.mxu0 %v6802
  %10168 = vmatprep.subr.bf16.mxu0 0
  %10169 = vmatpush1.bf16.msra.mxu0 %v6805
  %10170 = vmatprep.subr.bf16.mxu0 0
  %10171 = vmatpush1.bf16.msra.mxu0 %v6808
  %10172 = vmatprep.subr.bf16.mxu0 0
  %10173 = vmatpush1.bf16.msra.mxu0 %v6811
  %10174 = vmatprep.subr.bf16.mxu0 0
  %10175 = vmatpush1.bf16.msra.mxu0 %v6814
  %10176 = vmatprep.subr.bf16.mxu0 0
  %10177 = vmatpush1.bf16.msra.mxu0 %v6817
  %10178 = vmatprep.mubr.bf16.mxu0 %v117
  %10179 = vmatmul.mubr.bf16.gmra.mrb[0].mxu0 %v116
  %v10180 = vpop.f32.mrb[0].mxu0
  %v10181 = vadd.f32 %v10141, %v10180
  %v10182 = vpop.f32.mrb[0].mxu0
  %v10183 = vpop.f32.mrb[0].mxu0
  %v10184 = vpop.f32.mrb[0].mxu0
  %10185 = vdwg.mxu0
  %10186 = vmatprep.subr.bf16.mxu0 0
  %10187 = vmatpush1.bf16.msra.mxu0 %v6820
  %10188 = vmatprep.subr.bf16.mxu0 0
  %10189 = vmatpush1.bf16.msra.mxu0 %v6823
  %10190 = vmatprep.subr.bf16.mxu0 0
  %10191 = vmatpush1.bf16.msra.mxu0 %v6826
  %10192 = vmatprep.subr.bf16.mxu0 0
  %10193 = vmatpush1.bf16.msra.mxu0 %v6829
  %10194 = vmatprep.subr.bf16.mxu0 0
  %10195 = vmatpush1.bf16.msra.mxu0 %v6832
  %10196 = vmatprep.subr.bf16.mxu0 0
  %10197 = vmatpush1.bf16.msra.mxu0 %v6835
  %10198 = vmatprep.subr.bf16.mxu0 0
  %10199 = vmatpush1.bf16.msra.mxu0 %v6838
  %10200 = vmatprep.subr.bf16.mxu0 0
  %10201 = vmatpush1.bf16.msra.mxu0 %v6841
  %10202 = vmatprep.subr.bf16.mxu0 0
  %10203 = vmatpush1.bf16.msra.mxu0 %v6844
  %10204 = vmatprep.subr.bf16.mxu0 0
  %10205 = vmatpush1.bf16.msra.mxu0 %v6847
  %10206 = vmatprep.subr.bf16.mxu0 0
  %10207 = vmatpush1.bf16.msra.mxu0 %v6850
  %10208 = vmatprep.subr.bf16.mxu0 0
  %10209 = vmatpush1.bf16.msra.mxu0 %v6853
  %10210 = vmatprep.subr.bf16.mxu0 0
  %10211 = vmatpush1.bf16.msra.mxu0 %v6856
  %10212 = vmatprep.subr.bf16.mxu0 0
  %10213 = vmatpush1.bf16.msra.mxu0 %v6859
  %10214 = vmatprep.subr.bf16.mxu0 0
  %10215 = vmatpush1.bf16.msra.mxu0 %v6862
  %10216 = vmatprep.subr.bf16.mxu0 0
  %10217 = vmatpush1.bf16.msra.mxu0 %v6865
  %10218 = vmatprep.mubr.bf16.mxu0 %v119
  %10219 = vmatmul.mubr.bf16.gmra.mrb[0].mxu0 %v118
  %v10220 = vpop.f32.mrb[0].mxu0
  %v10221 = vadd.f32 %v10181, %v10220
  %v10222 = vpop.f32.mrb[0].mxu0
  %v10223 = vpop.f32.mrb[0].mxu0
  %v10224 = vpop.f32.mrb[0].mxu0
  %10225 = vdwg.mxu0
  %10226 = vmatprep.subr.bf16.mxu0 0
  %10227 = vmatpush1.bf16.msra.mxu0 %v6868
  %10228 = vmatprep.subr.bf16.mxu0 0
  %10229 = vmatpush1.bf16.msra.mxu0 %v6871
  %10230 = vmatprep.subr.bf16.mxu0 0
  %10231 = vmatpush1.bf16.msra.mxu0 %v6874
  %10232 = vmatprep.subr.bf16.mxu0 0
  %10233 = vmatpush1.bf16.msra.mxu0 %v6877
  %10234 = vmatprep.subr.bf16.mxu0 0
  %10235 = vmatpush1.bf16.msra.mxu0 %v6880
  %10236 = vmatprep.subr.bf16.mxu0 0
  %10237 = vmatpush1.bf16.msra.mxu0 %v6883
  %10238 = vmatprep.subr.bf16.mxu0 0
  %10239 = vmatpush1.bf16.msra.mxu0 %v6886
  %10240 = vmatprep.subr.bf16.mxu0 0
  %10241 = vmatpush1.bf16.msra.mxu0 %v6889
  %10242 = vmatprep.subr.bf16.mxu0 0
  %10243 = vmatpush1.bf16.msra.mxu0 %v6892
  %10244 = vmatprep.subr.bf16.mxu0 0
  %10245 = vmatpush1.bf16.msra.mxu0 %v6895
  %10246 = vmatprep.subr.bf16.mxu0 0
  %10247 = vmatpush1.bf16.msra.mxu0 %v6898
  %10248 = vmatprep.subr.bf16.mxu0 0
  %10249 = vmatpush1.bf16.msra.mxu0 %v6901
  %10250 = vmatprep.subr.bf16.mxu0 0
  %10251 = vmatpush1.bf16.msra.mxu0 %v6904
  %10252 = vmatprep.subr.bf16.mxu0 0
  %10253 = vmatpush1.bf16.msra.mxu0 %v6907
  %10254 = vmatprep.subr.bf16.mxu0 0
  %10255 = vmatpush1.bf16.msra.mxu0 %v6910
  %10256 = vmatprep.subr.bf16.mxu0 0
  %10257 = vmatpush1.bf16.msra.mxu0 %v6913
  %10258 = vmatprep.mubr.bf16.mxu0 %v121
  %10259 = vmatmul.mubr.bf16.gmra.mrb[0].mxu0 %v120
  %v10260 = vpop.f32.mrb[0].mxu0
  %v10261 = vadd.f32 %v10221, %v10260
  %v10262 = vpop.f32.mrb[0].mxu0
  %v10263 = vpop.f32.mrb[0].mxu0
  %v10264 = vpop.f32.mrb[0].mxu0
  %10265 = vdwg.mxu0
  %10266 = vmatprep.subr.bf16.mxu0 0
  %10267 = vmatpush1.bf16.msra.mxu0 %v6916
  %10268 = vmatprep.subr.bf16.mxu0 0
  %10269 = vmatpush1.bf16.msra.mxu0 %v6919
  %10270 = vmatprep.subr.bf16.mxu0 0
  %10271 = vmatpush1.bf16.msra.mxu0 %v6922
  %10272 = vmatprep.subr.bf16.mxu0 0
  %10273 = vmatpush1.bf16.msra.mxu0 %v6925
  %10274 = vmatprep.subr.bf16.mxu0 0
  %10275 = vmatpush1.bf16.msra.mxu0 %v6928
  %10276 = vmatprep.subr.bf16.mxu0 0
  %10277 = vmatpush1.bf16.msra.mxu0 %v6931
  %10278 = vmatprep.subr.bf16.mxu0 0
  %10279 = vmatpush1.bf16.msra.mxu0 %v6934
  %10280 = vmatprep.subr.bf16.mxu0 0
  %10281 = vmatpush1.bf16.msra.mxu0 %v6937
  %10282 = vmatprep.subr.bf16.mxu0 0
  %10283 = vmatpush1.bf16.msra.mxu0 %v6940
  %10284 = vmatprep.subr.bf16.mxu0 0
  %10285 = vmatpush1.bf16.msra.mxu0 %v6943
  %10286 = vmatprep.subr.bf16.mxu0 0
  %10287 = vmatpush1.bf16.msra.mxu0 %v6946
  %10288 = vmatprep.subr.bf16.mxu0 0
  %10289 = vmatpush1.bf16.msra.mxu0 %v6949
  %10290 = vmatprep.subr.bf16.mxu0 0
  %10291 = vmatpush1.bf16.msra.mxu0 %v6952
  %10292 = vmatprep.subr.bf16.mxu0 0
  %10293 = vmatpush1.bf16.msra.mxu0 %v6955
  %10294 = vmatprep.subr.bf16.mxu0 0
  %10295 = vmatpush1.bf16.msra.mxu0 %v6958
  %10296 = vmatprep.subr.bf16.mxu0 0
  %10297 = vmatpush1.bf16.msra.mxu0 %v6961
  %10298 = vmatprep.mubr.bf16.mxu0 %v123
  %10299 = vmatmul.mubr.bf16.gmra.mrb[0].mxu0 %v122
  %v10300 = vpop.f32.mrb[0].mxu0
  %v10301 = vadd.f32 %v10261, %v10300
  %v10302 = vpop.f32.mrb[0].mxu0
  %v10303 = vpop.f32.mrb[0].mxu0
  %v10304 = vpop.f32.mrb[0].mxu0
  %10305 = vdwg.mxu0
  %10306 = vmatprep.subr.bf16.mxu0 0
  %10307 = vmatpush1.bf16.msra.mxu0 %v6964
  %10308 = vmatprep.subr.bf16.mxu0 0
  %10309 = vmatpush1.bf16.msra.mxu0 %v6967
  %10310 = vmatprep.subr.bf16.mxu0 0
  %10311 = vmatpush1.bf16.msra.mxu0 %v6970
  %10312 = vmatprep.subr.bf16.mxu0 0
  %10313 = vmatpush1.bf16.msra.mxu0 %v6973
  %10314 = vmatprep.subr.bf16.mxu0 0
  %10315 = vmatpush1.bf16.msra.mxu0 %v6976
  %10316 = vmatprep.subr.bf16.mxu0 0
  %10317 = vmatpush1.bf16.msra.mxu0 %v6979
  %10318 = vmatprep.subr.bf16.mxu0 0
  %10319 = vmatpush1.bf16.msra.mxu0 %v6982
  %10320 = vmatprep.subr.bf16.mxu0 0
  %10321 = vmatpush1.bf16.msra.mxu0 %v6985
  %10322 = vmatprep.subr.bf16.mxu0 0
  %10323 = vmatpush1.bf16.msra.mxu0 %v6988
  %10324 = vmatprep.subr.bf16.mxu0 0
  %10325 = vmatpush1.bf16.msra.mxu0 %v6991
  %10326 = vmatprep.subr.bf16.mxu0 0
  %10327 = vmatpush1.bf16.msra.mxu0 %v6994
  %10328 = vmatprep.subr.bf16.mxu0 0
  %10329 = vmatpush1.bf16.msra.mxu0 %v6997
  %10330 = vmatprep.subr.bf16.mxu0 0
  %10331 = vmatpush1.bf16.msra.mxu0 %v7000
  %10332 = vmatprep.subr.bf16.mxu0 0
  %10333 = vmatpush1.bf16.msra.mxu0 %v7003
  %10334 = vmatprep.subr.bf16.mxu0 0
  %10335 = vmatpush1.bf16.msra.mxu0 %v7006
  %10336 = vmatprep.subr.bf16.mxu0 0
  %10337 = vmatpush1.bf16.msra.mxu0 %v7009
  %10338 = vmatprep.mubr.bf16.mxu0 %v125
  %10339 = vmatmul.mubr.bf16.gmra.mrb[0].mxu0 %v124
  %v10340 = vpop.f32.mrb[0].mxu0
  %v10341 = vadd.f32 %v10301, %v10340
  %v10342 = vpop.f32.mrb[0].mxu0
  %v10343 = vpop.f32.mrb[0].mxu0
  %v10344 = vpop.f32.mrb[0].mxu0
  %10345 = vdwg.mxu0
  %10346 = vmatprep.subr.bf16.mxu0 0
  %10347 = vmatpush1.bf16.msra.mxu0 %v7012
  %10348 = vmatprep.subr.bf16.mxu0 0
  %10349 = vmatpush1.bf16.msra.mxu0 %v7015
  %10350 = vmatprep.subr.bf16.mxu0 0
  %10351 = vmatpush1.bf16.msra.mxu0 %v7018
  %10352 = vmatprep.subr.bf16.mxu0 0
  %10353 = vmatpush1.bf16.msra.mxu0 %v7021
  %10354 = vmatprep.subr.bf16.mxu0 0
  %10355 = vmatpush1.bf16.msra.mxu0 %v7024
  %10356 = vmatprep.subr.bf16.mxu0 0
  %10357 = vmatpush1.bf16.msra.mxu0 %v7027
  %10358 = vmatprep.subr.bf16.mxu0 0
  %10359 = vmatpush1.bf16.msra.mxu0 %v7030
  %10360 = vmatprep.subr.bf16.mxu0 0
  %10361 = vmatpush1.bf16.msra.mxu0 %v7033
  %10362 = vmatprep.subr.bf16.mxu0 0
  %10363 = vmatpush1.bf16.msra.mxu0 %v7036
  %10364 = vmatprep.subr.bf16.mxu0 0
  %10365 = vmatpush1.bf16.msra.mxu0 %v7039
  %10366 = vmatprep.subr.bf16.mxu0 0
  %10367 = vmatpush1.bf16.msra.mxu0 %v7042
  %10368 = vmatprep.subr.bf16.mxu0 0
  %10369 = vmatpush1.bf16.msra.mxu0 %v7045
  %10370 = vmatprep.subr.bf16.mxu0 0
  %10371 = vmatpush1.bf16.msra.mxu0 %v7048
  %10372 = vmatprep.subr.bf16.mxu0 0
  %10373 = vmatpush1.bf16.msra.mxu0 %v7051
  %10374 = vmatprep.subr.bf16.mxu0 0
  %10375 = vmatpush1.bf16.msra.mxu0 %v7054
  %10376 = vmatprep.subr.bf16.mxu0 0
  %10377 = vmatpush1.bf16.msra.mxu0 %v7057
  %10378 = vmatprep.mubr.bf16.mxu0 %v127
  %10379 = vmatmul.mubr.bf16.gmra.mrb[0].mxu0 %v126
  %v10380 = vpop.f32.mrb[0].mxu0
  %v10381 = vadd.f32 %v10341, %v10380
  %v10382 = vpop.f32.mrb[0].mxu0
  %v10383 = vpop.f32.mrb[0].mxu0
  %v10384 = vpop.f32.mrb[0].mxu0
  %10385 = vdwg.mxu0
  %10386 = vmatprep.subr.bf16.mxu0 0
  %10387 = vmatpush1.bf16.msra.mxu0 %v7060
  %10388 = vmatprep.subr.bf16.mxu0 0
  %10389 = vmatpush1.bf16.msra.mxu0 %v7063
  %10390 = vmatprep.subr.bf16.mxu0 0
  %10391 = vmatpush1.bf16.msra.mxu0 %v7066
  %10392 = vmatprep.subr.bf16.mxu0 0
  %10393 = vmatpush1.bf16.msra.mxu0 %v7069
  %10394 = vmatprep.subr.bf16.mxu0 0
  %10395 = vmatpush1.bf16.msra.mxu0 %v7072
  %10396 = vmatprep.subr.bf16.mxu0 0
  %10397 = vmatpush1.bf16.msra.mxu0 %v7075
  %10398 = vmatprep.subr.bf16.mxu0 0
  %10399 = vmatpush1.bf16.msra.mxu0 %v7078
  %10400 = vmatprep.subr.bf16.mxu0 0
  %10401 = vmatpush1.bf16.msra.mxu0 %v8318
  %10402 = vmatprep.subr.bf16.mxu0 0
  %10403 = vmatpush1.bf16.msra.mxu0 0
  %10404 = vmatprep.subr.bf16.mxu0 0
  %10405 = vmatpush1.bf16.msra.mxu0 0
  %10406 = vmatprep.subr.bf16.mxu0 0
  %10407 = vmatpush1.bf16.msra.mxu0 0
  %10408 = vmatprep.subr.bf16.mxu0 0
  %10409 = vmatpush1.bf16.msra.mxu0 0
  %10410 = vmatprep.subr.bf16.mxu0 0
  %10411 = vmatpush1.bf16.msra.mxu0 0
  %10412 = vmatprep.subr.bf16.mxu0 0
  %10413 = vmatpush1.bf16.msra.mxu0 0
  %10414 = vmatprep.subr.bf16.mxu0 0
  %10415 = vmatpush1.bf16.msra.mxu0 0
  %10416 = vmatprep.subr.bf16.mxu0 0
  %10417 = vmatpush1.bf16.msra.mxu0 0
  %10418 = vmatprep.mubr.bf16.mxu0 0
  %10419 = vmatmul.mubr.bf16.gmra.mrb[0].mxu0 %v8305
  %v10420 = vpop.f32.mrb[0].mxu0
  %v10421 = vadd.f32 %v10381, %v10420
  %v10422 = vpop.f32.mrb[0].mxu0
  %v10423 = vpop.f32.mrb[0].mxu0
  %v10424 = vpop.f32.mrb[0].mxu0
  %10425 = vdwg.mxu0
  %v10426 = vmax.f32 %v9380, 0.0
  %v10427 = vmax.f32 %v9382, 0.0
  %v10428 = vmax.f32 %v10421, 0.0
  %v10429 = vld [vmem:[%s3] sm:$0xff]
  %v10430 = vld [vmem:[%s3 + $0x8] sm:$0xff]
  %v10431 = vld [vmem:[%s3 + $0x10] sm:$0xff]
  %v10432 = vld [vmem:[%s3 + $0x18] sm:$0xff]
  %v10433 = vld [vmem:[%s3 + $0x20] sm:$0xff]
  %v10434 = vld [vmem:[%s3 + $0x28] sm:$0xff]
  %v10435 = vld [vmem:[%s3 + $0x30] sm:$0xff]
  %v10436 = vld [vmem:[%s3 + $0x38] sm:$0xff]
  %v10437 = vld [vmem:[%s3 + $0x40] sm:$0xff]
  %v10438 = vld [vmem:[%s3 + $0x48] sm:$0xff]
  %v10439 = vld [vmem:[%s3 + $0x50] sm:$0xff]
  %v10440 = vld [vmem:[%s3 + $0x58] sm:$0xff]
  %v10441 = vld [vmem:[%s3 + $0x60] sm:$0xff]
  %v10442 = vld [vmem:[%s3 + $0x68] sm:$0xff]
  %v10443 = vld [vmem:[%s3 + $0x70] sm:$0xff]
  %v10444 = vld [vmem:[%s3 + $0x78] sm:$0xff]
  %v10445 = vld [vmem:[%s3 + $0x80] sm:$0xff]
  %v10446 = vld [vmem:[%s3 + $0x88] sm:$0xff]
  %v10447 = vld [vmem:[%s3 + $0x90] sm:$0xff]
  %v10448 = vld [vmem:[%s3 + $0x98] sm:$0xff]
  %v10449 = vld [vmem:[%s3 + $0xa0] sm:$0xff]
  %v10450 = vld [vmem:[%s3 + $0xa8] sm:$0xff]
  %v10451 = vld [vmem:[%s3 + $0xb0] sm:$0xff]
  %v10452 = vld [vmem:[%s3 + $0xb8] sm:$0xff]
  %v10453 = vld [vmem:[%s3 + $0xc0] sm:$0xff]
  %v10454 = vld [vmem:[%s3 + $0xc8] sm:$0xff]
  %v10455 = vld [vmem:[%s3 + $0xd0] sm:$0xff]
  %v10456 = vld [vmem:[%s3 + $0xd8] sm:$0xff]
  %v10457 = vld [vmem:[%s3 + $0xe0] sm:$0xff]
  %v10458 = vld [vmem:[%s3 + $0xe8] sm:$0xff]
  %v10459 = vld [vmem:[%s3 + $0xf0] sm:$0xff]
  %v10460 = vld [vmem:[%s3 + $0xf8] sm:$0xff]
  %v10461 = vld [vmem:[%s3 + $0x100] sm:$0xff]
  %v10462 = vld [vmem:[%s3 + $0x108] sm:$0xff]
  %v10463 = vld [vmem:[%s3 + $0x110] sm:$0xff]
  %v10464 = vld [vmem:[%s3 + $0x118] sm:$0xff]
  %v10465 = vld [vmem:[%s3 + $0x120] sm:$0xff]
  %v10466 = vld [vmem:[%s3 + $0x128] sm:$0xf]
  %v10467 = vld [vmem:[%s4] sm:$0x1]
  %v10469 = vlaneseq
  %v10470 = vshrl.u32 %v10469, 7
  %v10471 = vsub.s32 0, %v10470
  %v10472 = vrot.slane %v10467, %v10471
  %vm10474 = vcmask 359424
  %v10476 = vsel %vm10474, %v10428, 0
  %vm10478 = vcmask 1043456
  %v10480 = vsel %vm10478, %v10466, 0
  %10482 = vmatprep.subr.mxu0 0.0
  %10483 = vmatpush1.msra.mxu0 %v10429
  %10484 = vmatprep.subr.mxu0 0.0
  %10485 = vmatpush1.msra.mxu0 %v10430
  %10486 = vmatprep.subr.mxu0 0.0
  %10487 = vmatpush1.msra.mxu0 %v10431
  %10488 = vmatprep.subr.mxu0 0.0
  %10489 = vmatpush1.msra.mxu0 %v10432
  %10490 = vmatprep.subr.mxu0 0.0
  %10491 = vmatpush1.msra.mxu0 %v10433
  %10492 = vmatprep.subr.mxu0 0.0
  %10493 = vmatpush1.msra.mxu0 %v10434
  %10494 = vmatprep.subr.mxu0 0.0
  %10495 = vmatpush1.msra.mxu0 %v10435
  %10496 = vmatprep.subr.mxu0 0.0
  %10497 = vmatpush1.msra.mxu0 %v10436
  %10498 = vmatprep.subr.mxu0 0.0
  %10499 = vmatpush1.msra.mxu0 %v10437
  %10500 = vmatprep.subr.mxu0 0.0
  %10501 = vmatpush1.msra.mxu0 %v10438
  %10502 = vmatprep.subr.mxu0 0.0
  %10503 = vmatpush1.msra.mxu0 %v10439
  %10504 = vmatprep.subr.mxu0 0.0
  %10505 = vmatpush1.msra.mxu0 %v10440
  %10506 = vmatprep.subr.mxu0 0.0
  %10507 = vmatpush1.msra.mxu0 %v10441
  %10508 = vmatprep.subr.mxu0 0.0
  %10509 = vmatpush1.msra.mxu0 %v10442
  %10510 = vmatprep.subr.mxu0 0.0
  %10511 = vmatpush1.msra.mxu0 %v10443
  %10512 = vmatprep.subr.mxu0 0.0
  %10513 = vmatpush1.msra.mxu0 %v10444
  %10514 = vmatprep.subr.mxu0 0.0
  %10515 = vmatpush1.msra.mxu0 %v10445
  %10516 = vmatprep.subr.mxu0 0.0
  %10517 = vmatpush1.msra.mxu0 %v10446
  %10518 = vmatprep.subr.mxu0 0.0
  %10519 = vmatpush1.msra.mxu0 %v10447
  %10520 = vmatprep.subr.mxu0 0.0
  %10521 = vmatpush1.msra.mxu0 %v10448
  %10522 = vmatprep.subr.mxu0 0.0
  %10523 = vmatpush1.msra.mxu0 %v10449
  %10524 = vmatprep.subr.mxu0 0.0
  %10525 = vmatpush1.msra.mxu0 %v10450
  %10526 = vmatprep.subr.mxu0 0.0
  %10527 = vmatpush1.msra.mxu0 %v10451
  %10528 = vmatprep.subr.mxu0 0.0
  %10529 = vmatpush1.msra.mxu0 %v10452
  %10530 = vmatprep.subr.mxu0 0.0
  %10531 = vmatpush1.msra.mxu0 %v10453
  %10532 = vmatprep.subr.mxu0 0.0
  %10533 = vmatpush1.msra.mxu0 %v10454
  %10534 = vmatprep.subr.mxu0 0.0
  %10535 = vmatpush1.msra.mxu0 %v10455
  %10536 = vmatprep.subr.mxu0 0.0
  %10537 = vmatpush1.msra.mxu0 %v10456
  %10538 = vmatprep.subr.mxu0 0.0
  %10539 = vmatpush1.msra.mxu0 %v10457
  %10540 = vmatprep.subr.mxu0 0.0
  %10541 = vmatpush1.msra.mxu0 %v10458
  %10542 = vmatprep.subr.mxu0 0.0
  %10543 = vmatpush1.msra.mxu0 %v10459
  %10544 = vmatprep.subr.mxu0 0.0
  %10545 = vmatpush1.msra.mxu0 %v10460
  %10546 = vmatprep.mubr.f32.mxu0 %v10427
  %10547 = vmatmul.mubr.f32.gmra.mrb[0].mxu0 %v10426
  %v10548 = vpop.f32.mrb[0].mxu0
  %v10549 = vadd.f32 %v10472, %v10548
  %v10550 = vpop.f32.mrb[0].mxu0
  %10551 = vdwg.mxu0
  %10552 = vmatprep.subr.mxu0 0.0
  %10553 = vmatpush1.msra.mxu0 %v10461
  %10554 = vmatprep.subr.mxu0 0.0
  %10555 = vmatpush1.msra.mxu0 %v10462
  %10556 = vmatprep.subr.mxu0 0.0
  %10557 = vmatpush1.msra.mxu0 %v10463
  %10558 = vmatprep.subr.mxu0 0.0
  %10559 = vmatpush1.msra.mxu0 %v10464
  %10560 = vmatprep.subr.mxu0 0.0
  %10561 = vmatpush1.msra.mxu0 %v10465
  %10562 = vmatprep.subr.mxu0 0.0
  %10563 = vmatpush1.msra.mxu0 %v10480
  %10564 = vmatprep.subr.mxu0 0.0
  %10565 = vmatpush1.msra.mxu0 0.0
  %10566 = vmatprep.subr.mxu0 0.0
  %10567 = vmatpush1.msra.mxu0 0.0
  %10568 = vmatprep.subr.mxu0 0.0
  %10569 = vmatpush1.msra.mxu0 0.0
  %10570 = vmatprep.subr.mxu0 0.0
  %10571 = vmatpush1.msra.mxu0 0.0
  %10572 = vmatprep.subr.mxu0 0.0
  %10573 = vmatpush1.msra.mxu0 0.0
  %10574 = vmatprep.subr.mxu0 0.0
  %10575 = vmatpush1.msra.mxu0 0.0
  %10576 = vmatprep.subr.mxu0 0.0
  %10577 = vmatpush1.msra.mxu0 0.0
  %10578 = vmatprep.subr.mxu0 0.0
  %10579 = vmatpush1.msra.mxu0 0.0
  %10580 = vmatprep.subr.mxu0 0.0
  %10581 = vmatpush1.msra.mxu0 0.0
  %10582 = vmatprep.subr.mxu0 0.0
  %10583 = vmatpush1.msra.mxu0 0.0
  %10584 = vmatprep.subr.mxu0 0.0
  %10585 = vmatpush1.msra.mxu0 0.0
  %10586 = vmatprep.subr.mxu0 0.0
  %10587 = vmatpush1.msra.mxu0 0.0
  %10588 = vmatprep.subr.mxu0 0.0
  %10589 = vmatpush1.msra.mxu0 0.0
  %10590 = vmatprep.subr.mxu0 0.0
  %10591 = vmatpush1.msra.mxu0 0.0
  %10592 = vmatprep.subr.mxu0 0.0
  %10593 = vmatpush1.msra.mxu0 0.0
  %10594 = vmatprep.subr.mxu0 0.0
  %10595 = vmatpush1.msra.mxu0 0.0
  %10596 = vmatprep.subr.mxu0 0.0
  %10597 = vmatpush1.msra.mxu0 0.0
  %10598 = vmatprep.subr.mxu0 0.0
  %10599 = vmatpush1.msra.mxu0 0.0
  %10600 = vmatprep.subr.mxu0 0.0
  %10601 = vmatpush1.msra.mxu0 0.0
  %10602 = vmatprep.subr.mxu0 0.0
  %10603 = vmatpush1.msra.mxu0 0.0
  %10604 = vmatprep.subr.mxu0 0.0
  %10605 = vmatpush1.msra.mxu0 0.0
  %10606 = vmatprep.subr.mxu0 0.0
  %10607 = vmatpush1.msra.mxu0 0.0
  %10608 = vmatprep.subr.mxu0 0.0
  %10609 = vmatpush1.msra.mxu0 0.0
  %10610 = vmatprep.subr.mxu0 0.0
  %10611 = vmatpush1.msra.mxu0 0.0
  %10612 = vmatprep.subr.mxu0 0.0
  %10613 = vmatpush1.msra.mxu0 0.0
  %10614 = vmatprep.subr.mxu0 0.0
  %10615 = vmatpush1.msra.mxu0 0.0
  %10616 = vmatprep.mubr.f32.mxu0 0.0
  %10617 = vmatmul.mubr.f32.gmra.mrb[0].mxu0 %v10476
  %v10618 = vpop.f32.mrb[0].mxu0
  %v10619 = vadd.f32 %v10549, %v10618
  %v10620 = vpop.f32.mrb[0].mxu0
  %10621 = vdwg.mxu0
  %v10622 = vlaneseq
  %v10623 = vand.u32 %v10622, 127
  %vm10624 = vcmp.lt.s32.totalorder %v10623, 30
  %v10625 = vmax.f32 %v10619, 0.0
  %vm10626 = vcmp.eq.s32.totalorder %v10623, 30
  %v10627 = vtanh.pop %v10619
  %v10628 = vsel %vm10626, %v10627, 0.0
  %v10629 = vsel %vm10624, %v10625, %v10628
  %v10630 = vld [vmem:[%s5] sm:$0xff]
  %v10631 = vld [vmem:[%s5 + $0x8] sm:$0xff]
  %v10632 = vld [vmem:[%s5 + $0x10] sm:$0xff]
  %v10633 = vld [vmem:[%s5 + $0x18] sm:$0xff]
  %v10634 = vld [vmem:[%s5 + $0x20] sm:$0xff]
  %v10635 = vld [vmem:[%s5 + $0x28] sm:$0xff]
  %v10636 = vld [vmem:[%s5 + $0x30] sm:$0xff]
  %v10637 = vld [vmem:[%s5 + $0x38] sm:$0xff]
  %v10638 = vld [vmem:[%s5 + $0x40] sm:$0xff]
  %v10639 = vld [vmem:[%s5 + $0x48] sm:$0xff]
  %v10640 = vld [vmem:[%s5 + $0x50] sm:$0xff]
  %v10641 = vld [vmem:[%s5 + $0x58] sm:$0xff]
  %v10642 = vld [vmem:[%s5 + $0x60] sm:$0xff]
  %v10643 = vld [vmem:[%s5 + $0x68] sm:$0xff]
  %v10644 = vld [vmem:[%s5 + $0x70] sm:$0xff]
  %v10645 = vld [vmem:[%s5 + $0x78] sm:$0xff]
  %v10646 = vld [vmem:[%s6] sm:$0x1]
  %v10648 = vlaneseq
  %v10649 = vshrl.u32 %v10648, 7
  %v10650 = vsub.s32 0, %v10649
  %v10651 = vrot.slane %v10646, %v10650
  %10653 = vmatprep.subr.mxu0 0.0
  %10654 = vmatpush1.msra.mxu0 %v10630
  %10655 = vmatprep.subr.mxu0 0.0
  %10656 = vmatpush1.msra.mxu0 %v10631
  %10657 = vmatprep.subr.mxu0 0.0
  %10658 = vmatpush1.msra.mxu0 %v10632
  %10659 = vmatprep.subr.mxu0 0.0
  %10660 = vmatpush1.msra.mxu0 %v10633
  %10661 = vmatprep.subr.mxu0 0.0
  %10662 = vmatpush1.msra.mxu0 %v10634
  %10663 = vmatprep.subr.mxu0 0.0
  %10664 = vmatpush1.msra.mxu0 %v10635
  %10665 = vmatprep.subr.mxu0 0.0
  %10666 = vmatpush1.msra.mxu0 %v10636
  %10667 = vmatprep.subr.mxu0 0.0
  %10668 = vmatpush1.msra.mxu0 %v10637
  %10669 = vmatprep.subr.mxu0 0.0
  %10670 = vmatpush1.msra.mxu0 %v10638
  %10671 = vmatprep.subr.mxu0 0.0
  %10672 = vmatpush1.msra.mxu0 %v10639
  %10673 = vmatprep.subr.mxu0 0.0
  %10674 = vmatpush1.msra.mxu0 %v10640
  %10675 = vmatprep.subr.mxu0 0.0
  %10676 = vmatpush1.msra.mxu0 %v10641
  %10677 = vmatprep.subr.mxu0 0.0
  %10678 = vmatpush1.msra.mxu0 %v10642
  %10679 = vmatprep.subr.mxu0 0.0
  %10680 = vmatpush1.msra.mxu0 %v10643
  %10681 = vmatprep.subr.mxu0 0.0
  %10682 = vmatpush1.msra.mxu0 %v10644
  %10683 = vmatprep.subr.mxu0 0.0
  %10684 = vmatpush1.msra.mxu0 %v10645
  %10685 = vmatprep.subr.mxu0 0.0
  %10686 = vmatpush1.msra.mxu0 0.0
  %10687 = vmatprep.subr.mxu0 0.0
  %10688 = vmatpush1.msra.mxu0 0.0
  %10689 = vmatprep.subr.mxu0 0.0
  %10690 = vmatpush1.msra.mxu0 0.0
  %10691 = vmatprep.subr.mxu0 0.0
  %10692 = vmatpush1.msra.mxu0 0.0
  %10693 = vmatprep.subr.mxu0 0.0
  %10694 = vmatpush1.msra.mxu0 0.0
  %10695 = vmatprep.subr.mxu0 0.0
  %10696 = vmatpush1.msra.mxu0 0.0
  %10697 = vmatprep.subr.mxu0 0.0
  %10698 = vmatpush1.msra.mxu0 0.0
  %10699 = vmatprep.subr.mxu0 0.0
  %10700 = vmatpush1.msra.mxu0 0.0
  %10701 = vmatprep.subr.mxu0 0.0
  %10702 = vmatpush1.msra.mxu0 0.0
  %10703 = vmatprep.subr.mxu0 0.0
  %10704 = vmatpush1.msra.mxu0 0.0
  %10705 = vmatprep.subr.mxu0 0.0
  %10706 = vmatpush1.msra.mxu0 0.0
  %10707 = vmatprep.subr.mxu0 0.0
  %10708 = vmatpush1.msra.mxu0 0.0
  %10709 = vmatprep.subr.mxu0 0.0
  %10710 = vmatpush1.msra.mxu0 0.0
  %10711 = vmatprep.subr.mxu0 0.0
  %10712 = vmatpush1.msra.mxu0 0.0
  %10713 = vmatprep.subr.mxu0 0.0
  %10714 = vmatpush1.msra.mxu0 0.0
  %10715 = vmatprep.subr.mxu0 0.0
  %10716 = vmatpush1.msra.mxu0 0.0
  %10717 = vmatprep.mubr.f32.mxu0 0.0
  %10718 = vmatmul.mubr.f32.gmra.mrb[0].mxu0 %v10629
  %v10719 = vpop.f32.mrb[0].mxu0
  %v10720 = vadd.f32 %v10651, %v10719
  %v10721 = vpop.f32.mrb[0].mxu0
  %10722 = vdwg.mxu0
  %v10723 = vmax.f32 %v10720, 0.0
  %vm10724 = vcmp.ge.s32.totalorder %v10623, 32
  %vm10725 = vcmp.lt.s32.totalorder %v10623, 35
  %vm10726 = vmand %vm10724, %vm10725
  %v10727 = vsel %vm10726, %v10723, -inf
  %10728 = vmax.xlane.f32.xlu0 %v10727
  %v10729 = vpop.xlane.xlu0 %10728
  %v10730 = vsub.f32 %v10723, %v10729
  %v10731 = vmul.f32 %v10730, 1.442695
  %v10732 = vpow.pop %v10731
  %v10733 = vsel %vm10726, %v10732, 0.0
  %10734 = vadd.xlane.f32.xlu0 %v10733
  %v10735 = vpop.xlane.xlu0 %10734
  %v10736 = vrcp.pop %v10735
  %v10737 = vmul.f32 %v10733, %v10736
  %v10738 = vadd.f32 %v10629, %v10737
  %10739 = vst [vmem:[%s7] sm:$0xff] %v10738
  // Predicated region
  $region30: #{forward_pipeline.1} parent=0 // pred_check
    _
  $region31: #{forward_pipeline.1} parent=0 // pred_check_branch
    %10741 = sbr.rel (0) target = $region33
  $region32: #{forward_pipeline.1} parent=0 // pred_region
    _
  $region33: #{forward_pipeline.1} parent=0 // pred_fallthru
    _
  // Predicated region
  $region34: #{forward_pipeline.1} parent=0 // pred_check
    _
  $region35: #{forward_pipeline.1} parent=0 // pred_check_branch
    %10743 = sbr.rel (0) target = $region37
  $region36: #{forward_pipeline.1} parent=0 // pred_region
    _
  $region37: #{forward_pipeline.1} parent=0 // pred_fallthru
    _

</llo_original>
